<compile_context>
chip_gen: v5e
topology: v5e:2x2
jax: 0.10.0
libtpu: 0.0.40
codegen_flags: <defaults>
</compile_context>

<pallas_src>
import functools
import math

import jax
import jax.numpy as jnp
from jax import lax
from jax.experimental import pallas as pl
from jax.experimental.pallas import tpu as pltpu


# ----------------------------- in-kernel helpers -----------------------------

def _layernorm(x, g, b, eps=1e-5):
    """LayerNorm over the last dim (f32). x: (B, N, D); g, b: (1, D)."""
    mu = jnp.mean(x, axis=-1, keepdims=True)
    xc = x - mu
    var = jnp.mean(xc * xc, axis=-1, keepdims=True)
    return xc * lax.rsqrt(var + eps) * g + b


def _gelu_tanh(x):
    # tanh-approximate GELU: the transcendental rides the (otherwise idle) EUP
    # slot instead of burning ~10 VALU ops/element on an erf polynomial.
    # TODO(synk): PyTorch F.gelu default is exact erf; max deviation ~1e-3.
    c = math.sqrt(2.0 / math.pi)
    return 0.5 * x * (1.0 + jnp.tanh(c * (x + 0.044715 * (x * x * x))))


def _group_stats(x, num_groups):
    """GroupNorm stats broadcast back to channels.  x: (B, N, C) f32.
    Returns (mean, var), each (B, 1, C); centered two-pass (biased) variance."""
    _, _, c = x.shape
    cg = c // num_groups
    ch_mean = jnp.mean(x, axis=1, keepdims=True)                       # (B,1,C)
    if cg == 1:          # num_groups == C (demo config): group == channel stats
        mean_c = ch_mean
        var_c = jnp.mean((x - mean_c) ** 2, axis=1, keepdims=True)
        return mean_c, var_c
    # General C > 32: group-average the tiny per-channel stats with a
    # compile-time one-hot pair built from iota (no extra params or DMAs).
    f32 = jnp.float32
    grp = (lax.broadcasted_iota(jnp.int32, (c, num_groups), 0) // cg
           == lax.broadcasted_iota(jnp.int32, (c, num_groups), 1)).astype(f32)
    grp_t = (lax.broadcasted_iota(jnp.int32, (num_groups, c), 1) // cg
             == lax.broadcasted_iota(jnp.int32, (num_groups, c), 0)).astype(f32)
    mean_g = jnp.dot(jnp.squeeze(ch_mean, 1), grp,
                     preferred_element_type=f32) / cg                  # (B, G)
    mean_c = jnp.dot(mean_g, grp_t, preferred_element_type=f32)[:, None, :]
    d2 = jnp.mean((x - mean_c) ** 2, axis=1, keepdims=True)            # (B,1,C)
    var_g = jnp.dot(jnp.squeeze(d2, 1), grp, preferred_element_type=f32) / cg
    var_c = jnp.dot(var_g, grp_t, preferred_element_type=f32)[:, None, :]
    return mean_c, var_c


# --------------------------------- kernel ------------------------------------

def spatial_transformer_kernel(
    x_ref,                                         # (B, N, C) tokens, f32
    vec_ref,                                       # (1, P) packed small vectors
    w_in_ref,                                      # (C, D)  proj_in   (bf16)
    wq1_ref, wk1_ref, wv1_ref, wo1_ref,            # (D, D)  attn1     (bf16)
    wq2_ref, wk2_ref, wv2_ref, wo2_ref,            # (D, D)  attn2     (bf16)
    wg_ref,                                        # (D, 2*dff) GEGLU  (bf16)
    wf2_ref,                                       # (dff, D)          (bf16)
    w_out_ref,                                     # (D, C)  proj_out  (bf16)
    o_ref,                                         # (B, N, C) f32
    *, num_groups, n_heads, vec_offsets):
    f32, bf16 = jnp.float32, jnp.bfloat16
    x_in = x_ref[...].astype(f32)                  # (B, N, C)
    vec = vec_ref[...]                             # (1, P) f32

    def vslice(name):                              # packed vector -> (1, L) f32
        off, length = vec_offsets[name]
        return vec[:, off:off + length]

    def mm(a3, w_ref):
        """(B, M, K) f32 x (K, L) bf16 -> (B, M, L) f32 via ONE 2-D MXU matmul."""
        b_, m_, k_ = a3.shape
        l_ = w_ref.shape[-1]
        a2 = a3.reshape(b_ * m_, k_).astype(bf16)  # leading-dim merge: free
        r2 = jnp.dot(a2, w_ref[...], preferred_element_type=f32)
        return r2.reshape(b_, m_, l_)

    # --- GroupNorm(num_groups=32, eps=1e-6, affine) over (chans-in-group, H, W)
    mean_c, var_c = _group_stats(x_in, num_groups)
    xg = ((x_in - mean_c) * lax.rsqrt(var_c + 1e-6)
          * vslice("gn_g") + vslice("gn_b"))

    # --- proj_in: Conv2d(C, D, 1) == channel matmul in token layout
    x1 = mm(xg, w_in_ref) + vslice("b_in")                     # (B, N, D)

    def attn(x, wq_ref, wk_ref, wv_ref, wo_ref, bo):
        """Self-attention; scale already folded into wq.  x: (B, N, D) f32."""
        bsz, n_tok, d = x.shape
        dh = d // n_heads

        q = mm(x, wq_ref)                                      # (B, N, D) f32
        k = mm(x, wk_ref)
        v = mm(x, wv_ref)

        def split(t):      # (B, N, D) -> (H*B, N, dh) bf16, head-major Z order
            tb = t.astype(bf16)
            return jnp.concatenate(
                [tb[:, :, h * dh:(h + 1) * dh] for h in range(n_heads)], axis=0)

        qz, kz, vz = split(q), split(k), split(v)              # (Z, N, dh)

        s = lax.dot_general(qz, kz, (((2,), (2,)), ((0,), (0,))),
                            preferred_element_type=f32)        # (Z, N, N)
        s = s - jnp.max(s, axis=-1, keepdims=True)
        p = jnp.exp(s)
        p = p * pl.reciprocal(jnp.sum(p, axis=-1, keepdims=True), approx=True)

        o = lax.dot_general(p.astype(bf16), vz, (((2,), (1,)), ((0,), (0,))),
                            preferred_element_type=f32)        # (Z, N, dh)

        o4 = o.reshape(n_heads, bsz, n_tok, dh)                # leading split: free
        o_m = jnp.concatenate([o4[h] for h in range(n_heads)], axis=-1)  # (B,N,D)
        return mm(o_m, wo_ref) + bo                            # to_out Linear

    # --- BasicTransformerBlock (depth=1, context=None -> self-attention twice)
    x2 = attn(_layernorm(x1, vslice("n1_g"), vslice("n1_b")),
              wq1_ref, wk1_ref, wv1_ref, wo1_ref, vslice("bo1")) + x1
    x3 = attn(_layernorm(x2, vslice("n2_g"), vslice("n2_b")),
              wq2_ref, wk2_ref, wv2_ref, wo2_ref, vslice("bo2")) + x2

    # --- FeedForward with GEGLU (dropout=0 -> no-op); dff=256 keeps the
    #     value/gate lane split 128-aligned.
    h3 = _layernorm(x3, vslice("n3_g"), vslice("n3_b"))
    ff = mm(h3, wg_ref) + vslice("bg")                         # (B, N, 2*dff)
    dff = wf2_ref.shape[0]
    val, gate = ff[:, :, :dff], ff[:, :, dff:]                 # GEGLU chunk(2, -1)
    x4 = mm(val * _gelu_tanh(gate), wf2_ref) + vslice("bf2") + x3

    # --- proj_out: Conv2d(D, C, 1) + outer residual (y + x_in)
    # TODO(synk): at real latent sizes (N=1k-4k) the (Z,N,N) scores and
    # (N,2*dff) GEGLU tensors need a token-tiled grid (flash-style KV loop),
    # sized off pltpu.get_tpu_info().vmem_capacity_bytes (64 MiB on v7x) and a
    # "parallel" token axis so v7x's 2 TensorCores both work.
    y = mm(x4, w_out_ref) + vslice("b_out")                    # (B, N, C)
    o_ref[...] = (y + x_in).astype(o_ref.dtype)


# -------------------------------- wrapper -------------------------------------

_MAT_ORDER = ["w_in", "wq1", "wk1", "wv1", "wo1",
              "wq2", "wk2", "wv2", "wo2", "wg", "wf2", "w_out"]
_VEC_ORDER = ["gn_g", "gn_b", "b_in", "n1_g", "n1_b", "bo1",
              "n2_g", "n2_b", "bo2", "n3_g", "n3_b", "bf2", "b_out", "bg"]


def pack_params(params, n_heads, d_head):
    """One-time parameter transform: fold the SDPA scale into wq, cast matmul
    weights to bf16, and pack all tiny vectors into one (1, P) f32 array with
    static 128-aligned offsets."""
    p = dict(params)
    scale = d_head ** (-0.5)
    p["wq1"] = p["wq1"] * scale          # fold SDPA scale: s = (x wq) (x wk)^T
    p["wq2"] = p["wq2"] * scale
    packed = {k: jnp.asarray(p[k]).astype(jnp.bfloat16) for k in _MAT_ORDER}

    offsets, chunks, off = {}, [], 0
    for name in _VEC_ORDER:
        v = jnp.asarray(p[name], jnp.float32).reshape(-1)
        n = v.shape[0]
        pad = (-n) % 128                 # keep every slice start lane-aligned
        offsets[name] = (off, n)
        chunks.append(jnp.pad(v, (0, pad)))
        off += n + pad
    packed["vec"] = jnp.concatenate(chunks)[None, :]      # (1, P) f32
    packed["offsets"] = offsets
    packed["n_heads"] = n_heads
    return packed


def _vmem_limit_bytes():
    # Derive from the actual chip (64 MiB/TC on v7x, 128 MiB on v5e/v6e).
    try:
        cap = int(pltpu.get_tpu_info().vmem_capacity_bytes)
    except Exception:
        cap = 64 * 1024 * 1024
    return min(cap // 2, 64 * 1024 * 1024)


def spatial_transformer(x_nchw, packed, num_groups=32):
    b, c, h, w = x_nchw.shape
    n = h * w
    mats = [packed[k] for k in _MAT_ORDER]
    vec = packed["vec"]
    d = packed["w_in"].shape[1]
    dff = packed["wf2"].shape[0]
    heads = packed["n_heads"]

    # NCHW -> (B, N, C) token layout so the 1x1 convs become channel matmuls.
    # TODO(synk): at real latent sizes present a lane-dense (>=128-wide minor)
    # I/O layout to avoid masked partial stores with C=32.
    x_tok = jnp.transpose(x_nchw, (0, 2, 3, 1)).reshape(b, n, c)

    # Advisory cost estimate (MXU flops, EUP transcendentals, HBM bytes).
    attn_mm = 2 * (8 * b * n * d * d + 4 * b * n * n * d)       # two attention blocks
    mm_flops = (2 * b * n * c * d + attn_mm
                + 6 * b * n * d * dff + 2 * b * n * d * c)
    trans = 2 * heads * b * n * n + b * n * dff                 # exp + tanh
    bytes_acc = (2 * x_tok.size * x_tok.dtype.itemsize + vec.size * 4
                 + sum(int(m.size) * m.dtype.itemsize for m in mats))

    out_tok = pl.pallas_call(
        functools.partial(spatial_transformer_kernel,
                          num_groups=num_groups, n_heads=heads,
                          vec_offsets=packed["offsets"]),
        out_shape=jax.ShapeDtypeStruct((b, n, c), jnp.float32),
        # No grid / BlockSpecs: one step, every operand resident whole in VMEM,
        # so there is no pipeline loop and no double-buffered copies.
        input_output_aliases={0: 0},     # reuse x_tok's HBM buffer for the output
        cost_estimate=pl.CostEstimate(flops=int(mm_flops),
                                      transcendentals=int(trans),
                                      bytes_accessed=int(bytes_acc)),
        compiler_params=pltpu.CompilerParams(
            vmem_limit_bytes=_vmem_limit_bytes()),
    )(x_tok, vec, *mats)

    # (B, N, C) -> NCHW
    return jnp.transpose(out_tok.reshape(b, h, w, c), (0, 3, 1, 2))


def init_params(key, in_channels, n_heads, d_head):
    """PyTorch-semantic parameters (Linear weights stored transposed: (in, out))."""
    c = in_channels
    d = n_heads * d_head            # inner_dim
    dff = 4 * d                     # FeedForward inner dim (mult=4)
    f32 = jnp.float32
    ks = jax.random.split(key, 12)

    def mat(k, shape, std=0.02):
        return std * jax.random.normal(k, shape, dtype=f32)

    return {
        "gn_g": jnp.ones((c,), f32), "gn_b": jnp.zeros((c,), f32),
        # proj_in conv weight (D, C, 1, 1) stored transposed as (C, D)
        "w_in": mat(ks[0], (c, d)), "b_in": jnp.zeros((d,), f32),
        "n1_g": jnp.ones((d,), f32), "n1_b": jnp.zeros((d,), f32),
        # to_q/k/v: head h = output columns [h*dh, (h+1)*dh)
        "wq1": mat(ks[1], (d, d)), "wk1": mat(ks[2], (d, d)), "wv1": mat(ks[3], (d, d)),
        "wo1": mat(ks[4], (d, d)), "bo1": jnp.zeros((d,), f32),
        "n2_g": jnp.ones((d,), f32), "n2_b": jnp.zeros((d,), f32),
        "wq2": mat(ks[5], (d, d)), "wk2": mat(ks[6], (d, d)), "wv2": mat(ks[7], (d, d)),
        "wo2": mat(ks[8], (d, d)), "bo2": jnp.zeros((d,), f32),
        "n3_g": jnp.ones((d,), f32), "n3_b": jnp.zeros((d,), f32),
        # GEGLU proj Linear(d, 2*dff): columns [0:dff]=value, [dff:2dff]=gate
        "wg": mat(ks[9], (d, 2 * dff)), "bg": jnp.zeros((2 * dff,), f32),
        "wf2": mat(ks[10], (dff, d)), "bf2": jnp.zeros((d,), f32),
        # NOTE: the PyTorch module zero-inits proj_out (zero_module), making the
        # transformer an identity at init; small random values here so the
        # kernel compute is actually exercised (shapes unchanged).
        "w_out": mat(ks[11], (d, c)), "b_out": jnp.zeros((c,), f32),
    }


if __name__ == "__main__":
    key = jax.random.PRNGKey(0)
    k_x, k_p = jax.random.split(key)

    B, C, H, W = 2, 32, 8, 8          # in_channels must be divisible by 32 (GroupNorm)
    n_heads, d_head = 4, 16           # inner_dim = 64, dff = 256

    x = jax.random.normal(k_x, (B, C, H, W), dtype=jnp.float32)
    params = init_params(k_p, C, n_heads, d_head)
    packed = pack_params(params, n_heads, d_head)   # one-time param transform

    out = spatial_transformer(x, packed)
    out = jax.block_until_ready(out)
    assert out.shape == (B, C, H, W)
    assert bool(jnp.all(jnp.isfinite(out)))
    print("KERNEL_OK")
</pallas_src>

<mosaic_0001>
module attributes {stable_mosaic.version = 11 : i64} {
  func.func @spatial_transformer_kernel(%arg0: memref<2x64x32xf32, #tpu.memory_space<vmem>>, %arg1: memref<1x2176xf32, #tpu.memory_space<vmem>>, %arg2: memref<32x64xbf16, #tpu.memory_space<vmem>>, %arg3: memref<64x64xbf16, #tpu.memory_space<vmem>>, %arg4: memref<64x64xbf16, #tpu.memory_space<vmem>>, %arg5: memref<64x64xbf16, #tpu.memory_space<vmem>>, %arg6: memref<64x64xbf16, #tpu.memory_space<vmem>>, %arg7: memref<64x64xbf16, #tpu.memory_space<vmem>>, %arg8: memref<64x64xbf16, #tpu.memory_space<vmem>>, %arg9: memref<64x64xbf16, #tpu.memory_space<vmem>>, %arg10: memref<64x64xbf16, #tpu.memory_space<vmem>>, %arg11: memref<64x512xbf16, #tpu.memory_space<vmem>>, %arg12: memref<256x64xbf16, #tpu.memory_space<vmem>>, %arg13: memref<64x32xbf16, #tpu.memory_space<vmem>>, %arg14: memref<2x64x32xf32, #tpu.memory_space<vmem>>) attributes {dimension_semantics = [], scalar_prefetch = 0 : i64, scratch_operands = 0 : i64, tpu.core_type = #tpu.core_type<tc>} {
    %c0 = arith.constant 0 : index
    %c0_0 = arith.constant 0 : index
    %c0_1 = arith.constant 0 : index
    %0 = vector.load %arg0[%c0, %c0_0, %c0_1] : memref<2x64x32xf32, #tpu.memory_space<vmem>>, vector<2x64x32xf32>
    %c0_2 = arith.constant 0 : index
    %c0_3 = arith.constant 0 : index
    %1 = vector.load %arg1[%c0_2, %c0_3] : memref<1x2176xf32, #tpu.memory_space<vmem>>, vector<1x2176xf32>
    %cst = arith.constant dense<0.000000e+00> : vector<2x32xf32>
    %2 = vector.multi_reduction <add>, %0, %cst [1] : vector<2x64x32xf32> to vector<2x32xf32>
    %3 = vector.shape_cast %2 : vector<2x32xf32> to vector<2x1x32xf32>
    %cst_4 = arith.constant 6.400000e+01 : f32
    %4 = vector.broadcast %cst_4 : f32 to vector<2x1x32xf32>
    %5 = arith.divf %3, %4 : vector<2x1x32xf32>
    %6 = vector.broadcast %5 : vector<2x1x32xf32> to vector<2x64x32xf32>
    %7 = arith.subf %0, %6 : vector<2x64x32xf32>
    %8 = arith.mulf %7, %7 : vector<2x64x32xf32>
    %cst_5 = arith.constant dense<0.000000e+00> : vector<2x32xf32>
    %9 = vector.multi_reduction <add>, %8, %cst_5 [1] : vector<2x64x32xf32> to vector<2x32xf32>
    %10 = vector.shape_cast %9 : vector<2x32xf32> to vector<2x1x32xf32>
    %cst_6 = arith.constant 6.400000e+01 : f32
    %11 = vector.broadcast %cst_6 : f32 to vector<2x1x32xf32>
    %12 = arith.divf %10, %11 : vector<2x1x32xf32>
    %13 = vector.broadcast %5 : vector<2x1x32xf32> to vector<2x64x32xf32>
    %14 = arith.subf %0, %13 : vector<2x64x32xf32>
    %cst_7 = arith.constant 9.99999997E-7 : f32
    %15 = vector.broadcast %cst_7 : f32 to vector<2x1x32xf32>
    %16 = arith.addf %12, %15 : vector<2x1x32xf32>
    %17 = math.rsqrt %16 : vector<2x1x32xf32>
    %18 = vector.broadcast %17 : vector<2x1x32xf32> to vector<2x64x32xf32>
    %19 = arith.mulf %14, %18 : vector<2x64x32xf32>
    %20 = vector.extract_strided_slice %1 {offsets = [0, 0], sizes = [1, 32], strides = [1, 1]} : vector<1x2176xf32> to vector<1x32xf32>
    %21 = vector.shape_cast %20 : vector<1x32xf32> to vector<1x1x32xf32>
    %22 = vector.broadcast %21 : vector<1x1x32xf32> to vector<2x64x32xf32>
    %23 = arith.mulf %19, %22 : vector<2x64x32xf32>
    %24 = vector.extract_strided_slice %1 {offsets = [0, 128], sizes = [1, 32], strides = [1, 1]} : vector<1x2176xf32> to vector<1x32xf32>
    %25 = vector.shape_cast %24 : vector<1x32xf32> to vector<1x1x32xf32>
    %26 = vector.broadcast %25 : vector<1x1x32xf32> to vector<2x64x32xf32>
    %27 = arith.addf %23, %26 : vector<2x64x32xf32>
    %28 = vector.shape_cast %27 : vector<2x64x32xf32> to vector<128x32xf32>
    %29 = arith.truncf %28 : vector<128x32xf32> to vector<128x32xbf16>
    %c0_8 = arith.constant 0 : index
    %c0_9 = arith.constant 0 : index
    %30 = vector.load %arg2[%c0_8, %c0_9] : memref<32x64xbf16, #tpu.memory_space<vmem>>, vector<32x64xbf16>
    %cst_10 = arith.constant dense<0.000000e+00> : vector<128x64xf32>
    %31 = tpu.matmul %29, %30, %cst_10 {dimension_numbers = #tpu.dot_dimension_numbers<[1], [0], [0], [1], [0, 0, 1, 1], [], []>} : vector<128x32xbf16>, vector<32x64xbf16>, vector<128x64xf32> -> vector<128x64xf32>
    %32 = vector.shape_cast %31 : vector<128x64xf32> to vector<2x64x64xf32>
    %33 = vector.extract_strided_slice %1 {offsets = [0, 256], sizes = [1, 64], strides = [1, 1]} : vector<1x2176xf32> to vector<1x64xf32>
    %34 = vector.shape_cast %33 : vector<1x64xf32> to vector<1x1x64xf32>
    %35 = vector.broadcast %34 : vector<1x1x64xf32> to vector<2x64x64xf32>
    %36 = arith.addf %32, %35 : vector<2x64x64xf32>
    %37 = vector.extract_strided_slice %1 {offsets = [0, 384], sizes = [1, 64], strides = [1, 1]} : vector<1x2176xf32> to vector<1x64xf32>
    %38 = vector.extract_strided_slice %1 {offsets = [0, 512], sizes = [1, 64], strides = [1, 1]} : vector<1x2176xf32> to vector<1x64xf32>
    %cst_11 = arith.constant dense<0.000000e+00> : vector<2x64xf32>
    %39 = vector.multi_reduction <add>, %36, %cst_11 [2] : vector<2x64x64xf32> to vector<2x64xf32>
    %40 = vector.shape_cast %39 : vector<2x64xf32> to vector<2x64x1xf32>
    %cst_12 = arith.constant 6.400000e+01 : f32
    %41 = vector.broadcast %cst_12 : f32 to vector<2x64x1xf32>
    %42 = arith.divf %40, %41 : vector<2x64x1xf32>
    %43 = vector.broadcast %42 : vector<2x64x1xf32> to vector<2x64x64xf32>
    %44 = arith.subf %36, %43 : vector<2x64x64xf32>
    %45 = arith.mulf %44, %44 : vector<2x64x64xf32>
    %cst_13 = arith.constant dense<0.000000e+00> : vector<2x64xf32>
    %46 = vector.multi_reduction <add>, %45, %cst_13 [2] : vector<2x64x64xf32> to vector<2x64xf32>
    %47 = vector.shape_cast %46 : vector<2x64xf32> to vector<2x64x1xf32>
    %cst_14 = arith.constant 6.400000e+01 : f32
    %48 = vector.broadcast %cst_14 : f32 to vector<2x64x1xf32>
    %49 = arith.divf %47, %48 : vector<2x64x1xf32>
    %cst_15 = arith.constant 9.99999974E-6 : f32
    %50 = vector.broadcast %cst_15 : f32 to vector<2x64x1xf32>
    %51 = arith.addf %49, %50 : vector<2x64x1xf32>
    %52 = math.rsqrt %51 : vector<2x64x1xf32>
    %53 = vector.broadcast %52 : vector<2x64x1xf32> to vector<2x64x64xf32>
    %54 = arith.mulf %44, %53 : vector<2x64x64xf32>
    %55 = vector.shape_cast %37 : vector<1x64xf32> to vector<1x1x64xf32>
    %56 = vector.broadcast %55 : vector<1x1x64xf32> to vector<2x64x64xf32>
    %57 = arith.mulf %54, %56 : vector<2x64x64xf32>
    %58 = vector.shape_cast %38 : vector<1x64xf32> to vector<1x1x64xf32>
    %59 = vector.broadcast %58 : vector<1x1x64xf32> to vector<2x64x64xf32>
    %60 = arith.addf %57, %59 : vector<2x64x64xf32>
    %61 = vector.extract_strided_slice %1 {offsets = [0, 640], sizes = [1, 64], strides = [1, 1]} : vector<1x2176xf32> to vector<1x64xf32>
    %62 = vector.shape_cast %60 : vector<2x64x64xf32> to vector<128x64xf32>
    %63 = arith.truncf %62 : vector<128x64xf32> to vector<128x64xbf16>
    %c0_16 = arith.constant 0 : index
    %c0_17 = arith.constant 0 : index
    %64 = vector.load %arg3[%c0_16, %c0_17] : memref<64x64xbf16, #tpu.memory_space<vmem>>, vector<64x64xbf16>
    %cst_18 = arith.constant dense<0.000000e+00> : vector<128x64xf32>
    %65 = tpu.matmul %63, %64, %cst_18 {dimension_numbers = #tpu.dot_dimension_numbers<[1], [0], [0], [1], [0, 0, 1, 1], [], []>} : vector<128x64xbf16>, vector<64x64xbf16>, vector<128x64xf32> -> vector<128x64xf32>
    %66 = vector.shape_cast %65 : vector<128x64xf32> to vector<2x64x64xf32>
    %67 = vector.shape_cast %60 : vector<2x64x64xf32> to vector<128x64xf32>
    %68 = arith.truncf %67 : vector<128x64xf32> to vector<128x64xbf16>
    %c0_19 = arith.constant 0 : index
    %c0_20 = arith.constant 0 : index
    %69 = vector.load %arg4[%c0_19, %c0_20] : memref<64x64xbf16, #tpu.memory_space<vmem>>, vector<64x64xbf16>
    %cst_21 = arith.constant dense<0.000000e+00> : vector<128x64xf32>
    %70 = tpu.matmul %68, %69, %cst_21 {dimension_numbers = #tpu.dot_dimension_numbers<[1], [0], [0], [1], [0, 0, 1, 1], [], []>} : vector<128x64xbf16>, vector<64x64xbf16>, vector<128x64xf32> -> vector<128x64xf32>
    %71 = vector.shape_cast %70 : vector<128x64xf32> to vector<2x64x64xf32>
    %72 = vector.shape_cast %60 : vector<2x64x64xf32> to vector<128x64xf32>
    %73 = arith.truncf %72 : vector<128x64xf32> to vector<128x64xbf16>
    %c0_22 = arith.constant 0 : index
    %c0_23 = arith.constant 0 : index
    %74 = vector.load %arg5[%c0_22, %c0_23] : memref<64x64xbf16, #tpu.memory_space<vmem>>, vector<64x64xbf16>
    %cst_24 = arith.constant dense<0.000000e+00> : vector<128x64xf32>
    %75 = tpu.matmul %73, %74, %cst_24 {dimension_numbers = #tpu.dot_dimension_numbers<[1], [0], [0], [1], [0, 0, 1, 1], [], []>} : vector<128x64xbf16>, vector<64x64xbf16>, vector<128x64xf32> -> vector<128x64xf32>
    %76 = vector.shape_cast %75 : vector<128x64xf32> to vector<2x64x64xf32>
    %77 = arith.truncf %66 : vector<2x64x64xf32> to vector<2x64x64xbf16>
    %78 = vector.extract_strided_slice %77 {offsets = [0, 0, 0], sizes = [2, 64, 16], strides = [1, 1, 1]} : vector<2x64x64xbf16> to vector<2x64x16xbf16>
    %79 = vector.extract_strided_slice %77 {offsets = [0, 0, 16], sizes = [2, 64, 16], strides = [1, 1, 1]} : vector<2x64x64xbf16> to vector<2x64x16xbf16>
    %80 = vector.extract_strided_slice %77 {offsets = [0, 0, 32], sizes = [2, 64, 16], strides = [1, 1, 1]} : vector<2x64x64xbf16> to vector<2x64x16xbf16>
    %81 = vector.extract_strided_slice %77 {offsets = [0, 0, 48], sizes = [2, 64, 16], strides = [1, 1, 1]} : vector<2x64x64xbf16> to vector<2x64x16xbf16>
    %82 = tpu.concatenate %78, %79, %80, %81 in 0 : vector<2x64x16xbf16>, vector<2x64x16xbf16>, vector<2x64x16xbf16>, vector<2x64x16xbf16> -> vector<8x64x16xbf16>
    %83 = arith.truncf %71 : vector<2x64x64xf32> to vector<2x64x64xbf16>
    %84 = vector.extract_strided_slice %83 {offsets = [0, 0, 0], sizes = [2, 64, 16], strides = [1, 1, 1]} : vector<2x64x64xbf16> to vector<2x64x16xbf16>
    %85 = vector.extract_strided_slice %83 {offsets = [0, 0, 16], sizes = [2, 64, 16], strides = [1, 1, 1]} : vector<2x64x64xbf16> to vector<2x64x16xbf16>
    %86 = vector.extract_strided_slice %83 {offsets = [0, 0, 32], sizes = [2, 64, 16], strides = [1, 1, 1]} : vector<2x64x64xbf16> to vector<2x64x16xbf16>
    %87 = vector.extract_strided_slice %83 {offsets = [0, 0, 48], sizes = [2, 64, 16], strides = [1, 1, 1]} : vector<2x64x64xbf16> to vector<2x64x16xbf16>
    %88 = tpu.concatenate %84, %85, %86, %87 in 0 : vector<2x64x16xbf16>, vector<2x64x16xbf16>, vector<2x64x16xbf16>, vector<2x64x16xbf16> -> vector<8x64x16xbf16>
    %89 = arith.truncf %76 : vector<2x64x64xf32> to vector<2x64x64xbf16>
    %90 = vector.extract_strided_slice %89 {offsets = [0, 0, 0], sizes = [2, 64, 16], strides = [1, 1, 1]} : vector<2x64x64xbf16> to vector<2x64x16xbf16>
    %91 = vector.extract_strided_slice %89 {offsets = [0, 0, 16], sizes = [2, 64, 16], strides = [1, 1, 1]} : vector<2x64x64xbf16> to vector<2x64x16xbf16>
    %92 = vector.extract_strided_slice %89 {offsets = [0, 0, 32], sizes = [2, 64, 16], strides = [1, 1, 1]} : vector<2x64x64xbf16> to vector<2x64x16xbf16>
    %93 = vector.extract_strided_slice %89 {offsets = [0, 0, 48], sizes = [2, 64, 16], strides = [1, 1, 1]} : vector<2x64x64xbf16> to vector<2x64x16xbf16>
    %94 = tpu.concatenate %90, %91, %92, %93 in 0 : vector<2x64x16xbf16>, vector<2x64x16xbf16>, vector<2x64x16xbf16>, vector<2x64x16xbf16> -> vector<8x64x16xbf16>
    %cst_25 = arith.constant dense<0.000000e+00> : vector<8x64x64xf32>
    %95 = tpu.matmul %82, %88, %cst_25 {dimension_numbers = #tpu.dot_dimension_numbers<[2], [2], [1], [1], [0, 0, 0, 1, 1, 1], [0], [0]>} : vector<8x64x16xbf16>, vector<8x64x16xbf16>, vector<8x64x64xf32> -> vector<8x64x64xf32>
    %cst_26 = arith.constant dense<0xFF800000> : vector<8x64xf32>
    %96 = vector.multi_reduction <maximumf>, %95, %cst_26 [2] : vector<8x64x64xf32> to vector<8x64xf32>
    %97 = vector.shape_cast %96 : vector<8x64xf32> to vector<8x64x1xf32>
    %98 = vector.broadcast %97 : vector<8x64x1xf32> to vector<8x64x64xf32>
    %99 = arith.subf %95, %98 : vector<8x64x64xf32>
    %100 = math.exp %99 : vector<8x64x64xf32>
    %cst_27 = arith.constant dense<0.000000e+00> : vector<8x64xf32>
    %101 = vector.multi_reduction <add>, %100, %cst_27 [2] : vector<8x64x64xf32> to vector<8x64xf32>
    %102 = vector.shape_cast %101 : vector<8x64xf32> to vector<8x64x1xf32>
    %103 = tpu.reciprocal %102 {approx = true} : vector<8x64x1xf32> -> vector<8x64x1xf32>
    %104 = vector.broadcast %103 : vector<8x64x1xf32> to vector<8x64x64xf32>
    %105 = arith.mulf %100, %104 : vector<8x64x64xf32>
    %106 = arith.truncf %105 : vector<8x64x64xf32> to vector<8x64x64xbf16>
    %cst_28 = arith.constant dense<0.000000e+00> : vector<8x64x16xf32>
    %107 = tpu.matmul %106, %94, %cst_28 {dimension_numbers = #tpu.dot_dimension_numbers<[2], [1], [1], [2], [0, 0, 0, 1, 1, 2], [0], [0]>} : vector<8x64x64xbf16>, vector<8x64x16xbf16>, vector<8x64x16xf32> -> vector<8x64x16xf32>
    %108 = vector.shape_cast %107 : vector<8x64x16xf32> to vector<4x2x64x16xf32>
    %109 = vector.extract_strided_slice %108 {offsets = [0, 0, 0, 0], sizes = [1, 2, 64, 16], strides = [1, 1, 1, 1]} : vector<4x2x64x16xf32> to vector<1x2x64x16xf32>
    %110 = vector.shape_cast %109 : vector<1x2x64x16xf32> to vector<2x64x16xf32>
    %111 = vector.extract_strided_slice %108 {offsets = [1, 0, 0, 0], sizes = [1, 2, 64, 16], strides = [1, 1, 1, 1]} : vector<4x2x64x16xf32> to vector<1x2x64x16xf32>
    %112 = vector.shape_cast %111 : vector<1x2x64x16xf32> to vector<2x64x16xf32>
    %113 = vector.extract_strided_slice %108 {offsets = [2, 0, 0, 0], sizes = [1, 2, 64, 16], strides = [1, 1, 1, 1]} : vector<4x2x64x16xf32> to vector<1x2x64x16xf32>
    %114 = vector.shape_cast %113 : vector<1x2x64x16xf32> to vector<2x64x16xf32>
    %115 = vector.extract_strided_slice %108 {offsets = [3, 0, 0, 0], sizes = [1, 2, 64, 16], strides = [1, 1, 1, 1]} : vector<4x2x64x16xf32> to vector<1x2x64x16xf32>
    %116 = vector.shape_cast %115 : vector<1x2x64x16xf32> to vector<2x64x16xf32>
    %117 = tpu.concatenate %110, %112, %114, %116 in 2 : vector<2x64x16xf32>, vector<2x64x16xf32>, vector<2x64x16xf32>, vector<2x64x16xf32> -> vector<2x64x64xf32>
    %118 = vector.shape_cast %117 : vector<2x64x64xf32> to vector<128x64xf32>
    %119 = arith.truncf %118 : vector<128x64xf32> to vector<128x64xbf16>
    %c0_29 = arith.constant 0 : index
    %c0_30 = arith.constant 0 : index
    %120 = vector.load %arg6[%c0_29, %c0_30] : memref<64x64xbf16, #tpu.memory_space<vmem>>, vector<64x64xbf16>
    %cst_31 = arith.constant dense<0.000000e+00> : vector<128x64xf32>
    %121 = tpu.matmul %119, %120, %cst_31 {dimension_numbers = #tpu.dot_dimension_numbers<[1], [0], [0], [1], [0, 0, 1, 1], [], []>} : vector<128x64xbf16>, vector<64x64xbf16>, vector<128x64xf32> -> vector<128x64xf32>
    %122 = vector.shape_cast %121 : vector<128x64xf32> to vector<2x64x64xf32>
    %123 = vector.shape_cast %61 : vector<1x64xf32> to vector<1x1x64xf32>
    %124 = vector.broadcast %123 : vector<1x1x64xf32> to vector<2x64x64xf32>
    %125 = arith.addf %122, %124 : vector<2x64x64xf32>
    %126 = arith.addf %125, %36 : vector<2x64x64xf32>
    %127 = vector.extract_strided_slice %1 {offsets = [0, 768], sizes = [1, 64], strides = [1, 1]} : vector<1x2176xf32> to vector<1x64xf32>
    %128 = vector.extract_strided_slice %1 {offsets = [0, 896], sizes = [1, 64], strides = [1, 1]} : vector<1x2176xf32> to vector<1x64xf32>
    %cst_32 = arith.constant dense<0.000000e+00> : vector<2x64xf32>
    %129 = vector.multi_reduction <add>, %126, %cst_32 [2] : vector<2x64x64xf32> to vector<2x64xf32>
    %130 = vector.shape_cast %129 : vector<2x64xf32> to vector<2x64x1xf32>
    %cst_33 = arith.constant 6.400000e+01 : f32
    %131 = vector.broadcast %cst_33 : f32 to vector<2x64x1xf32>
    %132 = arith.divf %130, %131 : vector<2x64x1xf32>
    %133 = vector.broadcast %132 : vector<2x64x1xf32> to vector<2x64x64xf32>
    %134 = arith.subf %126, %133 : vector<2x64x64xf32>
    %135 = arith.mulf %134, %134 : vector<2x64x64xf32>
    %cst_34 = arith.constant dense<0.000000e+00> : vector<2x64xf32>
    %136 = vector.multi_reduction <add>, %135, %cst_34 [2] : vector<2x64x64xf32> to vector<2x64xf32>
    %137 = vector.shape_cast %136 : vector<2x64xf32> to vector<2x64x1xf32>
    %cst_35 = arith.constant 6.400000e+01 : f32
    %138 = vector.broadcast %cst_35 : f32 to vector<2x64x1xf32>
    %139 = arith.divf %137, %138 : vector<2x64x1xf32>
    %cst_36 = arith.constant 9.99999974E-6 : f32
    %140 = vector.broadcast %cst_36 : f32 to vector<2x64x1xf32>
    %141 = arith.addf %139, %140 : vector<2x64x1xf32>
    %142 = math.rsqrt %141 : vector<2x64x1xf32>
    %143 = vector.broadcast %142 : vector<2x64x1xf32> to vector<2x64x64xf32>
    %144 = arith.mulf %134, %143 : vector<2x64x64xf32>
    %145 = vector.shape_cast %127 : vector<1x64xf32> to vector<1x1x64xf32>
    %146 = vector.broadcast %145 : vector<1x1x64xf32> to vector<2x64x64xf32>
    %147 = arith.mulf %144, %146 : vector<2x64x64xf32>
    %148 = vector.shape_cast %128 : vector<1x64xf32> to vector<1x1x64xf32>
    %149 = vector.broadcast %148 : vector<1x1x64xf32> to vector<2x64x64xf32>
    %150 = arith.addf %147, %149 : vector<2x64x64xf32>
    %151 = vector.extract_strided_slice %1 {offsets = [0, 1024], sizes = [1, 64], strides = [1, 1]} : vector<1x2176xf32> to vector<1x64xf32>
    %152 = vector.shape_cast %150 : vector<2x64x64xf32> to vector<128x64xf32>
    %153 = arith.truncf %152 : vector<128x64xf32> to vector<128x64xbf16>
    %c0_37 = arith.constant 0 : index
    %c0_38 = arith.constant 0 : index
    %154 = vector.load %arg7[%c0_37, %c0_38] : memref<64x64xbf16, #tpu.memory_space<vmem>>, vector<64x64xbf16>
    %cst_39 = arith.constant dense<0.000000e+00> : vector<128x64xf32>
    %155 = tpu.matmul %153, %154, %cst_39 {dimension_numbers = #tpu.dot_dimension_numbers<[1], [0], [0], [1], [0, 0, 1, 1], [], []>} : vector<128x64xbf16>, vector<64x64xbf16>, vector<128x64xf32> -> vector<128x64xf32>
    %156 = vector.shape_cast %155 : vector<128x64xf32> to vector<2x64x64xf32>
    %157 = vector.shape_cast %150 : vector<2x64x64xf32> to vector<128x64xf32>
    %158 = arith.truncf %157 : vector<128x64xf32> to vector<128x64xbf16>
    %c0_40 = arith.constant 0 : index
    %c0_41 = arith.constant 0 : index
    %159 = vector.load %arg8[%c0_40, %c0_41] : memref<64x64xbf16, #tpu.memory_space<vmem>>, vector<64x64xbf16>
    %cst_42 = arith.constant dense<0.000000e+00> : vector<128x64xf32>
    %160 = tpu.matmul %158, %159, %cst_42 {dimension_numbers = #tpu.dot_dimension_numbers<[1], [0], [0], [1], [0, 0, 1, 1], [], []>} : vector<128x64xbf16>, vector<64x64xbf16>, vector<128x64xf32> -> vector<128x64xf32>
    %161 = vector.shape_cast %160 : vector<128x64xf32> to vector<2x64x64xf32>
    %162 = vector.shape_cast %150 : vector<2x64x64xf32> to vector<128x64xf32>
    %163 = arith.truncf %162 : vector<128x64xf32> to vector<128x64xbf16>
    %c0_43 = arith.constant 0 : index
    %c0_44 = arith.constant 0 : index
    %164 = vector.load %arg9[%c0_43, %c0_44] : memref<64x64xbf16, #tpu.memory_space<vmem>>, vector<64x64xbf16>
    %cst_45 = arith.constant dense<0.000000e+00> : vector<128x64xf32>
    %165 = tpu.matmul %163, %164, %cst_45 {dimension_numbers = #tpu.dot_dimension_numbers<[1], [0], [0], [1], [0, 0, 1, 1], [], []>} : vector<128x64xbf16>, vector<64x64xbf16>, vector<128x64xf32> -> vector<128x64xf32>
    %166 = vector.shape_cast %165 : vector<128x64xf32> to vector<2x64x64xf32>
    %167 = arith.truncf %156 : vector<2x64x64xf32> to vector<2x64x64xbf16>
    %168 = vector.extract_strided_slice %167 {offsets = [0, 0, 0], sizes = [2, 64, 16], strides = [1, 1, 1]} : vector<2x64x64xbf16> to vector<2x64x16xbf16>
    %169 = vector.extract_strided_slice %167 {offsets = [0, 0, 16], sizes = [2, 64, 16], strides = [1, 1, 1]} : vector<2x64x64xbf16> to vector<2x64x16xbf16>
    %170 = vector.extract_strided_slice %167 {offsets = [0, 0, 32], sizes = [2, 64, 16], strides = [1, 1, 1]} : vector<2x64x64xbf16> to vector<2x64x16xbf16>
    %171 = vector.extract_strided_slice %167 {offsets = [0, 0, 48], sizes = [2, 64, 16], strides = [1, 1, 1]} : vector<2x64x64xbf16> to vector<2x64x16xbf16>
    %172 = tpu.concatenate %168, %169, %170, %171 in 0 : vector<2x64x16xbf16>, vector<2x64x16xbf16>, vector<2x64x16xbf16>, vector<2x64x16xbf16> -> vector<8x64x16xbf16>
    %173 = arith.truncf %161 : vector<2x64x64xf32> to vector<2x64x64xbf16>
    %174 = vector.extract_strided_slice %173 {offsets = [0, 0, 0], sizes = [2, 64, 16], strides = [1, 1, 1]} : vector<2x64x64xbf16> to vector<2x64x16xbf16>
    %175 = vector.extract_strided_slice %173 {offsets = [0, 0, 16], sizes = [2, 64, 16], strides = [1, 1, 1]} : vector<2x64x64xbf16> to vector<2x64x16xbf16>
    %176 = vector.extract_strided_slice %173 {offsets = [0, 0, 32], sizes = [2, 64, 16], strides = [1, 1, 1]} : vector<2x64x64xbf16> to vector<2x64x16xbf16>
    %177 = vector.extract_strided_slice %173 {offsets = [0, 0, 48], sizes = [2, 64, 16], strides = [1, 1, 1]} : vector<2x64x64xbf16> to vector<2x64x16xbf16>
    %178 = tpu.concatenate %174, %175, %176, %177 in 0 : vector<2x64x16xbf16>, vector<2x64x16xbf16>, vector<2x64x16xbf16>, vector<2x64x16xbf16> -> vector<8x64x16xbf16>
    %179 = arith.truncf %166 : vector<2x64x64xf32> to vector<2x64x64xbf16>
    %180 = vector.extract_strided_slice %179 {offsets = [0, 0, 0], sizes = [2, 64, 16], strides = [1, 1, 1]} : vector<2x64x64xbf16> to vector<2x64x16xbf16>
    %181 = vector.extract_strided_slice %179 {offsets = [0, 0, 16], sizes = [2, 64, 16], strides = [1, 1, 1]} : vector<2x64x64xbf16> to vector<2x64x16xbf16>
    %182 = vector.extract_strided_slice %179 {offsets = [0, 0, 32], sizes = [2, 64, 16], strides = [1, 1, 1]} : vector<2x64x64xbf16> to vector<2x64x16xbf16>
    %183 = vector.extract_strided_slice %179 {offsets = [0, 0, 48], sizes = [2, 64, 16], strides = [1, 1, 1]} : vector<2x64x64xbf16> to vector<2x64x16xbf16>
    %184 = tpu.concatenate %180, %181, %182, %183 in 0 : vector<2x64x16xbf16>, vector<2x64x16xbf16>, vector<2x64x16xbf16>, vector<2x64x16xbf16> -> vector<8x64x16xbf16>
    %cst_46 = arith.constant dense<0.000000e+00> : vector<8x64x64xf32>
    %185 = tpu.matmul %172, %178, %cst_46 {dimension_numbers = #tpu.dot_dimension_numbers<[2], [2], [1], [1], [0, 0, 0, 1, 1, 1], [0], [0]>} : vector<8x64x16xbf16>, vector<8x64x16xbf16>, vector<8x64x64xf32> -> vector<8x64x64xf32>
    %cst_47 = arith.constant dense<0xFF800000> : vector<8x64xf32>
    %186 = vector.multi_reduction <maximumf>, %185, %cst_47 [2] : vector<8x64x64xf32> to vector<8x64xf32>
    %187 = vector.shape_cast %186 : vector<8x64xf32> to vector<8x64x1xf32>
    %188 = vector.broadcast %187 : vector<8x64x1xf32> to vector<8x64x64xf32>
    %189 = arith.subf %185, %188 : vector<8x64x64xf32>
    %190 = math.exp %189 : vector<8x64x64xf32>
    %cst_48 = arith.constant dense<0.000000e+00> : vector<8x64xf32>
    %191 = vector.multi_reduction <add>, %190, %cst_48 [2] : vector<8x64x64xf32> to vector<8x64xf32>
    %192 = vector.shape_cast %191 : vector<8x64xf32> to vector<8x64x1xf32>
    %193 = tpu.reciprocal %192 {approx = true} : vector<8x64x1xf32> -> vector<8x64x1xf32>
    %194 = vector.broadcast %193 : vector<8x64x1xf32> to vector<8x64x64xf32>
    %195 = arith.mulf %190, %194 : vector<8x64x64xf32>
    %196 = arith.truncf %195 : vector<8x64x64xf32> to vector<8x64x64xbf16>
    %cst_49 = arith.constant dense<0.000000e+00> : vector<8x64x16xf32>
    %197 = tpu.matmul %196, %184, %cst_49 {dimension_numbers = #tpu.dot_dimension_numbers<[2], [1], [1], [2], [0, 0, 0, 1, 1, 2], [0], [0]>} : vector<8x64x64xbf16>, vector<8x64x16xbf16>, vector<8x64x16xf32> -> vector<8x64x16xf32>
    %198 = vector.shape_cast %197 : vector<8x64x16xf32> to vector<4x2x64x16xf32>
    %199 = vector.extract_strided_slice %198 {offsets = [0, 0, 0, 0], sizes = [1, 2, 64, 16], strides = [1, 1, 1, 1]} : vector<4x2x64x16xf32> to vector<1x2x64x16xf32>
    %200 = vector.shape_cast %199 : vector<1x2x64x16xf32> to vector<2x64x16xf32>
    %201 = vector.extract_strided_slice %198 {offsets = [1, 0, 0, 0], sizes = [1, 2, 64, 16], strides = [1, 1, 1, 1]} : vector<4x2x64x16xf32> to vector<1x2x64x16xf32>
    %202 = vector.shape_cast %201 : vector<1x2x64x16xf32> to vector<2x64x16xf32>
    %203 = vector.extract_strided_slice %198 {offsets = [2, 0, 0, 0], sizes = [1, 2, 64, 16], strides = [1, 1, 1, 1]} : vector<4x2x64x16xf32> to vector<1x2x64x16xf32>
    %204 = vector.shape_cast %203 : vector<1x2x64x16xf32> to vector<2x64x16xf32>
    %205 = vector.extract_strided_slice %198 {offsets = [3, 0, 0, 0], sizes = [1, 2, 64, 16], strides = [1, 1, 1, 1]} : vector<4x2x64x16xf32> to vector<1x2x64x16xf32>
    %206 = vector.shape_cast %205 : vector<1x2x64x16xf32> to vector<2x64x16xf32>
    %207 = tpu.concatenate %200, %202, %204, %206 in 2 : vector<2x64x16xf32>, vector<2x64x16xf32>, vector<2x64x16xf32>, vector<2x64x16xf32> -> vector<2x64x64xf32>
    %208 = vector.shape_cast %207 : vector<2x64x64xf32> to vector<128x64xf32>
    %209 = arith.truncf %208 : vector<128x64xf32> to vector<128x64xbf16>
    %c0_50 = arith.constant 0 : index
    %c0_51 = arith.constant 0 : index
    %210 = vector.load %arg10[%c0_50, %c0_51] : memref<64x64xbf16, #tpu.memory_space<vmem>>, vector<64x64xbf16>
    %cst_52 = arith.constant dense<0.000000e+00> : vector<128x64xf32>
    %211 = tpu.matmul %209, %210, %cst_52 {dimension_numbers = #tpu.dot_dimension_numbers<[1], [0], [0], [1], [0, 0, 1, 1], [], []>} : vector<128x64xbf16>, vector<64x64xbf16>, vector<128x64xf32> -> vector<128x64xf32>
    %212 = vector.shape_cast %211 : vector<128x64xf32> to vector<2x64x64xf32>
    %213 = vector.shape_cast %151 : vector<1x64xf32> to vector<1x1x64xf32>
    %214 = vector.broadcast %213 : vector<1x1x64xf32> to vector<2x64x64xf32>
    %215 = arith.addf %212, %214 : vector<2x64x64xf32>
    %216 = arith.addf %215, %126 : vector<2x64x64xf32>
    %217 = vector.extract_strided_slice %1 {offsets = [0, 1152], sizes = [1, 64], strides = [1, 1]} : vector<1x2176xf32> to vector<1x64xf32>
    %218 = vector.extract_strided_slice %1 {offsets = [0, 1280], sizes = [1, 64], strides = [1, 1]} : vector<1x2176xf32> to vector<1x64xf32>
    %cst_53 = arith.constant dense<0.000000e+00> : vector<2x64xf32>
    %219 = vector.multi_reduction <add>, %216, %cst_53 [2] : vector<2x64x64xf32> to vector<2x64xf32>
    %220 = vector.shape_cast %219 : vector<2x64xf32> to vector<2x64x1xf32>
    %cst_54 = arith.constant 6.400000e+01 : f32
    %221 = vector.broadcast %cst_54 : f32 to vector<2x64x1xf32>
    %222 = arith.divf %220, %221 : vector<2x64x1xf32>
    %223 = vector.broadcast %222 : vector<2x64x1xf32> to vector<2x64x64xf32>
    %224 = arith.subf %216, %223 : vector<2x64x64xf32>
    %225 = arith.mulf %224, %224 : vector<2x64x64xf32>
    %cst_55 = arith.constant dense<0.000000e+00> : vector<2x64xf32>
    %226 = vector.multi_reduction <add>, %225, %cst_55 [2] : vector<2x64x64xf32> to vector<2x64xf32>
    %227 = vector.shape_cast %226 : vector<2x64xf32> to vector<2x64x1xf32>
    %cst_56 = arith.constant 6.400000e+01 : f32
    %228 = vector.broadcast %cst_56 : f32 to vector<2x64x1xf32>
    %229 = arith.divf %227, %228 : vector<2x64x1xf32>
    %cst_57 = arith.constant 9.99999974E-6 : f32
    %230 = vector.broadcast %cst_57 : f32 to vector<2x64x1xf32>
    %231 = arith.addf %229, %230 : vector<2x64x1xf32>
    %232 = math.rsqrt %231 : vector<2x64x1xf32>
    %233 = vector.broadcast %232 : vector<2x64x1xf32> to vector<2x64x64xf32>
    %234 = arith.mulf %224, %233 : vector<2x64x64xf32>
    %235 = vector.shape_cast %217 : vector<1x64xf32> to vector<1x1x64xf32>
    %236 = vector.broadcast %235 : vector<1x1x64xf32> to vector<2x64x64xf32>
    %237 = arith.mulf %234, %236 : vector<2x64x64xf32>
    %238 = vector.shape_cast %218 : vector<1x64xf32> to vector<1x1x64xf32>
    %239 = vector.broadcast %238 : vector<1x1x64xf32> to vector<2x64x64xf32>
    %240 = arith.addf %237, %239 : vector<2x64x64xf32>
    %241 = vector.shape_cast %240 : vector<2x64x64xf32> to vector<128x64xf32>
    %242 = arith.truncf %241 : vector<128x64xf32> to vector<128x64xbf16>
    %c0_58 = arith.constant 0 : index
    %c0_59 = arith.constant 0 : index
    %243 = vector.load %arg11[%c0_58, %c0_59] : memref<64x512xbf16, #tpu.memory_space<vmem>>, vector<64x512xbf16>
    %cst_60 = arith.constant dense<0.000000e+00> : vector<128x512xf32>
    %244 = tpu.matmul %242, %243, %cst_60 {dimension_numbers = #tpu.dot_dimension_numbers<[1], [0], [0], [1], [0, 0, 1, 1], [], []>} : vector<128x64xbf16>, vector<64x512xbf16>, vector<128x512xf32> -> vector<128x512xf32>
    %245 = vector.shape_cast %244 : vector<128x512xf32> to vector<2x64x512xf32>
    %246 = vector.extract_strided_slice %1 {offsets = [0, 1664], sizes = [1, 512], strides = [1, 1]} : vector<1x2176xf32> to vector<1x512xf32>
    %247 = vector.shape_cast %246 : vector<1x512xf32> to vector<1x1x512xf32>
    %248 = vector.broadcast %247 : vector<1x1x512xf32> to vector<2x64x512xf32>
    %249 = arith.addf %245, %248 : vector<2x64x512xf32>
    %250 = vector.extract_strided_slice %249 {offsets = [0, 0, 0], sizes = [2, 64, 256], strides = [1, 1, 1]} : vector<2x64x512xf32> to vector<2x64x256xf32>
    %251 = vector.extract_strided_slice %249 {offsets = [0, 0, 256], sizes = [2, 64, 256], strides = [1, 1, 1]} : vector<2x64x512xf32> to vector<2x64x256xf32>
    %cst_61 = arith.constant 5.000000e-01 : f32
    %252 = vector.broadcast %cst_61 : f32 to vector<2x64x256xf32>
    %253 = arith.mulf %252, %251 : vector<2x64x256xf32>
    %254 = arith.mulf %251, %251 : vector<2x64x256xf32>
    %255 = arith.mulf %254, %251 : vector<2x64x256xf32>
    %cst_62 = arith.constant 4.471500e-02 : f32
    %256 = vector.broadcast %cst_62 : f32 to vector<2x64x256xf32>
    %257 = arith.mulf %256, %255 : vector<2x64x256xf32>
    %258 = arith.addf %251, %257 : vector<2x64x256xf32>
    %cst_63 = arith.constant 0.797884583 : f32
    %259 = vector.broadcast %cst_63 : f32 to vector<2x64x256xf32>
    %260 = arith.mulf %259, %258 : vector<2x64x256xf32>
    %261 = math.tanh %260 : vector<2x64x256xf32>
    %cst_64 = arith.constant 1.000000e+00 : f32
    %262 = vector.broadcast %cst_64 : f32 to vector<2x64x256xf32>
    %263 = arith.addf %262, %261 : vector<2x64x256xf32>
    %264 = arith.mulf %253, %263 : vector<2x64x256xf32>
    %265 = arith.mulf %250, %264 : vector<2x64x256xf32>
    %266 = vector.shape_cast %265 : vector<2x64x256xf32> to vector<128x256xf32>
    %267 = arith.truncf %266 : vector<128x256xf32> to vector<128x256xbf16>
    %c0_65 = arith.constant 0 : index
    %c0_66 = arith.constant 0 : index
    %268 = vector.load %arg12[%c0_65, %c0_66] : memref<256x64xbf16, #tpu.memory_space<vmem>>, vector<256x64xbf16>
    %cst_67 = arith.constant dense<0.000000e+00> : vector<128x64xf32>
    %269 = tpu.matmul %267, %268, %cst_67 {dimension_numbers = #tpu.dot_dimension_numbers<[1], [0], [0], [1], [0, 0, 1, 1], [], []>} : vector<128x256xbf16>, vector<256x64xbf16>, vector<128x64xf32> -> vector<128x64xf32>
    %270 = vector.shape_cast %269 : vector<128x64xf32> to vector<2x64x64xf32>
    %271 = vector.extract_strided_slice %1 {offsets = [0, 1408], sizes = [1, 64], strides = [1, 1]} : vector<1x2176xf32> to vector<1x64xf32>
    %272 = vector.shape_cast %271 : vector<1x64xf32> to vector<1x1x64xf32>
    %273 = vector.broadcast %272 : vector<1x1x64xf32> to vector<2x64x64xf32>
    %274 = arith.addf %270, %273 : vector<2x64x64xf32>
    %275 = arith.addf %274, %216 : vector<2x64x64xf32>
    %276 = vector.shape_cast %275 : vector<2x64x64xf32> to vector<128x64xf32>
    %277 = arith.truncf %276 : vector<128x64xf32> to vector<128x64xbf16>
    %c0_68 = arith.constant 0 : index
    %c0_69 = arith.constant 0 : index
    %278 = vector.load %arg13[%c0_68, %c0_69] : memref<64x32xbf16, #tpu.memory_space<vmem>>, vector<64x32xbf16>
    %cst_70 = arith.constant dense<0.000000e+00> : vector<128x32xf32>
    %279 = tpu.matmul %277, %278, %cst_70 {dimension_numbers = #tpu.dot_dimension_numbers<[1], [0], [0], [1], [0, 0, 1, 1], [], []>} : vector<128x64xbf16>, vector<64x32xbf16>, vector<128x32xf32> -> vector<128x32xf32>
    %280 = vector.shape_cast %279 : vector<128x32xf32> to vector<2x64x32xf32>
    %281 = vector.extract_strided_slice %1 {offsets = [0, 1536], sizes = [1, 32], strides = [1, 1]} : vector<1x2176xf32> to vector<1x32xf32>
    %282 = vector.shape_cast %281 : vector<1x32xf32> to vector<1x1x32xf32>
    %283 = vector.broadcast %282 : vector<1x1x32xf32> to vector<2x64x32xf32>
    %284 = arith.addf %280, %283 : vector<2x64x32xf32>
    %285 = arith.addf %284, %0 : vector<2x64x32xf32>
    %c0_71 = arith.constant 0 : index
    %c0_72 = arith.constant 0 : index
    %c0_73 = arith.constant 0 : index
    %286 = vector.load %arg14[%c0_71, %c0_72, %c0_73] : memref<2x64x32xf32, #tpu.memory_space<vmem>>, vector<2x64x32xf32>
    tpu.vector_store %arg14[%c0_71, %c0_72, %c0_73], %285 {strides = array<i32>} : memref<2x64x32xf32, #tpu.memory_space<vmem>>, vector<2x64x32xf32>,
    return
  }
}

</mosaic_0001>

<llo_original>
// kernel: tpu_custom_call.1
$region0: #{tpu_custom_call.1}
  #allocation0 [shape = 'u32[]', space=smem, size = 0x4, offset = 0x4, fixed_abs, tag = 'smem constant byte address 0x4 - core index']
  #allocation1 [shape = 'u32[72,128]{1,0:T(1,128)}', space=vmem, size = 0x9000, scoped, tag = 'internal scratch']
  %s0 = inlined_call_operand.vmem [shape: f32[2,64,32], index: 0, kind: input, shape index: {}, may-alias: {0,14}]
  %s1 = inlined_call_operand.hbm [shape: f32[1,2176], index: 1, kind: input, shape index: {}]
  %s2 = inlined_call_operand.vmem [shape: bf16[32,64], index: 2, kind: input, shape index: {}]
  %s3 = inlined_call_operand.vmem [shape: bf16[64,64], index: 3, kind: input, shape index: {}]
  %s4 = inlined_call_operand.vmem [shape: bf16[64,64], index: 4, kind: input, shape index: {}]
  %s5 = inlined_call_operand.vmem [shape: bf16[64,64], index: 5, kind: input, shape index: {}]
  %s6 = inlined_call_operand.vmem [shape: bf16[64,64], index: 6, kind: input, shape index: {}]
  %s7 = inlined_call_operand.vmem [shape: bf16[64,64], index: 7, kind: input, shape index: {}]
  %s8 = inlined_call_operand.vmem [shape: bf16[64,64], index: 8, kind: input, shape index: {}]
  %s9 = inlined_call_operand.vmem [shape: bf16[64,64], index: 9, kind: input, shape index: {}]
  %s10 = inlined_call_operand.hbm [shape: bf16[64,64], index: 10, kind: input, shape index: {}]
  %s11 = inlined_call_operand.vmem [shape: bf16[64,512], index: 11, kind: input, shape index: {}]
  %s12 = inlined_call_operand.vmem [shape: bf16[256,64], index: 12, kind: input, shape index: {}]
  %s13 = inlined_call_operand.vmem [shape: bf16[64,32], index: 13, kind: input, shape index: {}]
  %s14 = inlined_call_operand.vmem [shape: f32[2,64,32], index: 14, kind: output, shape index: {}, may-alias: {0,14}]
  %s15 = sld [smem:[#allocation0]]
  $region74: #{tpu_custom_call.1} parent=0
    _
  %s17 = ssub.s32 1, %s15
  %s18 = scalar_select 0, %s17, %s15
  $region1: #{tpu_custom_call.1} parent=0
    #allocation2 [shape = 'u8[8704]{0}', space=vmem, size = 0x2400, scoped, tag = 'input window, operand 1, single buffered']
    #allocation3 [shape = 's32[1]{0}', space=sflag, size = 0x4, scoped, tag = 'scoped memory for tpu_custom_call.1']
    #allocation4 [shape = 'u8[16384]{0}', space=vmem, size = 0x4000, scoped, tag = 'input window, operand 10, single buffered']
    #allocation5 [shape = 's32[1]{0}', space=sflag, size = 0x4, scoped, tag = 'scoped memory for tpu_custom_call.1']
    %19 = vsyncpa [#allocation3], 0
    %20 = vsyncpa [#allocation5], 0
    // Predicated region
    $region2: #{tpu_custom_call.1} parent=1 // pred_check
      _
    $region3: #{tpu_custom_call.1} parent=1 // pred_check_branch
      %22 = sbr.rel (0) target = $region5
    $region4: #{tpu_custom_call.1} parent=1 // pred_region
      _
    $region5: #{tpu_custom_call.1} parent=1 // pred_fallthru
      _
    // Predicated region
    $region6: #{tpu_custom_call.1} parent=1 // pred_check
      _
    $region7: #{tpu_custom_call.1} parent=1 // pred_check_branch
      %24 = sbr.rel (0) target = $region9
    $region8: #{tpu_custom_call.1} parent=1 // pred_region
      %26 = vsyncadd [#allocation3], 0
      %s28 = sshll.u32 %s1, 4
      %s29 = int_to_ptr.hbm [resolvable:$true] %s28
      %s30 = sshll.u32 [#allocation2], 4
      %s31 = int_to_ptr.vmem [resolvable:$true] %s30
      %33 = dma.hbm_to_vmem [thread:$0]  %s29, 272, %s31, [#allocation3]
    $region9: #{tpu_custom_call.1} parent=1 // pred_fallthru
      _
    // Predicated region
    $region10: #{tpu_custom_call.1} parent=1 // pred_check
      _
    $region11: #{tpu_custom_call.1} parent=1 // pred_check_branch
      %35 = sbr.rel (0) target = $region13
    $region12: #{tpu_custom_call.1} parent=1 // pred_region
      _
    $region13: #{tpu_custom_call.1} parent=1 // pred_fallthru
      _
    // Predicated region
    $region14: #{tpu_custom_call.1} parent=1 // pred_check
      _
    $region15: #{tpu_custom_call.1} parent=1 // pred_check_branch
      %37 = sbr.rel (0) target = $region17
    $region16: #{tpu_custom_call.1} parent=1 // pred_region
      _
    $region17: #{tpu_custom_call.1} parent=1 // pred_fallthru
      _
    // Predicated region
    $region18: #{tpu_custom_call.1} parent=1 // pred_check
      _
    $region19: #{tpu_custom_call.1} parent=1 // pred_check_branch
      %39 = sbr.rel (0) target = $region21
    $region20: #{tpu_custom_call.1} parent=1 // pred_region
      _
    $region21: #{tpu_custom_call.1} parent=1 // pred_fallthru
      _
    // Predicated region
    $region22: #{tpu_custom_call.1} parent=1 // pred_check
      _
    $region23: #{tpu_custom_call.1} parent=1 // pred_check_branch
      %41 = sbr.rel (0) target = $region25
    $region24: #{tpu_custom_call.1} parent=1 // pred_region
      _
    $region25: #{tpu_custom_call.1} parent=1 // pred_fallthru
      _
    // Predicated region
    $region26: #{tpu_custom_call.1} parent=1 // pred_check
      _
    $region27: #{tpu_custom_call.1} parent=1 // pred_check_branch
      %43 = sbr.rel (0) target = $region29
    $region28: #{tpu_custom_call.1} parent=1 // pred_region
      _
    $region29: #{tpu_custom_call.1} parent=1 // pred_fallthru
      _
    // Predicated region
    $region30: #{tpu_custom_call.1} parent=1 // pred_check
      _
    $region31: #{tpu_custom_call.1} parent=1 // pred_check_branch
      %45 = sbr.rel (0) target = $region33
    $region32: #{tpu_custom_call.1} parent=1 // pred_region
      _
    $region33: #{tpu_custom_call.1} parent=1 // pred_fallthru
      _
    // Predicated region
    $region34: #{tpu_custom_call.1} parent=1 // pred_check
      _
    $region35: #{tpu_custom_call.1} parent=1 // pred_check_branch
      %47 = sbr.rel (0) target = $region37
    $region36: #{tpu_custom_call.1} parent=1 // pred_region
      _
    $region37: #{tpu_custom_call.1} parent=1 // pred_fallthru
      _
    // Predicated region
    $region38: #{tpu_custom_call.1} parent=1 // pred_check
      _
    $region39: #{tpu_custom_call.1} parent=1 // pred_check_branch
      %49 = sbr.rel (0) target = $region41
    $region40: #{tpu_custom_call.1} parent=1 // pred_region
      _
    $region41: #{tpu_custom_call.1} parent=1 // pred_fallthru
      _
    // Predicated region
    $region42: #{tpu_custom_call.1} parent=1 // pred_check
      _
    $region43: #{tpu_custom_call.1} parent=1 // pred_check_branch
      %51 = sbr.rel (0) target = $region45
    $region44: #{tpu_custom_call.1} parent=1 // pred_region
      %53 = vsyncadd [#allocation5], 0
      %s54 = sshll.u32 %s10, 4
      %s55 = int_to_ptr.hbm [resolvable:$true] %s54
      %s56 = sshll.u32 [#allocation4], 4
      %s57 = int_to_ptr.vmem [resolvable:$true] %s56
      %62 = dma.hbm_to_vmem [thread:$0]  %s55, 512, %s57, [#allocation5], 64, 64, 4
    $region45: #{tpu_custom_call.1} parent=1 // pred_fallthru
      _
    // Predicated region
    $region46: #{tpu_custom_call.1} parent=1 // pred_check
      _
    $region47: #{tpu_custom_call.1} parent=1 // pred_check_branch
      %64 = sbr.rel (0) target = $region49
    $region48: #{tpu_custom_call.1} parent=1 // pred_region
      _
    $region49: #{tpu_custom_call.1} parent=1 // pred_fallthru
      _
    // Predicated region
    $region50: #{tpu_custom_call.1} parent=1 // pred_check
      _
    $region51: #{tpu_custom_call.1} parent=1 // pred_check_branch
      %66 = sbr.rel (0) target = $region53
    $region52: #{tpu_custom_call.1} parent=1 // pred_region
      _
    $region53: #{tpu_custom_call.1} parent=1 // pred_fallthru
      _
    // Predicated region
    $region54: #{tpu_custom_call.1} parent=1 // pred_check
      _
    $region55: #{tpu_custom_call.1} parent=1 // pred_check_branch
      %68 = sbr.rel (0) target = $region57
    $region56: #{tpu_custom_call.1} parent=1 // pred_region
      _
    $region57: #{tpu_custom_call.1} parent=1 // pred_fallthru
      _
    // Predicated region
    $region58: #{tpu_custom_call.1} parent=1 // pred_check
      _
    $region59: #{tpu_custom_call.1} parent=1 // pred_check_branch
      %70 = sbr.rel (0) target = $region61
    $region60: #{tpu_custom_call.1} parent=1 // pred_region
      %72 = dma.done [#allocation3], 272
    $region61: #{tpu_custom_call.1} parent=1 // pred_fallthru
      _
    // Predicated region
    $region62: #{tpu_custom_call.1} parent=1 // pred_check
      _
    $region63: #{tpu_custom_call.1} parent=1 // pred_check_branch
      %74 = sbr.rel (0) target = $region65
    $region64: #{tpu_custom_call.1} parent=1 // pred_region
      %76 = dma.done [#allocation5], 512
    $region65: #{tpu_custom_call.1} parent=1 // pred_fallthru
      _
    %v78 = vld [vmem:[%s0] sm:$0xff]
    %v79 = vld [vmem:[%s0 + $0x8] sm:$0xff]
    %v80 = vld [vmem:[%s0 + $0x10] sm:$0xff]
    %v81 = vld [vmem:[%s0 + $0x18] sm:$0xff]
    %v82 = vld [vmem:[%s0 + $0x20] sm:$0xff]
    %v83 = vld [vmem:[%s0 + $0x28] sm:$0xff]
    %v84 = vld [vmem:[%s0 + $0x30] sm:$0xff]
    %v85 = vld [vmem:[%s0 + $0x38] sm:$0xff]
    %v86 = vld [vmem:[%s0 + $0x40] sm:$0xff]
    %v87 = vld [vmem:[%s0 + $0x48] sm:$0xff]
    %v88 = vld [vmem:[%s0 + $0x50] sm:$0xff]
    %v89 = vld [vmem:[%s0 + $0x58] sm:$0xff]
    %v90 = vld [vmem:[%s0 + $0x60] sm:$0xff]
    %v91 = vld [vmem:[%s0 + $0x68] sm:$0xff]
    %v92 = vld [vmem:[%s0 + $0x70] sm:$0xff]
    %v93 = vld [vmem:[%s0 + $0x78] sm:$0xff]
    %v94 = vld [vmem:[#allocation2] sm:$0xff]
    %v95 = vld [vmem:[#allocation2 + $0x8] sm:$0xff]
    %v96 = vld [vmem:[#allocation2 + $0x10] sm:$0x1]
    %vm97 = vcmask 261120
    %v98 = vsel %vm97, %v78, 0.0
    %v99 = vsel %vm97, %v79, 0.0
    %v100 = vadd.f32 %v98, %v99
    %v101 = vsel %vm97, %v80, 0.0
    %v102 = vadd.f32 %v100, %v101
    %v103 = vsel %vm97, %v81, 0.0
    %v104 = vadd.f32 %v102, %v103
    %v105 = vsel %vm97, %v82, 0.0
    %v106 = vadd.f32 %v104, %v105
    %v107 = vsel %vm97, %v83, 0.0
    %v108 = vadd.f32 %v106, %v107
    %v109 = vsel %vm97, %v84, 0.0
    %v110 = vadd.f32 %v108, %v109
    %v111 = vsel %vm97, %v85, 0.0
    %v112 = vadd.f32 %v110, %v111
    %v113 = vrot.slane %v112, 4
    %v114 = vadd.f32 %v112, %v113
    %v115 = vrot.slane %v114, 2
    %v116 = vadd.f32 %v114, %v115
    %v117 = vrot.slane %v116, 1
    %v118 = vadd.f32 %v116, %v117
    %v119 = vsel %vm97, %v86, 0.0
    %v120 = vsel %vm97, %v87, 0.0
    %v121 = vadd.f32 %v119, %v120
    %v122 = vsel %vm97, %v88, 0.0
    %v123 = vadd.f32 %v121, %v122
    %v124 = vsel %vm97, %v89, 0.0
    %v125 = vadd.f32 %v123, %v124
    %v126 = vsel %vm97, %v90, 0.0
    %v127 = vadd.f32 %v125, %v126
    %v128 = vsel %vm97, %v91, 0.0
    %v129 = vadd.f32 %v127, %v128
    %v130 = vsel %vm97, %v92, 0.0
    %v131 = vadd.f32 %v129, %v130
    %v132 = vsel %vm97, %v93, 0.0
    %v133 = vadd.f32 %v131, %v132
    %v134 = vrot.slane %v133, 4
    %v135 = vadd.f32 %v133, %v134
    %v136 = vrot.slane %v135, 2
    %v137 = vadd.f32 %v135, %v136
    %v138 = vrot.slane %v137, 1
    %v139 = vadd.f32 %v137, %v138
    %v140 = vrcp.pop 64.0
    %v141 = vmul.f32 64.0, %v140
    %v142 = vsub.f32 1.0, %v141
    %v143 = vmul.f32 %v140, %v142
    %v144 = vadd.f32 %v140, %v143
    %vm145 = vweird.f32 %v140
    %v146 = vsel %vm145, %v140, %v144
    %v147 = vmul.f32 %v118, %v146
    %v148 = vmul.f32 %v139, %v146
    %v149 = vsub.f32 %v78, %v147
    %v150 = vsub.f32 %v79, %v147
    %v151 = vsub.f32 %v80, %v147
    %v152 = vsub.f32 %v81, %v147
    %v153 = vsub.f32 %v82, %v147
    %v154 = vsub.f32 %v83, %v147
    %v155 = vsub.f32 %v84, %v147
    %v156 = vsub.f32 %v85, %v147
    %v157 = vsub.f32 %v86, %v148
    %v158 = vsub.f32 %v87, %v148
    %v159 = vsub.f32 %v88, %v148
    %v160 = vsub.f32 %v89, %v148
    %v161 = vsub.f32 %v90, %v148
    %v162 = vsub.f32 %v91, %v148
    %v163 = vsub.f32 %v92, %v148
    %v164 = vsub.f32 %v93, %v148
    %v165 = vmul.f32 %v149, %v149
    %v166 = vmul.f32 %v150, %v150
    %v167 = vmul.f32 %v151, %v151
    %v168 = vmul.f32 %v152, %v152
    %v169 = vmul.f32 %v153, %v153
    %v170 = vmul.f32 %v154, %v154
    %v171 = vmul.f32 %v155, %v155
    %v172 = vmul.f32 %v156, %v156
    %v173 = vmul.f32 %v157, %v157
    %v174 = vmul.f32 %v158, %v158
    %v175 = vmul.f32 %v159, %v159
    %v176 = vmul.f32 %v160, %v160
    %v177 = vmul.f32 %v161, %v161
    %v178 = vmul.f32 %v162, %v162
    %v179 = vmul.f32 %v163, %v163
    %v180 = vmul.f32 %v164, %v164
    %v181 = vsel %vm97, %v165, 0.0
    %v182 = vsel %vm97, %v166, 0.0
    %v183 = vadd.f32 %v181, %v182
    %v184 = vsel %vm97, %v167, 0.0
    %v185 = vadd.f32 %v183, %v184
    %v186 = vsel %vm97, %v168, 0.0
    %v187 = vadd.f32 %v185, %v186
    %v188 = vsel %vm97, %v169, 0.0
    %v189 = vadd.f32 %v187, %v188
    %v190 = vsel %vm97, %v170, 0.0
    %v191 = vadd.f32 %v189, %v190
    %v192 = vsel %vm97, %v171, 0.0
    %v193 = vadd.f32 %v191, %v192
    %v194 = vsel %vm97, %v172, 0.0
    %v195 = vadd.f32 %v193, %v194
    %v196 = vrot.slane %v195, 4
    %v197 = vadd.f32 %v195, %v196
    %v198 = vrot.slane %v197, 2
    %v199 = vadd.f32 %v197, %v198
    %v200 = vrot.slane %v199, 1
    %v201 = vadd.f32 %v199, %v200
    %v202 = vsel %vm97, %v173, 0.0
    %v203 = vsel %vm97, %v174, 0.0
    %v204 = vadd.f32 %v202, %v203
    %v205 = vsel %vm97, %v175, 0.0
    %v206 = vadd.f32 %v204, %v205
    %v207 = vsel %vm97, %v176, 0.0
    %v208 = vadd.f32 %v206, %v207
    %v209 = vsel %vm97, %v177, 0.0
    %v210 = vadd.f32 %v208, %v209
    %v211 = vsel %vm97, %v178, 0.0
    %v212 = vadd.f32 %v210, %v211
    %v213 = vsel %vm97, %v179, 0.0
    %v214 = vadd.f32 %v212, %v213
    %v215 = vsel %vm97, %v180, 0.0
    %v216 = vadd.f32 %v214, %v215
    %v217 = vrot.slane %v216, 4
    %v218 = vadd.f32 %v216, %v217
    %v219 = vrot.slane %v218, 2
    %v220 = vadd.f32 %v218, %v219
    %v221 = vrot.slane %v220, 1
    %v222 = vadd.f32 %v220, %v221
    %v223 = vmul.f32 %v201, %v146
    %v224 = vmul.f32 %v222, %v146
    %v225 = vadd.f32 %v223, 1e-06
    %v226 = vadd.f32 %v224, 1e-06
    %v227 = vrsqrt.pop %v225
    %v228 = vmul.f32 %v227, %v225
    %v229 = vmul.f32 %v228, %v227
    %v230 = vmul.f32 0.5, %v229
    %v231 = vsub.f32 1.5, %v230
    %v232 = vmul.f32 %v227, %v231
    %vm233 = vweird.f32 %v225
    %vm234 = vweird.f32 %v227
    %vm235 = vmor %vm233, %vm234
    %v236 = vsel %vm235, %v227, %v232
    %v237 = vrsqrt.pop %v226
    %v238 = vmul.f32 %v237, %v226
    %v239 = vmul.f32 %v238, %v237
    %v240 = vmul.f32 0.5, %v239
    %v241 = vsub.f32 1.5, %v240
    %v242 = vmul.f32 %v237, %v241
    %vm243 = vweird.f32 %v226
    %vm244 = vweird.f32 %v237
    %vm245 = vmor %vm243, %vm244
    %v246 = vsel %vm245, %v237, %v242
    %v247 = vmul.f32 %v149, %v236
    %v248 = vmul.f32 %v150, %v236
    %v249 = vmul.f32 %v151, %v236
    %v250 = vmul.f32 %v152, %v236
    %v251 = vmul.f32 %v153, %v236
    %v252 = vmul.f32 %v154, %v236
    %v253 = vmul.f32 %v155, %v236
    %v254 = vmul.f32 %v156, %v236
    %v255 = vmul.f32 %v157, %v246
    %v256 = vmul.f32 %v158, %v246
    %v257 = vmul.f32 %v159, %v246
    %v258 = vmul.f32 %v160, %v246
    %v259 = vmul.f32 %v161, %v246
    %v260 = vmul.f32 %v162, %v246
    %v261 = vmul.f32 %v163, %v246
    %v262 = vmul.f32 %v164, %v246
    %v264 = vperm.slane %v94, 0
    %v266 = vmul.f32 %v247, %v264
    %v267 = vmul.f32 %v248, %v264
    %v268 = vmul.f32 %v249, %v264
    %v269 = vmul.f32 %v250, %v264
    %v270 = vmul.f32 %v251, %v264
    %v271 = vmul.f32 %v252, %v264
    %v272 = vmul.f32 %v253, %v264
    %v273 = vmul.f32 %v254, %v264
    %v274 = vmul.f32 %v255, %v264
    %v275 = vmul.f32 %v256, %v264
    %v276 = vmul.f32 %v257, %v264
    %v277 = vmul.f32 %v258, %v264
    %v278 = vmul.f32 %v259, %v264
    %v279 = vmul.f32 %v260, %v264
    %v280 = vmul.f32 %v261, %v264
    %v281 = vmul.f32 %v262, %v264
    %v282 = vrot.slane %v94, 1
    %v283 = vperm.slane %v282, 0
    %v285 = vadd.f32 %v266, %v283
    %v286 = vadd.f32 %v267, %v283
    %v287 = vadd.f32 %v268, %v283
    %v288 = vadd.f32 %v269, %v283
    %v289 = vadd.f32 %v270, %v283
    %v290 = vadd.f32 %v271, %v283
    %v291 = vadd.f32 %v272, %v283
    %v292 = vadd.f32 %v273, %v283
    %v293 = vadd.f32 %v274, %v283
    %v294 = vadd.f32 %v275, %v283
    %v295 = vadd.f32 %v276, %v283
    %v296 = vadd.f32 %v277, %v283
    %v297 = vadd.f32 %v278, %v283
    %v298 = vadd.f32 %v279, %v283
    %v299 = vadd.f32 %v280, %v283
    %v300 = vadd.f32 %v281, %v283
    %v301 = vpack.c.bf16 %v286, %v285
    %v302 = vpack.c.bf16 %v288, %v287
    %v303 = vpack.c.bf16 %v290, %v289
    %v304 = vpack.c.bf16 %v292, %v291
    %v305 = vpack.c.bf16 %v294, %v293
    %v306 = vpack.c.bf16 %v296, %v295
    %v307 = vpack.c.bf16 %v298, %v297
    %v308 = vpack.c.bf16 %v300, %v299
    %v309 = vld [vmem:[%s2] sm:$0xf]
    %v310 = vld [vmem:[%s2 + $0x4] sm:$0xf]
    %v311 = vld [vmem:[%s2 + $0x8] sm:$0xf]
    %v312 = vld [vmem:[%s2 + $0xc] sm:$0xf]
    %v317 = vunpack.c.l.b16 %v309
    %v318 = vunpack.c.l.b16 %v310
    %v319 = vunpack.c.l.b16 %v311
    %v320 = vunpack.c.l.b16 %v312
    %v321 = vpack.c.b16 %v318, %v317
    %v322 = vpack.c.b16 %v320, %v319
    %v326 = vsel %vm97, %v301, 0
    %v329 = vsel %vm97, %v302, 0
    %v332 = vsel %vm97, %v303, 0
    %v335 = vsel %vm97, %v304, 0
    %v338 = vsel %vm97, %v305, 0
    %v341 = vsel %vm97, %v306, 0
    %v344 = vsel %vm97, %v307, 0
    %v347 = vsel %vm97, %v308, 0
    %349 = vmatpush.bf16.msra.mxu0 0
    %350 = vmatpush.bf16.msra.mxu0 0
    %351 = vmatpush.bf16.msra.mxu0 0
    %352 = vmatpush.bf16.msra.mxu0 0
    %353 = vmatpush.bf16.msra.mxu0 0
    %354 = vmatpush.bf16.msra.mxu0 0
    %355 = vmatpush.bf16.msra.mxu0 %v322
    %356 = vmatpush.bf16.msra.mxu0 %v321
    %357 = vmatmul.bf16.gmra.mxu0 %v326
    %v358 = vpop.f32.mrf.mxu0
    %v359 = vadd.f32 0.0, %v358
    %v360 = vpop.f32.mrf.mxu0
    %v361 = vadd.f32 0.0, %v360
    %362 = vmatmul.bf16.gmra.mxu0 %v329
    %v363 = vpop.f32.mrf.mxu0
    %v364 = vadd.f32 0.0, %v363
    %v365 = vpop.f32.mrf.mxu0
    %v366 = vadd.f32 0.0, %v365
    %367 = vmatmul.bf16.gmra.mxu0 %v332
    %v368 = vpop.f32.mrf.mxu0
    %v369 = vadd.f32 0.0, %v368
    %v370 = vpop.f32.mrf.mxu0
    %v371 = vadd.f32 0.0, %v370
    %372 = vmatmul.bf16.gmra.mxu0 %v335
    %v373 = vpop.f32.mrf.mxu0
    %v374 = vadd.f32 0.0, %v373
    %v375 = vpop.f32.mrf.mxu0
    %v376 = vadd.f32 0.0, %v375
    %377 = vmatmul.bf16.gmra.mxu0 %v338
    %v378 = vpop.f32.mrf.mxu0
    %v379 = vadd.f32 0.0, %v378
    %v380 = vpop.f32.mrf.mxu0
    %v381 = vadd.f32 0.0, %v380
    %382 = vmatmul.bf16.gmra.mxu0 %v341
    %v383 = vpop.f32.mrf.mxu0
    %v384 = vadd.f32 0.0, %v383
    %v385 = vpop.f32.mrf.mxu0
    %v386 = vadd.f32 0.0, %v385
    %387 = vmatmul.bf16.gmra.mxu0 %v344
    %v388 = vpop.f32.mrf.mxu0
    %v389 = vadd.f32 0.0, %v388
    %v390 = vpop.f32.mrf.mxu0
    %v391 = vadd.f32 0.0, %v390
    %392 = vmatmul.bf16.gmra.mxu0 %v347
    %v393 = vpop.f32.mrf.mxu0
    %v394 = vadd.f32 0.0, %v393
    %v395 = vpop.f32.mrf.mxu0
    %v396 = vadd.f32 0.0, %v395
    %397 = vdwg.mxu0
    %v398 = vrot.slane %v94, 2
    %v399 = vperm.slane %v398, 0
    %v401 = vadd.f32 %v359, %v399
    %v402 = vadd.f32 %v361, %v399
    %v403 = vadd.f32 %v364, %v399
    %v404 = vadd.f32 %v366, %v399
    %v405 = vadd.f32 %v369, %v399
    %v406 = vadd.f32 %v371, %v399
    %v407 = vadd.f32 %v374, %v399
    %v408 = vadd.f32 %v376, %v399
    %v409 = vadd.f32 %v379, %v399
    %v410 = vadd.f32 %v381, %v399
    %v411 = vadd.f32 %v384, %v399
    %v412 = vadd.f32 %v386, %v399
    %v413 = vadd.f32 %v389, %v399
    %v414 = vadd.f32 %v391, %v399
    %v415 = vadd.f32 %v394, %v399
    %v416 = vadd.f32 %v396, %v399
    %vm417 = vcmask 523264
    %v418 = vsel %vm417, %v401, 0.0
    %419 = vadd.xlane.f32.xlu0 %v418
    %v420 = vpop.xlane.xlu0 %419
    %v421 = vsel %vm417, %v402, 0.0
    %422 = vadd.xlane.f32.xlu0 %v421
    %v423 = vpop.xlane.xlu0 %422
    %v424 = vsel %vm417, %v403, 0.0
    %425 = vadd.xlane.f32.xlu0 %v424
    %v426 = vpop.xlane.xlu0 %425
    %v427 = vsel %vm417, %v404, 0.0
    %428 = vadd.xlane.f32.xlu0 %v427
    %v429 = vpop.xlane.xlu0 %428
    %v430 = vsel %vm417, %v405, 0.0
    %431 = vadd.xlane.f32.xlu0 %v430
    %v432 = vpop.xlane.xlu0 %431
    %v433 = vsel %vm417, %v406, 0.0
    %434 = vadd.xlane.f32.xlu0 %v433
    %v435 = vpop.xlane.xlu0 %434
    %v436 = vsel %vm417, %v407, 0.0
    %437 = vadd.xlane.f32.xlu0 %v436
    %v438 = vpop.xlane.xlu0 %437
    %v439 = vsel %vm417, %v408, 0.0
    %440 = vadd.xlane.f32.xlu0 %v439
    %v441 = vpop.xlane.xlu0 %440
    %v442 = vsel %vm417, %v409, 0.0
    %443 = vadd.xlane.f32.xlu0 %v442
    %v444 = vpop.xlane.xlu0 %443
    %v445 = vsel %vm417, %v410, 0.0
    %446 = vadd.xlane.f32.xlu0 %v445
    %v447 = vpop.xlane.xlu0 %446
    %v448 = vsel %vm417, %v411, 0.0
    %449 = vadd.xlane.f32.xlu0 %v448
    %v450 = vpop.xlane.xlu0 %449
    %v451 = vsel %vm417, %v412, 0.0
    %452 = vadd.xlane.f32.xlu0 %v451
    %v453 = vpop.xlane.xlu0 %452
    %v454 = vsel %vm417, %v413, 0.0
    %455 = vadd.xlane.f32.xlu0 %v454
    %v456 = vpop.xlane.xlu0 %455
    %v457 = vsel %vm417, %v414, 0.0
    %458 = vadd.xlane.f32.xlu0 %v457
    %v459 = vpop.xlane.xlu0 %458
    %v460 = vsel %vm417, %v415, 0.0
    %461 = vadd.xlane.f32.xlu0 %v460
    %v462 = vpop.xlane.xlu0 %461
    %v463 = vsel %vm417, %v416, 0.0
    %464 = vadd.xlane.f32.xlu0 %v463
    %v465 = vpop.xlane.xlu0 %464
    %v466 = vmul.f32 %v420, %v146
    %v467 = vmul.f32 %v423, %v146
    %v468 = vmul.f32 %v426, %v146
    %v469 = vmul.f32 %v429, %v146
    %v470 = vmul.f32 %v432, %v146
    %v471 = vmul.f32 %v435, %v146
    %v472 = vmul.f32 %v438, %v146
    %v473 = vmul.f32 %v441, %v146
    %v474 = vmul.f32 %v444, %v146
    %v475 = vmul.f32 %v447, %v146
    %v476 = vmul.f32 %v450, %v146
    %v477 = vmul.f32 %v453, %v146
    %v478 = vmul.f32 %v456, %v146
    %v479 = vmul.f32 %v459, %v146
    %v480 = vmul.f32 %v462, %v146
    %v481 = vmul.f32 %v465, %v146
    %v482 = vsub.f32 %v401, %v466
    %v483 = vsub.f32 %v402, %v467
    %v484 = vsub.f32 %v403, %v468
    %v485 = vsub.f32 %v404, %v469
    %v486 = vsub.f32 %v405, %v470
    %v487 = vsub.f32 %v406, %v471
    %v488 = vsub.f32 %v407, %v472
    %v489 = vsub.f32 %v408, %v473
    %v490 = vsub.f32 %v409, %v474
    %v491 = vsub.f32 %v410, %v475
    %v492 = vsub.f32 %v411, %v476
    %v493 = vsub.f32 %v412, %v477
    %v494 = vsub.f32 %v413, %v478
    %v495 = vsub.f32 %v414, %v479
    %v496 = vsub.f32 %v415, %v480
    %v497 = vsub.f32 %v416, %v481
    %v498 = vmul.f32 %v482, %v482
    %v499 = vmul.f32 %v483, %v483
    %v500 = vmul.f32 %v484, %v484
    %v501 = vmul.f32 %v485, %v485
    %v502 = vmul.f32 %v486, %v486
    %v503 = vmul.f32 %v487, %v487
    %v504 = vmul.f32 %v488, %v488
    %v505 = vmul.f32 %v489, %v489
    %v506 = vmul.f32 %v490, %v490
    %v507 = vmul.f32 %v491, %v491
    %v508 = vmul.f32 %v492, %v492
    %v509 = vmul.f32 %v493, %v493
    %v510 = vmul.f32 %v494, %v494
    %v511 = vmul.f32 %v495, %v495
    %v512 = vmul.f32 %v496, %v496
    %v513 = vmul.f32 %v497, %v497
    %v514 = vsel %vm417, %v498, 0.0
    %515 = vadd.xlane.f32.xlu0 %v514
    %v516 = vpop.xlane.xlu0 %515
    %v517 = vsel %vm417, %v499, 0.0
    %518 = vadd.xlane.f32.xlu0 %v517
    %v519 = vpop.xlane.xlu0 %518
    %v520 = vsel %vm417, %v500, 0.0
    %521 = vadd.xlane.f32.xlu0 %v520
    %v522 = vpop.xlane.xlu0 %521
    %v523 = vsel %vm417, %v501, 0.0
    %524 = vadd.xlane.f32.xlu0 %v523
    %v525 = vpop.xlane.xlu0 %524
    %v526 = vsel %vm417, %v502, 0.0
    %527 = vadd.xlane.f32.xlu0 %v526
    %v528 = vpop.xlane.xlu0 %527
    %v529 = vsel %vm417, %v503, 0.0
    %530 = vadd.xlane.f32.xlu0 %v529
    %v531 = vpop.xlane.xlu0 %530
    %v532 = vsel %vm417, %v504, 0.0
    %533 = vadd.xlane.f32.xlu0 %v532
    %v534 = vpop.xlane.xlu0 %533
    %v535 = vsel %vm417, %v505, 0.0
    %536 = vadd.xlane.f32.xlu0 %v535
    %v537 = vpop.xlane.xlu0 %536
    %v538 = vsel %vm417, %v506, 0.0
    %539 = vadd.xlane.f32.xlu0 %v538
    %v540 = vpop.xlane.xlu0 %539
    %v541 = vsel %vm417, %v507, 0.0
    %542 = vadd.xlane.f32.xlu0 %v541
    %v543 = vpop.xlane.xlu0 %542
    %v544 = vsel %vm417, %v508, 0.0
    %545 = vadd.xlane.f32.xlu0 %v544
    %v546 = vpop.xlane.xlu0 %545
    %v547 = vsel %vm417, %v509, 0.0
    %548 = vadd.xlane.f32.xlu0 %v547
    %v549 = vpop.xlane.xlu0 %548
    %v550 = vsel %vm417, %v510, 0.0
    %551 = vadd.xlane.f32.xlu0 %v550
    %v552 = vpop.xlane.xlu0 %551
    %v553 = vsel %vm417, %v511, 0.0
    %554 = vadd.xlane.f32.xlu0 %v553
    %v555 = vpop.xlane.xlu0 %554
    %v556 = vsel %vm417, %v512, 0.0
    %557 = vadd.xlane.f32.xlu0 %v556
    %v558 = vpop.xlane.xlu0 %557
    %v559 = vsel %vm417, %v513, 0.0
    %560 = vadd.xlane.f32.xlu0 %v559
    %v561 = vpop.xlane.xlu0 %560
    %v562 = vmul.f32 %v516, %v146
    %v563 = vmul.f32 %v519, %v146
    %v564 = vmul.f32 %v522, %v146
    %v565 = vmul.f32 %v525, %v146
    %v566 = vmul.f32 %v528, %v146
    %v567 = vmul.f32 %v531, %v146
    %v568 = vmul.f32 %v534, %v146
    %v569 = vmul.f32 %v537, %v146
    %v570 = vmul.f32 %v540, %v146
    %v571 = vmul.f32 %v543, %v146
    %v572 = vmul.f32 %v546, %v146
    %v573 = vmul.f32 %v549, %v146
    %v574 = vmul.f32 %v552, %v146
    %v575 = vmul.f32 %v555, %v146
    %v576 = vmul.f32 %v558, %v146
    %v577 = vmul.f32 %v561, %v146
    %v578 = vadd.f32 %v562, 1e-05
    %v579 = vadd.f32 %v563, 1e-05
    %v580 = vadd.f32 %v564, 1e-05
    %v581 = vadd.f32 %v565, 1e-05
    %v582 = vadd.f32 %v566, 1e-05
    %v583 = vadd.f32 %v567, 1e-05
    %v584 = vadd.f32 %v568, 1e-05
    %v585 = vadd.f32 %v569, 1e-05
    %v586 = vadd.f32 %v570, 1e-05
    %v587 = vadd.f32 %v571, 1e-05
    %v588 = vadd.f32 %v572, 1e-05
    %v589 = vadd.f32 %v573, 1e-05
    %v590 = vadd.f32 %v574, 1e-05
    %v591 = vadd.f32 %v575, 1e-05
    %v592 = vadd.f32 %v576, 1e-05
    %v593 = vadd.f32 %v577, 1e-05
    %v594 = vrsqrt.pop %v578
    %v595 = vmul.f32 %v594, %v578
    %v596 = vmul.f32 %v595, %v594
    %v597 = vmul.f32 0.5, %v596
    %v598 = vsub.f32 1.5, %v597
    %v599 = vmul.f32 %v594, %v598
    %vm600 = vweird.f32 %v578
    %vm601 = vweird.f32 %v594
    %vm602 = vmor %vm600, %vm601
    %v603 = vsel %vm602, %v594, %v599
    %v604 = vrsqrt.pop %v579
    %v605 = vmul.f32 %v604, %v579
    %v606 = vmul.f32 %v605, %v604
    %v607 = vmul.f32 0.5, %v606
    %v608 = vsub.f32 1.5, %v607
    %v609 = vmul.f32 %v604, %v608
    %vm610 = vweird.f32 %v579
    %vm611 = vweird.f32 %v604
    %vm612 = vmor %vm610, %vm611
    %v613 = vsel %vm612, %v604, %v609
    %v614 = vrsqrt.pop %v580
    %v615 = vmul.f32 %v614, %v580
    %v616 = vmul.f32 %v615, %v614
    %v617 = vmul.f32 0.5, %v616
    %v618 = vsub.f32 1.5, %v617
    %v619 = vmul.f32 %v614, %v618
    %vm620 = vweird.f32 %v580
    %vm621 = vweird.f32 %v614
    %vm622 = vmor %vm620, %vm621
    %v623 = vsel %vm622, %v614, %v619
    %v624 = vrsqrt.pop %v581
    %v625 = vmul.f32 %v624, %v581
    %v626 = vmul.f32 %v625, %v624
    %v627 = vmul.f32 0.5, %v626
    %v628 = vsub.f32 1.5, %v627
    %v629 = vmul.f32 %v624, %v628
    %vm630 = vweird.f32 %v581
    %vm631 = vweird.f32 %v624
    %vm632 = vmor %vm630, %vm631
    %v633 = vsel %vm632, %v624, %v629
    %v634 = vrsqrt.pop %v582
    %v635 = vmul.f32 %v634, %v582
    %v636 = vmul.f32 %v635, %v634
    %v637 = vmul.f32 0.5, %v636
    %v638 = vsub.f32 1.5, %v637
    %v639 = vmul.f32 %v634, %v638
    %vm640 = vweird.f32 %v582
    %vm641 = vweird.f32 %v634
    %vm642 = vmor %vm640, %vm641
    %v643 = vsel %vm642, %v634, %v639
    %v644 = vrsqrt.pop %v583
    %v645 = vmul.f32 %v644, %v583
    %v646 = vmul.f32 %v645, %v644
    %v647 = vmul.f32 0.5, %v646
    %v648 = vsub.f32 1.5, %v647
    %v649 = vmul.f32 %v644, %v648
    %vm650 = vweird.f32 %v583
    %vm651 = vweird.f32 %v644
    %vm652 = vmor %vm650, %vm651
    %v653 = vsel %vm652, %v644, %v649
    %v654 = vrsqrt.pop %v584
    %v655 = vmul.f32 %v654, %v584
    %v656 = vmul.f32 %v655, %v654
    %v657 = vmul.f32 0.5, %v656
    %v658 = vsub.f32 1.5, %v657
    %v659 = vmul.f32 %v654, %v658
    %vm660 = vweird.f32 %v584
    %vm661 = vweird.f32 %v654
    %vm662 = vmor %vm660, %vm661
    %v663 = vsel %vm662, %v654, %v659
    %v664 = vrsqrt.pop %v585
    %v665 = vmul.f32 %v664, %v585
    %v666 = vmul.f32 %v665, %v664
    %v667 = vmul.f32 0.5, %v666
    %v668 = vsub.f32 1.5, %v667
    %v669 = vmul.f32 %v664, %v668
    %vm670 = vweird.f32 %v585
    %vm671 = vweird.f32 %v664
    %vm672 = vmor %vm670, %vm671
    %v673 = vsel %vm672, %v664, %v669
    %v674 = vrsqrt.pop %v586
    %v675 = vmul.f32 %v674, %v586
    %v676 = vmul.f32 %v675, %v674
    %v677 = vmul.f32 0.5, %v676
    %v678 = vsub.f32 1.5, %v677
    %v679 = vmul.f32 %v674, %v678
    %vm680 = vweird.f32 %v586
    %vm681 = vweird.f32 %v674
    %vm682 = vmor %vm680, %vm681
    %v683 = vsel %vm682, %v674, %v679
    %v684 = vrsqrt.pop %v587
    %v685 = vmul.f32 %v684, %v587
    %v686 = vmul.f32 %v685, %v684
    %v687 = vmul.f32 0.5, %v686
    %v688 = vsub.f32 1.5, %v687
    %v689 = vmul.f32 %v684, %v688
    %vm690 = vweird.f32 %v587
    %vm691 = vweird.f32 %v684
    %vm692 = vmor %vm690, %vm691
    %v693 = vsel %vm692, %v684, %v689
    %v694 = vrsqrt.pop %v588
    %v695 = vmul.f32 %v694, %v588
    %v696 = vmul.f32 %v695, %v694
    %v697 = vmul.f32 0.5, %v696
    %v698 = vsub.f32 1.5, %v697
    %v699 = vmul.f32 %v694, %v698
    %vm700 = vweird.f32 %v588
    %vm701 = vweird.f32 %v694
    %vm702 = vmor %vm700, %vm701
    %v703 = vsel %vm702, %v694, %v699
    %v704 = vrsqrt.pop %v589
    %v705 = vmul.f32 %v704, %v589
    %v706 = vmul.f32 %v705, %v704
    %v707 = vmul.f32 0.5, %v706
    %v708 = vsub.f32 1.5, %v707
    %v709 = vmul.f32 %v704, %v708
    %vm710 = vweird.f32 %v589
    %vm711 = vweird.f32 %v704
    %vm712 = vmor %vm710, %vm711
    %v713 = vsel %vm712, %v704, %v709
    %v714 = vrsqrt.pop %v590
    %v715 = vmul.f32 %v714, %v590
    %v716 = vmul.f32 %v715, %v714
    %v717 = vmul.f32 0.5, %v716
    %v718 = vsub.f32 1.5, %v717
    %v719 = vmul.f32 %v714, %v718
    %vm720 = vweird.f32 %v590
    %vm721 = vweird.f32 %v714
    %vm722 = vmor %vm720, %vm721
    %v723 = vsel %vm722, %v714, %v719
    %v724 = vrsqrt.pop %v591
    %v725 = vmul.f32 %v724, %v591
    %v726 = vmul.f32 %v725, %v724
    %v727 = vmul.f32 0.5, %v726
    %v728 = vsub.f32 1.5, %v727
    %v729 = vmul.f32 %v724, %v728
    %vm730 = vweird.f32 %v591
    %vm731 = vweird.f32 %v724
    %vm732 = vmor %vm730, %vm731
    %v733 = vsel %vm732, %v724, %v729
    %v734 = vrsqrt.pop %v592
    %v735 = vmul.f32 %v734, %v592
    %v736 = vmul.f32 %v735, %v734
    %v737 = vmul.f32 0.5, %v736
    %v738 = vsub.f32 1.5, %v737
    %v739 = vmul.f32 %v734, %v738
    %vm740 = vweird.f32 %v592
    %vm741 = vweird.f32 %v734
    %vm742 = vmor %vm740, %vm741
    %v743 = vsel %vm742, %v734, %v739
    %v744 = vrsqrt.pop %v593
    %v745 = vmul.f32 %v744, %v593
    %v746 = vmul.f32 %v745, %v744
    %v747 = vmul.f32 0.5, %v746
    %v748 = vsub.f32 1.5, %v747
    %v749 = vmul.f32 %v744, %v748
    %vm750 = vweird.f32 %v593
    %vm751 = vweird.f32 %v744
    %vm752 = vmor %vm750, %vm751
    %v753 = vsel %vm752, %v744, %v749
    %v754 = vmul.f32 %v482, %v603
    %v755 = vmul.f32 %v483, %v613
    %v756 = vmul.f32 %v484, %v623
    %v757 = vmul.f32 %v485, %v633
    %v758 = vmul.f32 %v486, %v643
    %v759 = vmul.f32 %v487, %v653
    %v760 = vmul.f32 %v488, %v663
    %v761 = vmul.f32 %v489, %v673
    %v762 = vmul.f32 %v490, %v683
    %v763 = vmul.f32 %v491, %v693
    %v764 = vmul.f32 %v492, %v703
    %v765 = vmul.f32 %v493, %v713
    %v766 = vmul.f32 %v494, %v723
    %v767 = vmul.f32 %v495, %v733
    %v768 = vmul.f32 %v496, %v743
    %v769 = vmul.f32 %v497, %v753
    %v770 = vrot.slane %v94, 3
    %v771 = vperm.slane %v770, 0
    %v773 = vmul.f32 %v754, %v771
    %v774 = vmul.f32 %v755, %v771
    %v775 = vmul.f32 %v756, %v771
    %v776 = vmul.f32 %v757, %v771
    %v777 = vmul.f32 %v758, %v771
    %v778 = vmul.f32 %v759, %v771
    %v779 = vmul.f32 %v760, %v771
    %v780 = vmul.f32 %v761, %v771
    %v781 = vmul.f32 %v762, %v771
    %v782 = vmul.f32 %v763, %v771
    %v783 = vmul.f32 %v764, %v771
    %v784 = vmul.f32 %v765, %v771
    %v785 = vmul.f32 %v766, %v771
    %v786 = vmul.f32 %v767, %v771
    %v787 = vmul.f32 %v768, %v771
    %v788 = vmul.f32 %v769, %v771
    %v789 = vrot.slane %v94, 4
    %v790 = vperm.slane %v789, 0
    %v792 = vadd.f32 %v773, %v790
    %v793 = vadd.f32 %v774, %v790
    %v794 = vadd.f32 %v775, %v790
    %v795 = vadd.f32 %v776, %v790
    %v796 = vadd.f32 %v777, %v790
    %v797 = vadd.f32 %v778, %v790
    %v798 = vadd.f32 %v779, %v790
    %v799 = vadd.f32 %v780, %v790
    %v800 = vadd.f32 %v781, %v790
    %v801 = vadd.f32 %v782, %v790
    %v802 = vadd.f32 %v783, %v790
    %v803 = vadd.f32 %v784, %v790
    %v804 = vadd.f32 %v785, %v790
    %v805 = vadd.f32 %v786, %v790
    %v806 = vadd.f32 %v787, %v790
    %v807 = vadd.f32 %v788, %v790
    %v808 = vpack.c.bf16 %v793, %v792
    %v809 = vpack.c.bf16 %v795, %v794
    %v810 = vpack.c.bf16 %v797, %v796
    %v811 = vpack.c.bf16 %v799, %v798
    %v812 = vpack.c.bf16 %v801, %v800
    %v813 = vpack.c.bf16 %v803, %v802
    %v814 = vpack.c.bf16 %v805, %v804
    %v815 = vpack.c.bf16 %v807, %v806
    %v816 = vld [vmem:[%s3] sm:$0xf]
    %v817 = vld [vmem:[%s3 + $0x4] sm:$0xf]
    %v818 = vld [vmem:[%s3 + $0x8] sm:$0xf]
    %v819 = vld [vmem:[%s3 + $0xc] sm:$0xf]
    %v820 = vld [vmem:[%s3 + $0x10] sm:$0xf]
    %v821 = vld [vmem:[%s3 + $0x14] sm:$0xf]
    %v822 = vld [vmem:[%s3 + $0x18] sm:$0xf]
    %v823 = vld [vmem:[%s3 + $0x1c] sm:$0xf]
    %v832 = vunpack.c.l.b16 %v816
    %v833 = vunpack.c.l.b16 %v817
    %v834 = vunpack.c.l.b16 %v818
    %v835 = vunpack.c.l.b16 %v819
    %v836 = vunpack.c.l.b16 %v820
    %v837 = vunpack.c.l.b16 %v821
    %v838 = vunpack.c.l.b16 %v822
    %v839 = vunpack.c.l.b16 %v823
    %v840 = vpack.c.b16 %v833, %v832
    %v841 = vpack.c.b16 %v835, %v834
    %v842 = vpack.c.b16 %v837, %v836
    %v843 = vpack.c.b16 %v839, %v838
    %v849 = vsel %vm417, %v808, 0
    %v852 = vsel %vm417, %v809, 0
    %v855 = vsel %vm417, %v810, 0
    %v858 = vsel %vm417, %v811, 0
    %v861 = vsel %vm417, %v812, 0
    %v864 = vsel %vm417, %v813, 0
    %v867 = vsel %vm417, %v814, 0
    %v870 = vsel %vm417, %v815, 0
    %872 = vmatpush.bf16.msra.mxu0 0
    %873 = vmatpush.bf16.msra.mxu0 0
    %874 = vmatpush.bf16.msra.mxu0 0
    %875 = vmatpush.bf16.msra.mxu0 0
    %876 = vmatpush.bf16.msra.mxu0 %v843
    %877 = vmatpush.bf16.msra.mxu0 %v842
    %878 = vmatpush.bf16.msra.mxu0 %v841
    %879 = vmatpush.bf16.msra.mxu0 %v840
    %880 = vmatmul.bf16.gmra.mxu0 %v849
    %v881 = vpop.f32.mrf.mxu0
    %v882 = vadd.f32 0.0, %v881
    %v883 = vpop.f32.mrf.mxu0
    %v884 = vadd.f32 0.0, %v883
    %885 = vmatmul.bf16.gmra.mxu0 %v852
    %v886 = vpop.f32.mrf.mxu0
    %v887 = vadd.f32 0.0, %v886
    %v888 = vpop.f32.mrf.mxu0
    %v889 = vadd.f32 0.0, %v888
    %890 = vmatmul.bf16.gmra.mxu0 %v855
    %v891 = vpop.f32.mrf.mxu0
    %v892 = vadd.f32 0.0, %v891
    %v893 = vpop.f32.mrf.mxu0
    %v894 = vadd.f32 0.0, %v893
    %895 = vmatmul.bf16.gmra.mxu0 %v858
    %v896 = vpop.f32.mrf.mxu0
    %v897 = vadd.f32 0.0, %v896
    %v898 = vpop.f32.mrf.mxu0
    %v899 = vadd.f32 0.0, %v898
    %900 = vmatmul.bf16.gmra.mxu0 %v861
    %v901 = vpop.f32.mrf.mxu0
    %v902 = vadd.f32 0.0, %v901
    %v903 = vpop.f32.mrf.mxu0
    %v904 = vadd.f32 0.0, %v903
    %905 = vmatmul.bf16.gmra.mxu0 %v864
    %v906 = vpop.f32.mrf.mxu0
    %v907 = vadd.f32 0.0, %v906
    %v908 = vpop.f32.mrf.mxu0
    %v909 = vadd.f32 0.0, %v908
    %910 = vmatmul.bf16.gmra.mxu0 %v867
    %v911 = vpop.f32.mrf.mxu0
    %v912 = vadd.f32 0.0, %v911
    %v913 = vpop.f32.mrf.mxu0
    %v914 = vadd.f32 0.0, %v913
    %915 = vmatmul.bf16.gmra.mxu0 %v870
    %v916 = vpop.f32.mrf.mxu0
    %v917 = vadd.f32 0.0, %v916
    %v918 = vpop.f32.mrf.mxu0
    %v919 = vadd.f32 0.0, %v918
    %920 = vdwg.mxu0
    %v921 = vld [vmem:[%s4] sm:$0xf]
    %v922 = vld [vmem:[%s4 + $0x4] sm:$0xf]
    %v923 = vld [vmem:[%s4 + $0x8] sm:$0xf]
    %v924 = vld [vmem:[%s4 + $0xc] sm:$0xf]
    %v925 = vld [vmem:[%s4 + $0x10] sm:$0xf]
    %v926 = vld [vmem:[%s4 + $0x14] sm:$0xf]
    %v927 = vld [vmem:[%s4 + $0x18] sm:$0xf]
    %v928 = vld [vmem:[%s4 + $0x1c] sm:$0xf]
    %v937 = vunpack.c.l.b16 %v921
    %v938 = vunpack.c.l.b16 %v922
    %v939 = vunpack.c.l.b16 %v923
    %v940 = vunpack.c.l.b16 %v924
    %v941 = vunpack.c.l.b16 %v925
    %v942 = vunpack.c.l.b16 %v926
    %v943 = vunpack.c.l.b16 %v927
    %v944 = vunpack.c.l.b16 %v928
    %v945 = vpack.c.b16 %v938, %v937
    %v946 = vpack.c.b16 %v940, %v939
    %v947 = vpack.c.b16 %v942, %v941
    %v948 = vpack.c.b16 %v944, %v943
    %953 = vmatpush.bf16.msra.mxu0 0
    %954 = vmatpush.bf16.msra.mxu0 0
    %955 = vmatpush.bf16.msra.mxu0 0
    %956 = vmatpush.bf16.msra.mxu0 0
    %957 = vmatpush.bf16.msra.mxu0 %v948
    %958 = vmatpush.bf16.msra.mxu0 %v947
    %959 = vmatpush.bf16.msra.mxu0 %v946
    %960 = vmatpush.bf16.msra.mxu0 %v945
    %961 = vmatmul.bf16.gmra.mxu0 %v849
    %v962 = vpop.f32.mrf.mxu0
    %v963 = vadd.f32 0.0, %v962
    %v964 = vpop.f32.mrf.mxu0
    %v965 = vadd.f32 0.0, %v964
    %966 = vmatmul.bf16.gmra.mxu0 %v852
    %v967 = vpop.f32.mrf.mxu0
    %v968 = vadd.f32 0.0, %v967
    %v969 = vpop.f32.mrf.mxu0
    %v970 = vadd.f32 0.0, %v969
    %971 = vmatmul.bf16.gmra.mxu0 %v855
    %v972 = vpop.f32.mrf.mxu0
    %v973 = vadd.f32 0.0, %v972
    %v974 = vpop.f32.mrf.mxu0
    %v975 = vadd.f32 0.0, %v974
    %976 = vmatmul.bf16.gmra.mxu0 %v858
    %v977 = vpop.f32.mrf.mxu0
    %v978 = vadd.f32 0.0, %v977
    %v979 = vpop.f32.mrf.mxu0
    %v980 = vadd.f32 0.0, %v979
    %981 = vmatmul.bf16.gmra.mxu0 %v861
    %v982 = vpop.f32.mrf.mxu0
    %v983 = vadd.f32 0.0, %v982
    %v984 = vpop.f32.mrf.mxu0
    %v985 = vadd.f32 0.0, %v984
    %986 = vmatmul.bf16.gmra.mxu0 %v864
    %v987 = vpop.f32.mrf.mxu0
    %v988 = vadd.f32 0.0, %v987
    %v989 = vpop.f32.mrf.mxu0
    %v990 = vadd.f32 0.0, %v989
    %991 = vmatmul.bf16.gmra.mxu0 %v867
    %v992 = vpop.f32.mrf.mxu0
    %v993 = vadd.f32 0.0, %v992
    %v994 = vpop.f32.mrf.mxu0
    %v995 = vadd.f32 0.0, %v994
    %996 = vmatmul.bf16.gmra.mxu0 %v870
    %v997 = vpop.f32.mrf.mxu0
    %v998 = vadd.f32 0.0, %v997
    %v999 = vpop.f32.mrf.mxu0
    %v1000 = vadd.f32 0.0, %v999
    %1001 = vdwg.mxu0
    %v1002 = vld [vmem:[%s5] sm:$0xf]
    %v1003 = vld [vmem:[%s5 + $0x4] sm:$0xf]
    %v1004 = vld [vmem:[%s5 + $0x8] sm:$0xf]
    %v1005 = vld [vmem:[%s5 + $0xc] sm:$0xf]
    %v1006 = vld [vmem:[%s5 + $0x10] sm:$0xf]
    %v1007 = vld [vmem:[%s5 + $0x14] sm:$0xf]
    %v1008 = vld [vmem:[%s5 + $0x18] sm:$0xf]
    %v1009 = vld [vmem:[%s5 + $0x1c] sm:$0xf]
    %v1018 = vunpack.c.l.b16 %v1002
    %v1019 = vunpack.c.l.b16 %v1003
    %v1020 = vunpack.c.l.b16 %v1004
    %v1021 = vunpack.c.l.b16 %v1005
    %v1022 = vunpack.c.l.b16 %v1006
    %v1023 = vunpack.c.l.b16 %v1007
    %v1024 = vunpack.c.l.b16 %v1008
    %v1025 = vunpack.c.l.b16 %v1009
    %v1026 = vpack.c.b16 %v1019, %v1018
    %v1027 = vpack.c.b16 %v1021, %v1020
    %v1028 = vpack.c.b16 %v1023, %v1022
    %v1029 = vpack.c.b16 %v1025, %v1024
    %1034 = vmatpush.bf16.msra.mxu0 0
    %1035 = vmatpush.bf16.msra.mxu0 0
    %1036 = vmatpush.bf16.msra.mxu0 0
    %1037 = vmatpush.bf16.msra.mxu0 0
    %1038 = vmatpush.bf16.msra.mxu0 %v1029
    %1039 = vmatpush.bf16.msra.mxu0 %v1028
    %1040 = vmatpush.bf16.msra.mxu0 %v1027
    %1041 = vmatpush.bf16.msra.mxu0 %v1026
    %1042 = vmatmul.bf16.gmra.mxu0 %v849
    %v1043 = vpop.f32.mrf.mxu0
    %v1044 = vadd.f32 0.0, %v1043
    %v1045 = vpop.f32.mrf.mxu0
    %v1046 = vadd.f32 0.0, %v1045
    %1047 = vmatmul.bf16.gmra.mxu0 %v852
    %v1048 = vpop.f32.mrf.mxu0
    %v1049 = vadd.f32 0.0, %v1048
    %v1050 = vpop.f32.mrf.mxu0
    %v1051 = vadd.f32 0.0, %v1050
    %1052 = vmatmul.bf16.gmra.mxu0 %v855
    %v1053 = vpop.f32.mrf.mxu0
    %v1054 = vadd.f32 0.0, %v1053
    %v1055 = vpop.f32.mrf.mxu0
    %v1056 = vadd.f32 0.0, %v1055
    %1057 = vmatmul.bf16.gmra.mxu0 %v858
    %v1058 = vpop.f32.mrf.mxu0
    %v1059 = vadd.f32 0.0, %v1058
    %v1060 = vpop.f32.mrf.mxu0
    %v1061 = vadd.f32 0.0, %v1060
    %1062 = vmatmul.bf16.gmra.mxu0 %v861
    %v1063 = vpop.f32.mrf.mxu0
    %v1064 = vadd.f32 0.0, %v1063
    %v1065 = vpop.f32.mrf.mxu0
    %v1066 = vadd.f32 0.0, %v1065
    %1067 = vmatmul.bf16.gmra.mxu0 %v864
    %v1068 = vpop.f32.mrf.mxu0
    %v1069 = vadd.f32 0.0, %v1068
    %v1070 = vpop.f32.mrf.mxu0
    %v1071 = vadd.f32 0.0, %v1070
    %1072 = vmatmul.bf16.gmra.mxu0 %v867
    %v1073 = vpop.f32.mrf.mxu0
    %v1074 = vadd.f32 0.0, %v1073
    %v1075 = vpop.f32.mrf.mxu0
    %v1076 = vadd.f32 0.0, %v1075
    %1077 = vmatmul.bf16.gmra.mxu0 %v870
    %v1078 = vpop.f32.mrf.mxu0
    %v1079 = vadd.f32 0.0, %v1078
    %v1080 = vpop.f32.mrf.mxu0
    %v1081 = vadd.f32 0.0, %v1080
    %1082 = vdwg.mxu0
    %v1083 = vpack.c.bf16 %v882, %v882
    %v1084 = vpack.c.bf16 %v884, %v884
    %v1085 = vpack.c.bf16 %v887, %v887
    %v1086 = vpack.c.bf16 %v889, %v889
    %v1087 = vpack.c.bf16 %v892, %v892
    %v1088 = vpack.c.bf16 %v894, %v894
    %v1089 = vpack.c.bf16 %v897, %v897
    %v1090 = vpack.c.bf16 %v899, %v899
    %v1091 = vpack.c.bf16 %v902, %v902
    %v1092 = vpack.c.bf16 %v904, %v904
    %v1093 = vpack.c.bf16 %v907, %v907
    %v1094 = vpack.c.bf16 %v909, %v909
    %v1095 = vpack.c.bf16 %v912, %v912
    %v1096 = vpack.c.bf16 %v914, %v914
    %v1097 = vpack.c.bf16 %v917, %v917
    %v1098 = vpack.c.bf16 %v919, %v919
    %1115 = vrot.lane.b32.xlu0 %v1083, 112
    %v1116 = vpop.permute.xlu0 %1115
    %1117 = vrot.lane.b32.xlu0 %v1084, 112
    %v1118 = vpop.permute.xlu0 %1117
    %1119 = vrot.lane.b32.xlu0 %v1085, 112
    %v1120 = vpop.permute.xlu0 %1119
    %1121 = vrot.lane.b32.xlu0 %v1086, 112
    %v1122 = vpop.permute.xlu0 %1121
    %1123 = vrot.lane.b32.xlu0 %v1087, 112
    %v1124 = vpop.permute.xlu0 %1123
    %1125 = vrot.lane.b32.xlu0 %v1088, 112
    %v1126 = vpop.permute.xlu0 %1125
    %1127 = vrot.lane.b32.xlu0 %v1089, 112
    %v1128 = vpop.permute.xlu0 %1127
    %1129 = vrot.lane.b32.xlu0 %v1090, 112
    %v1130 = vpop.permute.xlu0 %1129
    %1131 = vrot.lane.b32.xlu0 %v1091, 112
    %v1132 = vpop.permute.xlu0 %1131
    %1133 = vrot.lane.b32.xlu0 %v1092, 112
    %v1134 = vpop.permute.xlu0 %1133
    %1135 = vrot.lane.b32.xlu0 %v1093, 112
    %v1136 = vpop.permute.xlu0 %1135
    %1137 = vrot.lane.b32.xlu0 %v1094, 112
    %v1138 = vpop.permute.xlu0 %1137
    %1139 = vrot.lane.b32.xlu0 %v1095, 112
    %v1140 = vpop.permute.xlu0 %1139
    %1141 = vrot.lane.b32.xlu0 %v1096, 112
    %v1142 = vpop.permute.xlu0 %1141
    %1143 = vrot.lane.b32.xlu0 %v1097, 112
    %v1144 = vpop.permute.xlu0 %1143
    %1145 = vrot.lane.b32.xlu0 %v1098, 112
    %v1146 = vpop.permute.xlu0 %1145
    %1147 = vrot.lane.b32.xlu0 %v1083, 96
    %v1148 = vpop.permute.xlu0 %1147
    %1149 = vrot.lane.b32.xlu0 %v1084, 96
    %v1150 = vpop.permute.xlu0 %1149
    %1151 = vrot.lane.b32.xlu0 %v1085, 96
    %v1152 = vpop.permute.xlu0 %1151
    %1153 = vrot.lane.b32.xlu0 %v1086, 96
    %v1154 = vpop.permute.xlu0 %1153
    %1155 = vrot.lane.b32.xlu0 %v1087, 96
    %v1156 = vpop.permute.xlu0 %1155
    %1157 = vrot.lane.b32.xlu0 %v1088, 96
    %v1158 = vpop.permute.xlu0 %1157
    %1159 = vrot.lane.b32.xlu0 %v1089, 96
    %v1160 = vpop.permute.xlu0 %1159
    %1161 = vrot.lane.b32.xlu0 %v1090, 96
    %v1162 = vpop.permute.xlu0 %1161
    %1163 = vrot.lane.b32.xlu0 %v1091, 96
    %v1164 = vpop.permute.xlu0 %1163
    %1165 = vrot.lane.b32.xlu0 %v1092, 96
    %v1166 = vpop.permute.xlu0 %1165
    %1167 = vrot.lane.b32.xlu0 %v1093, 96
    %v1168 = vpop.permute.xlu0 %1167
    %1169 = vrot.lane.b32.xlu0 %v1094, 96
    %v1170 = vpop.permute.xlu0 %1169
    %1171 = vrot.lane.b32.xlu0 %v1095, 96
    %v1172 = vpop.permute.xlu0 %1171
    %1173 = vrot.lane.b32.xlu0 %v1096, 96
    %v1174 = vpop.permute.xlu0 %1173
    %1175 = vrot.lane.b32.xlu0 %v1097, 96
    %v1176 = vpop.permute.xlu0 %1175
    %1177 = vrot.lane.b32.xlu0 %v1098, 96
    %v1178 = vpop.permute.xlu0 %1177
    %1179 = vrot.lane.b32.xlu0 %v1083, 80
    %v1180 = vpop.permute.xlu0 %1179
    %1181 = vrot.lane.b32.xlu0 %v1084, 80
    %v1182 = vpop.permute.xlu0 %1181
    %1183 = vrot.lane.b32.xlu0 %v1085, 80
    %v1184 = vpop.permute.xlu0 %1183
    %1185 = vrot.lane.b32.xlu0 %v1086, 80
    %v1186 = vpop.permute.xlu0 %1185
    %1187 = vrot.lane.b32.xlu0 %v1087, 80
    %v1188 = vpop.permute.xlu0 %1187
    %1189 = vrot.lane.b32.xlu0 %v1088, 80
    %v1190 = vpop.permute.xlu0 %1189
    %1191 = vrot.lane.b32.xlu0 %v1089, 80
    %v1192 = vpop.permute.xlu0 %1191
    %1193 = vrot.lane.b32.xlu0 %v1090, 80
    %v1194 = vpop.permute.xlu0 %1193
    %1195 = vrot.lane.b32.xlu0 %v1091, 80
    %v1196 = vpop.permute.xlu0 %1195
    %1197 = vrot.lane.b32.xlu0 %v1092, 80
    %v1198 = vpop.permute.xlu0 %1197
    %1199 = vrot.lane.b32.xlu0 %v1093, 80
    %v1200 = vpop.permute.xlu0 %1199
    %1201 = vrot.lane.b32.xlu0 %v1094, 80
    %v1202 = vpop.permute.xlu0 %1201
    %1203 = vrot.lane.b32.xlu0 %v1095, 80
    %v1204 = vpop.permute.xlu0 %1203
    %1205 = vrot.lane.b32.xlu0 %v1096, 80
    %v1206 = vpop.permute.xlu0 %1205
    %1207 = vrot.lane.b32.xlu0 %v1097, 80
    %v1208 = vpop.permute.xlu0 %1207
    %1209 = vrot.lane.b32.xlu0 %v1098, 80
    %v1210 = vpop.permute.xlu0 %1209
    %v1211 = vpack.c.bf16 %v963, %v963
    %v1212 = vpack.c.bf16 %v965, %v965
    %v1213 = vpack.c.bf16 %v968, %v968
    %v1214 = vpack.c.bf16 %v970, %v970
    %v1215 = vpack.c.bf16 %v973, %v973
    %v1216 = vpack.c.bf16 %v975, %v975
    %v1217 = vpack.c.bf16 %v978, %v978
    %v1218 = vpack.c.bf16 %v980, %v980
    %v1219 = vpack.c.bf16 %v983, %v983
    %v1220 = vpack.c.bf16 %v985, %v985
    %v1221 = vpack.c.bf16 %v988, %v988
    %v1222 = vpack.c.bf16 %v990, %v990
    %v1223 = vpack.c.bf16 %v993, %v993
    %v1224 = vpack.c.bf16 %v995, %v995
    %v1225 = vpack.c.bf16 %v998, %v998
    %v1226 = vpack.c.bf16 %v1000, %v1000
    %1243 = vrot.lane.b32.xlu0 %v1211, 112
    %v1244 = vpop.permute.xlu0 %1243
    %1245 = vrot.lane.b32.xlu0 %v1212, 112
    %v1246 = vpop.permute.xlu0 %1245
    %1247 = vrot.lane.b32.xlu0 %v1213, 112
    %v1248 = vpop.permute.xlu0 %1247
    %1249 = vrot.lane.b32.xlu0 %v1214, 112
    %v1250 = vpop.permute.xlu0 %1249
    %1251 = vrot.lane.b32.xlu0 %v1215, 112
    %v1252 = vpop.permute.xlu0 %1251
    %1253 = vrot.lane.b32.xlu0 %v1216, 112
    %v1254 = vpop.permute.xlu0 %1253
    %1255 = vrot.lane.b32.xlu0 %v1217, 112
    %v1256 = vpop.permute.xlu0 %1255
    %1257 = vrot.lane.b32.xlu0 %v1218, 112
    %v1258 = vpop.permute.xlu0 %1257
    %1259 = vrot.lane.b32.xlu0 %v1219, 112
    %v1260 = vpop.permute.xlu0 %1259
    %1261 = vrot.lane.b32.xlu0 %v1220, 112
    %v1262 = vpop.permute.xlu0 %1261
    %1263 = vrot.lane.b32.xlu0 %v1221, 112
    %v1264 = vpop.permute.xlu0 %1263
    %1265 = vrot.lane.b32.xlu0 %v1222, 112
    %v1266 = vpop.permute.xlu0 %1265
    %1267 = vrot.lane.b32.xlu0 %v1223, 112
    %v1268 = vpop.permute.xlu0 %1267
    %1269 = vrot.lane.b32.xlu0 %v1224, 112
    %v1270 = vpop.permute.xlu0 %1269
    %1271 = vrot.lane.b32.xlu0 %v1225, 112
    %v1272 = vpop.permute.xlu0 %1271
    %1273 = vrot.lane.b32.xlu0 %v1226, 112
    %v1274 = vpop.permute.xlu0 %1273
    %1275 = vrot.lane.b32.xlu0 %v1211, 96
    %v1276 = vpop.permute.xlu0 %1275
    %1277 = vrot.lane.b32.xlu0 %v1212, 96
    %v1278 = vpop.permute.xlu0 %1277
    %1279 = vrot.lane.b32.xlu0 %v1213, 96
    %v1280 = vpop.permute.xlu0 %1279
    %1281 = vrot.lane.b32.xlu0 %v1214, 96
    %v1282 = vpop.permute.xlu0 %1281
    %1283 = vrot.lane.b32.xlu0 %v1215, 96
    %v1284 = vpop.permute.xlu0 %1283
    %1285 = vrot.lane.b32.xlu0 %v1216, 96
    %v1286 = vpop.permute.xlu0 %1285
    %1287 = vrot.lane.b32.xlu0 %v1217, 96
    %v1288 = vpop.permute.xlu0 %1287
    %1289 = vrot.lane.b32.xlu0 %v1218, 96
    %v1290 = vpop.permute.xlu0 %1289
    %1291 = vrot.lane.b32.xlu0 %v1219, 96
    %v1292 = vpop.permute.xlu0 %1291
    %1293 = vrot.lane.b32.xlu0 %v1220, 96
    %v1294 = vpop.permute.xlu0 %1293
    %1295 = vrot.lane.b32.xlu0 %v1221, 96
    %v1296 = vpop.permute.xlu0 %1295
    %1297 = vrot.lane.b32.xlu0 %v1222, 96
    %v1298 = vpop.permute.xlu0 %1297
    %1299 = vrot.lane.b32.xlu0 %v1223, 96
    %v1300 = vpop.permute.xlu0 %1299
    %1301 = vrot.lane.b32.xlu0 %v1224, 96
    %v1302 = vpop.permute.xlu0 %1301
    %1303 = vrot.lane.b32.xlu0 %v1225, 96
    %v1304 = vpop.permute.xlu0 %1303
    %1305 = vrot.lane.b32.xlu0 %v1226, 96
    %v1306 = vpop.permute.xlu0 %1305
    %1307 = vrot.lane.b32.xlu0 %v1211, 80
    %v1308 = vpop.permute.xlu0 %1307
    %1309 = vrot.lane.b32.xlu0 %v1212, 80
    %v1310 = vpop.permute.xlu0 %1309
    %1311 = vrot.lane.b32.xlu0 %v1213, 80
    %v1312 = vpop.permute.xlu0 %1311
    %1313 = vrot.lane.b32.xlu0 %v1214, 80
    %v1314 = vpop.permute.xlu0 %1313
    %1315 = vrot.lane.b32.xlu0 %v1215, 80
    %v1316 = vpop.permute.xlu0 %1315
    %1317 = vrot.lane.b32.xlu0 %v1216, 80
    %v1318 = vpop.permute.xlu0 %1317
    %1319 = vrot.lane.b32.xlu0 %v1217, 80
    %v1320 = vpop.permute.xlu0 %1319
    %1321 = vrot.lane.b32.xlu0 %v1218, 80
    %v1322 = vpop.permute.xlu0 %1321
    %1323 = vrot.lane.b32.xlu0 %v1219, 80
    %v1324 = vpop.permute.xlu0 %1323
    %1325 = vrot.lane.b32.xlu0 %v1220, 80
    %v1326 = vpop.permute.xlu0 %1325
    %1327 = vrot.lane.b32.xlu0 %v1221, 80
    %v1328 = vpop.permute.xlu0 %1327
    %1329 = vrot.lane.b32.xlu0 %v1222, 80
    %v1330 = vpop.permute.xlu0 %1329
    %1331 = vrot.lane.b32.xlu0 %v1223, 80
    %v1332 = vpop.permute.xlu0 %1331
    %1333 = vrot.lane.b32.xlu0 %v1224, 80
    %v1334 = vpop.permute.xlu0 %1333
    %1335 = vrot.lane.b32.xlu0 %v1225, 80
    %v1336 = vpop.permute.xlu0 %1335
    %1337 = vrot.lane.b32.xlu0 %v1226, 80
    %v1338 = vpop.permute.xlu0 %1337
    %v1339 = vpack.c.bf16 %v1044, %v1044
    %v1340 = vpack.c.bf16 %v1046, %v1046
    %v1341 = vpack.c.bf16 %v1049, %v1049
    %v1342 = vpack.c.bf16 %v1051, %v1051
    %v1343 = vpack.c.bf16 %v1054, %v1054
    %v1344 = vpack.c.bf16 %v1056, %v1056
    %v1345 = vpack.c.bf16 %v1059, %v1059
    %v1346 = vpack.c.bf16 %v1061, %v1061
    %v1347 = vpack.c.bf16 %v1064, %v1064
    %v1348 = vpack.c.bf16 %v1066, %v1066
    %v1349 = vpack.c.bf16 %v1069, %v1069
    %v1350 = vpack.c.bf16 %v1071, %v1071
    %v1351 = vpack.c.bf16 %v1074, %v1074
    %v1352 = vpack.c.bf16 %v1076, %v1076
    %v1353 = vpack.c.bf16 %v1079, %v1079
    %v1354 = vpack.c.bf16 %v1081, %v1081
    %1371 = vrot.lane.b32.xlu0 %v1339, 112
    %v1372 = vpop.permute.xlu0 %1371
    %1373 = vrot.lane.b32.xlu0 %v1340, 112
    %v1374 = vpop.permute.xlu0 %1373
    %1375 = vrot.lane.b32.xlu0 %v1341, 112
    %v1376 = vpop.permute.xlu0 %1375
    %1377 = vrot.lane.b32.xlu0 %v1342, 112
    %v1378 = vpop.permute.xlu0 %1377
    %1379 = vrot.lane.b32.xlu0 %v1343, 112
    %v1380 = vpop.permute.xlu0 %1379
    %1381 = vrot.lane.b32.xlu0 %v1344, 112
    %v1382 = vpop.permute.xlu0 %1381
    %1383 = vrot.lane.b32.xlu0 %v1345, 112
    %v1384 = vpop.permute.xlu0 %1383
    %1385 = vrot.lane.b32.xlu0 %v1346, 112
    %v1386 = vpop.permute.xlu0 %1385
    %1387 = vrot.lane.b32.xlu0 %v1347, 112
    %v1388 = vpop.permute.xlu0 %1387
    %1389 = vrot.lane.b32.xlu0 %v1348, 112
    %v1390 = vpop.permute.xlu0 %1389
    %1391 = vrot.lane.b32.xlu0 %v1349, 112
    %v1392 = vpop.permute.xlu0 %1391
    %1393 = vrot.lane.b32.xlu0 %v1350, 112
    %v1394 = vpop.permute.xlu0 %1393
    %1395 = vrot.lane.b32.xlu0 %v1351, 112
    %v1396 = vpop.permute.xlu0 %1395
    %1397 = vrot.lane.b32.xlu0 %v1352, 112
    %v1398 = vpop.permute.xlu0 %1397
    %1399 = vrot.lane.b32.xlu0 %v1353, 112
    %v1400 = vpop.permute.xlu0 %1399
    %1401 = vrot.lane.b32.xlu0 %v1354, 112
    %v1402 = vpop.permute.xlu0 %1401
    %1403 = vrot.lane.b32.xlu0 %v1339, 96
    %v1404 = vpop.permute.xlu0 %1403
    %1405 = vrot.lane.b32.xlu0 %v1340, 96
    %v1406 = vpop.permute.xlu0 %1405
    %1407 = vrot.lane.b32.xlu0 %v1341, 96
    %v1408 = vpop.permute.xlu0 %1407
    %1409 = vrot.lane.b32.xlu0 %v1342, 96
    %v1410 = vpop.permute.xlu0 %1409
    %1411 = vrot.lane.b32.xlu0 %v1343, 96
    %v1412 = vpop.permute.xlu0 %1411
    %1413 = vrot.lane.b32.xlu0 %v1344, 96
    %v1414 = vpop.permute.xlu0 %1413
    %1415 = vrot.lane.b32.xlu0 %v1345, 96
    %v1416 = vpop.permute.xlu0 %1415
    %1417 = vrot.lane.b32.xlu0 %v1346, 96
    %v1418 = vpop.permute.xlu0 %1417
    %1419 = vrot.lane.b32.xlu0 %v1347, 96
    %v1420 = vpop.permute.xlu0 %1419
    %1421 = vrot.lane.b32.xlu0 %v1348, 96
    %v1422 = vpop.permute.xlu0 %1421
    %1423 = vrot.lane.b32.xlu0 %v1349, 96
    %v1424 = vpop.permute.xlu0 %1423
    %1425 = vrot.lane.b32.xlu0 %v1350, 96
    %v1426 = vpop.permute.xlu0 %1425
    %1427 = vrot.lane.b32.xlu0 %v1351, 96
    %v1428 = vpop.permute.xlu0 %1427
    %1429 = vrot.lane.b32.xlu0 %v1352, 96
    %v1430 = vpop.permute.xlu0 %1429
    %1431 = vrot.lane.b32.xlu0 %v1353, 96
    %v1432 = vpop.permute.xlu0 %1431
    %1433 = vrot.lane.b32.xlu0 %v1354, 96
    %v1434 = vpop.permute.xlu0 %1433
    %1435 = vrot.lane.b32.xlu0 %v1339, 80
    %v1436 = vpop.permute.xlu0 %1435
    %1437 = vrot.lane.b32.xlu0 %v1340, 80
    %v1438 = vpop.permute.xlu0 %1437
    %1439 = vrot.lane.b32.xlu0 %v1341, 80
    %v1440 = vpop.permute.xlu0 %1439
    %1441 = vrot.lane.b32.xlu0 %v1342, 80
    %v1442 = vpop.permute.xlu0 %1441
    %1443 = vrot.lane.b32.xlu0 %v1343, 80
    %v1444 = vpop.permute.xlu0 %1443
    %1445 = vrot.lane.b32.xlu0 %v1344, 80
    %v1446 = vpop.permute.xlu0 %1445
    %1447 = vrot.lane.b32.xlu0 %v1345, 80
    %v1448 = vpop.permute.xlu0 %1447
    %1449 = vrot.lane.b32.xlu0 %v1346, 80
    %v1450 = vpop.permute.xlu0 %1449
    %1451 = vrot.lane.b32.xlu0 %v1347, 80
    %v1452 = vpop.permute.xlu0 %1451
    %1453 = vrot.lane.b32.xlu0 %v1348, 80
    %v1454 = vpop.permute.xlu0 %1453
    %1455 = vrot.lane.b32.xlu0 %v1349, 80
    %v1456 = vpop.permute.xlu0 %1455
    %1457 = vrot.lane.b32.xlu0 %v1350, 80
    %v1458 = vpop.permute.xlu0 %1457
    %1459 = vrot.lane.b32.xlu0 %v1351, 80
    %v1460 = vpop.permute.xlu0 %1459
    %1461 = vrot.lane.b32.xlu0 %v1352, 80
    %v1462 = vpop.permute.xlu0 %1461
    %1463 = vrot.lane.b32.xlu0 %v1353, 80
    %v1464 = vpop.permute.xlu0 %1463
    %1465 = vrot.lane.b32.xlu0 %v1354, 80
    %v1466 = vpop.permute.xlu0 %1465
    %v1467 = vunpack.c.l.b16 %v1083
    %v1468 = vunpack.c.l.b16 %v1084
    %v1469 = vunpack.c.l.b16 %v1085
    %v1470 = vunpack.c.l.b16 %v1086
    %v1471 = vunpack.c.l.b16 %v1087
    %v1472 = vunpack.c.l.b16 %v1088
    %v1473 = vunpack.c.l.b16 %v1089
    %v1474 = vunpack.c.l.b16 %v1090
    %v1475 = vpack.c.b16 %v1468, %v1467
    %v1476 = vpack.c.b16 %v1470, %v1469
    %v1477 = vpack.c.b16 %v1472, %v1471
    %v1478 = vpack.c.b16 %v1474, %v1473
    %v1479 = vunpack.c.l.b16 %v1211
    %v1480 = vunpack.c.l.b16 %v1212
    %v1481 = vunpack.c.l.b16 %v1213
    %v1482 = vunpack.c.l.b16 %v1214
    %v1483 = vunpack.c.l.b16 %v1215
    %v1484 = vunpack.c.l.b16 %v1216
    %v1485 = vunpack.c.l.b16 %v1217
    %v1486 = vunpack.c.l.b16 %v1218
    %v1487 = vpack.c.b16 %v1480, %v1479
    %v1488 = vpack.c.b16 %v1482, %v1481
    %v1489 = vpack.c.b16 %v1484, %v1483
    %v1490 = vpack.c.b16 %v1486, %v1485
    %vm1491 = vcmask 130048
    %v1493 = vsel %vm1491, %v1475, 0
    %v1496 = vsel %vm1491, %v1476, 0
    %v1499 = vsel %vm1491, %v1477, 0
    %v1502 = vsel %vm1491, %v1478, 0
    %v1505 = vsel %vm1491, %v1487, 0
    %v1508 = vsel %vm1491, %v1488, 0
    %v1511 = vsel %vm1491, %v1489, 0
    %v1514 = vsel %vm1491, %v1490, 0
    %1516 = vmatpush.bf16.xpose.msra.mxu0 0
    %1517 = vmatpush.bf16.xpose.msra.mxu0 0
    %1518 = vmatpush.bf16.xpose.msra.mxu0 0
    %1519 = vmatpush.bf16.xpose.msra.mxu0 0
    %1520 = vmatpush.bf16.xpose.msra.mxu0 %v1514
    %1521 = vmatpush.bf16.xpose.msra.mxu0 %v1511
    %1522 = vmatpush.bf16.xpose.msra.mxu0 %v1508
    %1523 = vmatpush.bf16.xpose.msra.mxu0 %v1505
    %1524 = vmatmul.bf16.gmra.mxu0 %v1493
    %v1525 = vpop.f32.mrf.mxu0
    %v1526 = vadd.f32 0.0, %v1525
    %v1527 = vpop.f32.mrf.mxu0
    %v1528 = vadd.f32 0.0, %v1527
    %1529 = vmatmul.bf16.gmra.mxu0 %v1496
    %v1530 = vpop.f32.mrf.mxu0
    %v1531 = vadd.f32 0.0, %v1530
    %v1532 = vpop.f32.mrf.mxu0
    %v1533 = vadd.f32 0.0, %v1532
    %1534 = vmatmul.bf16.gmra.mxu0 %v1499
    %v1535 = vpop.f32.mrf.mxu0
    %v1536 = vadd.f32 0.0, %v1535
    %v1537 = vpop.f32.mrf.mxu0
    %v1538 = vadd.f32 0.0, %v1537
    %1539 = vmatmul.bf16.gmra.mxu0 %v1502
    %v1540 = vpop.f32.mrf.mxu0
    %v1541 = vadd.f32 0.0, %v1540
    %v1542 = vpop.f32.mrf.mxu0
    %v1543 = vadd.f32 0.0, %v1542
    %1544 = vdwg.mxu0
    %v1545 = vunpack.c.l.b16 %v1091
    %v1546 = vunpack.c.l.b16 %v1092
    %v1547 = vunpack.c.l.b16 %v1093
    %v1548 = vunpack.c.l.b16 %v1094
    %v1549 = vunpack.c.l.b16 %v1095
    %v1550 = vunpack.c.l.b16 %v1096
    %v1551 = vunpack.c.l.b16 %v1097
    %v1552 = vunpack.c.l.b16 %v1098
    %v1553 = vpack.c.b16 %v1546, %v1545
    %v1554 = vpack.c.b16 %v1548, %v1547
    %v1555 = vpack.c.b16 %v1550, %v1549
    %v1556 = vpack.c.b16 %v1552, %v1551
    %v1557 = vunpack.c.l.b16 %v1219
    %v1558 = vunpack.c.l.b16 %v1220
    %v1559 = vunpack.c.l.b16 %v1221
    %v1560 = vunpack.c.l.b16 %v1222
    %v1561 = vunpack.c.l.b16 %v1223
    %v1562 = vunpack.c.l.b16 %v1224
    %v1563 = vunpack.c.l.b16 %v1225
    %v1564 = vunpack.c.l.b16 %v1226
    %v1565 = vpack.c.b16 %v1558, %v1557
    %v1566 = vpack.c.b16 %v1560, %v1559
    %v1567 = vpack.c.b16 %v1562, %v1561
    %v1568 = vpack.c.b16 %v1564, %v1563
    %v1570 = vsel %vm1491, %v1553, 0
    %v1573 = vsel %vm1491, %v1554, 0
    %v1576 = vsel %vm1491, %v1555, 0
    %v1579 = vsel %vm1491, %v1556, 0
    %v1582 = vsel %vm1491, %v1565, 0
    %v1585 = vsel %vm1491, %v1566, 0
    %v1588 = vsel %vm1491, %v1567, 0
    %v1591 = vsel %vm1491, %v1568, 0
    %1593 = vmatpush.bf16.xpose.msra.mxu0 0
    %1594 = vmatpush.bf16.xpose.msra.mxu0 0
    %1595 = vmatpush.bf16.xpose.msra.mxu0 0
    %1596 = vmatpush.bf16.xpose.msra.mxu0 0
    %1597 = vmatpush.bf16.xpose.msra.mxu0 %v1591
    %1598 = vmatpush.bf16.xpose.msra.mxu0 %v1588
    %1599 = vmatpush.bf16.xpose.msra.mxu0 %v1585
    %1600 = vmatpush.bf16.xpose.msra.mxu0 %v1582
    %1601 = vmatmul.bf16.gmra.mxu0 %v1570
    %v1602 = vpop.f32.mrf.mxu0
    %v1603 = vadd.f32 0.0, %v1602
    %v1604 = vpop.f32.mrf.mxu0
    %v1605 = vadd.f32 0.0, %v1604
    %1606 = vmatmul.bf16.gmra.mxu0 %v1573
    %v1607 = vpop.f32.mrf.mxu0
    %v1608 = vadd.f32 0.0, %v1607
    %v1609 = vpop.f32.mrf.mxu0
    %v1610 = vadd.f32 0.0, %v1609
    %1611 = vmatmul.bf16.gmra.mxu0 %v1576
    %v1612 = vpop.f32.mrf.mxu0
    %v1613 = vadd.f32 0.0, %v1612
    %v1614 = vpop.f32.mrf.mxu0
    %v1615 = vadd.f32 0.0, %v1614
    %1616 = vmatmul.bf16.gmra.mxu0 %v1579
    %v1617 = vpop.f32.mrf.mxu0
    %v1618 = vadd.f32 0.0, %v1617
    %v1619 = vpop.f32.mrf.mxu0
    %v1620 = vadd.f32 0.0, %v1619
    %1621 = vdwg.mxu0
    %v1622 = vunpack.c.l.b16 %v1116
    %v1623 = vunpack.c.l.b16 %v1118
    %v1624 = vunpack.c.l.b16 %v1120
    %v1625 = vunpack.c.l.b16 %v1122
    %v1626 = vunpack.c.l.b16 %v1124
    %v1627 = vunpack.c.l.b16 %v1126
    %v1628 = vunpack.c.l.b16 %v1128
    %v1629 = vunpack.c.l.b16 %v1130
    %v1630 = vpack.c.b16 %v1623, %v1622
    %v1631 = vpack.c.b16 %v1625, %v1624
    %v1632 = vpack.c.b16 %v1627, %v1626
    %v1633 = vpack.c.b16 %v1629, %v1628
    %v1634 = vunpack.c.l.b16 %v1244
    %v1635 = vunpack.c.l.b16 %v1246
    %v1636 = vunpack.c.l.b16 %v1248
    %v1637 = vunpack.c.l.b16 %v1250
    %v1638 = vunpack.c.l.b16 %v1252
    %v1639 = vunpack.c.l.b16 %v1254
    %v1640 = vunpack.c.l.b16 %v1256
    %v1641 = vunpack.c.l.b16 %v1258
    %v1642 = vpack.c.b16 %v1635, %v1634
    %v1643 = vpack.c.b16 %v1637, %v1636
    %v1644 = vpack.c.b16 %v1639, %v1638
    %v1645 = vpack.c.b16 %v1641, %v1640
    %v1647 = vsel %vm1491, %v1630, 0
    %v1650 = vsel %vm1491, %v1631, 0
    %v1653 = vsel %vm1491, %v1632, 0
    %v1656 = vsel %vm1491, %v1633, 0
    %v1659 = vsel %vm1491, %v1642, 0
    %v1662 = vsel %vm1491, %v1643, 0
    %v1665 = vsel %vm1491, %v1644, 0
    %v1668 = vsel %vm1491, %v1645, 0
    %1670 = vmatpush.bf16.xpose.msra.mxu0 0
    %1671 = vmatpush.bf16.xpose.msra.mxu0 0
    %1672 = vmatpush.bf16.xpose.msra.mxu0 0
    %1673 = vmatpush.bf16.xpose.msra.mxu0 0
    %1674 = vmatpush.bf16.xpose.msra.mxu0 %v1668
    %1675 = vmatpush.bf16.xpose.msra.mxu0 %v1665
    %1676 = vmatpush.bf16.xpose.msra.mxu0 %v1662
    %1677 = vmatpush.bf16.xpose.msra.mxu0 %v1659
    %1678 = vmatmul.bf16.gmra.mxu0 %v1647
    %v1679 = vpop.f32.mrf.mxu0
    %v1680 = vadd.f32 0.0, %v1679
    %v1681 = vpop.f32.mrf.mxu0
    %v1682 = vadd.f32 0.0, %v1681
    %1683 = vmatmul.bf16.gmra.mxu0 %v1650
    %v1684 = vpop.f32.mrf.mxu0
    %v1685 = vadd.f32 0.0, %v1684
    %v1686 = vpop.f32.mrf.mxu0
    %v1687 = vadd.f32 0.0, %v1686
    %1688 = vmatmul.bf16.gmra.mxu0 %v1653
    %v1689 = vpop.f32.mrf.mxu0
    %v1690 = vadd.f32 0.0, %v1689
    %v1691 = vpop.f32.mrf.mxu0
    %v1692 = vadd.f32 0.0, %v1691
    %1693 = vmatmul.bf16.gmra.mxu0 %v1656
    %v1694 = vpop.f32.mrf.mxu0
    %v1695 = vadd.f32 0.0, %v1694
    %v1696 = vpop.f32.mrf.mxu0
    %v1697 = vadd.f32 0.0, %v1696
    %1698 = vdwg.mxu0
    %v1699 = vunpack.c.l.b16 %v1132
    %v1700 = vunpack.c.l.b16 %v1134
    %v1701 = vunpack.c.l.b16 %v1136
    %v1702 = vunpack.c.l.b16 %v1138
    %v1703 = vunpack.c.l.b16 %v1140
    %v1704 = vunpack.c.l.b16 %v1142
    %v1705 = vunpack.c.l.b16 %v1144
    %v1706 = vunpack.c.l.b16 %v1146
    %v1707 = vpack.c.b16 %v1700, %v1699
    %v1708 = vpack.c.b16 %v1702, %v1701
    %v1709 = vpack.c.b16 %v1704, %v1703
    %v1710 = vpack.c.b16 %v1706, %v1705
    %v1711 = vunpack.c.l.b16 %v1260
    %v1712 = vunpack.c.l.b16 %v1262
    %v1713 = vunpack.c.l.b16 %v1264
    %v1714 = vunpack.c.l.b16 %v1266
    %v1715 = vunpack.c.l.b16 %v1268
    %v1716 = vunpack.c.l.b16 %v1270
    %v1717 = vunpack.c.l.b16 %v1272
    %v1718 = vunpack.c.l.b16 %v1274
    %v1719 = vpack.c.b16 %v1712, %v1711
    %v1720 = vpack.c.b16 %v1714, %v1713
    %v1721 = vpack.c.b16 %v1716, %v1715
    %v1722 = vpack.c.b16 %v1718, %v1717
    %v1724 = vsel %vm1491, %v1707, 0
    %v1727 = vsel %vm1491, %v1708, 0
    %v1730 = vsel %vm1491, %v1709, 0
    %v1733 = vsel %vm1491, %v1710, 0
    %v1736 = vsel %vm1491, %v1719, 0
    %v1739 = vsel %vm1491, %v1720, 0
    %v1742 = vsel %vm1491, %v1721, 0
    %v1745 = vsel %vm1491, %v1722, 0
    %1747 = vmatpush.bf16.xpose.msra.mxu0 0
    %1748 = vmatpush.bf16.xpose.msra.mxu0 0
    %1749 = vmatpush.bf16.xpose.msra.mxu0 0
    %1750 = vmatpush.bf16.xpose.msra.mxu0 0
    %1751 = vmatpush.bf16.xpose.msra.mxu0 %v1745
    %1752 = vmatpush.bf16.xpose.msra.mxu0 %v1742
    %1753 = vmatpush.bf16.xpose.msra.mxu0 %v1739
    %1754 = vmatpush.bf16.xpose.msra.mxu0 %v1736
    %1755 = vmatmul.bf16.gmra.mxu0 %v1724
    %v1756 = vpop.f32.mrf.mxu0
    %v1757 = vadd.f32 0.0, %v1756
    %v1758 = vpop.f32.mrf.mxu0
    %v1759 = vadd.f32 0.0, %v1758
    %1760 = vmatmul.bf16.gmra.mxu0 %v1727
    %v1761 = vpop.f32.mrf.mxu0
    %v1762 = vadd.f32 0.0, %v1761
    %v1763 = vpop.f32.mrf.mxu0
    %v1764 = vadd.f32 0.0, %v1763
    %1765 = vmatmul.bf16.gmra.mxu0 %v1730
    %v1766 = vpop.f32.mrf.mxu0
    %v1767 = vadd.f32 0.0, %v1766
    %v1768 = vpop.f32.mrf.mxu0
    %v1769 = vadd.f32 0.0, %v1768
    %1770 = vmatmul.bf16.gmra.mxu0 %v1733
    %v1771 = vpop.f32.mrf.mxu0
    %v1772 = vadd.f32 0.0, %v1771
    %v1773 = vpop.f32.mrf.mxu0
    %v1774 = vadd.f32 0.0, %v1773
    %1775 = vdwg.mxu0
    %v1776 = vunpack.c.l.b16 %v1148
    %v1777 = vunpack.c.l.b16 %v1150
    %v1778 = vunpack.c.l.b16 %v1152
    %v1779 = vunpack.c.l.b16 %v1154
    %v1780 = vunpack.c.l.b16 %v1156
    %v1781 = vunpack.c.l.b16 %v1158
    %v1782 = vunpack.c.l.b16 %v1160
    %v1783 = vunpack.c.l.b16 %v1162
    %v1784 = vpack.c.b16 %v1777, %v1776
    %v1785 = vpack.c.b16 %v1779, %v1778
    %v1786 = vpack.c.b16 %v1781, %v1780
    %v1787 = vpack.c.b16 %v1783, %v1782
    %v1788 = vunpack.c.l.b16 %v1276
    %v1789 = vunpack.c.l.b16 %v1278
    %v1790 = vunpack.c.l.b16 %v1280
    %v1791 = vunpack.c.l.b16 %v1282
    %v1792 = vunpack.c.l.b16 %v1284
    %v1793 = vunpack.c.l.b16 %v1286
    %v1794 = vunpack.c.l.b16 %v1288
    %v1795 = vunpack.c.l.b16 %v1290
    %v1796 = vpack.c.b16 %v1789, %v1788
    %v1797 = vpack.c.b16 %v1791, %v1790
    %v1798 = vpack.c.b16 %v1793, %v1792
    %v1799 = vpack.c.b16 %v1795, %v1794
    %v1801 = vsel %vm1491, %v1784, 0
    %v1804 = vsel %vm1491, %v1785, 0
    %v1807 = vsel %vm1491, %v1786, 0
    %v1810 = vsel %vm1491, %v1787, 0
    %v1813 = vsel %vm1491, %v1796, 0
    %v1816 = vsel %vm1491, %v1797, 0
    %v1819 = vsel %vm1491, %v1798, 0
    %v1822 = vsel %vm1491, %v1799, 0
    %1824 = vmatpush.bf16.xpose.msra.mxu0 0
    %1825 = vmatpush.bf16.xpose.msra.mxu0 0
    %1826 = vmatpush.bf16.xpose.msra.mxu0 0
    %1827 = vmatpush.bf16.xpose.msra.mxu0 0
    %1828 = vmatpush.bf16.xpose.msra.mxu0 %v1822
    %1829 = vmatpush.bf16.xpose.msra.mxu0 %v1819
    %1830 = vmatpush.bf16.xpose.msra.mxu0 %v1816
    %1831 = vmatpush.bf16.xpose.msra.mxu0 %v1813
    %1832 = vmatmul.bf16.gmra.mxu0 %v1801
    %v1833 = vpop.f32.mrf.mxu0
    %v1834 = vadd.f32 0.0, %v1833
    %v1835 = vpop.f32.mrf.mxu0
    %v1836 = vadd.f32 0.0, %v1835
    %1837 = vmatmul.bf16.gmra.mxu0 %v1804
    %v1838 = vpop.f32.mrf.mxu0
    %v1839 = vadd.f32 0.0, %v1838
    %v1840 = vpop.f32.mrf.mxu0
    %v1841 = vadd.f32 0.0, %v1840
    %1842 = vmatmul.bf16.gmra.mxu0 %v1807
    %v1843 = vpop.f32.mrf.mxu0
    %v1844 = vadd.f32 0.0, %v1843
    %v1845 = vpop.f32.mrf.mxu0
    %v1846 = vadd.f32 0.0, %v1845
    %1847 = vmatmul.bf16.gmra.mxu0 %v1810
    %v1848 = vpop.f32.mrf.mxu0
    %v1849 = vadd.f32 0.0, %v1848
    %v1850 = vpop.f32.mrf.mxu0
    %v1851 = vadd.f32 0.0, %v1850
    %1852 = vdwg.mxu0
    %v1853 = vunpack.c.l.b16 %v1164
    %v1854 = vunpack.c.l.b16 %v1166
    %v1855 = vunpack.c.l.b16 %v1168
    %v1856 = vunpack.c.l.b16 %v1170
    %v1857 = vunpack.c.l.b16 %v1172
    %v1858 = vunpack.c.l.b16 %v1174
    %v1859 = vunpack.c.l.b16 %v1176
    %v1860 = vunpack.c.l.b16 %v1178
    %v1861 = vpack.c.b16 %v1854, %v1853
    %v1862 = vpack.c.b16 %v1856, %v1855
    %v1863 = vpack.c.b16 %v1858, %v1857
    %v1864 = vpack.c.b16 %v1860, %v1859
    %v1865 = vunpack.c.l.b16 %v1292
    %v1866 = vunpack.c.l.b16 %v1294
    %v1867 = vunpack.c.l.b16 %v1296
    %v1868 = vunpack.c.l.b16 %v1298
    %v1869 = vunpack.c.l.b16 %v1300
    %v1870 = vunpack.c.l.b16 %v1302
    %v1871 = vunpack.c.l.b16 %v1304
    %v1872 = vunpack.c.l.b16 %v1306
    %v1873 = vpack.c.b16 %v1866, %v1865
    %v1874 = vpack.c.b16 %v1868, %v1867
    %v1875 = vpack.c.b16 %v1870, %v1869
    %v1876 = vpack.c.b16 %v1872, %v1871
    %v1878 = vsel %vm1491, %v1861, 0
    %v1881 = vsel %vm1491, %v1862, 0
    %v1884 = vsel %vm1491, %v1863, 0
    %v1887 = vsel %vm1491, %v1864, 0
    %v1890 = vsel %vm1491, %v1873, 0
    %v1893 = vsel %vm1491, %v1874, 0
    %v1896 = vsel %vm1491, %v1875, 0
    %v1899 = vsel %vm1491, %v1876, 0
    %1901 = vmatpush.bf16.xpose.msra.mxu0 0
    %1902 = vmatpush.bf16.xpose.msra.mxu0 0
    %1903 = vmatpush.bf16.xpose.msra.mxu0 0
    %1904 = vmatpush.bf16.xpose.msra.mxu0 0
    %1905 = vmatpush.bf16.xpose.msra.mxu0 %v1899
    %1906 = vmatpush.bf16.xpose.msra.mxu0 %v1896
    %1907 = vmatpush.bf16.xpose.msra.mxu0 %v1893
    %1908 = vmatpush.bf16.xpose.msra.mxu0 %v1890
    %1909 = vmatmul.bf16.gmra.mxu0 %v1878
    %v1910 = vpop.f32.mrf.mxu0
    %v1911 = vadd.f32 0.0, %v1910
    %v1912 = vpop.f32.mrf.mxu0
    %v1913 = vadd.f32 0.0, %v1912
    %1914 = vmatmul.bf16.gmra.mxu0 %v1881
    %v1915 = vpop.f32.mrf.mxu0
    %v1916 = vadd.f32 0.0, %v1915
    %v1917 = vpop.f32.mrf.mxu0
    %v1918 = vadd.f32 0.0, %v1917
    %1919 = vmatmul.bf16.gmra.mxu0 %v1884
    %v1920 = vpop.f32.mrf.mxu0
    %v1921 = vadd.f32 0.0, %v1920
    %v1922 = vpop.f32.mrf.mxu0
    %v1923 = vadd.f32 0.0, %v1922
    %1924 = vmatmul.bf16.gmra.mxu0 %v1887
    %v1925 = vpop.f32.mrf.mxu0
    %v1926 = vadd.f32 0.0, %v1925
    %v1927 = vpop.f32.mrf.mxu0
    %v1928 = vadd.f32 0.0, %v1927
    %1929 = vdwg.mxu0
    %v1930 = vunpack.c.l.b16 %v1180
    %v1931 = vunpack.c.l.b16 %v1182
    %v1932 = vunpack.c.l.b16 %v1184
    %v1933 = vunpack.c.l.b16 %v1186
    %v1934 = vunpack.c.l.b16 %v1188
    %v1935 = vunpack.c.l.b16 %v1190
    %v1936 = vunpack.c.l.b16 %v1192
    %v1937 = vunpack.c.l.b16 %v1194
    %v1938 = vpack.c.b16 %v1931, %v1930
    %v1939 = vpack.c.b16 %v1933, %v1932
    %v1940 = vpack.c.b16 %v1935, %v1934
    %v1941 = vpack.c.b16 %v1937, %v1936
    %v1942 = vunpack.c.l.b16 %v1308
    %v1943 = vunpack.c.l.b16 %v1310
    %v1944 = vunpack.c.l.b16 %v1312
    %v1945 = vunpack.c.l.b16 %v1314
    %v1946 = vunpack.c.l.b16 %v1316
    %v1947 = vunpack.c.l.b16 %v1318
    %v1948 = vunpack.c.l.b16 %v1320
    %v1949 = vunpack.c.l.b16 %v1322
    %v1950 = vpack.c.b16 %v1943, %v1942
    %v1951 = vpack.c.b16 %v1945, %v1944
    %v1952 = vpack.c.b16 %v1947, %v1946
    %v1953 = vpack.c.b16 %v1949, %v1948
    %v1955 = vsel %vm1491, %v1938, 0
    %v1958 = vsel %vm1491, %v1939, 0
    %v1961 = vsel %vm1491, %v1940, 0
    %v1964 = vsel %vm1491, %v1941, 0
    %v1967 = vsel %vm1491, %v1950, 0
    %v1970 = vsel %vm1491, %v1951, 0
    %v1973 = vsel %vm1491, %v1952, 0
    %v1976 = vsel %vm1491, %v1953, 0
    %1978 = vmatpush.bf16.xpose.msra.mxu0 0
    %1979 = vmatpush.bf16.xpose.msra.mxu0 0
    %1980 = vmatpush.bf16.xpose.msra.mxu0 0
    %1981 = vmatpush.bf16.xpose.msra.mxu0 0
    %1982 = vmatpush.bf16.xpose.msra.mxu0 %v1976
    %1983 = vmatpush.bf16.xpose.msra.mxu0 %v1973
    %1984 = vmatpush.bf16.xpose.msra.mxu0 %v1970
    %1985 = vmatpush.bf16.xpose.msra.mxu0 %v1967
    %1986 = vmatmul.bf16.gmra.mxu0 %v1955
    %v1987 = vpop.f32.mrf.mxu0
    %v1988 = vadd.f32 0.0, %v1987
    %v1989 = vpop.f32.mrf.mxu0
    %v1990 = vadd.f32 0.0, %v1989
    %1991 = vmatmul.bf16.gmra.mxu0 %v1958
    %v1992 = vpop.f32.mrf.mxu0
    %v1993 = vadd.f32 0.0, %v1992
    %v1994 = vpop.f32.mrf.mxu0
    %v1995 = vadd.f32 0.0, %v1994
    %1996 = vmatmul.bf16.gmra.mxu0 %v1961
    %v1997 = vpop.f32.mrf.mxu0
    %v1998 = vadd.f32 0.0, %v1997
    %v1999 = vpop.f32.mrf.mxu0
    %v2000 = vadd.f32 0.0, %v1999
    %2001 = vmatmul.bf16.gmra.mxu0 %v1964
    %v2002 = vpop.f32.mrf.mxu0
    %v2003 = vadd.f32 0.0, %v2002
    %v2004 = vpop.f32.mrf.mxu0
    %v2005 = vadd.f32 0.0, %v2004
    %2006 = vdwg.mxu0
    %v2007 = vunpack.c.l.b16 %v1196
    %v2008 = vunpack.c.l.b16 %v1198
    %v2009 = vunpack.c.l.b16 %v1200
    %v2010 = vunpack.c.l.b16 %v1202
    %v2011 = vunpack.c.l.b16 %v1204
    %v2012 = vunpack.c.l.b16 %v1206
    %v2013 = vunpack.c.l.b16 %v1208
    %v2014 = vunpack.c.l.b16 %v1210
    %v2015 = vpack.c.b16 %v2008, %v2007
    %v2016 = vpack.c.b16 %v2010, %v2009
    %v2017 = vpack.c.b16 %v2012, %v2011
    %v2018 = vpack.c.b16 %v2014, %v2013
    %v2019 = vunpack.c.l.b16 %v1324
    %v2020 = vunpack.c.l.b16 %v1326
    %v2021 = vunpack.c.l.b16 %v1328
    %v2022 = vunpack.c.l.b16 %v1330
    %v2023 = vunpack.c.l.b16 %v1332
    %v2024 = vunpack.c.l.b16 %v1334
    %v2025 = vunpack.c.l.b16 %v1336
    %v2026 = vunpack.c.l.b16 %v1338
    %v2027 = vpack.c.b16 %v2020, %v2019
    %v2028 = vpack.c.b16 %v2022, %v2021
    %v2029 = vpack.c.b16 %v2024, %v2023
    %v2030 = vpack.c.b16 %v2026, %v2025
    %v2032 = vsel %vm1491, %v2015, 0
    %v2035 = vsel %vm1491, %v2016, 0
    %v2038 = vsel %vm1491, %v2017, 0
    %v2041 = vsel %vm1491, %v2018, 0
    %v2044 = vsel %vm1491, %v2027, 0
    %v2047 = vsel %vm1491, %v2028, 0
    %v2050 = vsel %vm1491, %v2029, 0
    %v2053 = vsel %vm1491, %v2030, 0
    %2055 = vmatpush.bf16.xpose.msra.mxu0 0
    %2056 = vmatpush.bf16.xpose.msra.mxu0 0
    %2057 = vmatpush.bf16.xpose.msra.mxu0 0
    %2058 = vmatpush.bf16.xpose.msra.mxu0 0
    %2059 = vmatpush.bf16.xpose.msra.mxu0 %v2053
    %2060 = vmatpush.bf16.xpose.msra.mxu0 %v2050
    %2061 = vmatpush.bf16.xpose.msra.mxu0 %v2047
    %2062 = vmatpush.bf16.xpose.msra.mxu0 %v2044
    %2063 = vmatmul.bf16.gmra.mxu0 %v2032
    %v2064 = vpop.f32.mrf.mxu0
    %v2065 = vadd.f32 0.0, %v2064
    %v2066 = vpop.f32.mrf.mxu0
    %v2067 = vadd.f32 0.0, %v2066
    %2068 = vmatmul.bf16.gmra.mxu0 %v2035
    %v2069 = vpop.f32.mrf.mxu0
    %v2070 = vadd.f32 0.0, %v2069
    %v2071 = vpop.f32.mrf.mxu0
    %v2072 = vadd.f32 0.0, %v2071
    %2073 = vmatmul.bf16.gmra.mxu0 %v2038
    %v2074 = vpop.f32.mrf.mxu0
    %v2075 = vadd.f32 0.0, %v2074
    %v2076 = vpop.f32.mrf.mxu0
    %v2077 = vadd.f32 0.0, %v2076
    %2078 = vmatmul.bf16.gmra.mxu0 %v2041
    %v2079 = vpop.f32.mrf.mxu0
    %v2080 = vadd.f32 0.0, %v2079
    %v2081 = vpop.f32.mrf.mxu0
    %v2082 = vadd.f32 0.0, %v2081
    %2083 = vdwg.mxu0
    %v2084 = vsel %vm417, %v1526, -inf
    %2085 = vmax.xlane.f32.xlu0 %v2084
    %v2086 = vpop.xlane.xlu0 %2085
    %v2087 = vsel %vm417, %v1528, -inf
    %2088 = vmax.xlane.f32.xlu0 %v2087
    %v2089 = vpop.xlane.xlu0 %2088
    %v2090 = vsel %vm417, %v1531, -inf
    %2091 = vmax.xlane.f32.xlu0 %v2090
    %v2092 = vpop.xlane.xlu0 %2091
    %v2093 = vsel %vm417, %v1533, -inf
    %2094 = vmax.xlane.f32.xlu0 %v2093
    %v2095 = vpop.xlane.xlu0 %2094
    %v2096 = vsel %vm417, %v1536, -inf
    %2097 = vmax.xlane.f32.xlu0 %v2096
    %v2098 = vpop.xlane.xlu0 %2097
    %v2099 = vsel %vm417, %v1538, -inf
    %2100 = vmax.xlane.f32.xlu0 %v2099
    %v2101 = vpop.xlane.xlu0 %2100
    %v2102 = vsel %vm417, %v1541, -inf
    %2103 = vmax.xlane.f32.xlu0 %v2102
    %v2104 = vpop.xlane.xlu0 %2103
    %v2105 = vsel %vm417, %v1543, -inf
    %2106 = vmax.xlane.f32.xlu0 %v2105
    %v2107 = vpop.xlane.xlu0 %2106
    %v2108 = vsel %vm417, %v1603, -inf
    %2109 = vmax.xlane.f32.xlu0 %v2108
    %v2110 = vpop.xlane.xlu0 %2109
    %v2111 = vsel %vm417, %v1605, -inf
    %2112 = vmax.xlane.f32.xlu0 %v2111
    %v2113 = vpop.xlane.xlu0 %2112
    %v2114 = vsel %vm417, %v1608, -inf
    %2115 = vmax.xlane.f32.xlu0 %v2114
    %v2116 = vpop.xlane.xlu0 %2115
    %v2117 = vsel %vm417, %v1610, -inf
    %2118 = vmax.xlane.f32.xlu0 %v2117
    %v2119 = vpop.xlane.xlu0 %2118
    %v2120 = vsel %vm417, %v1613, -inf
    %2121 = vmax.xlane.f32.xlu0 %v2120
    %v2122 = vpop.xlane.xlu0 %2121
    %v2123 = vsel %vm417, %v1615, -inf
    %2124 = vmax.xlane.f32.xlu0 %v2123
    %v2125 = vpop.xlane.xlu0 %2124
    %v2126 = vsel %vm417, %v1618, -inf
    %2127 = vmax.xlane.f32.xlu0 %v2126
    %v2128 = vpop.xlane.xlu0 %2127
    %v2129 = vsel %vm417, %v1620, -inf
    %2130 = vmax.xlane.f32.xlu0 %v2129
    %v2131 = vpop.xlane.xlu0 %2130
    %v2132 = vsel %vm417, %v1680, -inf
    %2133 = vmax.xlane.f32.xlu0 %v2132
    %v2134 = vpop.xlane.xlu0 %2133
    %v2135 = vsel %vm417, %v1682, -inf
    %2136 = vmax.xlane.f32.xlu0 %v2135
    %v2137 = vpop.xlane.xlu0 %2136
    %v2138 = vsel %vm417, %v1685, -inf
    %2139 = vmax.xlane.f32.xlu0 %v2138
    %v2140 = vpop.xlane.xlu0 %2139
    %v2141 = vsel %vm417, %v1687, -inf
    %2142 = vmax.xlane.f32.xlu0 %v2141
    %v2143 = vpop.xlane.xlu0 %2142
    %v2144 = vsel %vm417, %v1690, -inf
    %2145 = vmax.xlane.f32.xlu0 %v2144
    %v2146 = vpop.xlane.xlu0 %2145
    %v2147 = vsel %vm417, %v1692, -inf
    %2148 = vmax.xlane.f32.xlu0 %v2147
    %v2149 = vpop.xlane.xlu0 %2148
    %v2150 = vsel %vm417, %v1695, -inf
    %2151 = vmax.xlane.f32.xlu0 %v2150
    %v2152 = vpop.xlane.xlu0 %2151
    %v2153 = vsel %vm417, %v1697, -inf
    %2154 = vmax.xlane.f32.xlu0 %v2153
    %v2155 = vpop.xlane.xlu0 %2154
    %v2156 = vsel %vm417, %v1757, -inf
    %2157 = vmax.xlane.f32.xlu0 %v2156
    %v2158 = vpop.xlane.xlu0 %2157
    %v2159 = vsel %vm417, %v1759, -inf
    %2160 = vmax.xlane.f32.xlu0 %v2159
    %v2161 = vpop.xlane.xlu0 %2160
    %v2162 = vsel %vm417, %v1762, -inf
    %2163 = vmax.xlane.f32.xlu0 %v2162
    %v2164 = vpop.xlane.xlu0 %2163
    %v2165 = vsel %vm417, %v1764, -inf
    %2166 = vmax.xlane.f32.xlu0 %v2165
    %v2167 = vpop.xlane.xlu0 %2166
    %v2168 = vsel %vm417, %v1767, -inf
    %2169 = vmax.xlane.f32.xlu0 %v2168
    %v2170 = vpop.xlane.xlu0 %2169
    %v2171 = vsel %vm417, %v1769, -inf
    %2172 = vmax.xlane.f32.xlu0 %v2171
    %v2173 = vpop.xlane.xlu0 %2172
    %v2174 = vsel %vm417, %v1772, -inf
    %2175 = vmax.xlane.f32.xlu0 %v2174
    %v2176 = vpop.xlane.xlu0 %2175
    %v2177 = vsel %vm417, %v1774, -inf
    %2178 = vmax.xlane.f32.xlu0 %v2177
    %v2179 = vpop.xlane.xlu0 %2178
    %v2180 = vsel %vm417, %v1834, -inf
    %2181 = vmax.xlane.f32.xlu0 %v2180
    %v2182 = vpop.xlane.xlu0 %2181
    %v2183 = vsel %vm417, %v1836, -inf
    %2184 = vmax.xlane.f32.xlu0 %v2183
    %v2185 = vpop.xlane.xlu0 %2184
    %v2186 = vsel %vm417, %v1839, -inf
    %2187 = vmax.xlane.f32.xlu0 %v2186
    %v2188 = vpop.xlane.xlu0 %2187
    %v2189 = vsel %vm417, %v1841, -inf
    %2190 = vmax.xlane.f32.xlu0 %v2189
    %v2191 = vpop.xlane.xlu0 %2190
    %v2192 = vsel %vm417, %v1844, -inf
    %2193 = vmax.xlane.f32.xlu0 %v2192
    %v2194 = vpop.xlane.xlu0 %2193
    %v2195 = vsel %vm417, %v1846, -inf
    %2196 = vmax.xlane.f32.xlu0 %v2195
    %v2197 = vpop.xlane.xlu0 %2196
    %v2198 = vsel %vm417, %v1849, -inf
    %2199 = vmax.xlane.f32.xlu0 %v2198
    %v2200 = vpop.xlane.xlu0 %2199
    %v2201 = vsel %vm417, %v1851, -inf
    %2202 = vmax.xlane.f32.xlu0 %v2201
    %v2203 = vpop.xlane.xlu0 %2202
    %v2204 = vsel %vm417, %v1911, -inf
    %2205 = vmax.xlane.f32.xlu0 %v2204
    %v2206 = vpop.xlane.xlu0 %2205
    %v2207 = vsel %vm417, %v1913, -inf
    %2208 = vmax.xlane.f32.xlu0 %v2207
    %v2209 = vpop.xlane.xlu0 %2208
    %v2210 = vsel %vm417, %v1916, -inf
    %2211 = vmax.xlane.f32.xlu0 %v2210
    %v2212 = vpop.xlane.xlu0 %2211
    %v2213 = vsel %vm417, %v1918, -inf
    %2214 = vmax.xlane.f32.xlu0 %v2213
    %v2215 = vpop.xlane.xlu0 %2214
    %v2216 = vsel %vm417, %v1921, -inf
    %2217 = vmax.xlane.f32.xlu0 %v2216
    %v2218 = vpop.xlane.xlu0 %2217
    %v2219 = vsel %vm417, %v1923, -inf
    %2220 = vmax.xlane.f32.xlu0 %v2219
    %v2221 = vpop.xlane.xlu0 %2220
    %v2222 = vsel %vm417, %v1926, -inf
    %2223 = vmax.xlane.f32.xlu0 %v2222
    %v2224 = vpop.xlane.xlu0 %2223
    %v2225 = vsel %vm417, %v1928, -inf
    %2226 = vmax.xlane.f32.xlu0 %v2225
    %v2227 = vpop.xlane.xlu0 %2226
    %v2228 = vsel %vm417, %v1988, -inf
    %2229 = vmax.xlane.f32.xlu0 %v2228
    %v2230 = vpop.xlane.xlu0 %2229
    %v2231 = vsel %vm417, %v1990, -inf
    %2232 = vmax.xlane.f32.xlu0 %v2231
    %v2233 = vpop.xlane.xlu0 %2232
    %v2234 = vsel %vm417, %v1993, -inf
    %2235 = vmax.xlane.f32.xlu0 %v2234
    %v2236 = vpop.xlane.xlu0 %2235
    %v2237 = vsel %vm417, %v1995, -inf
    %2238 = vmax.xlane.f32.xlu0 %v2237
    %v2239 = vpop.xlane.xlu0 %2238
    %v2240 = vsel %vm417, %v1998, -inf
    %2241 = vmax.xlane.f32.xlu0 %v2240
    %v2242 = vpop.xlane.xlu0 %2241
    %v2243 = vsel %vm417, %v2000, -inf
    %2244 = vmax.xlane.f32.xlu0 %v2243
    %v2245 = vpop.xlane.xlu0 %2244
    %v2246 = vsel %vm417, %v2003, -inf
    %2247 = vmax.xlane.f32.xlu0 %v2246
    %v2248 = vpop.xlane.xlu0 %2247
    %v2249 = vsel %vm417, %v2005, -inf
    %2250 = vmax.xlane.f32.xlu0 %v2249
    %v2251 = vpop.xlane.xlu0 %2250
    %v2252 = vsel %vm417, %v2065, -inf
    %2253 = vmax.xlane.f32.xlu0 %v2252
    %v2254 = vpop.xlane.xlu0 %2253
    %v2255 = vsel %vm417, %v2067, -inf
    %2256 = vmax.xlane.f32.xlu0 %v2255
    %v2257 = vpop.xlane.xlu0 %2256
    %v2258 = vsel %vm417, %v2070, -inf
    %2259 = vmax.xlane.f32.xlu0 %v2258
    %v2260 = vpop.xlane.xlu0 %2259
    %v2261 = vsel %vm417, %v2072, -inf
    %2262 = vmax.xlane.f32.xlu0 %v2261
    %v2263 = vpop.xlane.xlu0 %2262
    %v2264 = vsel %vm417, %v2075, -inf
    %2265 = vmax.xlane.f32.xlu0 %v2264
    %v2266 = vpop.xlane.xlu0 %2265
    %v2267 = vsel %vm417, %v2077, -inf
    %2268 = vmax.xlane.f32.xlu0 %v2267
    %v2269 = vpop.xlane.xlu0 %2268
    %v2270 = vsel %vm417, %v2080, -inf
    %2271 = vmax.xlane.f32.xlu0 %v2270
    %v2272 = vpop.xlane.xlu0 %2271
    %v2273 = vsel %vm417, %v2082, -inf
    %2274 = vmax.xlane.f32.xlu0 %v2273
    %v2275 = vpop.xlane.xlu0 %2274
    %v2276 = vsub.f32 %v1526, %v2086
    %v2277 = vsub.f32 %v1528, %v2089
    %v2278 = vsub.f32 %v1531, %v2092
    %v2279 = vsub.f32 %v1533, %v2095
    %v2280 = vsub.f32 %v1536, %v2098
    %v2281 = vsub.f32 %v1538, %v2101
    %v2282 = vsub.f32 %v1541, %v2104
    %v2283 = vsub.f32 %v1543, %v2107
    %v2284 = vsub.f32 %v1603, %v2110
    %v2285 = vsub.f32 %v1605, %v2113
    %v2286 = vsub.f32 %v1608, %v2116
    %v2287 = vsub.f32 %v1610, %v2119
    %v2288 = vsub.f32 %v1613, %v2122
    %v2289 = vsub.f32 %v1615, %v2125
    %v2290 = vsub.f32 %v1618, %v2128
    %v2291 = vsub.f32 %v1620, %v2131
    %v2292 = vsub.f32 %v1680, %v2134
    %v2293 = vsub.f32 %v1682, %v2137
    %v2294 = vsub.f32 %v1685, %v2140
    %v2295 = vsub.f32 %v1687, %v2143
    %v2296 = vsub.f32 %v1690, %v2146
    %v2297 = vsub.f32 %v1692, %v2149
    %v2298 = vsub.f32 %v1695, %v2152
    %v2299 = vsub.f32 %v1697, %v2155
    %v2300 = vsub.f32 %v1757, %v2158
    %v2301 = vsub.f32 %v1759, %v2161
    %v2302 = vsub.f32 %v1762, %v2164
    %v2303 = vsub.f32 %v1764, %v2167
    %v2304 = vsub.f32 %v1767, %v2170
    %v2305 = vsub.f32 %v1769, %v2173
    %v2306 = vsub.f32 %v1772, %v2176
    %v2307 = vsub.f32 %v1774, %v2179
    %v2308 = vsub.f32 %v1834, %v2182
    %v2309 = vsub.f32 %v1836, %v2185
    %v2310 = vsub.f32 %v1839, %v2188
    %v2311 = vsub.f32 %v1841, %v2191
    %v2312 = vsub.f32 %v1844, %v2194
    %v2313 = vsub.f32 %v1846, %v2197
    %v2314 = vsub.f32 %v1849, %v2200
    %v2315 = vsub.f32 %v1851, %v2203
    %v2316 = vsub.f32 %v1911, %v2206
    %v2317 = vsub.f32 %v1913, %v2209
    %v2318 = vsub.f32 %v1916, %v2212
    %v2319 = vsub.f32 %v1918, %v2215
    %v2320 = vsub.f32 %v1921, %v2218
    %v2321 = vsub.f32 %v1923, %v2221
    %v2322 = vsub.f32 %v1926, %v2224
    %v2323 = vsub.f32 %v1928, %v2227
    %v2324 = vsub.f32 %v1988, %v2230
    %v2325 = vsub.f32 %v1990, %v2233
    %v2326 = vsub.f32 %v1993, %v2236
    %v2327 = vsub.f32 %v1995, %v2239
    %v2328 = vsub.f32 %v1998, %v2242
    %v2329 = vsub.f32 %v2000, %v2245
    %v2330 = vsub.f32 %v2003, %v2248
    %v2331 = vsub.f32 %v2005, %v2251
    %v2332 = vsub.f32 %v2065, %v2254
    %v2333 = vsub.f32 %v2067, %v2257
    %v2334 = vsub.f32 %v2070, %v2260
    %v2335 = vsub.f32 %v2072, %v2263
    %v2336 = vsub.f32 %v2075, %v2266
    %v2337 = vsub.f32 %v2077, %v2269
    %v2338 = vsub.f32 %v2080, %v2272
    %v2339 = vsub.f32 %v2082, %v2275
    %v2340 = vmul.f32 %v2276, 1.442695
    %v2341 = vpow.pop %v2340
    %v2342 = vmul.f32 %v2277, 1.442695
    %v2343 = vpow.pop %v2342
    %v2344 = vmul.f32 %v2278, 1.442695
    %v2345 = vpow.pop %v2344
    %v2346 = vmul.f32 %v2279, 1.442695
    %v2347 = vpow.pop %v2346
    %v2348 = vmul.f32 %v2280, 1.442695
    %v2349 = vpow.pop %v2348
    %v2350 = vmul.f32 %v2281, 1.442695
    %v2351 = vpow.pop %v2350
    %v2352 = vmul.f32 %v2282, 1.442695
    %v2353 = vpow.pop %v2352
    %v2354 = vmul.f32 %v2283, 1.442695
    %v2355 = vpow.pop %v2354
    %v2356 = vmul.f32 %v2284, 1.442695
    %v2357 = vpow.pop %v2356
    %v2358 = vmul.f32 %v2285, 1.442695
    %v2359 = vpow.pop %v2358
    %v2360 = vmul.f32 %v2286, 1.442695
    %v2361 = vpow.pop %v2360
    %v2362 = vmul.f32 %v2287, 1.442695
    %v2363 = vpow.pop %v2362
    %v2364 = vmul.f32 %v2288, 1.442695
    %v2365 = vpow.pop %v2364
    %v2366 = vmul.f32 %v2289, 1.442695
    %v2367 = vpow.pop %v2366
    %v2368 = vmul.f32 %v2290, 1.442695
    %v2369 = vpow.pop %v2368
    %v2370 = vmul.f32 %v2291, 1.442695
    %v2371 = vpow.pop %v2370
    %v2372 = vmul.f32 %v2292, 1.442695
    %v2373 = vpow.pop %v2372
    %v2374 = vmul.f32 %v2293, 1.442695
    %v2375 = vpow.pop %v2374
    %v2376 = vmul.f32 %v2294, 1.442695
    %v2377 = vpow.pop %v2376
    %v2378 = vmul.f32 %v2295, 1.442695
    %v2379 = vpow.pop %v2378
    %v2380 = vmul.f32 %v2296, 1.442695
    %v2381 = vpow.pop %v2380
    %v2382 = vmul.f32 %v2297, 1.442695
    %v2383 = vpow.pop %v2382
    %v2384 = vmul.f32 %v2298, 1.442695
    %v2385 = vpow.pop %v2384
    %v2386 = vmul.f32 %v2299, 1.442695
    %v2387 = vpow.pop %v2386
    %v2388 = vmul.f32 %v2300, 1.442695
    %v2389 = vpow.pop %v2388
    %v2390 = vmul.f32 %v2301, 1.442695
    %v2391 = vpow.pop %v2390
    %v2392 = vmul.f32 %v2302, 1.442695
    %v2393 = vpow.pop %v2392
    %v2394 = vmul.f32 %v2303, 1.442695
    %v2395 = vpow.pop %v2394
    %v2396 = vmul.f32 %v2304, 1.442695
    %v2397 = vpow.pop %v2396
    %v2398 = vmul.f32 %v2305, 1.442695
    %v2399 = vpow.pop %v2398
    %v2400 = vmul.f32 %v2306, 1.442695
    %v2401 = vpow.pop %v2400
    %v2402 = vmul.f32 %v2307, 1.442695
    %v2403 = vpow.pop %v2402
    %v2404 = vmul.f32 %v2308, 1.442695
    %v2405 = vpow.pop %v2404
    %v2406 = vmul.f32 %v2309, 1.442695
    %v2407 = vpow.pop %v2406
    %v2408 = vmul.f32 %v2310, 1.442695
    %v2409 = vpow.pop %v2408
    %v2410 = vmul.f32 %v2311, 1.442695
    %v2411 = vpow.pop %v2410
    %v2412 = vmul.f32 %v2312, 1.442695
    %v2413 = vpow.pop %v2412
    %v2414 = vmul.f32 %v2313, 1.442695
    %v2415 = vpow.pop %v2414
    %v2416 = vmul.f32 %v2314, 1.442695
    %v2417 = vpow.pop %v2416
    %v2418 = vmul.f32 %v2315, 1.442695
    %v2419 = vpow.pop %v2418
    %v2420 = vmul.f32 %v2316, 1.442695
    %v2421 = vpow.pop %v2420
    %v2422 = vmul.f32 %v2317, 1.442695
    %v2423 = vpow.pop %v2422
    %v2424 = vmul.f32 %v2318, 1.442695
    %v2425 = vpow.pop %v2424
    %v2426 = vmul.f32 %v2319, 1.442695
    %v2427 = vpow.pop %v2426
    %v2428 = vmul.f32 %v2320, 1.442695
    %v2429 = vpow.pop %v2428
    %v2430 = vmul.f32 %v2321, 1.442695
    %v2431 = vpow.pop %v2430
    %v2432 = vmul.f32 %v2322, 1.442695
    %v2433 = vpow.pop %v2432
    %v2434 = vmul.f32 %v2323, 1.442695
    %v2435 = vpow.pop %v2434
    %v2436 = vmul.f32 %v2324, 1.442695
    %v2437 = vpow.pop %v2436
    %v2438 = vmul.f32 %v2325, 1.442695
    %v2439 = vpow.pop %v2438
    %v2440 = vmul.f32 %v2326, 1.442695
    %v2441 = vpow.pop %v2440
    %v2442 = vmul.f32 %v2327, 1.442695
    %v2443 = vpow.pop %v2442
    %v2444 = vmul.f32 %v2328, 1.442695
    %v2445 = vpow.pop %v2444
    %v2446 = vmul.f32 %v2329, 1.442695
    %v2447 = vpow.pop %v2446
    %v2448 = vmul.f32 %v2330, 1.442695
    %v2449 = vpow.pop %v2448
    %v2450 = vmul.f32 %v2331, 1.442695
    %v2451 = vpow.pop %v2450
    %v2452 = vmul.f32 %v2332, 1.442695
    %v2453 = vpow.pop %v2452
    %v2454 = vmul.f32 %v2333, 1.442695
    %v2455 = vpow.pop %v2454
    %v2456 = vmul.f32 %v2334, 1.442695
    %v2457 = vpow.pop %v2456
    %v2458 = vmul.f32 %v2335, 1.442695
    %v2459 = vpow.pop %v2458
    %v2460 = vmul.f32 %v2336, 1.442695
    %v2461 = vpow.pop %v2460
    %v2462 = vmul.f32 %v2337, 1.442695
    %v2463 = vpow.pop %v2462
    %v2464 = vmul.f32 %v2338, 1.442695
    %v2465 = vpow.pop %v2464
    %v2466 = vmul.f32 %v2339, 1.442695
    %v2467 = vpow.pop %v2466
    %v2468 = vsel %vm417, %v2341, 0.0
    %2469 = vadd.xlane.f32.xlu0 %v2468
    %v2470 = vpop.xlane.xlu0 %2469
    %v2471 = vsel %vm417, %v2343, 0.0
    %2472 = vadd.xlane.f32.xlu0 %v2471
    %v2473 = vpop.xlane.xlu0 %2472
    %v2474 = vsel %vm417, %v2345, 0.0
    %2475 = vadd.xlane.f32.xlu0 %v2474
    %v2476 = vpop.xlane.xlu0 %2475
    %v2477 = vsel %vm417, %v2347, 0.0
    %2478 = vadd.xlane.f32.xlu0 %v2477
    %v2479 = vpop.xlane.xlu0 %2478
    %v2480 = vsel %vm417, %v2349, 0.0
    %2481 = vadd.xlane.f32.xlu0 %v2480
    %v2482 = vpop.xlane.xlu0 %2481
    %v2483 = vsel %vm417, %v2351, 0.0
    %2484 = vadd.xlane.f32.xlu0 %v2483
    %v2485 = vpop.xlane.xlu0 %2484
    %v2486 = vsel %vm417, %v2353, 0.0
    %2487 = vadd.xlane.f32.xlu0 %v2486
    %v2488 = vpop.xlane.xlu0 %2487
    %v2489 = vsel %vm417, %v2355, 0.0
    %2490 = vadd.xlane.f32.xlu0 %v2489
    %v2491 = vpop.xlane.xlu0 %2490
    %v2492 = vsel %vm417, %v2357, 0.0
    %2493 = vadd.xlane.f32.xlu0 %v2492
    %v2494 = vpop.xlane.xlu0 %2493
    %v2495 = vsel %vm417, %v2359, 0.0
    %2496 = vadd.xlane.f32.xlu0 %v2495
    %v2497 = vpop.xlane.xlu0 %2496
    %v2498 = vsel %vm417, %v2361, 0.0
    %2499 = vadd.xlane.f32.xlu0 %v2498
    %v2500 = vpop.xlane.xlu0 %2499
    %v2501 = vsel %vm417, %v2363, 0.0
    %2502 = vadd.xlane.f32.xlu0 %v2501
    %v2503 = vpop.xlane.xlu0 %2502
    %v2504 = vsel %vm417, %v2365, 0.0
    %2505 = vadd.xlane.f32.xlu0 %v2504
    %v2506 = vpop.xlane.xlu0 %2505
    %v2507 = vsel %vm417, %v2367, 0.0
    %2508 = vadd.xlane.f32.xlu0 %v2507
    %v2509 = vpop.xlane.xlu0 %2508
    %v2510 = vsel %vm417, %v2369, 0.0
    %2511 = vadd.xlane.f32.xlu0 %v2510
    %v2512 = vpop.xlane.xlu0 %2511
    %v2513 = vsel %vm417, %v2371, 0.0
    %2514 = vadd.xlane.f32.xlu0 %v2513
    %v2515 = vpop.xlane.xlu0 %2514
    %v2516 = vsel %vm417, %v2373, 0.0
    %2517 = vadd.xlane.f32.xlu0 %v2516
    %v2518 = vpop.xlane.xlu0 %2517
    %v2519 = vsel %vm417, %v2375, 0.0
    %2520 = vadd.xlane.f32.xlu0 %v2519
    %v2521 = vpop.xlane.xlu0 %2520
    %v2522 = vsel %vm417, %v2377, 0.0
    %2523 = vadd.xlane.f32.xlu0 %v2522
    %v2524 = vpop.xlane.xlu0 %2523
    %v2525 = vsel %vm417, %v2379, 0.0
    %2526 = vadd.xlane.f32.xlu0 %v2525
    %v2527 = vpop.xlane.xlu0 %2526
    %v2528 = vsel %vm417, %v2381, 0.0
    %2529 = vadd.xlane.f32.xlu0 %v2528
    %v2530 = vpop.xlane.xlu0 %2529
    %v2531 = vsel %vm417, %v2383, 0.0
    %2532 = vadd.xlane.f32.xlu0 %v2531
    %v2533 = vpop.xlane.xlu0 %2532
    %v2534 = vsel %vm417, %v2385, 0.0
    %2535 = vadd.xlane.f32.xlu0 %v2534
    %v2536 = vpop.xlane.xlu0 %2535
    %v2537 = vsel %vm417, %v2387, 0.0
    %2538 = vadd.xlane.f32.xlu0 %v2537
    %v2539 = vpop.xlane.xlu0 %2538
    %v2540 = vsel %vm417, %v2389, 0.0
    %2541 = vadd.xlane.f32.xlu0 %v2540
    %v2542 = vpop.xlane.xlu0 %2541
    %v2543 = vsel %vm417, %v2391, 0.0
    %2544 = vadd.xlane.f32.xlu0 %v2543
    %v2545 = vpop.xlane.xlu0 %2544
    %v2546 = vsel %vm417, %v2393, 0.0
    %2547 = vadd.xlane.f32.xlu0 %v2546
    %v2548 = vpop.xlane.xlu0 %2547
    %v2549 = vsel %vm417, %v2395, 0.0
    %2550 = vadd.xlane.f32.xlu0 %v2549
    %v2551 = vpop.xlane.xlu0 %2550
    %v2552 = vsel %vm417, %v2397, 0.0
    %2553 = vadd.xlane.f32.xlu0 %v2552
    %v2554 = vpop.xlane.xlu0 %2553
    %v2555 = vsel %vm417, %v2399, 0.0
    %2556 = vadd.xlane.f32.xlu0 %v2555
    %v2557 = vpop.xlane.xlu0 %2556
    %v2558 = vsel %vm417, %v2401, 0.0
    %2559 = vadd.xlane.f32.xlu0 %v2558
    %v2560 = vpop.xlane.xlu0 %2559
    %v2561 = vsel %vm417, %v2403, 0.0
    %2562 = vadd.xlane.f32.xlu0 %v2561
    %v2563 = vpop.xlane.xlu0 %2562
    %v2564 = vsel %vm417, %v2405, 0.0
    %2565 = vadd.xlane.f32.xlu0 %v2564
    %v2566 = vpop.xlane.xlu0 %2565
    %v2567 = vsel %vm417, %v2407, 0.0
    %2568 = vadd.xlane.f32.xlu0 %v2567
    %v2569 = vpop.xlane.xlu0 %2568
    %v2570 = vsel %vm417, %v2409, 0.0
    %2571 = vadd.xlane.f32.xlu0 %v2570
    %v2572 = vpop.xlane.xlu0 %2571
    %v2573 = vsel %vm417, %v2411, 0.0
    %2574 = vadd.xlane.f32.xlu0 %v2573
    %v2575 = vpop.xlane.xlu0 %2574
    %v2576 = vsel %vm417, %v2413, 0.0
    %2577 = vadd.xlane.f32.xlu0 %v2576
    %v2578 = vpop.xlane.xlu0 %2577
    %v2579 = vsel %vm417, %v2415, 0.0
    %2580 = vadd.xlane.f32.xlu0 %v2579
    %v2581 = vpop.xlane.xlu0 %2580
    %v2582 = vsel %vm417, %v2417, 0.0
    %2583 = vadd.xlane.f32.xlu0 %v2582
    %v2584 = vpop.xlane.xlu0 %2583
    %v2585 = vsel %vm417, %v2419, 0.0
    %2586 = vadd.xlane.f32.xlu0 %v2585
    %v2587 = vpop.xlane.xlu0 %2586
    %v2588 = vsel %vm417, %v2421, 0.0
    %2589 = vadd.xlane.f32.xlu0 %v2588
    %v2590 = vpop.xlane.xlu0 %2589
    %v2591 = vsel %vm417, %v2423, 0.0
    %2592 = vadd.xlane.f32.xlu0 %v2591
    %v2593 = vpop.xlane.xlu0 %2592
    %v2594 = vsel %vm417, %v2425, 0.0
    %2595 = vadd.xlane.f32.xlu0 %v2594
    %v2596 = vpop.xlane.xlu0 %2595
    %v2597 = vsel %vm417, %v2427, 0.0
    %2598 = vadd.xlane.f32.xlu0 %v2597
    %v2599 = vpop.xlane.xlu0 %2598
    %v2600 = vsel %vm417, %v2429, 0.0
    %2601 = vadd.xlane.f32.xlu0 %v2600
    %v2602 = vpop.xlane.xlu0 %2601
    %v2603 = vsel %vm417, %v2431, 0.0
    %2604 = vadd.xlane.f32.xlu0 %v2603
    %v2605 = vpop.xlane.xlu0 %2604
    %v2606 = vsel %vm417, %v2433, 0.0
    %2607 = vadd.xlane.f32.xlu0 %v2606
    %v2608 = vpop.xlane.xlu0 %2607
    %v2609 = vsel %vm417, %v2435, 0.0
    %2610 = vadd.xlane.f32.xlu0 %v2609
    %v2611 = vpop.xlane.xlu0 %2610
    %v2612 = vsel %vm417, %v2437, 0.0
    %2613 = vadd.xlane.f32.xlu0 %v2612
    %v2614 = vpop.xlane.xlu0 %2613
    %v2615 = vsel %vm417, %v2439, 0.0
    %2616 = vadd.xlane.f32.xlu0 %v2615
    %v2617 = vpop.xlane.xlu0 %2616
    %v2618 = vsel %vm417, %v2441, 0.0
    %2619 = vadd.xlane.f32.xlu0 %v2618
    %v2620 = vpop.xlane.xlu0 %2619
    %v2621 = vsel %vm417, %v2443, 0.0
    %2622 = vadd.xlane.f32.xlu0 %v2621
    %v2623 = vpop.xlane.xlu0 %2622
    %v2624 = vsel %vm417, %v2445, 0.0
    %2625 = vadd.xlane.f32.xlu0 %v2624
    %v2626 = vpop.xlane.xlu0 %2625
    %v2627 = vsel %vm417, %v2447, 0.0
    %2628 = vadd.xlane.f32.xlu0 %v2627
    %v2629 = vpop.xlane.xlu0 %2628
    %v2630 = vsel %vm417, %v2449, 0.0
    %2631 = vadd.xlane.f32.xlu0 %v2630
    %v2632 = vpop.xlane.xlu0 %2631
    %v2633 = vsel %vm417, %v2451, 0.0
    %2634 = vadd.xlane.f32.xlu0 %v2633
    %v2635 = vpop.xlane.xlu0 %2634
    %v2636 = vsel %vm417, %v2453, 0.0
    %2637 = vadd.xlane.f32.xlu0 %v2636
    %v2638 = vpop.xlane.xlu0 %2637
    %v2639 = vsel %vm417, %v2455, 0.0
    %2640 = vadd.xlane.f32.xlu0 %v2639
    %v2641 = vpop.xlane.xlu0 %2640
    %v2642 = vsel %vm417, %v2457, 0.0
    %2643 = vadd.xlane.f32.xlu0 %v2642
    %v2644 = vpop.xlane.xlu0 %2643
    %v2645 = vsel %vm417, %v2459, 0.0
    %2646 = vadd.xlane.f32.xlu0 %v2645
    %v2647 = vpop.xlane.xlu0 %2646
    %v2648 = vsel %vm417, %v2461, 0.0
    %2649 = vadd.xlane.f32.xlu0 %v2648
    %v2650 = vpop.xlane.xlu0 %2649
    %v2651 = vsel %vm417, %v2463, 0.0
    %2652 = vadd.xlane.f32.xlu0 %v2651
    %v2653 = vpop.xlane.xlu0 %2652
    %v2654 = vsel %vm417, %v2465, 0.0
    %2655 = vadd.xlane.f32.xlu0 %v2654
    %v2656 = vpop.xlane.xlu0 %2655
    %v2657 = vsel %vm417, %v2467, 0.0
    %2658 = vadd.xlane.f32.xlu0 %v2657
    %v2659 = vpop.xlane.xlu0 %2658
    %v2660 = vrcp.pop %v2470
    %v2661 = vrcp.pop %v2473
    %v2662 = vrcp.pop %v2476
    %v2663 = vrcp.pop %v2479
    %v2664 = vrcp.pop %v2482
    %v2665 = vrcp.pop %v2485
    %v2666 = vrcp.pop %v2488
    %v2667 = vrcp.pop %v2491
    %v2668 = vrcp.pop %v2494
    %v2669 = vrcp.pop %v2497
    %v2670 = vrcp.pop %v2500
    %v2671 = vrcp.pop %v2503
    %v2672 = vrcp.pop %v2506
    %v2673 = vrcp.pop %v2509
    %v2674 = vrcp.pop %v2512
    %v2675 = vrcp.pop %v2515
    %v2676 = vrcp.pop %v2518
    %v2677 = vrcp.pop %v2521
    %v2678 = vrcp.pop %v2524
    %v2679 = vrcp.pop %v2527
    %v2680 = vrcp.pop %v2530
    %v2681 = vrcp.pop %v2533
    %v2682 = vrcp.pop %v2536
    %v2683 = vrcp.pop %v2539
    %v2684 = vrcp.pop %v2542
    %v2685 = vrcp.pop %v2545
    %v2686 = vrcp.pop %v2548
    %v2687 = vrcp.pop %v2551
    %v2688 = vrcp.pop %v2554
    %v2689 = vrcp.pop %v2557
    %v2690 = vrcp.pop %v2560
    %v2691 = vrcp.pop %v2563
    %v2692 = vrcp.pop %v2566
    %v2693 = vrcp.pop %v2569
    %v2694 = vrcp.pop %v2572
    %v2695 = vrcp.pop %v2575
    %v2696 = vrcp.pop %v2578
    %v2697 = vrcp.pop %v2581
    %v2698 = vrcp.pop %v2584
    %v2699 = vrcp.pop %v2587
    %v2700 = vrcp.pop %v2590
    %v2701 = vrcp.pop %v2593
    %v2702 = vrcp.pop %v2596
    %v2703 = vrcp.pop %v2599
    %v2704 = vrcp.pop %v2602
    %v2705 = vrcp.pop %v2605
    %v2706 = vrcp.pop %v2608
    %v2707 = vrcp.pop %v2611
    %v2708 = vrcp.pop %v2614
    %v2709 = vrcp.pop %v2617
    %v2710 = vrcp.pop %v2620
    %v2711 = vrcp.pop %v2623
    %v2712 = vrcp.pop %v2626
    %v2713 = vrcp.pop %v2629
    %v2714 = vrcp.pop %v2632
    %v2715 = vrcp.pop %v2635
    %v2716 = vrcp.pop %v2638
    %v2717 = vrcp.pop %v2641
    %v2718 = vrcp.pop %v2644
    %v2719 = vrcp.pop %v2647
    %v2720 = vrcp.pop %v2650
    %v2721 = vrcp.pop %v2653
    %v2722 = vrcp.pop %v2656
    %v2723 = vrcp.pop %v2659
    %v2724 = vmul.f32 %v2341, %v2660
    %v2725 = vmul.f32 %v2343, %v2661
    %v2726 = vmul.f32 %v2345, %v2662
    %v2727 = vmul.f32 %v2347, %v2663
    %v2728 = vmul.f32 %v2349, %v2664
    %v2729 = vmul.f32 %v2351, %v2665
    %v2730 = vmul.f32 %v2353, %v2666
    %v2731 = vmul.f32 %v2355, %v2667
    %v2732 = vmul.f32 %v2357, %v2668
    %v2733 = vmul.f32 %v2359, %v2669
    %v2734 = vmul.f32 %v2361, %v2670
    %v2735 = vmul.f32 %v2363, %v2671
    %v2736 = vmul.f32 %v2365, %v2672
    %v2737 = vmul.f32 %v2367, %v2673
    %v2738 = vmul.f32 %v2369, %v2674
    %v2739 = vmul.f32 %v2371, %v2675
    %v2740 = vmul.f32 %v2373, %v2676
    %v2741 = vmul.f32 %v2375, %v2677
    %v2742 = vmul.f32 %v2377, %v2678
    %v2743 = vmul.f32 %v2379, %v2679
    %v2744 = vmul.f32 %v2381, %v2680
    %v2745 = vmul.f32 %v2383, %v2681
    %v2746 = vmul.f32 %v2385, %v2682
    %v2747 = vmul.f32 %v2387, %v2683
    %v2748 = vmul.f32 %v2389, %v2684
    %v2749 = vmul.f32 %v2391, %v2685
    %v2750 = vmul.f32 %v2393, %v2686
    %v2751 = vmul.f32 %v2395, %v2687
    %v2752 = vmul.f32 %v2397, %v2688
    %v2753 = vmul.f32 %v2399, %v2689
    %v2754 = vmul.f32 %v2401, %v2690
    %v2755 = vmul.f32 %v2403, %v2691
    %v2756 = vmul.f32 %v2405, %v2692
    %v2757 = vmul.f32 %v2407, %v2693
    %v2758 = vmul.f32 %v2409, %v2694
    %v2759 = vmul.f32 %v2411, %v2695
    %v2760 = vmul.f32 %v2413, %v2696
    %v2761 = vmul.f32 %v2415, %v2697
    %v2762 = vmul.f32 %v2417, %v2698
    %v2763 = vmul.f32 %v2419, %v2699
    %v2764 = vmul.f32 %v2421, %v2700
    %v2765 = vmul.f32 %v2423, %v2701
    %v2766 = vmul.f32 %v2425, %v2702
    %v2767 = vmul.f32 %v2427, %v2703
    %v2768 = vmul.f32 %v2429, %v2704
    %v2769 = vmul.f32 %v2431, %v2705
    %v2770 = vmul.f32 %v2433, %v2706
    %v2771 = vmul.f32 %v2435, %v2707
    %v2772 = vmul.f32 %v2437, %v2708
    %v2773 = vmul.f32 %v2439, %v2709
    %v2774 = vmul.f32 %v2441, %v2710
    %v2775 = vmul.f32 %v2443, %v2711
    %v2776 = vmul.f32 %v2445, %v2712
    %v2777 = vmul.f32 %v2447, %v2713
    %v2778 = vmul.f32 %v2449, %v2714
    %v2779 = vmul.f32 %v2451, %v2715
    %v2780 = vmul.f32 %v2453, %v2716
    %v2781 = vmul.f32 %v2455, %v2717
    %v2782 = vmul.f32 %v2457, %v2718
    %v2783 = vmul.f32 %v2459, %v2719
    %v2784 = vmul.f32 %v2461, %v2720
    %v2785 = vmul.f32 %v2463, %v2721
    %v2786 = vmul.f32 %v2465, %v2722
    %v2787 = vmul.f32 %v2467, %v2723
    %v2788 = vpack.c.bf16 %v2724, %v2724
    %v2789 = vpack.c.bf16 %v2725, %v2725
    %v2790 = vpack.c.bf16 %v2726, %v2726
    %v2791 = vpack.c.bf16 %v2727, %v2727
    %v2792 = vpack.c.bf16 %v2728, %v2728
    %v2793 = vpack.c.bf16 %v2729, %v2729
    %v2794 = vpack.c.bf16 %v2730, %v2730
    %v2795 = vpack.c.bf16 %v2731, %v2731
    %v2796 = vpack.c.bf16 %v2732, %v2732
    %v2797 = vpack.c.bf16 %v2733, %v2733
    %v2798 = vpack.c.bf16 %v2734, %v2734
    %v2799 = vpack.c.bf16 %v2735, %v2735
    %v2800 = vpack.c.bf16 %v2736, %v2736
    %v2801 = vpack.c.bf16 %v2737, %v2737
    %v2802 = vpack.c.bf16 %v2738, %v2738
    %v2803 = vpack.c.bf16 %v2739, %v2739
    %v2804 = vpack.c.bf16 %v2740, %v2740
    %v2805 = vpack.c.bf16 %v2741, %v2741
    %v2806 = vpack.c.bf16 %v2742, %v2742
    %v2807 = vpack.c.bf16 %v2743, %v2743
    %v2808 = vpack.c.bf16 %v2744, %v2744
    %v2809 = vpack.c.bf16 %v2745, %v2745
    %v2810 = vpack.c.bf16 %v2746, %v2746
    %v2811 = vpack.c.bf16 %v2747, %v2747
    %v2812 = vpack.c.bf16 %v2748, %v2748
    %v2813 = vpack.c.bf16 %v2749, %v2749
    %v2814 = vpack.c.bf16 %v2750, %v2750
    %v2815 = vpack.c.bf16 %v2751, %v2751
    %v2816 = vpack.c.bf16 %v2752, %v2752
    %v2817 = vpack.c.bf16 %v2753, %v2753
    %v2818 = vpack.c.bf16 %v2754, %v2754
    %v2819 = vpack.c.bf16 %v2755, %v2755
    %v2820 = vpack.c.bf16 %v2756, %v2756
    %v2821 = vpack.c.bf16 %v2757, %v2757
    %v2822 = vpack.c.bf16 %v2758, %v2758
    %v2823 = vpack.c.bf16 %v2759, %v2759
    %v2824 = vpack.c.bf16 %v2760, %v2760
    %v2825 = vpack.c.bf16 %v2761, %v2761
    %v2826 = vpack.c.bf16 %v2762, %v2762
    %v2827 = vpack.c.bf16 %v2763, %v2763
    %v2828 = vpack.c.bf16 %v2764, %v2764
    %v2829 = vpack.c.bf16 %v2765, %v2765
    %v2830 = vpack.c.bf16 %v2766, %v2766
    %v2831 = vpack.c.bf16 %v2767, %v2767
    %v2832 = vpack.c.bf16 %v2768, %v2768
    %v2833 = vpack.c.bf16 %v2769, %v2769
    %v2834 = vpack.c.bf16 %v2770, %v2770
    %v2835 = vpack.c.bf16 %v2771, %v2771
    %v2836 = vpack.c.bf16 %v2772, %v2772
    %v2837 = vpack.c.bf16 %v2773, %v2773
    %v2838 = vpack.c.bf16 %v2774, %v2774
    %v2839 = vpack.c.bf16 %v2775, %v2775
    %v2840 = vpack.c.bf16 %v2776, %v2776
    %v2841 = vpack.c.bf16 %v2777, %v2777
    %v2842 = vpack.c.bf16 %v2778, %v2778
    %v2843 = vpack.c.bf16 %v2779, %v2779
    %v2844 = vpack.c.bf16 %v2780, %v2780
    %v2845 = vpack.c.bf16 %v2781, %v2781
    %v2846 = vpack.c.bf16 %v2782, %v2782
    %v2847 = vpack.c.bf16 %v2783, %v2783
    %v2848 = vpack.c.bf16 %v2784, %v2784
    %v2849 = vpack.c.bf16 %v2785, %v2785
    %v2850 = vpack.c.bf16 %v2786, %v2786
    %v2851 = vpack.c.bf16 %v2787, %v2787
    %v2860 = vunpack.c.l.b16 %v2788
    %v2861 = vunpack.c.l.b16 %v2789
    %v2862 = vunpack.c.l.b16 %v2790
    %v2863 = vunpack.c.l.b16 %v2791
    %v2864 = vunpack.c.l.b16 %v2792
    %v2865 = vunpack.c.l.b16 %v2793
    %v2866 = vunpack.c.l.b16 %v2794
    %v2867 = vunpack.c.l.b16 %v2795
    %v2868 = vpack.c.b16 %v2861, %v2860
    %v2869 = vpack.c.b16 %v2863, %v2862
    %v2870 = vpack.c.b16 %v2865, %v2864
    %v2871 = vpack.c.b16 %v2867, %v2866
    %v2872 = vunpack.c.l.b16 %v1339
    %v2873 = vunpack.c.l.b16 %v1340
    %v2874 = vunpack.c.l.b16 %v1341
    %v2875 = vunpack.c.l.b16 %v1342
    %v2876 = vunpack.c.l.b16 %v1343
    %v2877 = vunpack.c.l.b16 %v1344
    %v2878 = vunpack.c.l.b16 %v1345
    %v2879 = vunpack.c.l.b16 %v1346
    %v2880 = vpack.c.b16 %v2873, %v2872
    %v2881 = vpack.c.b16 %v2875, %v2874
    %v2882 = vpack.c.b16 %v2877, %v2876
    %v2883 = vpack.c.b16 %v2879, %v2878
    %v2889 = vsel %vm417, %v2868, 0
    %v2892 = vsel %vm417, %v2869, 0
    %v2895 = vsel %vm417, %v2870, 0
    %v2898 = vsel %vm417, %v2871, 0
    %2900 = vmatpush.bf16.msra.mxu0 0
    %2901 = vmatpush.bf16.msra.mxu0 0
    %2902 = vmatpush.bf16.msra.mxu0 0
    %2903 = vmatpush.bf16.msra.mxu0 0
    %2904 = vmatpush.bf16.msra.mxu0 %v2883
    %2905 = vmatpush.bf16.msra.mxu0 %v2882
    %2906 = vmatpush.bf16.msra.mxu0 %v2881
    %2907 = vmatpush.bf16.msra.mxu0 %v2880
    %2908 = vmatmul.bf16.gmra.mxu0 %v2889
    %v2909 = vpop.f32.mrf.mxu0
    %v2910 = vadd.f32 0.0, %v2909
    %v2911 = vpop.f32.mrf.mxu0
    %v2912 = vadd.f32 0.0, %v2911
    %2913 = vmatmul.bf16.gmra.mxu0 %v2892
    %v2914 = vpop.f32.mrf.mxu0
    %v2915 = vadd.f32 0.0, %v2914
    %v2916 = vpop.f32.mrf.mxu0
    %v2917 = vadd.f32 0.0, %v2916
    %2918 = vmatmul.bf16.gmra.mxu0 %v2895
    %v2919 = vpop.f32.mrf.mxu0
    %v2920 = vadd.f32 0.0, %v2919
    %v2921 = vpop.f32.mrf.mxu0
    %v2922 = vadd.f32 0.0, %v2921
    %2923 = vmatmul.bf16.gmra.mxu0 %v2898
    %v2924 = vpop.f32.mrf.mxu0
    %v2925 = vadd.f32 0.0, %v2924
    %v2926 = vpop.f32.mrf.mxu0
    %v2927 = vadd.f32 0.0, %v2926
    %2928 = vdwg.mxu0
    %v2937 = vunpack.c.l.b16 %v2796
    %v2938 = vunpack.c.l.b16 %v2797
    %v2939 = vunpack.c.l.b16 %v2798
    %v2940 = vunpack.c.l.b16 %v2799
    %v2941 = vunpack.c.l.b16 %v2800
    %v2942 = vunpack.c.l.b16 %v2801
    %v2943 = vunpack.c.l.b16 %v2802
    %v2944 = vunpack.c.l.b16 %v2803
    %v2945 = vpack.c.b16 %v2938, %v2937
    %v2946 = vpack.c.b16 %v2940, %v2939
    %v2947 = vpack.c.b16 %v2942, %v2941
    %v2948 = vpack.c.b16 %v2944, %v2943
    %v2949 = vunpack.c.l.b16 %v1347
    %v2950 = vunpack.c.l.b16 %v1348
    %v2951 = vunpack.c.l.b16 %v1349
    %v2952 = vunpack.c.l.b16 %v1350
    %v2953 = vunpack.c.l.b16 %v1351
    %v2954 = vunpack.c.l.b16 %v1352
    %v2955 = vunpack.c.l.b16 %v1353
    %v2956 = vunpack.c.l.b16 %v1354
    %v2957 = vpack.c.b16 %v2950, %v2949
    %v2958 = vpack.c.b16 %v2952, %v2951
    %v2959 = vpack.c.b16 %v2954, %v2953
    %v2960 = vpack.c.b16 %v2956, %v2955
    %v2966 = vsel %vm417, %v2945, 0
    %v2969 = vsel %vm417, %v2946, 0
    %v2972 = vsel %vm417, %v2947, 0
    %v2975 = vsel %vm417, %v2948, 0
    %2977 = vmatpush.bf16.msra.mxu0 0
    %2978 = vmatpush.bf16.msra.mxu0 0
    %2979 = vmatpush.bf16.msra.mxu0 0
    %2980 = vmatpush.bf16.msra.mxu0 0
    %2981 = vmatpush.bf16.msra.mxu0 %v2960
    %2982 = vmatpush.bf16.msra.mxu0 %v2959
    %2983 = vmatpush.bf16.msra.mxu0 %v2958
    %2984 = vmatpush.bf16.msra.mxu0 %v2957
    %2985 = vmatmul.bf16.gmra.mxu0 %v2966
    %v2986 = vpop.f32.mrf.mxu0
    %v2987 = vadd.f32 0.0, %v2986
    %v2988 = vpop.f32.mrf.mxu0
    %v2989 = vadd.f32 0.0, %v2988
    %2990 = vmatmul.bf16.gmra.mxu0 %v2969
    %v2991 = vpop.f32.mrf.mxu0
    %v2992 = vadd.f32 0.0, %v2991
    %v2993 = vpop.f32.mrf.mxu0
    %v2994 = vadd.f32 0.0, %v2993
    %2995 = vmatmul.bf16.gmra.mxu0 %v2972
    %v2996 = vpop.f32.mrf.mxu0
    %v2997 = vadd.f32 0.0, %v2996
    %v2998 = vpop.f32.mrf.mxu0
    %v2999 = vadd.f32 0.0, %v2998
    %3000 = vmatmul.bf16.gmra.mxu0 %v2975
    %v3001 = vpop.f32.mrf.mxu0
    %v3002 = vadd.f32 0.0, %v3001
    %v3003 = vpop.f32.mrf.mxu0
    %v3004 = vadd.f32 0.0, %v3003
    %3005 = vdwg.mxu0
    %v3014 = vunpack.c.l.b16 %v2804
    %v3015 = vunpack.c.l.b16 %v2805
    %v3016 = vunpack.c.l.b16 %v2806
    %v3017 = vunpack.c.l.b16 %v2807
    %v3018 = vunpack.c.l.b16 %v2808
    %v3019 = vunpack.c.l.b16 %v2809
    %v3020 = vunpack.c.l.b16 %v2810
    %v3021 = vunpack.c.l.b16 %v2811
    %v3022 = vpack.c.b16 %v3015, %v3014
    %v3023 = vpack.c.b16 %v3017, %v3016
    %v3024 = vpack.c.b16 %v3019, %v3018
    %v3025 = vpack.c.b16 %v3021, %v3020
    %v3026 = vunpack.c.l.b16 %v1372
    %v3027 = vunpack.c.l.b16 %v1374
    %v3028 = vunpack.c.l.b16 %v1376
    %v3029 = vunpack.c.l.b16 %v1378
    %v3030 = vunpack.c.l.b16 %v1380
    %v3031 = vunpack.c.l.b16 %v1382
    %v3032 = vunpack.c.l.b16 %v1384
    %v3033 = vunpack.c.l.b16 %v1386
    %v3034 = vpack.c.b16 %v3027, %v3026
    %v3035 = vpack.c.b16 %v3029, %v3028
    %v3036 = vpack.c.b16 %v3031, %v3030
    %v3037 = vpack.c.b16 %v3033, %v3032
    %v3043 = vsel %vm417, %v3022, 0
    %v3046 = vsel %vm417, %v3023, 0
    %v3049 = vsel %vm417, %v3024, 0
    %v3052 = vsel %vm417, %v3025, 0
    %3054 = vmatpush.bf16.msra.mxu0 0
    %3055 = vmatpush.bf16.msra.mxu0 0
    %3056 = vmatpush.bf16.msra.mxu0 0
    %3057 = vmatpush.bf16.msra.mxu0 0
    %3058 = vmatpush.bf16.msra.mxu0 %v3037
    %3059 = vmatpush.bf16.msra.mxu0 %v3036
    %3060 = vmatpush.bf16.msra.mxu0 %v3035
    %3061 = vmatpush.bf16.msra.mxu0 %v3034
    %3062 = vmatmul.bf16.gmra.mxu0 %v3043
    %v3063 = vpop.f32.mrf.mxu0
    %v3064 = vadd.f32 0.0, %v3063
    %v3065 = vpop.f32.mrf.mxu0
    %v3066 = vadd.f32 0.0, %v3065
    %3067 = vmatmul.bf16.gmra.mxu0 %v3046
    %v3068 = vpop.f32.mrf.mxu0
    %v3069 = vadd.f32 0.0, %v3068
    %v3070 = vpop.f32.mrf.mxu0
    %v3071 = vadd.f32 0.0, %v3070
    %3072 = vmatmul.bf16.gmra.mxu0 %v3049
    %v3073 = vpop.f32.mrf.mxu0
    %v3074 = vadd.f32 0.0, %v3073
    %v3075 = vpop.f32.mrf.mxu0
    %v3076 = vadd.f32 0.0, %v3075
    %3077 = vmatmul.bf16.gmra.mxu0 %v3052
    %v3078 = vpop.f32.mrf.mxu0
    %v3079 = vadd.f32 0.0, %v3078
    %v3080 = vpop.f32.mrf.mxu0
    %v3081 = vadd.f32 0.0, %v3080
    %3082 = vdwg.mxu0
    %v3091 = vunpack.c.l.b16 %v2812
    %v3092 = vunpack.c.l.b16 %v2813
    %v3093 = vunpack.c.l.b16 %v2814
    %v3094 = vunpack.c.l.b16 %v2815
    %v3095 = vunpack.c.l.b16 %v2816
    %v3096 = vunpack.c.l.b16 %v2817
    %v3097 = vunpack.c.l.b16 %v2818
    %v3098 = vunpack.c.l.b16 %v2819
    %v3099 = vpack.c.b16 %v3092, %v3091
    %v3100 = vpack.c.b16 %v3094, %v3093
    %v3101 = vpack.c.b16 %v3096, %v3095
    %v3102 = vpack.c.b16 %v3098, %v3097
    %v3103 = vunpack.c.l.b16 %v1388
    %v3104 = vunpack.c.l.b16 %v1390
    %v3105 = vunpack.c.l.b16 %v1392
    %v3106 = vunpack.c.l.b16 %v1394
    %v3107 = vunpack.c.l.b16 %v1396
    %v3108 = vunpack.c.l.b16 %v1398
    %v3109 = vunpack.c.l.b16 %v1400
    %v3110 = vunpack.c.l.b16 %v1402
    %v3111 = vpack.c.b16 %v3104, %v3103
    %v3112 = vpack.c.b16 %v3106, %v3105
    %v3113 = vpack.c.b16 %v3108, %v3107
    %v3114 = vpack.c.b16 %v3110, %v3109
    %v3120 = vsel %vm417, %v3099, 0
    %v3123 = vsel %vm417, %v3100, 0
    %v3126 = vsel %vm417, %v3101, 0
    %v3129 = vsel %vm417, %v3102, 0
    %3131 = vmatpush.bf16.msra.mxu0 0
    %3132 = vmatpush.bf16.msra.mxu0 0
    %3133 = vmatpush.bf16.msra.mxu0 0
    %3134 = vmatpush.bf16.msra.mxu0 0
    %3135 = vmatpush.bf16.msra.mxu0 %v3114
    %3136 = vmatpush.bf16.msra.mxu0 %v3113
    %3137 = vmatpush.bf16.msra.mxu0 %v3112
    %3138 = vmatpush.bf16.msra.mxu0 %v3111
    %3139 = vmatmul.bf16.gmra.mxu0 %v3120
    %v3140 = vpop.f32.mrf.mxu0
    %v3141 = vadd.f32 0.0, %v3140
    %v3142 = vpop.f32.mrf.mxu0
    %v3143 = vadd.f32 0.0, %v3142
    %3144 = vmatmul.bf16.gmra.mxu0 %v3123
    %v3145 = vpop.f32.mrf.mxu0
    %v3146 = vadd.f32 0.0, %v3145
    %v3147 = vpop.f32.mrf.mxu0
    %v3148 = vadd.f32 0.0, %v3147
    %3149 = vmatmul.bf16.gmra.mxu0 %v3126
    %v3150 = vpop.f32.mrf.mxu0
    %v3151 = vadd.f32 0.0, %v3150
    %v3152 = vpop.f32.mrf.mxu0
    %v3153 = vadd.f32 0.0, %v3152
    %3154 = vmatmul.bf16.gmra.mxu0 %v3129
    %v3155 = vpop.f32.mrf.mxu0
    %v3156 = vadd.f32 0.0, %v3155
    %v3157 = vpop.f32.mrf.mxu0
    %v3158 = vadd.f32 0.0, %v3157
    %3159 = vdwg.mxu0
    %v3168 = vunpack.c.l.b16 %v2820
    %v3169 = vunpack.c.l.b16 %v2821
    %v3170 = vunpack.c.l.b16 %v2822
    %v3171 = vunpack.c.l.b16 %v2823
    %v3172 = vunpack.c.l.b16 %v2824
    %v3173 = vunpack.c.l.b16 %v2825
    %v3174 = vunpack.c.l.b16 %v2826
    %v3175 = vunpack.c.l.b16 %v2827
    %v3176 = vpack.c.b16 %v3169, %v3168
    %v3177 = vpack.c.b16 %v3171, %v3170
    %v3178 = vpack.c.b16 %v3173, %v3172
    %v3179 = vpack.c.b16 %v3175, %v3174
    %v3180 = vunpack.c.l.b16 %v1404
    %v3181 = vunpack.c.l.b16 %v1406
    %v3182 = vunpack.c.l.b16 %v1408
    %v3183 = vunpack.c.l.b16 %v1410
    %v3184 = vunpack.c.l.b16 %v1412
    %v3185 = vunpack.c.l.b16 %v1414
    %v3186 = vunpack.c.l.b16 %v1416
    %v3187 = vunpack.c.l.b16 %v1418
    %v3188 = vpack.c.b16 %v3181, %v3180
    %v3189 = vpack.c.b16 %v3183, %v3182
    %v3190 = vpack.c.b16 %v3185, %v3184
    %v3191 = vpack.c.b16 %v3187, %v3186
    %v3197 = vsel %vm417, %v3176, 0
    %v3200 = vsel %vm417, %v3177, 0
    %v3203 = vsel %vm417, %v3178, 0
    %v3206 = vsel %vm417, %v3179, 0
    %3208 = vmatpush.bf16.msra.mxu0 0
    %3209 = vmatpush.bf16.msra.mxu0 0
    %3210 = vmatpush.bf16.msra.mxu0 0
    %3211 = vmatpush.bf16.msra.mxu0 0
    %3212 = vmatpush.bf16.msra.mxu0 %v3191
    %3213 = vmatpush.bf16.msra.mxu0 %v3190
    %3214 = vmatpush.bf16.msra.mxu0 %v3189
    %3215 = vmatpush.bf16.msra.mxu0 %v3188
    %3216 = vmatmul.bf16.gmra.mxu0 %v3197
    %v3217 = vpop.f32.mrf.mxu0
    %v3218 = vadd.f32 0.0, %v3217
    %v3219 = vpop.f32.mrf.mxu0
    %v3220 = vadd.f32 0.0, %v3219
    %3221 = vmatmul.bf16.gmra.mxu0 %v3200
    %v3222 = vpop.f32.mrf.mxu0
    %v3223 = vadd.f32 0.0, %v3222
    %v3224 = vpop.f32.mrf.mxu0
    %v3225 = vadd.f32 0.0, %v3224
    %3226 = vmatmul.bf16.gmra.mxu0 %v3203
    %v3227 = vpop.f32.mrf.mxu0
    %v3228 = vadd.f32 0.0, %v3227
    %v3229 = vpop.f32.mrf.mxu0
    %v3230 = vadd.f32 0.0, %v3229
    %3231 = vmatmul.bf16.gmra.mxu0 %v3206
    %v3232 = vpop.f32.mrf.mxu0
    %v3233 = vadd.f32 0.0, %v3232
    %v3234 = vpop.f32.mrf.mxu0
    %v3235 = vadd.f32 0.0, %v3234
    %3236 = vdwg.mxu0
    %v3245 = vunpack.c.l.b16 %v2828
    %v3246 = vunpack.c.l.b16 %v2829
    %v3247 = vunpack.c.l.b16 %v2830
    %v3248 = vunpack.c.l.b16 %v2831
    %v3249 = vunpack.c.l.b16 %v2832
    %v3250 = vunpack.c.l.b16 %v2833
    %v3251 = vunpack.c.l.b16 %v2834
    %v3252 = vunpack.c.l.b16 %v2835
    %v3253 = vpack.c.b16 %v3246, %v3245
    %v3254 = vpack.c.b16 %v3248, %v3247
    %v3255 = vpack.c.b16 %v3250, %v3249
    %v3256 = vpack.c.b16 %v3252, %v3251
    %v3257 = vunpack.c.l.b16 %v1420
    %v3258 = vunpack.c.l.b16 %v1422
    %v3259 = vunpack.c.l.b16 %v1424
    %v3260 = vunpack.c.l.b16 %v1426
    %v3261 = vunpack.c.l.b16 %v1428
    %v3262 = vunpack.c.l.b16 %v1430
    %v3263 = vunpack.c.l.b16 %v1432
    %v3264 = vunpack.c.l.b16 %v1434
    %v3265 = vpack.c.b16 %v3258, %v3257
    %v3266 = vpack.c.b16 %v3260, %v3259
    %v3267 = vpack.c.b16 %v3262, %v3261
    %v3268 = vpack.c.b16 %v3264, %v3263
    %v3274 = vsel %vm417, %v3253, 0
    %v3277 = vsel %vm417, %v3254, 0
    %v3280 = vsel %vm417, %v3255, 0
    %v3283 = vsel %vm417, %v3256, 0
    %3285 = vmatpush.bf16.msra.mxu0 0
    %3286 = vmatpush.bf16.msra.mxu0 0
    %3287 = vmatpush.bf16.msra.mxu0 0
    %3288 = vmatpush.bf16.msra.mxu0 0
    %3289 = vmatpush.bf16.msra.mxu0 %v3268
    %3290 = vmatpush.bf16.msra.mxu0 %v3267
    %3291 = vmatpush.bf16.msra.mxu0 %v3266
    %3292 = vmatpush.bf16.msra.mxu0 %v3265
    %3293 = vmatmul.bf16.gmra.mxu0 %v3274
    %v3294 = vpop.f32.mrf.mxu0
    %v3295 = vadd.f32 0.0, %v3294
    %v3296 = vpop.f32.mrf.mxu0
    %v3297 = vadd.f32 0.0, %v3296
    %3298 = vmatmul.bf16.gmra.mxu0 %v3277
    %v3299 = vpop.f32.mrf.mxu0
    %v3300 = vadd.f32 0.0, %v3299
    %v3301 = vpop.f32.mrf.mxu0
    %v3302 = vadd.f32 0.0, %v3301
    %3303 = vmatmul.bf16.gmra.mxu0 %v3280
    %v3304 = vpop.f32.mrf.mxu0
    %v3305 = vadd.f32 0.0, %v3304
    %v3306 = vpop.f32.mrf.mxu0
    %v3307 = vadd.f32 0.0, %v3306
    %3308 = vmatmul.bf16.gmra.mxu0 %v3283
    %v3309 = vpop.f32.mrf.mxu0
    %v3310 = vadd.f32 0.0, %v3309
    %v3311 = vpop.f32.mrf.mxu0
    %v3312 = vadd.f32 0.0, %v3311
    %3313 = vdwg.mxu0
    %v3322 = vunpack.c.l.b16 %v2836
    %v3323 = vunpack.c.l.b16 %v2837
    %v3324 = vunpack.c.l.b16 %v2838
    %v3325 = vunpack.c.l.b16 %v2839
    %v3326 = vunpack.c.l.b16 %v2840
    %v3327 = vunpack.c.l.b16 %v2841
    %v3328 = vunpack.c.l.b16 %v2842
    %v3329 = vunpack.c.l.b16 %v2843
    %v3330 = vpack.c.b16 %v3323, %v3322
    %v3331 = vpack.c.b16 %v3325, %v3324
    %v3332 = vpack.c.b16 %v3327, %v3326
    %v3333 = vpack.c.b16 %v3329, %v3328
    %v3334 = vunpack.c.l.b16 %v1436
    %v3335 = vunpack.c.l.b16 %v1438
    %v3336 = vunpack.c.l.b16 %v1440
    %v3337 = vunpack.c.l.b16 %v1442
    %v3338 = vunpack.c.l.b16 %v1444
    %v3339 = vunpack.c.l.b16 %v1446
    %v3340 = vunpack.c.l.b16 %v1448
    %v3341 = vunpack.c.l.b16 %v1450
    %v3342 = vpack.c.b16 %v3335, %v3334
    %v3343 = vpack.c.b16 %v3337, %v3336
    %v3344 = vpack.c.b16 %v3339, %v3338
    %v3345 = vpack.c.b16 %v3341, %v3340
    %v3351 = vsel %vm417, %v3330, 0
    %v3354 = vsel %vm417, %v3331, 0
    %v3357 = vsel %vm417, %v3332, 0
    %v3360 = vsel %vm417, %v3333, 0
    %3362 = vmatpush.bf16.msra.mxu0 0
    %3363 = vmatpush.bf16.msra.mxu0 0
    %3364 = vmatpush.bf16.msra.mxu0 0
    %3365 = vmatpush.bf16.msra.mxu0 0
    %3366 = vmatpush.bf16.msra.mxu0 %v3345
    %3367 = vmatpush.bf16.msra.mxu0 %v3344
    %3368 = vmatpush.bf16.msra.mxu0 %v3343
    %3369 = vmatpush.bf16.msra.mxu0 %v3342
    %3370 = vmatmul.bf16.gmra.mxu0 %v3351
    %v3371 = vpop.f32.mrf.mxu0
    %v3372 = vadd.f32 0.0, %v3371
    %v3373 = vpop.f32.mrf.mxu0
    %v3374 = vadd.f32 0.0, %v3373
    %3375 = vmatmul.bf16.gmra.mxu0 %v3354
    %v3376 = vpop.f32.mrf.mxu0
    %v3377 = vadd.f32 0.0, %v3376
    %v3378 = vpop.f32.mrf.mxu0
    %v3379 = vadd.f32 0.0, %v3378
    %3380 = vmatmul.bf16.gmra.mxu0 %v3357
    %v3381 = vpop.f32.mrf.mxu0
    %v3382 = vadd.f32 0.0, %v3381
    %v3383 = vpop.f32.mrf.mxu0
    %v3384 = vadd.f32 0.0, %v3383
    %3385 = vmatmul.bf16.gmra.mxu0 %v3360
    %v3386 = vpop.f32.mrf.mxu0
    %v3387 = vadd.f32 0.0, %v3386
    %v3388 = vpop.f32.mrf.mxu0
    %v3389 = vadd.f32 0.0, %v3388
    %3390 = vdwg.mxu0
    %v3399 = vunpack.c.l.b16 %v2844
    %v3400 = vunpack.c.l.b16 %v2845
    %v3401 = vunpack.c.l.b16 %v2846
    %v3402 = vunpack.c.l.b16 %v2847
    %v3403 = vunpack.c.l.b16 %v2848
    %v3404 = vunpack.c.l.b16 %v2849
    %v3405 = vunpack.c.l.b16 %v2850
    %v3406 = vunpack.c.l.b16 %v2851
    %v3407 = vpack.c.b16 %v3400, %v3399
    %v3408 = vpack.c.b16 %v3402, %v3401
    %v3409 = vpack.c.b16 %v3404, %v3403
    %v3410 = vpack.c.b16 %v3406, %v3405
    %v3411 = vunpack.c.l.b16 %v1452
    %v3412 = vunpack.c.l.b16 %v1454
    %v3413 = vunpack.c.l.b16 %v1456
    %v3414 = vunpack.c.l.b16 %v1458
    %v3415 = vunpack.c.l.b16 %v1460
    %v3416 = vunpack.c.l.b16 %v1462
    %v3417 = vunpack.c.l.b16 %v1464
    %v3418 = vunpack.c.l.b16 %v1466
    %v3419 = vpack.c.b16 %v3412, %v3411
    %v3420 = vpack.c.b16 %v3414, %v3413
    %v3421 = vpack.c.b16 %v3416, %v3415
    %v3422 = vpack.c.b16 %v3418, %v3417
    %v3428 = vsel %vm417, %v3407, 0
    %v3431 = vsel %vm417, %v3408, 0
    %v3434 = vsel %vm417, %v3409, 0
    %v3437 = vsel %vm417, %v3410, 0
    %3439 = vmatpush.bf16.msra.mxu0 0
    %3440 = vmatpush.bf16.msra.mxu0 0
    %3441 = vmatpush.bf16.msra.mxu0 0
    %3442 = vmatpush.bf16.msra.mxu0 0
    %3443 = vmatpush.bf16.msra.mxu0 %v3422
    %3444 = vmatpush.bf16.msra.mxu0 %v3421
    %3445 = vmatpush.bf16.msra.mxu0 %v3420
    %3446 = vmatpush.bf16.msra.mxu0 %v3419
    %3447 = vmatmul.bf16.gmra.mxu0 %v3428
    %v3448 = vpop.f32.mrf.mxu0
    %v3449 = vadd.f32 0.0, %v3448
    %v3450 = vpop.f32.mrf.mxu0
    %v3451 = vadd.f32 0.0, %v3450
    %3452 = vmatmul.bf16.gmra.mxu0 %v3431
    %v3453 = vpop.f32.mrf.mxu0
    %v3454 = vadd.f32 0.0, %v3453
    %v3455 = vpop.f32.mrf.mxu0
    %v3456 = vadd.f32 0.0, %v3455
    %3457 = vmatmul.bf16.gmra.mxu0 %v3434
    %v3458 = vpop.f32.mrf.mxu0
    %v3459 = vadd.f32 0.0, %v3458
    %v3460 = vpop.f32.mrf.mxu0
    %v3461 = vadd.f32 0.0, %v3460
    %3462 = vmatmul.bf16.gmra.mxu0 %v3437
    %v3463 = vpop.f32.mrf.mxu0
    %v3464 = vadd.f32 0.0, %v3463
    %v3465 = vpop.f32.mrf.mxu0
    %v3466 = vadd.f32 0.0, %v3465
    %3467 = vdwg.mxu0
    %3484 = vrot.lane.b32.xlu0 %v3064, 16
    %v3485 = vpop.permute.xlu0 %3484
    %3486 = vrot.lane.b32.xlu0 %v3066, 16
    %v3487 = vpop.permute.xlu0 %3486
    %3488 = vrot.lane.b32.xlu0 %v3069, 16
    %v3489 = vpop.permute.xlu0 %3488
    %3490 = vrot.lane.b32.xlu0 %v3071, 16
    %v3491 = vpop.permute.xlu0 %3490
    %3492 = vrot.lane.b32.xlu0 %v3074, 16
    %v3493 = vpop.permute.xlu0 %3492
    %3494 = vrot.lane.b32.xlu0 %v3076, 16
    %v3495 = vpop.permute.xlu0 %3494
    %3496 = vrot.lane.b32.xlu0 %v3079, 16
    %v3497 = vpop.permute.xlu0 %3496
    %3498 = vrot.lane.b32.xlu0 %v3081, 16
    %v3499 = vpop.permute.xlu0 %3498
    %3500 = vrot.lane.b32.xlu0 %v3141, 16
    %v3501 = vpop.permute.xlu0 %3500
    %3502 = vrot.lane.b32.xlu0 %v3143, 16
    %v3503 = vpop.permute.xlu0 %3502
    %3504 = vrot.lane.b32.xlu0 %v3146, 16
    %v3505 = vpop.permute.xlu0 %3504
    %3506 = vrot.lane.b32.xlu0 %v3148, 16
    %v3507 = vpop.permute.xlu0 %3506
    %3508 = vrot.lane.b32.xlu0 %v3151, 16
    %v3509 = vpop.permute.xlu0 %3508
    %3510 = vrot.lane.b32.xlu0 %v3153, 16
    %v3511 = vpop.permute.xlu0 %3510
    %3512 = vrot.lane.b32.xlu0 %v3156, 16
    %v3513 = vpop.permute.xlu0 %3512
    %3514 = vrot.lane.b32.xlu0 %v3158, 16
    %v3515 = vpop.permute.xlu0 %3514
    %3548 = vrot.lane.b32.xlu0 %v3218, 32
    %v3549 = vpop.permute.xlu0 %3548
    %3550 = vrot.lane.b32.xlu0 %v3220, 32
    %v3551 = vpop.permute.xlu0 %3550
    %3552 = vrot.lane.b32.xlu0 %v3223, 32
    %v3553 = vpop.permute.xlu0 %3552
    %3554 = vrot.lane.b32.xlu0 %v3225, 32
    %v3555 = vpop.permute.xlu0 %3554
    %3556 = vrot.lane.b32.xlu0 %v3228, 32
    %v3557 = vpop.permute.xlu0 %3556
    %3558 = vrot.lane.b32.xlu0 %v3230, 32
    %v3559 = vpop.permute.xlu0 %3558
    %3560 = vrot.lane.b32.xlu0 %v3233, 32
    %v3561 = vpop.permute.xlu0 %3560
    %3562 = vrot.lane.b32.xlu0 %v3235, 32
    %v3563 = vpop.permute.xlu0 %3562
    %3564 = vrot.lane.b32.xlu0 %v3295, 32
    %v3565 = vpop.permute.xlu0 %3564
    %3566 = vrot.lane.b32.xlu0 %v3297, 32
    %v3567 = vpop.permute.xlu0 %3566
    %3568 = vrot.lane.b32.xlu0 %v3300, 32
    %v3569 = vpop.permute.xlu0 %3568
    %3570 = vrot.lane.b32.xlu0 %v3302, 32
    %v3571 = vpop.permute.xlu0 %3570
    %3572 = vrot.lane.b32.xlu0 %v3305, 32
    %v3573 = vpop.permute.xlu0 %3572
    %3574 = vrot.lane.b32.xlu0 %v3307, 32
    %v3575 = vpop.permute.xlu0 %3574
    %3576 = vrot.lane.b32.xlu0 %v3310, 32
    %v3577 = vpop.permute.xlu0 %3576
    %3578 = vrot.lane.b32.xlu0 %v3312, 32
    %v3579 = vpop.permute.xlu0 %3578
    %3612 = vrot.lane.b32.xlu0 %v3372, 48
    %v3613 = vpop.permute.xlu0 %3612
    %3614 = vrot.lane.b32.xlu0 %v3374, 48
    %v3615 = vpop.permute.xlu0 %3614
    %3616 = vrot.lane.b32.xlu0 %v3377, 48
    %v3617 = vpop.permute.xlu0 %3616
    %3618 = vrot.lane.b32.xlu0 %v3379, 48
    %v3619 = vpop.permute.xlu0 %3618
    %3620 = vrot.lane.b32.xlu0 %v3382, 48
    %v3621 = vpop.permute.xlu0 %3620
    %3622 = vrot.lane.b32.xlu0 %v3384, 48
    %v3623 = vpop.permute.xlu0 %3622
    %3624 = vrot.lane.b32.xlu0 %v3387, 48
    %v3625 = vpop.permute.xlu0 %3624
    %3626 = vrot.lane.b32.xlu0 %v3389, 48
    %v3627 = vpop.permute.xlu0 %3626
    %3628 = vrot.lane.b32.xlu0 %v3449, 48
    %v3629 = vpop.permute.xlu0 %3628
    %3630 = vrot.lane.b32.xlu0 %v3451, 48
    %v3631 = vpop.permute.xlu0 %3630
    %3632 = vrot.lane.b32.xlu0 %v3454, 48
    %v3633 = vpop.permute.xlu0 %3632
    %3634 = vrot.lane.b32.xlu0 %v3456, 48
    %v3635 = vpop.permute.xlu0 %3634
    %3636 = vrot.lane.b32.xlu0 %v3459, 48
    %v3637 = vpop.permute.xlu0 %3636
    %3638 = vrot.lane.b32.xlu0 %v3461, 48
    %v3639 = vpop.permute.xlu0 %3638
    %3640 = vrot.lane.b32.xlu0 %v3464, 48
    %v3641 = vpop.permute.xlu0 %3640
    %3642 = vrot.lane.b32.xlu0 %v3466, 48
    %v3643 = vpop.permute.xlu0 %3642
    %v3660 = vsel %vm1491, %v2910, %v3485
    %v3661 = vsel %vm1491, %v2912, %v3487
    %v3662 = vsel %vm1491, %v2915, %v3489
    %v3663 = vsel %vm1491, %v2917, %v3491
    %v3664 = vsel %vm1491, %v2920, %v3493
    %v3665 = vsel %vm1491, %v2922, %v3495
    %v3666 = vsel %vm1491, %v2925, %v3497
    %v3667 = vsel %vm1491, %v2927, %v3499
    %v3668 = vsel %vm1491, %v2987, %v3501
    %v3669 = vsel %vm1491, %v2989, %v3503
    %v3670 = vsel %vm1491, %v2992, %v3505
    %v3671 = vsel %vm1491, %v2994, %v3507
    %v3672 = vsel %vm1491, %v2997, %v3509
    %v3673 = vsel %vm1491, %v2999, %v3511
    %v3674 = vsel %vm1491, %v3002, %v3513
    %v3675 = vsel %vm1491, %v3004, %v3515
    %v3676 = vsel %vm97, %v3660, %v3549
    %v3677 = vsel %vm97, %v3661, %v3551
    %v3678 = vsel %vm97, %v3662, %v3553
    %v3679 = vsel %vm97, %v3663, %v3555
    %v3680 = vsel %vm97, %v3664, %v3557
    %v3681 = vsel %vm97, %v3665, %v3559
    %v3682 = vsel %vm97, %v3666, %v3561
    %v3683 = vsel %vm97, %v3667, %v3563
    %v3684 = vsel %vm97, %v3668, %v3565
    %v3685 = vsel %vm97, %v3669, %v3567
    %v3686 = vsel %vm97, %v3670, %v3569
    %v3687 = vsel %vm97, %v3671, %v3571
    %v3688 = vsel %vm97, %v3672, %v3573
    %v3689 = vsel %vm97, %v3673, %v3575
    %v3690 = vsel %vm97, %v3674, %v3577
    %v3691 = vsel %vm97, %v3675, %v3579
    %vm3692 = vcmask 392192
    %v3693 = vsel %vm3692, %v3676, %v3613
    %v3694 = vsel %vm3692, %v3677, %v3615
    %v3695 = vsel %vm3692, %v3678, %v3617
    %v3696 = vsel %vm3692, %v3679, %v3619
    %v3697 = vsel %vm3692, %v3680, %v3621
    %v3698 = vsel %vm3692, %v3681, %v3623
    %v3699 = vsel %vm3692, %v3682, %v3625
    %v3700 = vsel %vm3692, %v3683, %v3627
    %v3701 = vsel %vm3692, %v3684, %v3629
    %v3702 = vsel %vm3692, %v3685, %v3631
    %v3703 = vsel %vm3692, %v3686, %v3633
    %v3704 = vsel %vm3692, %v3687, %v3635
    %v3705 = vsel %vm3692, %v3688, %v3637
    %v3706 = vsel %vm3692, %v3689, %v3639
    %v3707 = vsel %vm3692, %v3690, %v3641
    %v3708 = vsel %vm3692, %v3691, %v3643
    %v3709 = vpack.c.bf16 %v3694, %v3693
    %v3710 = vpack.c.bf16 %v3696, %v3695
    %v3711 = vpack.c.bf16 %v3698, %v3697
    %v3712 = vpack.c.bf16 %v3700, %v3699
    %v3713 = vpack.c.bf16 %v3702, %v3701
    %v3714 = vpack.c.bf16 %v3704, %v3703
    %v3715 = vpack.c.bf16 %v3706, %v3705
    %v3716 = vpack.c.bf16 %v3708, %v3707
    %v3717 = vld [vmem:[%s6] sm:$0xf]
    %v3718 = vld [vmem:[%s6 + $0x4] sm:$0xf]
    %v3719 = vld [vmem:[%s6 + $0x8] sm:$0xf]
    %v3720 = vld [vmem:[%s6 + $0xc] sm:$0xf]
    %v3721 = vld [vmem:[%s6 + $0x10] sm:$0xf]
    %v3722 = vld [vmem:[%s6 + $0x14] sm:$0xf]
    %v3723 = vld [vmem:[%s6 + $0x18] sm:$0xf]
    %v3724 = vld [vmem:[%s6 + $0x1c] sm:$0xf]
    %v3733 = vunpack.c.l.b16 %v3717
    %v3734 = vunpack.c.l.b16 %v3718
    %v3735 = vunpack.c.l.b16 %v3719
    %v3736 = vunpack.c.l.b16 %v3720
    %v3737 = vunpack.c.l.b16 %v3721
    %v3738 = vunpack.c.l.b16 %v3722
    %v3739 = vunpack.c.l.b16 %v3723
    %v3740 = vunpack.c.l.b16 %v3724
    %v3741 = vpack.c.b16 %v3734, %v3733
    %v3742 = vpack.c.b16 %v3736, %v3735
    %v3743 = vpack.c.b16 %v3738, %v3737
    %v3744 = vpack.c.b16 %v3740, %v3739
    %v3750 = vsel %vm417, %v3709, 0
    %v3753 = vsel %vm417, %v3710, 0
    %v3756 = vsel %vm417, %v3711, 0
    %v3759 = vsel %vm417, %v3712, 0
    %v3762 = vsel %vm417, %v3713, 0
    %v3765 = vsel %vm417, %v3714, 0
    %v3768 = vsel %vm417, %v3715, 0
    %v3771 = vsel %vm417, %v3716, 0
    %3773 = vmatpush.bf16.msra.mxu0 0
    %3774 = vmatpush.bf16.msra.mxu0 0
    %3775 = vmatpush.bf16.msra.mxu0 0
    %3776 = vmatpush.bf16.msra.mxu0 0
    %3777 = vmatpush.bf16.msra.mxu0 %v3744
    %3778 = vmatpush.bf16.msra.mxu0 %v3743
    %3779 = vmatpush.bf16.msra.mxu0 %v3742
    %3780 = vmatpush.bf16.msra.mxu0 %v3741
    %3781 = vmatmul.bf16.gmra.mxu0 %v3750
    %v3782 = vpop.f32.mrf.mxu0
    %v3783 = vadd.f32 0.0, %v3782
    %v3784 = vpop.f32.mrf.mxu0
    %v3785 = vadd.f32 0.0, %v3784
    %3786 = vmatmul.bf16.gmra.mxu0 %v3753
    %v3787 = vpop.f32.mrf.mxu0
    %v3788 = vadd.f32 0.0, %v3787
    %v3789 = vpop.f32.mrf.mxu0
    %v3790 = vadd.f32 0.0, %v3789
    %3791 = vmatmul.bf16.gmra.mxu0 %v3756
    %v3792 = vpop.f32.mrf.mxu0
    %v3793 = vadd.f32 0.0, %v3792
    %v3794 = vpop.f32.mrf.mxu0
    %v3795 = vadd.f32 0.0, %v3794
    %3796 = vmatmul.bf16.gmra.mxu0 %v3759
    %v3797 = vpop.f32.mrf.mxu0
    %v3798 = vadd.f32 0.0, %v3797
    %v3799 = vpop.f32.mrf.mxu0
    %v3800 = vadd.f32 0.0, %v3799
    %3801 = vmatmul.bf16.gmra.mxu0 %v3762
    %v3802 = vpop.f32.mrf.mxu0
    %v3803 = vadd.f32 0.0, %v3802
    %v3804 = vpop.f32.mrf.mxu0
    %v3805 = vadd.f32 0.0, %v3804
    %3806 = vmatmul.bf16.gmra.mxu0 %v3765
    %v3807 = vpop.f32.mrf.mxu0
    %v3808 = vadd.f32 0.0, %v3807
    %v3809 = vpop.f32.mrf.mxu0
    %v3810 = vadd.f32 0.0, %v3809
    %3811 = vmatmul.bf16.gmra.mxu0 %v3768
    %v3812 = vpop.f32.mrf.mxu0
    %v3813 = vadd.f32 0.0, %v3812
    %v3814 = vpop.f32.mrf.mxu0
    %v3815 = vadd.f32 0.0, %v3814
    %3816 = vmatmul.bf16.gmra.mxu0 %v3771
    %v3817 = vpop.f32.mrf.mxu0
    %v3818 = vadd.f32 0.0, %v3817
    %v3819 = vpop.f32.mrf.mxu0
    %v3820 = vadd.f32 0.0, %v3819
    %3821 = vdwg.mxu0
    %v3822 = vrot.slane %v94, 5
    %v3823 = vperm.slane %v3822, 0
    %v3825 = vadd.f32 %v3783, %v3823
    %v3826 = vadd.f32 %v3785, %v3823
    %v3827 = vadd.f32 %v3788, %v3823
    %v3828 = vadd.f32 %v3790, %v3823
    %v3829 = vadd.f32 %v3793, %v3823
    %v3830 = vadd.f32 %v3795, %v3823
    %v3831 = vadd.f32 %v3798, %v3823
    %v3832 = vadd.f32 %v3800, %v3823
    %v3833 = vadd.f32 %v3803, %v3823
    %v3834 = vadd.f32 %v3805, %v3823
    %v3835 = vadd.f32 %v3808, %v3823
    %v3836 = vadd.f32 %v3810, %v3823
    %v3837 = vadd.f32 %v3813, %v3823
    %v3838 = vadd.f32 %v3815, %v3823
    %v3839 = vadd.f32 %v3818, %v3823
    %v3840 = vadd.f32 %v3820, %v3823
    %v3841 = vadd.f32 %v3825, %v401
    %v3842 = vadd.f32 %v3826, %v402
    %v3843 = vadd.f32 %v3827, %v403
    %v3844 = vadd.f32 %v3828, %v404
    %v3845 = vadd.f32 %v3829, %v405
    %v3846 = vadd.f32 %v3830, %v406
    %v3847 = vadd.f32 %v3831, %v407
    %v3848 = vadd.f32 %v3832, %v408
    %v3849 = vadd.f32 %v3833, %v409
    %v3850 = vadd.f32 %v3834, %v410
    %v3851 = vadd.f32 %v3835, %v411
    %v3852 = vadd.f32 %v3836, %v412
    %v3853 = vadd.f32 %v3837, %v413
    %v3854 = vadd.f32 %v3838, %v414
    %v3855 = vadd.f32 %v3839, %v415
    %v3856 = vadd.f32 %v3840, %v416
    %v3857 = vsel %vm417, %v3841, 0.0
    %3858 = vadd.xlane.f32.xlu0 %v3857
    %v3859 = vpop.xlane.xlu0 %3858
    %v3860 = vsel %vm417, %v3842, 0.0
    %3861 = vadd.xlane.f32.xlu0 %v3860
    %v3862 = vpop.xlane.xlu0 %3861
    %v3863 = vsel %vm417, %v3843, 0.0
    %3864 = vadd.xlane.f32.xlu0 %v3863
    %v3865 = vpop.xlane.xlu0 %3864
    %v3866 = vsel %vm417, %v3844, 0.0
    %3867 = vadd.xlane.f32.xlu0 %v3866
    %v3868 = vpop.xlane.xlu0 %3867
    %v3869 = vsel %vm417, %v3845, 0.0
    %3870 = vadd.xlane.f32.xlu0 %v3869
    %v3871 = vpop.xlane.xlu0 %3870
    %v3872 = vsel %vm417, %v3846, 0.0
    %3873 = vadd.xlane.f32.xlu0 %v3872
    %v3874 = vpop.xlane.xlu0 %3873
    %v3875 = vsel %vm417, %v3847, 0.0
    %3876 = vadd.xlane.f32.xlu0 %v3875
    %v3877 = vpop.xlane.xlu0 %3876
    %v3878 = vsel %vm417, %v3848, 0.0
    %3879 = vadd.xlane.f32.xlu0 %v3878
    %v3880 = vpop.xlane.xlu0 %3879
    %v3881 = vsel %vm417, %v3849, 0.0
    %3882 = vadd.xlane.f32.xlu0 %v3881
    %v3883 = vpop.xlane.xlu0 %3882
    %v3884 = vsel %vm417, %v3850, 0.0
    %3885 = vadd.xlane.f32.xlu0 %v3884
    %v3886 = vpop.xlane.xlu0 %3885
    %v3887 = vsel %vm417, %v3851, 0.0
    %3888 = vadd.xlane.f32.xlu0 %v3887
    %v3889 = vpop.xlane.xlu0 %3888
    %v3890 = vsel %vm417, %v3852, 0.0
    %3891 = vadd.xlane.f32.xlu0 %v3890
    %v3892 = vpop.xlane.xlu0 %3891
    %v3893 = vsel %vm417, %v3853, 0.0
    %3894 = vadd.xlane.f32.xlu0 %v3893
    %v3895 = vpop.xlane.xlu0 %3894
    %v3896 = vsel %vm417, %v3854, 0.0
    %3897 = vadd.xlane.f32.xlu0 %v3896
    %v3898 = vpop.xlane.xlu0 %3897
    %v3899 = vsel %vm417, %v3855, 0.0
    %3900 = vadd.xlane.f32.xlu0 %v3899
    %v3901 = vpop.xlane.xlu0 %3900
    %v3902 = vsel %vm417, %v3856, 0.0
    %3903 = vadd.xlane.f32.xlu0 %v3902
    %v3904 = vpop.xlane.xlu0 %3903
    %v3905 = vmul.f32 %v3859, %v146
    %v3906 = vmul.f32 %v3862, %v146
    %v3907 = vmul.f32 %v3865, %v146
    %v3908 = vmul.f32 %v3868, %v146
    %v3909 = vmul.f32 %v3871, %v146
    %v3910 = vmul.f32 %v3874, %v146
    %v3911 = vmul.f32 %v3877, %v146
    %v3912 = vmul.f32 %v3880, %v146
    %v3913 = vmul.f32 %v3883, %v146
    %v3914 = vmul.f32 %v3886, %v146
    %v3915 = vmul.f32 %v3889, %v146
    %v3916 = vmul.f32 %v3892, %v146
    %v3917 = vmul.f32 %v3895, %v146
    %v3918 = vmul.f32 %v3898, %v146
    %v3919 = vmul.f32 %v3901, %v146
    %v3920 = vmul.f32 %v3904, %v146
    %v3921 = vsub.f32 %v3841, %v3905
    %v3922 = vsub.f32 %v3842, %v3906
    %v3923 = vsub.f32 %v3843, %v3907
    %v3924 = vsub.f32 %v3844, %v3908
    %v3925 = vsub.f32 %v3845, %v3909
    %v3926 = vsub.f32 %v3846, %v3910
    %v3927 = vsub.f32 %v3847, %v3911
    %v3928 = vsub.f32 %v3848, %v3912
    %v3929 = vsub.f32 %v3849, %v3913
    %v3930 = vsub.f32 %v3850, %v3914
    %v3931 = vsub.f32 %v3851, %v3915
    %v3932 = vsub.f32 %v3852, %v3916
    %v3933 = vsub.f32 %v3853, %v3917
    %v3934 = vsub.f32 %v3854, %v3918
    %v3935 = vsub.f32 %v3855, %v3919
    %v3936 = vsub.f32 %v3856, %v3920
    %v3937 = vmul.f32 %v3921, %v3921
    %v3938 = vmul.f32 %v3922, %v3922
    %v3939 = vmul.f32 %v3923, %v3923
    %v3940 = vmul.f32 %v3924, %v3924
    %v3941 = vmul.f32 %v3925, %v3925
    %v3942 = vmul.f32 %v3926, %v3926
    %v3943 = vmul.f32 %v3927, %v3927
    %v3944 = vmul.f32 %v3928, %v3928
    %v3945 = vmul.f32 %v3929, %v3929
    %v3946 = vmul.f32 %v3930, %v3930
    %v3947 = vmul.f32 %v3931, %v3931
    %v3948 = vmul.f32 %v3932, %v3932
    %v3949 = vmul.f32 %v3933, %v3933
    %v3950 = vmul.f32 %v3934, %v3934
    %v3951 = vmul.f32 %v3935, %v3935
    %v3952 = vmul.f32 %v3936, %v3936
    %v3953 = vsel %vm417, %v3937, 0.0
    %3954 = vadd.xlane.f32.xlu0 %v3953
    %v3955 = vpop.xlane.xlu0 %3954
    %v3956 = vsel %vm417, %v3938, 0.0
    %3957 = vadd.xlane.f32.xlu0 %v3956
    %v3958 = vpop.xlane.xlu0 %3957
    %v3959 = vsel %vm417, %v3939, 0.0
    %3960 = vadd.xlane.f32.xlu0 %v3959
    %v3961 = vpop.xlane.xlu0 %3960
    %v3962 = vsel %vm417, %v3940, 0.0
    %3963 = vadd.xlane.f32.xlu0 %v3962
    %v3964 = vpop.xlane.xlu0 %3963
    %v3965 = vsel %vm417, %v3941, 0.0
    %3966 = vadd.xlane.f32.xlu0 %v3965
    %v3967 = vpop.xlane.xlu0 %3966
    %v3968 = vsel %vm417, %v3942, 0.0
    %3969 = vadd.xlane.f32.xlu0 %v3968
    %v3970 = vpop.xlane.xlu0 %3969
    %v3971 = vsel %vm417, %v3943, 0.0
    %3972 = vadd.xlane.f32.xlu0 %v3971
    %v3973 = vpop.xlane.xlu0 %3972
    %v3974 = vsel %vm417, %v3944, 0.0
    %3975 = vadd.xlane.f32.xlu0 %v3974
    %v3976 = vpop.xlane.xlu0 %3975
    %v3977 = vsel %vm417, %v3945, 0.0
    %3978 = vadd.xlane.f32.xlu0 %v3977
    %v3979 = vpop.xlane.xlu0 %3978
    %v3980 = vsel %vm417, %v3946, 0.0
    %3981 = vadd.xlane.f32.xlu0 %v3980
    %v3982 = vpop.xlane.xlu0 %3981
    %v3983 = vsel %vm417, %v3947, 0.0
    %3984 = vadd.xlane.f32.xlu0 %v3983
    %v3985 = vpop.xlane.xlu0 %3984
    %v3986 = vsel %vm417, %v3948, 0.0
    %3987 = vadd.xlane.f32.xlu0 %v3986
    %v3988 = vpop.xlane.xlu0 %3987
    %v3989 = vsel %vm417, %v3949, 0.0
    %3990 = vadd.xlane.f32.xlu0 %v3989
    %v3991 = vpop.xlane.xlu0 %3990
    %v3992 = vsel %vm417, %v3950, 0.0
    %3993 = vadd.xlane.f32.xlu0 %v3992
    %v3994 = vpop.xlane.xlu0 %3993
    %v3995 = vsel %vm417, %v3951, 0.0
    %3996 = vadd.xlane.f32.xlu0 %v3995
    %v3997 = vpop.xlane.xlu0 %3996
    %v3998 = vsel %vm417, %v3952, 0.0
    %3999 = vadd.xlane.f32.xlu0 %v3998
    %v4000 = vpop.xlane.xlu0 %3999
    %v4001 = vmul.f32 %v3955, %v146
    %v4002 = vmul.f32 %v3958, %v146
    %v4003 = vmul.f32 %v3961, %v146
    %v4004 = vmul.f32 %v3964, %v146
    %v4005 = vmul.f32 %v3967, %v146
    %v4006 = vmul.f32 %v3970, %v146
    %v4007 = vmul.f32 %v3973, %v146
    %v4008 = vmul.f32 %v3976, %v146
    %v4009 = vmul.f32 %v3979, %v146
    %v4010 = vmul.f32 %v3982, %v146
    %v4011 = vmul.f32 %v3985, %v146
    %v4012 = vmul.f32 %v3988, %v146
    %v4013 = vmul.f32 %v3991, %v146
    %v4014 = vmul.f32 %v3994, %v146
    %v4015 = vmul.f32 %v3997, %v146
    %v4016 = vmul.f32 %v4000, %v146
    %v4017 = vadd.f32 %v4001, 1e-05
    %v4018 = vadd.f32 %v4002, 1e-05
    %v4019 = vadd.f32 %v4003, 1e-05
    %v4020 = vadd.f32 %v4004, 1e-05
    %v4021 = vadd.f32 %v4005, 1e-05
    %v4022 = vadd.f32 %v4006, 1e-05
    %v4023 = vadd.f32 %v4007, 1e-05
    %v4024 = vadd.f32 %v4008, 1e-05
    %v4025 = vadd.f32 %v4009, 1e-05
    %v4026 = vadd.f32 %v4010, 1e-05
    %v4027 = vadd.f32 %v4011, 1e-05
    %v4028 = vadd.f32 %v4012, 1e-05
    %v4029 = vadd.f32 %v4013, 1e-05
    %v4030 = vadd.f32 %v4014, 1e-05
    %v4031 = vadd.f32 %v4015, 1e-05
    %v4032 = vadd.f32 %v4016, 1e-05
    %v4033 = vrsqrt.pop %v4017
    %v4034 = vmul.f32 %v4033, %v4017
    %v4035 = vmul.f32 %v4034, %v4033
    %v4036 = vmul.f32 0.5, %v4035
    %v4037 = vsub.f32 1.5, %v4036
    %v4038 = vmul.f32 %v4033, %v4037
    %vm4039 = vweird.f32 %v4017
    %vm4040 = vweird.f32 %v4033
    %vm4041 = vmor %vm4039, %vm4040
    %v4042 = vsel %vm4041, %v4033, %v4038
    %v4043 = vrsqrt.pop %v4018
    %v4044 = vmul.f32 %v4043, %v4018
    %v4045 = vmul.f32 %v4044, %v4043
    %v4046 = vmul.f32 0.5, %v4045
    %v4047 = vsub.f32 1.5, %v4046
    %v4048 = vmul.f32 %v4043, %v4047
    %vm4049 = vweird.f32 %v4018
    %vm4050 = vweird.f32 %v4043
    %vm4051 = vmor %vm4049, %vm4050
    %v4052 = vsel %vm4051, %v4043, %v4048
    %v4053 = vrsqrt.pop %v4019
    %v4054 = vmul.f32 %v4053, %v4019
    %v4055 = vmul.f32 %v4054, %v4053
    %v4056 = vmul.f32 0.5, %v4055
    %v4057 = vsub.f32 1.5, %v4056
    %v4058 = vmul.f32 %v4053, %v4057
    %vm4059 = vweird.f32 %v4019
    %vm4060 = vweird.f32 %v4053
    %vm4061 = vmor %vm4059, %vm4060
    %v4062 = vsel %vm4061, %v4053, %v4058
    %v4063 = vrsqrt.pop %v4020
    %v4064 = vmul.f32 %v4063, %v4020
    %v4065 = vmul.f32 %v4064, %v4063
    %v4066 = vmul.f32 0.5, %v4065
    %v4067 = vsub.f32 1.5, %v4066
    %v4068 = vmul.f32 %v4063, %v4067
    %vm4069 = vweird.f32 %v4020
    %vm4070 = vweird.f32 %v4063
    %vm4071 = vmor %vm4069, %vm4070
    %v4072 = vsel %vm4071, %v4063, %v4068
    %v4073 = vrsqrt.pop %v4021
    %v4074 = vmul.f32 %v4073, %v4021
    %v4075 = vmul.f32 %v4074, %v4073
    %v4076 = vmul.f32 0.5, %v4075
    %v4077 = vsub.f32 1.5, %v4076
    %v4078 = vmul.f32 %v4073, %v4077
    %vm4079 = vweird.f32 %v4021
    %vm4080 = vweird.f32 %v4073
    %vm4081 = vmor %vm4079, %vm4080
    %v4082 = vsel %vm4081, %v4073, %v4078
    %v4083 = vrsqrt.pop %v4022
    %v4084 = vmul.f32 %v4083, %v4022
    %v4085 = vmul.f32 %v4084, %v4083
    %v4086 = vmul.f32 0.5, %v4085
    %v4087 = vsub.f32 1.5, %v4086
    %v4088 = vmul.f32 %v4083, %v4087
    %vm4089 = vweird.f32 %v4022
    %vm4090 = vweird.f32 %v4083
    %vm4091 = vmor %vm4089, %vm4090
    %v4092 = vsel %vm4091, %v4083, %v4088
    %v4093 = vrsqrt.pop %v4023
    %v4094 = vmul.f32 %v4093, %v4023
    %v4095 = vmul.f32 %v4094, %v4093
    %v4096 = vmul.f32 0.5, %v4095
    %v4097 = vsub.f32 1.5, %v4096
    %v4098 = vmul.f32 %v4093, %v4097
    %vm4099 = vweird.f32 %v4023
    %vm4100 = vweird.f32 %v4093
    %vm4101 = vmor %vm4099, %vm4100
    %v4102 = vsel %vm4101, %v4093, %v4098
    %v4103 = vrsqrt.pop %v4024
    %v4104 = vmul.f32 %v4103, %v4024
    %v4105 = vmul.f32 %v4104, %v4103
    %v4106 = vmul.f32 0.5, %v4105
    %v4107 = vsub.f32 1.5, %v4106
    %v4108 = vmul.f32 %v4103, %v4107
    %vm4109 = vweird.f32 %v4024
    %vm4110 = vweird.f32 %v4103
    %vm4111 = vmor %vm4109, %vm4110
    %v4112 = vsel %vm4111, %v4103, %v4108
    %v4113 = vrsqrt.pop %v4025
    %v4114 = vmul.f32 %v4113, %v4025
    %v4115 = vmul.f32 %v4114, %v4113
    %v4116 = vmul.f32 0.5, %v4115
    %v4117 = vsub.f32 1.5, %v4116
    %v4118 = vmul.f32 %v4113, %v4117
    %vm4119 = vweird.f32 %v4025
    %vm4120 = vweird.f32 %v4113
    %vm4121 = vmor %vm4119, %vm4120
    %v4122 = vsel %vm4121, %v4113, %v4118
    %v4123 = vrsqrt.pop %v4026
    %v4124 = vmul.f32 %v4123, %v4026
    %v4125 = vmul.f32 %v4124, %v4123
    %v4126 = vmul.f32 0.5, %v4125
    %v4127 = vsub.f32 1.5, %v4126
    %v4128 = vmul.f32 %v4123, %v4127
    %vm4129 = vweird.f32 %v4026
    %vm4130 = vweird.f32 %v4123
    %vm4131 = vmor %vm4129, %vm4130
    %v4132 = vsel %vm4131, %v4123, %v4128
    %v4133 = vrsqrt.pop %v4027
    %v4134 = vmul.f32 %v4133, %v4027
    %v4135 = vmul.f32 %v4134, %v4133
    %v4136 = vmul.f32 0.5, %v4135
    %v4137 = vsub.f32 1.5, %v4136
    %v4138 = vmul.f32 %v4133, %v4137
    %vm4139 = vweird.f32 %v4027
    %vm4140 = vweird.f32 %v4133
    %vm4141 = vmor %vm4139, %vm4140
    %v4142 = vsel %vm4141, %v4133, %v4138
    %v4143 = vrsqrt.pop %v4028
    %v4144 = vmul.f32 %v4143, %v4028
    %v4145 = vmul.f32 %v4144, %v4143
    %v4146 = vmul.f32 0.5, %v4145
    %v4147 = vsub.f32 1.5, %v4146
    %v4148 = vmul.f32 %v4143, %v4147
    %vm4149 = vweird.f32 %v4028
    %vm4150 = vweird.f32 %v4143
    %vm4151 = vmor %vm4149, %vm4150
    %v4152 = vsel %vm4151, %v4143, %v4148
    %v4153 = vrsqrt.pop %v4029
    %v4154 = vmul.f32 %v4153, %v4029
    %v4155 = vmul.f32 %v4154, %v4153
    %v4156 = vmul.f32 0.5, %v4155
    %v4157 = vsub.f32 1.5, %v4156
    %v4158 = vmul.f32 %v4153, %v4157
    %vm4159 = vweird.f32 %v4029
    %vm4160 = vweird.f32 %v4153
    %vm4161 = vmor %vm4159, %vm4160
    %v4162 = vsel %vm4161, %v4153, %v4158
    %v4163 = vrsqrt.pop %v4030
    %v4164 = vmul.f32 %v4163, %v4030
    %v4165 = vmul.f32 %v4164, %v4163
    %v4166 = vmul.f32 0.5, %v4165
    %v4167 = vsub.f32 1.5, %v4166
    %v4168 = vmul.f32 %v4163, %v4167
    %vm4169 = vweird.f32 %v4030
    %vm4170 = vweird.f32 %v4163
    %vm4171 = vmor %vm4169, %vm4170
    %v4172 = vsel %vm4171, %v4163, %v4168
    %v4173 = vrsqrt.pop %v4031
    %v4174 = vmul.f32 %v4173, %v4031
    %v4175 = vmul.f32 %v4174, %v4173
    %v4176 = vmul.f32 0.5, %v4175
    %v4177 = vsub.f32 1.5, %v4176
    %v4178 = vmul.f32 %v4173, %v4177
    %vm4179 = vweird.f32 %v4031
    %vm4180 = vweird.f32 %v4173
    %vm4181 = vmor %vm4179, %vm4180
    %v4182 = vsel %vm4181, %v4173, %v4178
    %v4183 = vrsqrt.pop %v4032
    %v4184 = vmul.f32 %v4183, %v4032
    %v4185 = vmul.f32 %v4184, %v4183
    %v4186 = vmul.f32 0.5, %v4185
    %v4187 = vsub.f32 1.5, %v4186
    %v4188 = vmul.f32 %v4183, %v4187
    %vm4189 = vweird.f32 %v4032
    %vm4190 = vweird.f32 %v4183
    %vm4191 = vmor %vm4189, %vm4190
    %v4192 = vsel %vm4191, %v4183, %v4188
    %v4193 = vmul.f32 %v3921, %v4042
    %v4194 = vmul.f32 %v3922, %v4052
    %v4195 = vmul.f32 %v3923, %v4062
    %v4196 = vmul.f32 %v3924, %v4072
    %v4197 = vmul.f32 %v3925, %v4082
    %v4198 = vmul.f32 %v3926, %v4092
    %v4199 = vmul.f32 %v3927, %v4102
    %v4200 = vmul.f32 %v3928, %v4112
    %v4201 = vmul.f32 %v3929, %v4122
    %v4202 = vmul.f32 %v3930, %v4132
    %v4203 = vmul.f32 %v3931, %v4142
    %v4204 = vmul.f32 %v3932, %v4152
    %v4205 = vmul.f32 %v3933, %v4162
    %v4206 = vmul.f32 %v3934, %v4172
    %v4207 = vmul.f32 %v3935, %v4182
    %v4208 = vmul.f32 %v3936, %v4192
    %v4209 = vrot.slane %v94, 6
    %v4210 = vperm.slane %v4209, 0
    %v4212 = vmul.f32 %v4193, %v4210
    %v4213 = vmul.f32 %v4194, %v4210
    %v4214 = vmul.f32 %v4195, %v4210
    %v4215 = vmul.f32 %v4196, %v4210
    %v4216 = vmul.f32 %v4197, %v4210
    %v4217 = vmul.f32 %v4198, %v4210
    %v4218 = vmul.f32 %v4199, %v4210
    %v4219 = vmul.f32 %v4200, %v4210
    %v4220 = vmul.f32 %v4201, %v4210
    %v4221 = vmul.f32 %v4202, %v4210
    %v4222 = vmul.f32 %v4203, %v4210
    %v4223 = vmul.f32 %v4204, %v4210
    %v4224 = vmul.f32 %v4205, %v4210
    %v4225 = vmul.f32 %v4206, %v4210
    %v4226 = vmul.f32 %v4207, %v4210
    %v4227 = vmul.f32 %v4208, %v4210
    %v4228 = vrot.slane %v94, 7
    %v4229 = vperm.slane %v4228, 0
    %v4231 = vadd.f32 %v4212, %v4229
    %v4232 = vadd.f32 %v4213, %v4229
    %v4233 = vadd.f32 %v4214, %v4229
    %v4234 = vadd.f32 %v4215, %v4229
    %v4235 = vadd.f32 %v4216, %v4229
    %v4236 = vadd.f32 %v4217, %v4229
    %v4237 = vadd.f32 %v4218, %v4229
    %v4238 = vadd.f32 %v4219, %v4229
    %v4239 = vadd.f32 %v4220, %v4229
    %v4240 = vadd.f32 %v4221, %v4229
    %v4241 = vadd.f32 %v4222, %v4229
    %v4242 = vadd.f32 %v4223, %v4229
    %v4243 = vadd.f32 %v4224, %v4229
    %v4244 = vadd.f32 %v4225, %v4229
    %v4245 = vadd.f32 %v4226, %v4229
    %v4246 = vadd.f32 %v4227, %v4229
    %v4247 = vpack.c.bf16 %v4232, %v4231
    %v4248 = vpack.c.bf16 %v4234, %v4233
    %v4249 = vpack.c.bf16 %v4236, %v4235
    %v4250 = vpack.c.bf16 %v4238, %v4237
    %v4251 = vpack.c.bf16 %v4240, %v4239
    %v4252 = vpack.c.bf16 %v4242, %v4241
    %v4253 = vpack.c.bf16 %v4244, %v4243
    %v4254 = vpack.c.bf16 %v4246, %v4245
    %v4255 = vld [vmem:[%s7] sm:$0xf]
    %v4256 = vld [vmem:[%s7 + $0x4] sm:$0xf]
    %v4257 = vld [vmem:[%s7 + $0x8] sm:$0xf]
    %v4258 = vld [vmem:[%s7 + $0xc] sm:$0xf]
    %v4259 = vld [vmem:[%s7 + $0x10] sm:$0xf]
    %v4260 = vld [vmem:[%s7 + $0x14] sm:$0xf]
    %v4261 = vld [vmem:[%s7 + $0x18] sm:$0xf]
    %v4262 = vld [vmem:[%s7 + $0x1c] sm:$0xf]
    %v4271 = vunpack.c.l.b16 %v4255
    %v4272 = vunpack.c.l.b16 %v4256
    %v4273 = vunpack.c.l.b16 %v4257
    %v4274 = vunpack.c.l.b16 %v4258
    %v4275 = vunpack.c.l.b16 %v4259
    %v4276 = vunpack.c.l.b16 %v4260
    %v4277 = vunpack.c.l.b16 %v4261
    %v4278 = vunpack.c.l.b16 %v4262
    %v4279 = vpack.c.b16 %v4272, %v4271
    %v4280 = vpack.c.b16 %v4274, %v4273
    %v4281 = vpack.c.b16 %v4276, %v4275
    %v4282 = vpack.c.b16 %v4278, %v4277
    %v4288 = vsel %vm417, %v4247, 0
    %v4291 = vsel %vm417, %v4248, 0
    %v4294 = vsel %vm417, %v4249, 0
    %v4297 = vsel %vm417, %v4250, 0
    %v4300 = vsel %vm417, %v4251, 0
    %v4303 = vsel %vm417, %v4252, 0
    %v4306 = vsel %vm417, %v4253, 0
    %v4309 = vsel %vm417, %v4254, 0
    %4311 = vmatpush.bf16.msra.mxu0 0
    %4312 = vmatpush.bf16.msra.mxu0 0
    %4313 = vmatpush.bf16.msra.mxu0 0
    %4314 = vmatpush.bf16.msra.mxu0 0
    %4315 = vmatpush.bf16.msra.mxu0 %v4282
    %4316 = vmatpush.bf16.msra.mxu0 %v4281
    %4317 = vmatpush.bf16.msra.mxu0 %v4280
    %4318 = vmatpush.bf16.msra.mxu0 %v4279
    %4319 = vmatmul.bf16.gmra.mxu0 %v4288
    %v4320 = vpop.f32.mrf.mxu0
    %v4321 = vadd.f32 0.0, %v4320
    %v4322 = vpop.f32.mrf.mxu0
    %v4323 = vadd.f32 0.0, %v4322
    %4324 = vmatmul.bf16.gmra.mxu0 %v4291
    %v4325 = vpop.f32.mrf.mxu0
    %v4326 = vadd.f32 0.0, %v4325
    %v4327 = vpop.f32.mrf.mxu0
    %v4328 = vadd.f32 0.0, %v4327
    %4329 = vmatmul.bf16.gmra.mxu0 %v4294
    %v4330 = vpop.f32.mrf.mxu0
    %v4331 = vadd.f32 0.0, %v4330
    %v4332 = vpop.f32.mrf.mxu0
    %v4333 = vadd.f32 0.0, %v4332
    %4334 = vmatmul.bf16.gmra.mxu0 %v4297
    %v4335 = vpop.f32.mrf.mxu0
    %v4336 = vadd.f32 0.0, %v4335
    %v4337 = vpop.f32.mrf.mxu0
    %v4338 = vadd.f32 0.0, %v4337
    %4339 = vmatmul.bf16.gmra.mxu0 %v4300
    %v4340 = vpop.f32.mrf.mxu0
    %v4341 = vadd.f32 0.0, %v4340
    %v4342 = vpop.f32.mrf.mxu0
    %v4343 = vadd.f32 0.0, %v4342
    %4344 = vmatmul.bf16.gmra.mxu0 %v4303
    %v4345 = vpop.f32.mrf.mxu0
    %v4346 = vadd.f32 0.0, %v4345
    %v4347 = vpop.f32.mrf.mxu0
    %v4348 = vadd.f32 0.0, %v4347
    %4349 = vmatmul.bf16.gmra.mxu0 %v4306
    %v4350 = vpop.f32.mrf.mxu0
    %v4351 = vadd.f32 0.0, %v4350
    %v4352 = vpop.f32.mrf.mxu0
    %v4353 = vadd.f32 0.0, %v4352
    %4354 = vmatmul.bf16.gmra.mxu0 %v4309
    %v4355 = vpop.f32.mrf.mxu0
    %v4356 = vadd.f32 0.0, %v4355
    %v4357 = vpop.f32.mrf.mxu0
    %v4358 = vadd.f32 0.0, %v4357
    %4359 = vdwg.mxu0
    %v4360 = vld [vmem:[%s8] sm:$0xf]
    %v4361 = vld [vmem:[%s8 + $0x4] sm:$0xf]
    %v4362 = vld [vmem:[%s8 + $0x8] sm:$0xf]
    %v4363 = vld [vmem:[%s8 + $0xc] sm:$0xf]
    %v4364 = vld [vmem:[%s8 + $0x10] sm:$0xf]
    %v4365 = vld [vmem:[%s8 + $0x14] sm:$0xf]
    %v4366 = vld [vmem:[%s8 + $0x18] sm:$0xf]
    %v4367 = vld [vmem:[%s8 + $0x1c] sm:$0xf]
    %v4376 = vunpack.c.l.b16 %v4360
    %v4377 = vunpack.c.l.b16 %v4361
    %v4378 = vunpack.c.l.b16 %v4362
    %v4379 = vunpack.c.l.b16 %v4363
    %v4380 = vunpack.c.l.b16 %v4364
    %v4381 = vunpack.c.l.b16 %v4365
    %v4382 = vunpack.c.l.b16 %v4366
    %v4383 = vunpack.c.l.b16 %v4367
    %v4384 = vpack.c.b16 %v4377, %v4376
    %v4385 = vpack.c.b16 %v4379, %v4378
    %v4386 = vpack.c.b16 %v4381, %v4380
    %v4387 = vpack.c.b16 %v4383, %v4382
    %4392 = vmatpush.bf16.msra.mxu0 0
    %4393 = vmatpush.bf16.msra.mxu0 0
    %4394 = vmatpush.bf16.msra.mxu0 0
    %4395 = vmatpush.bf16.msra.mxu0 0
    %4396 = vmatpush.bf16.msra.mxu0 %v4387
    %4397 = vmatpush.bf16.msra.mxu0 %v4386
    %4398 = vmatpush.bf16.msra.mxu0 %v4385
    %4399 = vmatpush.bf16.msra.mxu0 %v4384
    %4400 = vmatmul.bf16.gmra.mxu0 %v4288
    %v4401 = vpop.f32.mrf.mxu0
    %v4402 = vadd.f32 0.0, %v4401
    %v4403 = vpop.f32.mrf.mxu0
    %v4404 = vadd.f32 0.0, %v4403
    %4405 = vmatmul.bf16.gmra.mxu0 %v4291
    %v4406 = vpop.f32.mrf.mxu0
    %v4407 = vadd.f32 0.0, %v4406
    %v4408 = vpop.f32.mrf.mxu0
    %v4409 = vadd.f32 0.0, %v4408
    %4410 = vmatmul.bf16.gmra.mxu0 %v4294
    %v4411 = vpop.f32.mrf.mxu0
    %v4412 = vadd.f32 0.0, %v4411
    %v4413 = vpop.f32.mrf.mxu0
    %v4414 = vadd.f32 0.0, %v4413
    %4415 = vmatmul.bf16.gmra.mxu0 %v4297
    %v4416 = vpop.f32.mrf.mxu0
    %v4417 = vadd.f32 0.0, %v4416
    %v4418 = vpop.f32.mrf.mxu0
    %v4419 = vadd.f32 0.0, %v4418
    %4420 = vmatmul.bf16.gmra.mxu0 %v4300
    %v4421 = vpop.f32.mrf.mxu0
    %v4422 = vadd.f32 0.0, %v4421
    %v4423 = vpop.f32.mrf.mxu0
    %v4424 = vadd.f32 0.0, %v4423
    %4425 = vmatmul.bf16.gmra.mxu0 %v4303
    %v4426 = vpop.f32.mrf.mxu0
    %v4427 = vadd.f32 0.0, %v4426
    %v4428 = vpop.f32.mrf.mxu0
    %v4429 = vadd.f32 0.0, %v4428
    %4430 = vmatmul.bf16.gmra.mxu0 %v4306
    %v4431 = vpop.f32.mrf.mxu0
    %v4432 = vadd.f32 0.0, %v4431
    %v4433 = vpop.f32.mrf.mxu0
    %v4434 = vadd.f32 0.0, %v4433
    %4435 = vmatmul.bf16.gmra.mxu0 %v4309
    %v4436 = vpop.f32.mrf.mxu0
    %v4437 = vadd.f32 0.0, %v4436
    %v4438 = vpop.f32.mrf.mxu0
    %v4439 = vadd.f32 0.0, %v4438
    %4440 = vdwg.mxu0
    %v4441 = vld [vmem:[%s9] sm:$0xf]
    %v4442 = vld [vmem:[%s9 + $0x4] sm:$0xf]
    %v4443 = vld [vmem:[%s9 + $0x8] sm:$0xf]
    %v4444 = vld [vmem:[%s9 + $0xc] sm:$0xf]
    %v4445 = vld [vmem:[%s9 + $0x10] sm:$0xf]
    %v4446 = vld [vmem:[%s9 + $0x14] sm:$0xf]
    %v4447 = vld [vmem:[%s9 + $0x18] sm:$0xf]
    %v4448 = vld [vmem:[%s9 + $0x1c] sm:$0xf]
    %v4457 = vunpack.c.l.b16 %v4441
    %v4458 = vunpack.c.l.b16 %v4442
    %v4459 = vunpack.c.l.b16 %v4443
    %v4460 = vunpack.c.l.b16 %v4444
    %v4461 = vunpack.c.l.b16 %v4445
    %v4462 = vunpack.c.l.b16 %v4446
    %v4463 = vunpack.c.l.b16 %v4447
    %v4464 = vunpack.c.l.b16 %v4448
    %v4465 = vpack.c.b16 %v4458, %v4457
    %v4466 = vpack.c.b16 %v4460, %v4459
    %v4467 = vpack.c.b16 %v4462, %v4461
    %v4468 = vpack.c.b16 %v4464, %v4463
    %4473 = vmatpush.bf16.msra.mxu0 0
    %4474 = vmatpush.bf16.msra.mxu0 0
    %4475 = vmatpush.bf16.msra.mxu0 0
    %4476 = vmatpush.bf16.msra.mxu0 0
    %4477 = vmatpush.bf16.msra.mxu0 %v4468
    %4478 = vmatpush.bf16.msra.mxu0 %v4467
    %4479 = vmatpush.bf16.msra.mxu0 %v4466
    %4480 = vmatpush.bf16.msra.mxu0 %v4465
    %4481 = vmatmul.bf16.gmra.mxu0 %v4288
    %v4482 = vpop.f32.mrf.mxu0
    %v4483 = vadd.f32 0.0, %v4482
    %v4484 = vpop.f32.mrf.mxu0
    %v4485 = vadd.f32 0.0, %v4484
    %4486 = vmatmul.bf16.gmra.mxu0 %v4291
    %v4487 = vpop.f32.mrf.mxu0
    %v4488 = vadd.f32 0.0, %v4487
    %v4489 = vpop.f32.mrf.mxu0
    %v4490 = vadd.f32 0.0, %v4489
    %4491 = vmatmul.bf16.gmra.mxu0 %v4294
    %v4492 = vpop.f32.mrf.mxu0
    %v4493 = vadd.f32 0.0, %v4492
    %v4494 = vpop.f32.mrf.mxu0
    %v4495 = vadd.f32 0.0, %v4494
    %4496 = vmatmul.bf16.gmra.mxu0 %v4297
    %v4497 = vpop.f32.mrf.mxu0
    %v4498 = vadd.f32 0.0, %v4497
    %v4499 = vpop.f32.mrf.mxu0
    %v4500 = vadd.f32 0.0, %v4499
    %4501 = vmatmul.bf16.gmra.mxu0 %v4300
    %v4502 = vpop.f32.mrf.mxu0
    %v4503 = vadd.f32 0.0, %v4502
    %v4504 = vpop.f32.mrf.mxu0
    %v4505 = vadd.f32 0.0, %v4504
    %4506 = vmatmul.bf16.gmra.mxu0 %v4303
    %v4507 = vpop.f32.mrf.mxu0
    %v4508 = vadd.f32 0.0, %v4507
    %v4509 = vpop.f32.mrf.mxu0
    %v4510 = vadd.f32 0.0, %v4509
    %4511 = vmatmul.bf16.gmra.mxu0 %v4306
    %v4512 = vpop.f32.mrf.mxu0
    %v4513 = vadd.f32 0.0, %v4512
    %v4514 = vpop.f32.mrf.mxu0
    %v4515 = vadd.f32 0.0, %v4514
    %4516 = vmatmul.bf16.gmra.mxu0 %v4309
    %v4517 = vpop.f32.mrf.mxu0
    %v4518 = vadd.f32 0.0, %v4517
    %v4519 = vpop.f32.mrf.mxu0
    %v4520 = vadd.f32 0.0, %v4519
    %4521 = vdwg.mxu0
    %v4522 = vpack.c.bf16 %v4321, %v4321
    %v4523 = vpack.c.bf16 %v4323, %v4323
    %v4524 = vpack.c.bf16 %v4326, %v4326
    %v4525 = vpack.c.bf16 %v4328, %v4328
    %v4526 = vpack.c.bf16 %v4331, %v4331
    %v4527 = vpack.c.bf16 %v4333, %v4333
    %v4528 = vpack.c.bf16 %v4336, %v4336
    %v4529 = vpack.c.bf16 %v4338, %v4338
    %v4530 = vpack.c.bf16 %v4341, %v4341
    %v4531 = vpack.c.bf16 %v4343, %v4343
    %v4532 = vpack.c.bf16 %v4346, %v4346
    %v4533 = vpack.c.bf16 %v4348, %v4348
    %v4534 = vpack.c.bf16 %v4351, %v4351
    %v4535 = vpack.c.bf16 %v4353, %v4353
    %v4536 = vpack.c.bf16 %v4356, %v4356
    %v4537 = vpack.c.bf16 %v4358, %v4358
    %4554 = vrot.lane.b32.xlu0 %v4522, 112
    %v4555 = vpop.permute.xlu0 %4554
    %4556 = vrot.lane.b32.xlu0 %v4523, 112
    %v4557 = vpop.permute.xlu0 %4556
    %4558 = vrot.lane.b32.xlu0 %v4524, 112
    %v4559 = vpop.permute.xlu0 %4558
    %4560 = vrot.lane.b32.xlu0 %v4525, 112
    %v4561 = vpop.permute.xlu0 %4560
    %4562 = vrot.lane.b32.xlu0 %v4526, 112
    %v4563 = vpop.permute.xlu0 %4562
    %4564 = vrot.lane.b32.xlu0 %v4527, 112
    %v4565 = vpop.permute.xlu0 %4564
    %4566 = vrot.lane.b32.xlu0 %v4528, 112
    %v4567 = vpop.permute.xlu0 %4566
    %4568 = vrot.lane.b32.xlu0 %v4529, 112
    %v4569 = vpop.permute.xlu0 %4568
    %4570 = vrot.lane.b32.xlu0 %v4530, 112
    %v4571 = vpop.permute.xlu0 %4570
    %4572 = vrot.lane.b32.xlu0 %v4531, 112
    %v4573 = vpop.permute.xlu0 %4572
    %4574 = vrot.lane.b32.xlu0 %v4532, 112
    %v4575 = vpop.permute.xlu0 %4574
    %4576 = vrot.lane.b32.xlu0 %v4533, 112
    %v4577 = vpop.permute.xlu0 %4576
    %4578 = vrot.lane.b32.xlu0 %v4534, 112
    %v4579 = vpop.permute.xlu0 %4578
    %4580 = vrot.lane.b32.xlu0 %v4535, 112
    %v4581 = vpop.permute.xlu0 %4580
    %4582 = vrot.lane.b32.xlu0 %v4536, 112
    %v4583 = vpop.permute.xlu0 %4582
    %4584 = vrot.lane.b32.xlu0 %v4537, 112
    %v4585 = vpop.permute.xlu0 %4584
    %4586 = vrot.lane.b32.xlu0 %v4522, 96
    %v4587 = vpop.permute.xlu0 %4586
    %4588 = vrot.lane.b32.xlu0 %v4523, 96
    %v4589 = vpop.permute.xlu0 %4588
    %4590 = vrot.lane.b32.xlu0 %v4524, 96
    %v4591 = vpop.permute.xlu0 %4590
    %4592 = vrot.lane.b32.xlu0 %v4525, 96
    %v4593 = vpop.permute.xlu0 %4592
    %4594 = vrot.lane.b32.xlu0 %v4526, 96
    %v4595 = vpop.permute.xlu0 %4594
    %4596 = vrot.lane.b32.xlu0 %v4527, 96
    %v4597 = vpop.permute.xlu0 %4596
    %4598 = vrot.lane.b32.xlu0 %v4528, 96
    %v4599 = vpop.permute.xlu0 %4598
    %4600 = vrot.lane.b32.xlu0 %v4529, 96
    %v4601 = vpop.permute.xlu0 %4600
    %4602 = vrot.lane.b32.xlu0 %v4530, 96
    %v4603 = vpop.permute.xlu0 %4602
    %4604 = vrot.lane.b32.xlu0 %v4531, 96
    %v4605 = vpop.permute.xlu0 %4604
    %4606 = vrot.lane.b32.xlu0 %v4532, 96
    %v4607 = vpop.permute.xlu0 %4606
    %4608 = vrot.lane.b32.xlu0 %v4533, 96
    %v4609 = vpop.permute.xlu0 %4608
    %4610 = vrot.lane.b32.xlu0 %v4534, 96
    %v4611 = vpop.permute.xlu0 %4610
    %4612 = vrot.lane.b32.xlu0 %v4535, 96
    %v4613 = vpop.permute.xlu0 %4612
    %4614 = vrot.lane.b32.xlu0 %v4536, 96
    %v4615 = vpop.permute.xlu0 %4614
    %4616 = vrot.lane.b32.xlu0 %v4537, 96
    %v4617 = vpop.permute.xlu0 %4616
    %4618 = vrot.lane.b32.xlu0 %v4522, 80
    %v4619 = vpop.permute.xlu0 %4618
    %4620 = vrot.lane.b32.xlu0 %v4523, 80
    %v4621 = vpop.permute.xlu0 %4620
    %4622 = vrot.lane.b32.xlu0 %v4524, 80
    %v4623 = vpop.permute.xlu0 %4622
    %4624 = vrot.lane.b32.xlu0 %v4525, 80
    %v4625 = vpop.permute.xlu0 %4624
    %4626 = vrot.lane.b32.xlu0 %v4526, 80
    %v4627 = vpop.permute.xlu0 %4626
    %4628 = vrot.lane.b32.xlu0 %v4527, 80
    %v4629 = vpop.permute.xlu0 %4628
    %4630 = vrot.lane.b32.xlu0 %v4528, 80
    %v4631 = vpop.permute.xlu0 %4630
    %4632 = vrot.lane.b32.xlu0 %v4529, 80
    %v4633 = vpop.permute.xlu0 %4632
    %4634 = vrot.lane.b32.xlu0 %v4530, 80
    %v4635 = vpop.permute.xlu0 %4634
    %4636 = vrot.lane.b32.xlu0 %v4531, 80
    %v4637 = vpop.permute.xlu0 %4636
    %4638 = vrot.lane.b32.xlu0 %v4532, 80
    %v4639 = vpop.permute.xlu0 %4638
    %4640 = vrot.lane.b32.xlu0 %v4533, 80
    %v4641 = vpop.permute.xlu0 %4640
    %4642 = vrot.lane.b32.xlu0 %v4534, 80
    %v4643 = vpop.permute.xlu0 %4642
    %4644 = vrot.lane.b32.xlu0 %v4535, 80
    %v4645 = vpop.permute.xlu0 %4644
    %4646 = vrot.lane.b32.xlu0 %v4536, 80
    %v4647 = vpop.permute.xlu0 %4646
    %4648 = vrot.lane.b32.xlu0 %v4537, 80
    %v4649 = vpop.permute.xlu0 %4648
    %v4650 = vpack.c.bf16 %v4402, %v4402
    %v4651 = vpack.c.bf16 %v4404, %v4404
    %v4652 = vpack.c.bf16 %v4407, %v4407
    %v4653 = vpack.c.bf16 %v4409, %v4409
    %v4654 = vpack.c.bf16 %v4412, %v4412
    %v4655 = vpack.c.bf16 %v4414, %v4414
    %v4656 = vpack.c.bf16 %v4417, %v4417
    %v4657 = vpack.c.bf16 %v4419, %v4419
    %v4658 = vpack.c.bf16 %v4422, %v4422
    %v4659 = vpack.c.bf16 %v4424, %v4424
    %v4660 = vpack.c.bf16 %v4427, %v4427
    %v4661 = vpack.c.bf16 %v4429, %v4429
    %v4662 = vpack.c.bf16 %v4432, %v4432
    %v4663 = vpack.c.bf16 %v4434, %v4434
    %v4664 = vpack.c.bf16 %v4437, %v4437
    %v4665 = vpack.c.bf16 %v4439, %v4439
    %4682 = vrot.lane.b32.xlu0 %v4650, 112
    %v4683 = vpop.permute.xlu0 %4682
    %4684 = vrot.lane.b32.xlu0 %v4651, 112
    %v4685 = vpop.permute.xlu0 %4684
    %4686 = vrot.lane.b32.xlu0 %v4652, 112
    %v4687 = vpop.permute.xlu0 %4686
    %4688 = vrot.lane.b32.xlu0 %v4653, 112
    %v4689 = vpop.permute.xlu0 %4688
    %4690 = vrot.lane.b32.xlu0 %v4654, 112
    %v4691 = vpop.permute.xlu0 %4690
    %4692 = vrot.lane.b32.xlu0 %v4655, 112
    %v4693 = vpop.permute.xlu0 %4692
    %4694 = vrot.lane.b32.xlu0 %v4656, 112
    %v4695 = vpop.permute.xlu0 %4694
    %4696 = vrot.lane.b32.xlu0 %v4657, 112
    %v4697 = vpop.permute.xlu0 %4696
    %4698 = vrot.lane.b32.xlu0 %v4658, 112
    %v4699 = vpop.permute.xlu0 %4698
    %4700 = vrot.lane.b32.xlu0 %v4659, 112
    %v4701 = vpop.permute.xlu0 %4700
    %4702 = vrot.lane.b32.xlu0 %v4660, 112
    %v4703 = vpop.permute.xlu0 %4702
    %4704 = vrot.lane.b32.xlu0 %v4661, 112
    %v4705 = vpop.permute.xlu0 %4704
    %4706 = vrot.lane.b32.xlu0 %v4662, 112
    %v4707 = vpop.permute.xlu0 %4706
    %4708 = vrot.lane.b32.xlu0 %v4663, 112
    %v4709 = vpop.permute.xlu0 %4708
    %4710 = vrot.lane.b32.xlu0 %v4664, 112
    %v4711 = vpop.permute.xlu0 %4710
    %4712 = vrot.lane.b32.xlu0 %v4665, 112
    %v4713 = vpop.permute.xlu0 %4712
    %4714 = vrot.lane.b32.xlu0 %v4650, 96
    %v4715 = vpop.permute.xlu0 %4714
    %4716 = vrot.lane.b32.xlu0 %v4651, 96
    %v4717 = vpop.permute.xlu0 %4716
    %4718 = vrot.lane.b32.xlu0 %v4652, 96
    %v4719 = vpop.permute.xlu0 %4718
    %4720 = vrot.lane.b32.xlu0 %v4653, 96
    %v4721 = vpop.permute.xlu0 %4720
    %4722 = vrot.lane.b32.xlu0 %v4654, 96
    %v4723 = vpop.permute.xlu0 %4722
    %4724 = vrot.lane.b32.xlu0 %v4655, 96
    %v4725 = vpop.permute.xlu0 %4724
    %4726 = vrot.lane.b32.xlu0 %v4656, 96
    %v4727 = vpop.permute.xlu0 %4726
    %4728 = vrot.lane.b32.xlu0 %v4657, 96
    %v4729 = vpop.permute.xlu0 %4728
    %4730 = vrot.lane.b32.xlu0 %v4658, 96
    %v4731 = vpop.permute.xlu0 %4730
    %4732 = vrot.lane.b32.xlu0 %v4659, 96
    %v4733 = vpop.permute.xlu0 %4732
    %4734 = vrot.lane.b32.xlu0 %v4660, 96
    %v4735 = vpop.permute.xlu0 %4734
    %4736 = vrot.lane.b32.xlu0 %v4661, 96
    %v4737 = vpop.permute.xlu0 %4736
    %4738 = vrot.lane.b32.xlu0 %v4662, 96
    %v4739 = vpop.permute.xlu0 %4738
    %4740 = vrot.lane.b32.xlu0 %v4663, 96
    %v4741 = vpop.permute.xlu0 %4740
    %4742 = vrot.lane.b32.xlu0 %v4664, 96
    %v4743 = vpop.permute.xlu0 %4742
    %4744 = vrot.lane.b32.xlu0 %v4665, 96
    %v4745 = vpop.permute.xlu0 %4744
    %4746 = vrot.lane.b32.xlu0 %v4650, 80
    %v4747 = vpop.permute.xlu0 %4746
    %4748 = vrot.lane.b32.xlu0 %v4651, 80
    %v4749 = vpop.permute.xlu0 %4748
    %4750 = vrot.lane.b32.xlu0 %v4652, 80
    %v4751 = vpop.permute.xlu0 %4750
    %4752 = vrot.lane.b32.xlu0 %v4653, 80
    %v4753 = vpop.permute.xlu0 %4752
    %4754 = vrot.lane.b32.xlu0 %v4654, 80
    %v4755 = vpop.permute.xlu0 %4754
    %4756 = vrot.lane.b32.xlu0 %v4655, 80
    %v4757 = vpop.permute.xlu0 %4756
    %4758 = vrot.lane.b32.xlu0 %v4656, 80
    %v4759 = vpop.permute.xlu0 %4758
    %4760 = vrot.lane.b32.xlu0 %v4657, 80
    %v4761 = vpop.permute.xlu0 %4760
    %4762 = vrot.lane.b32.xlu0 %v4658, 80
    %v4763 = vpop.permute.xlu0 %4762
    %4764 = vrot.lane.b32.xlu0 %v4659, 80
    %v4765 = vpop.permute.xlu0 %4764
    %4766 = vrot.lane.b32.xlu0 %v4660, 80
    %v4767 = vpop.permute.xlu0 %4766
    %4768 = vrot.lane.b32.xlu0 %v4661, 80
    %v4769 = vpop.permute.xlu0 %4768
    %4770 = vrot.lane.b32.xlu0 %v4662, 80
    %v4771 = vpop.permute.xlu0 %4770
    %4772 = vrot.lane.b32.xlu0 %v4663, 80
    %v4773 = vpop.permute.xlu0 %4772
    %4774 = vrot.lane.b32.xlu0 %v4664, 80
    %v4775 = vpop.permute.xlu0 %4774
    %4776 = vrot.lane.b32.xlu0 %v4665, 80
    %v4777 = vpop.permute.xlu0 %4776
    %v4778 = vpack.c.bf16 %v4483, %v4483
    %v4779 = vpack.c.bf16 %v4485, %v4485
    %v4780 = vpack.c.bf16 %v4488, %v4488
    %v4781 = vpack.c.bf16 %v4490, %v4490
    %v4782 = vpack.c.bf16 %v4493, %v4493
    %v4783 = vpack.c.bf16 %v4495, %v4495
    %v4784 = vpack.c.bf16 %v4498, %v4498
    %v4785 = vpack.c.bf16 %v4500, %v4500
    %v4786 = vpack.c.bf16 %v4503, %v4503
    %v4787 = vpack.c.bf16 %v4505, %v4505
    %v4788 = vpack.c.bf16 %v4508, %v4508
    %v4789 = vpack.c.bf16 %v4510, %v4510
    %v4790 = vpack.c.bf16 %v4513, %v4513
    %v4791 = vpack.c.bf16 %v4515, %v4515
    %v4792 = vpack.c.bf16 %v4518, %v4518
    %v4793 = vpack.c.bf16 %v4520, %v4520
    %4810 = vrot.lane.b32.xlu0 %v4778, 112
    %v4811 = vpop.permute.xlu0 %4810
    %4812 = vrot.lane.b32.xlu0 %v4779, 112
    %v4813 = vpop.permute.xlu0 %4812
    %4814 = vrot.lane.b32.xlu0 %v4780, 112
    %v4815 = vpop.permute.xlu0 %4814
    %4816 = vrot.lane.b32.xlu0 %v4781, 112
    %v4817 = vpop.permute.xlu0 %4816
    %4818 = vrot.lane.b32.xlu0 %v4782, 112
    %v4819 = vpop.permute.xlu0 %4818
    %4820 = vrot.lane.b32.xlu0 %v4783, 112
    %v4821 = vpop.permute.xlu0 %4820
    %4822 = vrot.lane.b32.xlu0 %v4784, 112
    %v4823 = vpop.permute.xlu0 %4822
    %4824 = vrot.lane.b32.xlu0 %v4785, 112
    %v4825 = vpop.permute.xlu0 %4824
    %4826 = vrot.lane.b32.xlu0 %v4786, 112
    %v4827 = vpop.permute.xlu0 %4826
    %4828 = vrot.lane.b32.xlu0 %v4787, 112
    %v4829 = vpop.permute.xlu0 %4828
    %4830 = vrot.lane.b32.xlu0 %v4788, 112
    %v4831 = vpop.permute.xlu0 %4830
    %4832 = vrot.lane.b32.xlu0 %v4789, 112
    %v4833 = vpop.permute.xlu0 %4832
    %4834 = vrot.lane.b32.xlu0 %v4790, 112
    %v4835 = vpop.permute.xlu0 %4834
    %4836 = vrot.lane.b32.xlu0 %v4791, 112
    %v4837 = vpop.permute.xlu0 %4836
    %4838 = vrot.lane.b32.xlu0 %v4792, 112
    %v4839 = vpop.permute.xlu0 %4838
    %4840 = vrot.lane.b32.xlu0 %v4793, 112
    %v4841 = vpop.permute.xlu0 %4840
    %4842 = vrot.lane.b32.xlu0 %v4778, 96
    %v4843 = vpop.permute.xlu0 %4842
    %4844 = vrot.lane.b32.xlu0 %v4779, 96
    %v4845 = vpop.permute.xlu0 %4844
    %4846 = vrot.lane.b32.xlu0 %v4780, 96
    %v4847 = vpop.permute.xlu0 %4846
    %4848 = vrot.lane.b32.xlu0 %v4781, 96
    %v4849 = vpop.permute.xlu0 %4848
    %4850 = vrot.lane.b32.xlu0 %v4782, 96
    %v4851 = vpop.permute.xlu0 %4850
    %4852 = vrot.lane.b32.xlu0 %v4783, 96
    %v4853 = vpop.permute.xlu0 %4852
    %4854 = vrot.lane.b32.xlu0 %v4784, 96
    %v4855 = vpop.permute.xlu0 %4854
    %4856 = vrot.lane.b32.xlu0 %v4785, 96
    %v4857 = vpop.permute.xlu0 %4856
    %4858 = vrot.lane.b32.xlu0 %v4786, 96
    %v4859 = vpop.permute.xlu0 %4858
    %4860 = vrot.lane.b32.xlu0 %v4787, 96
    %v4861 = vpop.permute.xlu0 %4860
    %4862 = vrot.lane.b32.xlu0 %v4788, 96
    %v4863 = vpop.permute.xlu0 %4862
    %4864 = vrot.lane.b32.xlu0 %v4789, 96
    %v4865 = vpop.permute.xlu0 %4864
    %4866 = vrot.lane.b32.xlu0 %v4790, 96
    %v4867 = vpop.permute.xlu0 %4866
    %4868 = vrot.lane.b32.xlu0 %v4791, 96
    %v4869 = vpop.permute.xlu0 %4868
    %4870 = vrot.lane.b32.xlu0 %v4792, 96
    %v4871 = vpop.permute.xlu0 %4870
    %4872 = vrot.lane.b32.xlu0 %v4793, 96
    %v4873 = vpop.permute.xlu0 %4872
    %4874 = vrot.lane.b32.xlu0 %v4778, 80
    %v4875 = vpop.permute.xlu0 %4874
    %4876 = vrot.lane.b32.xlu0 %v4779, 80
    %v4877 = vpop.permute.xlu0 %4876
    %4878 = vrot.lane.b32.xlu0 %v4780, 80
    %v4879 = vpop.permute.xlu0 %4878
    %4880 = vrot.lane.b32.xlu0 %v4781, 80
    %v4881 = vpop.permute.xlu0 %4880
    %4882 = vrot.lane.b32.xlu0 %v4782, 80
    %v4883 = vpop.permute.xlu0 %4882
    %4884 = vrot.lane.b32.xlu0 %v4783, 80
    %v4885 = vpop.permute.xlu0 %4884
    %4886 = vrot.lane.b32.xlu0 %v4784, 80
    %v4887 = vpop.permute.xlu0 %4886
    %4888 = vrot.lane.b32.xlu0 %v4785, 80
    %v4889 = vpop.permute.xlu0 %4888
    %4890 = vrot.lane.b32.xlu0 %v4786, 80
    %v4891 = vpop.permute.xlu0 %4890
    %4892 = vrot.lane.b32.xlu0 %v4787, 80
    %v4893 = vpop.permute.xlu0 %4892
    %4894 = vrot.lane.b32.xlu0 %v4788, 80
    %v4895 = vpop.permute.xlu0 %4894
    %4896 = vrot.lane.b32.xlu0 %v4789, 80
    %v4897 = vpop.permute.xlu0 %4896
    %4898 = vrot.lane.b32.xlu0 %v4790, 80
    %v4899 = vpop.permute.xlu0 %4898
    %4900 = vrot.lane.b32.xlu0 %v4791, 80
    %v4901 = vpop.permute.xlu0 %4900
    %4902 = vrot.lane.b32.xlu0 %v4792, 80
    %v4903 = vpop.permute.xlu0 %4902
    %4904 = vrot.lane.b32.xlu0 %v4793, 80
    %v4905 = vpop.permute.xlu0 %4904
    %v4906 = vunpack.c.l.b16 %v4522
    %v4907 = vunpack.c.l.b16 %v4523
    %v4908 = vunpack.c.l.b16 %v4524
    %v4909 = vunpack.c.l.b16 %v4525
    %v4910 = vunpack.c.l.b16 %v4526
    %v4911 = vunpack.c.l.b16 %v4527
    %v4912 = vunpack.c.l.b16 %v4528
    %v4913 = vunpack.c.l.b16 %v4529
    %v4914 = vpack.c.b16 %v4907, %v4906
    %v4915 = vpack.c.b16 %v4909, %v4908
    %v4916 = vpack.c.b16 %v4911, %v4910
    %v4917 = vpack.c.b16 %v4913, %v4912
    %v4918 = vunpack.c.l.b16 %v4650
    %v4919 = vunpack.c.l.b16 %v4651
    %v4920 = vunpack.c.l.b16 %v4652
    %v4921 = vunpack.c.l.b16 %v4653
    %v4922 = vunpack.c.l.b16 %v4654
    %v4923 = vunpack.c.l.b16 %v4655
    %v4924 = vunpack.c.l.b16 %v4656
    %v4925 = vunpack.c.l.b16 %v4657
    %v4926 = vpack.c.b16 %v4919, %v4918
    %v4927 = vpack.c.b16 %v4921, %v4920
    %v4928 = vpack.c.b16 %v4923, %v4922
    %v4929 = vpack.c.b16 %v4925, %v4924
    %v4931 = vsel %vm1491, %v4914, 0
    %v4934 = vsel %vm1491, %v4915, 0
    %v4937 = vsel %vm1491, %v4916, 0
    %v4940 = vsel %vm1491, %v4917, 0
    %v4943 = vsel %vm1491, %v4926, 0
    %v4946 = vsel %vm1491, %v4927, 0
    %v4949 = vsel %vm1491, %v4928, 0
    %v4952 = vsel %vm1491, %v4929, 0
    %4954 = vmatpush.bf16.xpose.msra.mxu0 0
    %4955 = vmatpush.bf16.xpose.msra.mxu0 0
    %4956 = vmatpush.bf16.xpose.msra.mxu0 0
    %4957 = vmatpush.bf16.xpose.msra.mxu0 0
    %4958 = vmatpush.bf16.xpose.msra.mxu0 %v4952
    %4959 = vmatpush.bf16.xpose.msra.mxu0 %v4949
    %4960 = vmatpush.bf16.xpose.msra.mxu0 %v4946
    %4961 = vmatpush.bf16.xpose.msra.mxu0 %v4943
    %4962 = vmatmul.bf16.gmra.mxu0 %v4931
    %v4963 = vpop.f32.mrf.mxu0
    %v4964 = vadd.f32 0.0, %v4963
    %v4965 = vpop.f32.mrf.mxu0
    %v4966 = vadd.f32 0.0, %v4965
    %4967 = vmatmul.bf16.gmra.mxu0 %v4934
    %v4968 = vpop.f32.mrf.mxu0
    %v4969 = vadd.f32 0.0, %v4968
    %v4970 = vpop.f32.mrf.mxu0
    %v4971 = vadd.f32 0.0, %v4970
    %4972 = vmatmul.bf16.gmra.mxu0 %v4937
    %v4973 = vpop.f32.mrf.mxu0
    %v4974 = vadd.f32 0.0, %v4973
    %v4975 = vpop.f32.mrf.mxu0
    %v4976 = vadd.f32 0.0, %v4975
    %4977 = vmatmul.bf16.gmra.mxu0 %v4940
    %v4978 = vpop.f32.mrf.mxu0
    %v4979 = vadd.f32 0.0, %v4978
    %v4980 = vpop.f32.mrf.mxu0
    %v4981 = vadd.f32 0.0, %v4980
    %4982 = vdwg.mxu0
    %v4983 = vunpack.c.l.b16 %v4530
    %v4984 = vunpack.c.l.b16 %v4531
    %v4985 = vunpack.c.l.b16 %v4532
    %v4986 = vunpack.c.l.b16 %v4533
    %v4987 = vunpack.c.l.b16 %v4534
    %v4988 = vunpack.c.l.b16 %v4535
    %v4989 = vunpack.c.l.b16 %v4536
    %v4990 = vunpack.c.l.b16 %v4537
    %v4991 = vpack.c.b16 %v4984, %v4983
    %v4992 = vpack.c.b16 %v4986, %v4985
    %v4993 = vpack.c.b16 %v4988, %v4987
    %v4994 = vpack.c.b16 %v4990, %v4989
    %v4995 = vunpack.c.l.b16 %v4658
    %v4996 = vunpack.c.l.b16 %v4659
    %v4997 = vunpack.c.l.b16 %v4660
    %v4998 = vunpack.c.l.b16 %v4661
    %v4999 = vunpack.c.l.b16 %v4662
    %v5000 = vunpack.c.l.b16 %v4663
    %v5001 = vunpack.c.l.b16 %v4664
    %v5002 = vunpack.c.l.b16 %v4665
    %v5003 = vpack.c.b16 %v4996, %v4995
    %v5004 = vpack.c.b16 %v4998, %v4997
    %v5005 = vpack.c.b16 %v5000, %v4999
    %v5006 = vpack.c.b16 %v5002, %v5001
    %v5008 = vsel %vm1491, %v4991, 0
    %v5011 = vsel %vm1491, %v4992, 0
    %v5014 = vsel %vm1491, %v4993, 0
    %v5017 = vsel %vm1491, %v4994, 0
    %v5020 = vsel %vm1491, %v5003, 0
    %v5023 = vsel %vm1491, %v5004, 0
    %v5026 = vsel %vm1491, %v5005, 0
    %v5029 = vsel %vm1491, %v5006, 0
    %5031 = vmatpush.bf16.xpose.msra.mxu0 0
    %5032 = vmatpush.bf16.xpose.msra.mxu0 0
    %5033 = vmatpush.bf16.xpose.msra.mxu0 0
    %5034 = vmatpush.bf16.xpose.msra.mxu0 0
    %5035 = vmatpush.bf16.xpose.msra.mxu0 %v5029
    %5036 = vmatpush.bf16.xpose.msra.mxu0 %v5026
    %5037 = vmatpush.bf16.xpose.msra.mxu0 %v5023
    %5038 = vmatpush.bf16.xpose.msra.mxu0 %v5020
    %5039 = vmatmul.bf16.gmra.mxu0 %v5008
    %v5040 = vpop.f32.mrf.mxu0
    %v5041 = vadd.f32 0.0, %v5040
    %v5042 = vpop.f32.mrf.mxu0
    %v5043 = vadd.f32 0.0, %v5042
    %5044 = vmatmul.bf16.gmra.mxu0 %v5011
    %v5045 = vpop.f32.mrf.mxu0
    %v5046 = vadd.f32 0.0, %v5045
    %v5047 = vpop.f32.mrf.mxu0
    %v5048 = vadd.f32 0.0, %v5047
    %5049 = vmatmul.bf16.gmra.mxu0 %v5014
    %v5050 = vpop.f32.mrf.mxu0
    %v5051 = vadd.f32 0.0, %v5050
    %v5052 = vpop.f32.mrf.mxu0
    %v5053 = vadd.f32 0.0, %v5052
    %5054 = vmatmul.bf16.gmra.mxu0 %v5017
    %v5055 = vpop.f32.mrf.mxu0
    %v5056 = vadd.f32 0.0, %v5055
    %v5057 = vpop.f32.mrf.mxu0
    %v5058 = vadd.f32 0.0, %v5057
    %5059 = vdwg.mxu0
    %v5060 = vunpack.c.l.b16 %v4555
    %v5061 = vunpack.c.l.b16 %v4557
    %v5062 = vunpack.c.l.b16 %v4559
    %v5063 = vunpack.c.l.b16 %v4561
    %v5064 = vunpack.c.l.b16 %v4563
    %v5065 = vunpack.c.l.b16 %v4565
    %v5066 = vunpack.c.l.b16 %v4567
    %v5067 = vunpack.c.l.b16 %v4569
    %v5068 = vpack.c.b16 %v5061, %v5060
    %v5069 = vpack.c.b16 %v5063, %v5062
    %v5070 = vpack.c.b16 %v5065, %v5064
    %v5071 = vpack.c.b16 %v5067, %v5066
    %v5072 = vunpack.c.l.b16 %v4683
    %v5073 = vunpack.c.l.b16 %v4685
    %v5074 = vunpack.c.l.b16 %v4687
    %v5075 = vunpack.c.l.b16 %v4689
    %v5076 = vunpack.c.l.b16 %v4691
    %v5077 = vunpack.c.l.b16 %v4693
    %v5078 = vunpack.c.l.b16 %v4695
    %v5079 = vunpack.c.l.b16 %v4697
    %v5080 = vpack.c.b16 %v5073, %v5072
    %v5081 = vpack.c.b16 %v5075, %v5074
    %v5082 = vpack.c.b16 %v5077, %v5076
    %v5083 = vpack.c.b16 %v5079, %v5078
    %v5085 = vsel %vm1491, %v5068, 0
    %v5088 = vsel %vm1491, %v5069, 0
    %v5091 = vsel %vm1491, %v5070, 0
    %v5094 = vsel %vm1491, %v5071, 0
    %v5097 = vsel %vm1491, %v5080, 0
    %v5100 = vsel %vm1491, %v5081, 0
    %v5103 = vsel %vm1491, %v5082, 0
    %v5106 = vsel %vm1491, %v5083, 0
    %5108 = vmatpush.bf16.xpose.msra.mxu0 0
    %5109 = vmatpush.bf16.xpose.msra.mxu0 0
    %5110 = vmatpush.bf16.xpose.msra.mxu0 0
    %5111 = vmatpush.bf16.xpose.msra.mxu0 0
    %5112 = vmatpush.bf16.xpose.msra.mxu0 %v5106
    %5113 = vmatpush.bf16.xpose.msra.mxu0 %v5103
    %5114 = vmatpush.bf16.xpose.msra.mxu0 %v5100
    %5115 = vmatpush.bf16.xpose.msra.mxu0 %v5097
    %5116 = vmatmul.bf16.gmra.mxu0 %v5085
    %v5117 = vpop.f32.mrf.mxu0
    %v5118 = vadd.f32 0.0, %v5117
    %v5119 = vpop.f32.mrf.mxu0
    %v5120 = vadd.f32 0.0, %v5119
    %5121 = vmatmul.bf16.gmra.mxu0 %v5088
    %v5122 = vpop.f32.mrf.mxu0
    %v5123 = vadd.f32 0.0, %v5122
    %v5124 = vpop.f32.mrf.mxu0
    %v5125 = vadd.f32 0.0, %v5124
    %5126 = vmatmul.bf16.gmra.mxu0 %v5091
    %v5127 = vpop.f32.mrf.mxu0
    %v5128 = vadd.f32 0.0, %v5127
    %v5129 = vpop.f32.mrf.mxu0
    %v5130 = vadd.f32 0.0, %v5129
    %5131 = vmatmul.bf16.gmra.mxu0 %v5094
    %v5132 = vpop.f32.mrf.mxu0
    %v5133 = vadd.f32 0.0, %v5132
    %v5134 = vpop.f32.mrf.mxu0
    %v5135 = vadd.f32 0.0, %v5134
    %5136 = vdwg.mxu0
    %v5137 = vunpack.c.l.b16 %v4571
    %v5138 = vunpack.c.l.b16 %v4573
    %v5139 = vunpack.c.l.b16 %v4575
    %v5140 = vunpack.c.l.b16 %v4577
    %v5141 = vunpack.c.l.b16 %v4579
    %v5142 = vunpack.c.l.b16 %v4581
    %v5143 = vunpack.c.l.b16 %v4583
    %v5144 = vunpack.c.l.b16 %v4585
    %v5145 = vpack.c.b16 %v5138, %v5137
    %v5146 = vpack.c.b16 %v5140, %v5139
    %v5147 = vpack.c.b16 %v5142, %v5141
    %v5148 = vpack.c.b16 %v5144, %v5143
    %v5149 = vunpack.c.l.b16 %v4699
    %v5150 = vunpack.c.l.b16 %v4701
    %v5151 = vunpack.c.l.b16 %v4703
    %v5152 = vunpack.c.l.b16 %v4705
    %v5153 = vunpack.c.l.b16 %v4707
    %v5154 = vunpack.c.l.b16 %v4709
    %v5155 = vunpack.c.l.b16 %v4711
    %v5156 = vunpack.c.l.b16 %v4713
    %v5157 = vpack.c.b16 %v5150, %v5149
    %v5158 = vpack.c.b16 %v5152, %v5151
    %v5159 = vpack.c.b16 %v5154, %v5153
    %v5160 = vpack.c.b16 %v5156, %v5155
    %v5162 = vsel %vm1491, %v5145, 0
    %v5165 = vsel %vm1491, %v5146, 0
    %v5168 = vsel %vm1491, %v5147, 0
    %v5171 = vsel %vm1491, %v5148, 0
    %v5174 = vsel %vm1491, %v5157, 0
    %v5177 = vsel %vm1491, %v5158, 0
    %v5180 = vsel %vm1491, %v5159, 0
    %v5183 = vsel %vm1491, %v5160, 0
    %5185 = vmatpush.bf16.xpose.msra.mxu0 0
    %5186 = vmatpush.bf16.xpose.msra.mxu0 0
    %5187 = vmatpush.bf16.xpose.msra.mxu0 0
    %5188 = vmatpush.bf16.xpose.msra.mxu0 0
    %5189 = vmatpush.bf16.xpose.msra.mxu0 %v5183
    %5190 = vmatpush.bf16.xpose.msra.mxu0 %v5180
    %5191 = vmatpush.bf16.xpose.msra.mxu0 %v5177
    %5192 = vmatpush.bf16.xpose.msra.mxu0 %v5174
    %5193 = vmatmul.bf16.gmra.mxu0 %v5162
    %v5194 = vpop.f32.mrf.mxu0
    %v5195 = vadd.f32 0.0, %v5194
    %v5196 = vpop.f32.mrf.mxu0
    %v5197 = vadd.f32 0.0, %v5196
    %5198 = vmatmul.bf16.gmra.mxu0 %v5165
    %v5199 = vpop.f32.mrf.mxu0
    %v5200 = vadd.f32 0.0, %v5199
    %v5201 = vpop.f32.mrf.mxu0
    %v5202 = vadd.f32 0.0, %v5201
    %5203 = vmatmul.bf16.gmra.mxu0 %v5168
    %v5204 = vpop.f32.mrf.mxu0
    %v5205 = vadd.f32 0.0, %v5204
    %v5206 = vpop.f32.mrf.mxu0
    %v5207 = vadd.f32 0.0, %v5206
    %5208 = vmatmul.bf16.gmra.mxu0 %v5171
    %v5209 = vpop.f32.mrf.mxu0
    %v5210 = vadd.f32 0.0, %v5209
    %v5211 = vpop.f32.mrf.mxu0
    %v5212 = vadd.f32 0.0, %v5211
    %5213 = vdwg.mxu0
    %v5214 = vunpack.c.l.b16 %v4587
    %v5215 = vunpack.c.l.b16 %v4589
    %v5216 = vunpack.c.l.b16 %v4591
    %v5217 = vunpack.c.l.b16 %v4593
    %v5218 = vunpack.c.l.b16 %v4595
    %v5219 = vunpack.c.l.b16 %v4597
    %v5220 = vunpack.c.l.b16 %v4599
    %v5221 = vunpack.c.l.b16 %v4601
    %v5222 = vpack.c.b16 %v5215, %v5214
    %v5223 = vpack.c.b16 %v5217, %v5216
    %v5224 = vpack.c.b16 %v5219, %v5218
    %v5225 = vpack.c.b16 %v5221, %v5220
    %v5226 = vunpack.c.l.b16 %v4715
    %v5227 = vunpack.c.l.b16 %v4717
    %v5228 = vunpack.c.l.b16 %v4719
    %v5229 = vunpack.c.l.b16 %v4721
    %v5230 = vunpack.c.l.b16 %v4723
    %v5231 = vunpack.c.l.b16 %v4725
    %v5232 = vunpack.c.l.b16 %v4727
    %v5233 = vunpack.c.l.b16 %v4729
    %v5234 = vpack.c.b16 %v5227, %v5226
    %v5235 = vpack.c.b16 %v5229, %v5228
    %v5236 = vpack.c.b16 %v5231, %v5230
    %v5237 = vpack.c.b16 %v5233, %v5232
    %v5239 = vsel %vm1491, %v5222, 0
    %v5242 = vsel %vm1491, %v5223, 0
    %v5245 = vsel %vm1491, %v5224, 0
    %v5248 = vsel %vm1491, %v5225, 0
    %v5251 = vsel %vm1491, %v5234, 0
    %v5254 = vsel %vm1491, %v5235, 0
    %v5257 = vsel %vm1491, %v5236, 0
    %v5260 = vsel %vm1491, %v5237, 0
    %5262 = vmatpush.bf16.xpose.msra.mxu0 0
    %5263 = vmatpush.bf16.xpose.msra.mxu0 0
    %5264 = vmatpush.bf16.xpose.msra.mxu0 0
    %5265 = vmatpush.bf16.xpose.msra.mxu0 0
    %5266 = vmatpush.bf16.xpose.msra.mxu0 %v5260
    %5267 = vmatpush.bf16.xpose.msra.mxu0 %v5257
    %5268 = vmatpush.bf16.xpose.msra.mxu0 %v5254
    %5269 = vmatpush.bf16.xpose.msra.mxu0 %v5251
    %5270 = vmatmul.bf16.gmra.mxu0 %v5239
    %v5271 = vpop.f32.mrf.mxu0
    %v5272 = vadd.f32 0.0, %v5271
    %v5273 = vpop.f32.mrf.mxu0
    %v5274 = vadd.f32 0.0, %v5273
    %5275 = vmatmul.bf16.gmra.mxu0 %v5242
    %v5276 = vpop.f32.mrf.mxu0
    %v5277 = vadd.f32 0.0, %v5276
    %v5278 = vpop.f32.mrf.mxu0
    %v5279 = vadd.f32 0.0, %v5278
    %5280 = vmatmul.bf16.gmra.mxu0 %v5245
    %v5281 = vpop.f32.mrf.mxu0
    %v5282 = vadd.f32 0.0, %v5281
    %v5283 = vpop.f32.mrf.mxu0
    %v5284 = vadd.f32 0.0, %v5283
    %5285 = vmatmul.bf16.gmra.mxu0 %v5248
    %v5286 = vpop.f32.mrf.mxu0
    %v5287 = vadd.f32 0.0, %v5286
    %v5288 = vpop.f32.mrf.mxu0
    %v5289 = vadd.f32 0.0, %v5288
    %5290 = vdwg.mxu0
    %v5291 = vunpack.c.l.b16 %v4603
    %v5292 = vunpack.c.l.b16 %v4605
    %v5293 = vunpack.c.l.b16 %v4607
    %v5294 = vunpack.c.l.b16 %v4609
    %v5295 = vunpack.c.l.b16 %v4611
    %v5296 = vunpack.c.l.b16 %v4613
    %v5297 = vunpack.c.l.b16 %v4615
    %v5298 = vunpack.c.l.b16 %v4617
    %v5299 = vpack.c.b16 %v5292, %v5291
    %v5300 = vpack.c.b16 %v5294, %v5293
    %v5301 = vpack.c.b16 %v5296, %v5295
    %v5302 = vpack.c.b16 %v5298, %v5297
    %v5303 = vunpack.c.l.b16 %v4731
    %v5304 = vunpack.c.l.b16 %v4733
    %v5305 = vunpack.c.l.b16 %v4735
    %v5306 = vunpack.c.l.b16 %v4737
    %v5307 = vunpack.c.l.b16 %v4739
    %v5308 = vunpack.c.l.b16 %v4741
    %v5309 = vunpack.c.l.b16 %v4743
    %v5310 = vunpack.c.l.b16 %v4745
    %v5311 = vpack.c.b16 %v5304, %v5303
    %v5312 = vpack.c.b16 %v5306, %v5305
    %v5313 = vpack.c.b16 %v5308, %v5307
    %v5314 = vpack.c.b16 %v5310, %v5309
    %v5316 = vsel %vm1491, %v5299, 0
    %v5319 = vsel %vm1491, %v5300, 0
    %v5322 = vsel %vm1491, %v5301, 0
    %v5325 = vsel %vm1491, %v5302, 0
    %v5328 = vsel %vm1491, %v5311, 0
    %v5331 = vsel %vm1491, %v5312, 0
    %v5334 = vsel %vm1491, %v5313, 0
    %v5337 = vsel %vm1491, %v5314, 0
    %5339 = vmatpush.bf16.xpose.msra.mxu0 0
    %5340 = vmatpush.bf16.xpose.msra.mxu0 0
    %5341 = vmatpush.bf16.xpose.msra.mxu0 0
    %5342 = vmatpush.bf16.xpose.msra.mxu0 0
    %5343 = vmatpush.bf16.xpose.msra.mxu0 %v5337
    %5344 = vmatpush.bf16.xpose.msra.mxu0 %v5334
    %5345 = vmatpush.bf16.xpose.msra.mxu0 %v5331
    %5346 = vmatpush.bf16.xpose.msra.mxu0 %v5328
    %5347 = vmatmul.bf16.gmra.mxu0 %v5316
    %v5348 = vpop.f32.mrf.mxu0
    %v5349 = vadd.f32 0.0, %v5348
    %v5350 = vpop.f32.mrf.mxu0
    %v5351 = vadd.f32 0.0, %v5350
    %5352 = vmatmul.bf16.gmra.mxu0 %v5319
    %v5353 = vpop.f32.mrf.mxu0
    %v5354 = vadd.f32 0.0, %v5353
    %v5355 = vpop.f32.mrf.mxu0
    %v5356 = vadd.f32 0.0, %v5355
    %5357 = vmatmul.bf16.gmra.mxu0 %v5322
    %v5358 = vpop.f32.mrf.mxu0
    %v5359 = vadd.f32 0.0, %v5358
    %v5360 = vpop.f32.mrf.mxu0
    %v5361 = vadd.f32 0.0, %v5360
    %5362 = vmatmul.bf16.gmra.mxu0 %v5325
    %v5363 = vpop.f32.mrf.mxu0
    %v5364 = vadd.f32 0.0, %v5363
    %v5365 = vpop.f32.mrf.mxu0
    %v5366 = vadd.f32 0.0, %v5365
    %5367 = vdwg.mxu0
    %v5368 = vunpack.c.l.b16 %v4619
    %v5369 = vunpack.c.l.b16 %v4621
    %v5370 = vunpack.c.l.b16 %v4623
    %v5371 = vunpack.c.l.b16 %v4625
    %v5372 = vunpack.c.l.b16 %v4627
    %v5373 = vunpack.c.l.b16 %v4629
    %v5374 = vunpack.c.l.b16 %v4631
    %v5375 = vunpack.c.l.b16 %v4633
    %v5376 = vpack.c.b16 %v5369, %v5368
    %v5377 = vpack.c.b16 %v5371, %v5370
    %v5378 = vpack.c.b16 %v5373, %v5372
    %v5379 = vpack.c.b16 %v5375, %v5374
    %v5380 = vunpack.c.l.b16 %v4747
    %v5381 = vunpack.c.l.b16 %v4749
    %v5382 = vunpack.c.l.b16 %v4751
    %v5383 = vunpack.c.l.b16 %v4753
    %v5384 = vunpack.c.l.b16 %v4755
    %v5385 = vunpack.c.l.b16 %v4757
    %v5386 = vunpack.c.l.b16 %v4759
    %v5387 = vunpack.c.l.b16 %v4761
    %v5388 = vpack.c.b16 %v5381, %v5380
    %v5389 = vpack.c.b16 %v5383, %v5382
    %v5390 = vpack.c.b16 %v5385, %v5384
    %v5391 = vpack.c.b16 %v5387, %v5386
    %v5393 = vsel %vm1491, %v5376, 0
    %v5396 = vsel %vm1491, %v5377, 0
    %v5399 = vsel %vm1491, %v5378, 0
    %v5402 = vsel %vm1491, %v5379, 0
    %v5405 = vsel %vm1491, %v5388, 0
    %v5408 = vsel %vm1491, %v5389, 0
    %v5411 = vsel %vm1491, %v5390, 0
    %v5414 = vsel %vm1491, %v5391, 0
    %5416 = vmatpush.bf16.xpose.msra.mxu0 0
    %5417 = vmatpush.bf16.xpose.msra.mxu0 0
    %5418 = vmatpush.bf16.xpose.msra.mxu0 0
    %5419 = vmatpush.bf16.xpose.msra.mxu0 0
    %5420 = vmatpush.bf16.xpose.msra.mxu0 %v5414
    %5421 = vmatpush.bf16.xpose.msra.mxu0 %v5411
    %5422 = vmatpush.bf16.xpose.msra.mxu0 %v5408
    %5423 = vmatpush.bf16.xpose.msra.mxu0 %v5405
    %5424 = vmatmul.bf16.gmra.mxu0 %v5393
    %v5425 = vpop.f32.mrf.mxu0
    %v5426 = vadd.f32 0.0, %v5425
    %v5427 = vpop.f32.mrf.mxu0
    %v5428 = vadd.f32 0.0, %v5427
    %5429 = vmatmul.bf16.gmra.mxu0 %v5396
    %v5430 = vpop.f32.mrf.mxu0
    %v5431 = vadd.f32 0.0, %v5430
    %v5432 = vpop.f32.mrf.mxu0
    %v5433 = vadd.f32 0.0, %v5432
    %5434 = vmatmul.bf16.gmra.mxu0 %v5399
    %v5435 = vpop.f32.mrf.mxu0
    %v5436 = vadd.f32 0.0, %v5435
    %v5437 = vpop.f32.mrf.mxu0
    %v5438 = vadd.f32 0.0, %v5437
    %5439 = vmatmul.bf16.gmra.mxu0 %v5402
    %v5440 = vpop.f32.mrf.mxu0
    %v5441 = vadd.f32 0.0, %v5440
    %v5442 = vpop.f32.mrf.mxu0
    %v5443 = vadd.f32 0.0, %v5442
    %5444 = vdwg.mxu0
    %v5445 = vunpack.c.l.b16 %v4635
    %v5446 = vunpack.c.l.b16 %v4637
    %v5447 = vunpack.c.l.b16 %v4639
    %v5448 = vunpack.c.l.b16 %v4641
    %v5449 = vunpack.c.l.b16 %v4643
    %v5450 = vunpack.c.l.b16 %v4645
    %v5451 = vunpack.c.l.b16 %v4647
    %v5452 = vunpack.c.l.b16 %v4649
    %v5453 = vpack.c.b16 %v5446, %v5445
    %v5454 = vpack.c.b16 %v5448, %v5447
    %v5455 = vpack.c.b16 %v5450, %v5449
    %v5456 = vpack.c.b16 %v5452, %v5451
    %v5457 = vunpack.c.l.b16 %v4763
    %v5458 = vunpack.c.l.b16 %v4765
    %v5459 = vunpack.c.l.b16 %v4767
    %v5460 = vunpack.c.l.b16 %v4769
    %v5461 = vunpack.c.l.b16 %v4771
    %v5462 = vunpack.c.l.b16 %v4773
    %v5463 = vunpack.c.l.b16 %v4775
    %v5464 = vunpack.c.l.b16 %v4777
    %v5465 = vpack.c.b16 %v5458, %v5457
    %v5466 = vpack.c.b16 %v5460, %v5459
    %v5467 = vpack.c.b16 %v5462, %v5461
    %v5468 = vpack.c.b16 %v5464, %v5463
    %v5470 = vsel %vm1491, %v5453, 0
    %v5473 = vsel %vm1491, %v5454, 0
    %v5476 = vsel %vm1491, %v5455, 0
    %v5479 = vsel %vm1491, %v5456, 0
    %v5482 = vsel %vm1491, %v5465, 0
    %v5485 = vsel %vm1491, %v5466, 0
    %v5488 = vsel %vm1491, %v5467, 0
    %v5491 = vsel %vm1491, %v5468, 0
    %5493 = vmatpush.bf16.xpose.msra.mxu0 0
    %5494 = vmatpush.bf16.xpose.msra.mxu0 0
    %5495 = vmatpush.bf16.xpose.msra.mxu0 0
    %5496 = vmatpush.bf16.xpose.msra.mxu0 0
    %5497 = vmatpush.bf16.xpose.msra.mxu0 %v5491
    %5498 = vmatpush.bf16.xpose.msra.mxu0 %v5488
    %5499 = vmatpush.bf16.xpose.msra.mxu0 %v5485
    %5500 = vmatpush.bf16.xpose.msra.mxu0 %v5482
    %5501 = vmatmul.bf16.gmra.mxu0 %v5470
    %v5502 = vpop.f32.mrf.mxu0
    %v5503 = vadd.f32 0.0, %v5502
    %v5504 = vpop.f32.mrf.mxu0
    %v5505 = vadd.f32 0.0, %v5504
    %5506 = vmatmul.bf16.gmra.mxu0 %v5473
    %v5507 = vpop.f32.mrf.mxu0
    %v5508 = vadd.f32 0.0, %v5507
    %v5509 = vpop.f32.mrf.mxu0
    %v5510 = vadd.f32 0.0, %v5509
    %5511 = vmatmul.bf16.gmra.mxu0 %v5476
    %v5512 = vpop.f32.mrf.mxu0
    %v5513 = vadd.f32 0.0, %v5512
    %v5514 = vpop.f32.mrf.mxu0
    %v5515 = vadd.f32 0.0, %v5514
    %5516 = vmatmul.bf16.gmra.mxu0 %v5479
    %v5517 = vpop.f32.mrf.mxu0
    %v5518 = vadd.f32 0.0, %v5517
    %v5519 = vpop.f32.mrf.mxu0
    %v5520 = vadd.f32 0.0, %v5519
    %5521 = vdwg.mxu0
    %v5522 = vsel %vm417, %v4964, -inf
    %5523 = vmax.xlane.f32.xlu0 %v5522
    %v5524 = vpop.xlane.xlu0 %5523
    %v5525 = vsel %vm417, %v4966, -inf
    %5526 = vmax.xlane.f32.xlu0 %v5525
    %v5527 = vpop.xlane.xlu0 %5526
    %v5528 = vsel %vm417, %v4969, -inf
    %5529 = vmax.xlane.f32.xlu0 %v5528
    %v5530 = vpop.xlane.xlu0 %5529
    %v5531 = vsel %vm417, %v4971, -inf
    %5532 = vmax.xlane.f32.xlu0 %v5531
    %v5533 = vpop.xlane.xlu0 %5532
    %v5534 = vsel %vm417, %v4974, -inf
    %5535 = vmax.xlane.f32.xlu0 %v5534
    %v5536 = vpop.xlane.xlu0 %5535
    %v5537 = vsel %vm417, %v4976, -inf
    %5538 = vmax.xlane.f32.xlu0 %v5537
    %v5539 = vpop.xlane.xlu0 %5538
    %v5540 = vsel %vm417, %v4979, -inf
    %5541 = vmax.xlane.f32.xlu0 %v5540
    %v5542 = vpop.xlane.xlu0 %5541
    %v5543 = vsel %vm417, %v4981, -inf
    %5544 = vmax.xlane.f32.xlu0 %v5543
    %v5545 = vpop.xlane.xlu0 %5544
    %v5546 = vsel %vm417, %v5041, -inf
    %5547 = vmax.xlane.f32.xlu0 %v5546
    %v5548 = vpop.xlane.xlu0 %5547
    %v5549 = vsel %vm417, %v5043, -inf
    %5550 = vmax.xlane.f32.xlu0 %v5549
    %v5551 = vpop.xlane.xlu0 %5550
    %v5552 = vsel %vm417, %v5046, -inf
    %5553 = vmax.xlane.f32.xlu0 %v5552
    %v5554 = vpop.xlane.xlu0 %5553
    %v5555 = vsel %vm417, %v5048, -inf
    %5556 = vmax.xlane.f32.xlu0 %v5555
    %v5557 = vpop.xlane.xlu0 %5556
    %v5558 = vsel %vm417, %v5051, -inf
    %5559 = vmax.xlane.f32.xlu0 %v5558
    %v5560 = vpop.xlane.xlu0 %5559
    %v5561 = vsel %vm417, %v5053, -inf
    %5562 = vmax.xlane.f32.xlu0 %v5561
    %v5563 = vpop.xlane.xlu0 %5562
    %v5564 = vsel %vm417, %v5056, -inf
    %5565 = vmax.xlane.f32.xlu0 %v5564
    %v5566 = vpop.xlane.xlu0 %5565
    %v5567 = vsel %vm417, %v5058, -inf
    %5568 = vmax.xlane.f32.xlu0 %v5567
    %v5569 = vpop.xlane.xlu0 %5568
    %v5570 = vsel %vm417, %v5118, -inf
    %5571 = vmax.xlane.f32.xlu0 %v5570
    %v5572 = vpop.xlane.xlu0 %5571
    %v5573 = vsel %vm417, %v5120, -inf
    %5574 = vmax.xlane.f32.xlu0 %v5573
    %v5575 = vpop.xlane.xlu0 %5574
    %v5576 = vsel %vm417, %v5123, -inf
    %5577 = vmax.xlane.f32.xlu0 %v5576
    %v5578 = vpop.xlane.xlu0 %5577
    %v5579 = vsel %vm417, %v5125, -inf
    %5580 = vmax.xlane.f32.xlu0 %v5579
    %v5581 = vpop.xlane.xlu0 %5580
    %v5582 = vsel %vm417, %v5128, -inf
    %5583 = vmax.xlane.f32.xlu0 %v5582
    %v5584 = vpop.xlane.xlu0 %5583
    %v5585 = vsel %vm417, %v5130, -inf
    %5586 = vmax.xlane.f32.xlu0 %v5585
    %v5587 = vpop.xlane.xlu0 %5586
    %v5588 = vsel %vm417, %v5133, -inf
    %5589 = vmax.xlane.f32.xlu0 %v5588
    %v5590 = vpop.xlane.xlu0 %5589
    %v5591 = vsel %vm417, %v5135, -inf
    %5592 = vmax.xlane.f32.xlu0 %v5591
    %v5593 = vpop.xlane.xlu0 %5592
    %v5594 = vsel %vm417, %v5195, -inf
    %5595 = vmax.xlane.f32.xlu0 %v5594
    %v5596 = vpop.xlane.xlu0 %5595
    %v5597 = vsel %vm417, %v5197, -inf
    %5598 = vmax.xlane.f32.xlu0 %v5597
    %v5599 = vpop.xlane.xlu0 %5598
    %v5600 = vsel %vm417, %v5200, -inf
    %5601 = vmax.xlane.f32.xlu0 %v5600
    %v5602 = vpop.xlane.xlu0 %5601
    %v5603 = vsel %vm417, %v5202, -inf
    %5604 = vmax.xlane.f32.xlu0 %v5603
    %v5605 = vpop.xlane.xlu0 %5604
    %v5606 = vsel %vm417, %v5205, -inf
    %5607 = vmax.xlane.f32.xlu0 %v5606
    %v5608 = vpop.xlane.xlu0 %5607
    %v5609 = vsel %vm417, %v5207, -inf
    %5610 = vmax.xlane.f32.xlu0 %v5609
    %v5611 = vpop.xlane.xlu0 %5610
    %v5612 = vsel %vm417, %v5210, -inf
    %5613 = vmax.xlane.f32.xlu0 %v5612
    %v5614 = vpop.xlane.xlu0 %5613
    %v5615 = vsel %vm417, %v5212, -inf
    %5616 = vmax.xlane.f32.xlu0 %v5615
    %v5617 = vpop.xlane.xlu0 %5616
    %v5618 = vsel %vm417, %v5272, -inf
    %5619 = vmax.xlane.f32.xlu0 %v5618
    %v5620 = vpop.xlane.xlu0 %5619
    %v5621 = vsel %vm417, %v5274, -inf
    %5622 = vmax.xlane.f32.xlu0 %v5621
    %v5623 = vpop.xlane.xlu0 %5622
    %v5624 = vsel %vm417, %v5277, -inf
    %5625 = vmax.xlane.f32.xlu0 %v5624
    %v5626 = vpop.xlane.xlu0 %5625
    %v5627 = vsel %vm417, %v5279, -inf
    %5628 = vmax.xlane.f32.xlu0 %v5627
    %v5629 = vpop.xlane.xlu0 %5628
    %v5630 = vsel %vm417, %v5282, -inf
    %5631 = vmax.xlane.f32.xlu0 %v5630
    %v5632 = vpop.xlane.xlu0 %5631
    %v5633 = vsel %vm417, %v5284, -inf
    %5634 = vmax.xlane.f32.xlu0 %v5633
    %v5635 = vpop.xlane.xlu0 %5634
    %v5636 = vsel %vm417, %v5287, -inf
    %5637 = vmax.xlane.f32.xlu0 %v5636
    %v5638 = vpop.xlane.xlu0 %5637
    %v5639 = vsel %vm417, %v5289, -inf
    %5640 = vmax.xlane.f32.xlu0 %v5639
    %v5641 = vpop.xlane.xlu0 %5640
    %v5642 = vsel %vm417, %v5349, -inf
    %5643 = vmax.xlane.f32.xlu0 %v5642
    %v5644 = vpop.xlane.xlu0 %5643
    %v5645 = vsel %vm417, %v5351, -inf
    %5646 = vmax.xlane.f32.xlu0 %v5645
    %v5647 = vpop.xlane.xlu0 %5646
    %v5648 = vsel %vm417, %v5354, -inf
    %5649 = vmax.xlane.f32.xlu0 %v5648
    %v5650 = vpop.xlane.xlu0 %5649
    %v5651 = vsel %vm417, %v5356, -inf
    %5652 = vmax.xlane.f32.xlu0 %v5651
    %v5653 = vpop.xlane.xlu0 %5652
    %v5654 = vsel %vm417, %v5359, -inf
    %5655 = vmax.xlane.f32.xlu0 %v5654
    %v5656 = vpop.xlane.xlu0 %5655
    %v5657 = vsel %vm417, %v5361, -inf
    %5658 = vmax.xlane.f32.xlu0 %v5657
    %v5659 = vpop.xlane.xlu0 %5658
    %v5660 = vsel %vm417, %v5364, -inf
    %5661 = vmax.xlane.f32.xlu0 %v5660
    %v5662 = vpop.xlane.xlu0 %5661
    %v5663 = vsel %vm417, %v5366, -inf
    %5664 = vmax.xlane.f32.xlu0 %v5663
    %v5665 = vpop.xlane.xlu0 %5664
    %v5666 = vsel %vm417, %v5426, -inf
    %5667 = vmax.xlane.f32.xlu0 %v5666
    %v5668 = vpop.xlane.xlu0 %5667
    %v5669 = vsel %vm417, %v5428, -inf
    %5670 = vmax.xlane.f32.xlu0 %v5669
    %v5671 = vpop.xlane.xlu0 %5670
    %v5672 = vsel %vm417, %v5431, -inf
    %5673 = vmax.xlane.f32.xlu0 %v5672
    %v5674 = vpop.xlane.xlu0 %5673
    %v5675 = vsel %vm417, %v5433, -inf
    %5676 = vmax.xlane.f32.xlu0 %v5675
    %v5677 = vpop.xlane.xlu0 %5676
    %v5678 = vsel %vm417, %v5436, -inf
    %5679 = vmax.xlane.f32.xlu0 %v5678
    %v5680 = vpop.xlane.xlu0 %5679
    %v5681 = vsel %vm417, %v5438, -inf
    %5682 = vmax.xlane.f32.xlu0 %v5681
    %v5683 = vpop.xlane.xlu0 %5682
    %v5684 = vsel %vm417, %v5441, -inf
    %5685 = vmax.xlane.f32.xlu0 %v5684
    %v5686 = vpop.xlane.xlu0 %5685
    %v5687 = vsel %vm417, %v5443, -inf
    %5688 = vmax.xlane.f32.xlu0 %v5687
    %v5689 = vpop.xlane.xlu0 %5688
    %v5690 = vsel %vm417, %v5503, -inf
    %5691 = vmax.xlane.f32.xlu0 %v5690
    %v5692 = vpop.xlane.xlu0 %5691
    %v5693 = vsel %vm417, %v5505, -inf
    %5694 = vmax.xlane.f32.xlu0 %v5693
    %v5695 = vpop.xlane.xlu0 %5694
    %v5696 = vsel %vm417, %v5508, -inf
    %5697 = vmax.xlane.f32.xlu0 %v5696
    %v5698 = vpop.xlane.xlu0 %5697
    %v5699 = vsel %vm417, %v5510, -inf
    %5700 = vmax.xlane.f32.xlu0 %v5699
    %v5701 = vpop.xlane.xlu0 %5700
    %v5702 = vsel %vm417, %v5513, -inf
    %5703 = vmax.xlane.f32.xlu0 %v5702
    %v5704 = vpop.xlane.xlu0 %5703
    %v5705 = vsel %vm417, %v5515, -inf
    %5706 = vmax.xlane.f32.xlu0 %v5705
    %v5707 = vpop.xlane.xlu0 %5706
    %v5708 = vsel %vm417, %v5518, -inf
    %5709 = vmax.xlane.f32.xlu0 %v5708
    %v5710 = vpop.xlane.xlu0 %5709
    %v5711 = vsel %vm417, %v5520, -inf
    %5712 = vmax.xlane.f32.xlu0 %v5711
    %v5713 = vpop.xlane.xlu0 %5712
    %v5714 = vsub.f32 %v4964, %v5524
    %v5715 = vsub.f32 %v4966, %v5527
    %v5716 = vsub.f32 %v4969, %v5530
    %v5717 = vsub.f32 %v4971, %v5533
    %v5718 = vsub.f32 %v4974, %v5536
    %v5719 = vsub.f32 %v4976, %v5539
    %v5720 = vsub.f32 %v4979, %v5542
    %v5721 = vsub.f32 %v4981, %v5545
    %v5722 = vsub.f32 %v5041, %v5548
    %v5723 = vsub.f32 %v5043, %v5551
    %v5724 = vsub.f32 %v5046, %v5554
    %v5725 = vsub.f32 %v5048, %v5557
    %v5726 = vsub.f32 %v5051, %v5560
    %v5727 = vsub.f32 %v5053, %v5563
    %v5728 = vsub.f32 %v5056, %v5566
    %v5729 = vsub.f32 %v5058, %v5569
    %v5730 = vsub.f32 %v5118, %v5572
    %v5731 = vsub.f32 %v5120, %v5575
    %v5732 = vsub.f32 %v5123, %v5578
    %v5733 = vsub.f32 %v5125, %v5581
    %v5734 = vsub.f32 %v5128, %v5584
    %v5735 = vsub.f32 %v5130, %v5587
    %v5736 = vsub.f32 %v5133, %v5590
    %v5737 = vsub.f32 %v5135, %v5593
    %v5738 = vsub.f32 %v5195, %v5596
    %v5739 = vsub.f32 %v5197, %v5599
    %v5740 = vsub.f32 %v5200, %v5602
    %v5741 = vsub.f32 %v5202, %v5605
    %v5742 = vsub.f32 %v5205, %v5608
    %v5743 = vsub.f32 %v5207, %v5611
    %v5744 = vsub.f32 %v5210, %v5614
    %v5745 = vsub.f32 %v5212, %v5617
    %v5746 = vsub.f32 %v5272, %v5620
    %v5747 = vsub.f32 %v5274, %v5623
    %v5748 = vsub.f32 %v5277, %v5626
    %v5749 = vsub.f32 %v5279, %v5629
    %v5750 = vsub.f32 %v5282, %v5632
    %v5751 = vsub.f32 %v5284, %v5635
    %v5752 = vsub.f32 %v5287, %v5638
    %v5753 = vsub.f32 %v5289, %v5641
    %v5754 = vsub.f32 %v5349, %v5644
    %v5755 = vsub.f32 %v5351, %v5647
    %v5756 = vsub.f32 %v5354, %v5650
    %v5757 = vsub.f32 %v5356, %v5653
    %v5758 = vsub.f32 %v5359, %v5656
    %v5759 = vsub.f32 %v5361, %v5659
    %v5760 = vsub.f32 %v5364, %v5662
    %v5761 = vsub.f32 %v5366, %v5665
    %v5762 = vsub.f32 %v5426, %v5668
    %v5763 = vsub.f32 %v5428, %v5671
    %v5764 = vsub.f32 %v5431, %v5674
    %v5765 = vsub.f32 %v5433, %v5677
    %v5766 = vsub.f32 %v5436, %v5680
    %v5767 = vsub.f32 %v5438, %v5683
    %v5768 = vsub.f32 %v5441, %v5686
    %v5769 = vsub.f32 %v5443, %v5689
    %v5770 = vsub.f32 %v5503, %v5692
    %v5771 = vsub.f32 %v5505, %v5695
    %v5772 = vsub.f32 %v5508, %v5698
    %v5773 = vsub.f32 %v5510, %v5701
    %v5774 = vsub.f32 %v5513, %v5704
    %v5775 = vsub.f32 %v5515, %v5707
    %v5776 = vsub.f32 %v5518, %v5710
    %v5777 = vsub.f32 %v5520, %v5713
    %v5778 = vmul.f32 %v5714, 1.442695
    %v5779 = vpow.pop %v5778
    %v5780 = vmul.f32 %v5715, 1.442695
    %v5781 = vpow.pop %v5780
    %v5782 = vmul.f32 %v5716, 1.442695
    %v5783 = vpow.pop %v5782
    %v5784 = vmul.f32 %v5717, 1.442695
    %v5785 = vpow.pop %v5784
    %v5786 = vmul.f32 %v5718, 1.442695
    %v5787 = vpow.pop %v5786
    %v5788 = vmul.f32 %v5719, 1.442695
    %v5789 = vpow.pop %v5788
    %v5790 = vmul.f32 %v5720, 1.442695
    %v5791 = vpow.pop %v5790
    %v5792 = vmul.f32 %v5721, 1.442695
    %v5793 = vpow.pop %v5792
    %v5794 = vmul.f32 %v5722, 1.442695
    %v5795 = vpow.pop %v5794
    %v5796 = vmul.f32 %v5723, 1.442695
    %v5797 = vpow.pop %v5796
    %v5798 = vmul.f32 %v5724, 1.442695
    %v5799 = vpow.pop %v5798
    %v5800 = vmul.f32 %v5725, 1.442695
    %v5801 = vpow.pop %v5800
    %v5802 = vmul.f32 %v5726, 1.442695
    %v5803 = vpow.pop %v5802
    %v5804 = vmul.f32 %v5727, 1.442695
    %v5805 = vpow.pop %v5804
    %v5806 = vmul.f32 %v5728, 1.442695
    %v5807 = vpow.pop %v5806
    %v5808 = vmul.f32 %v5729, 1.442695
    %v5809 = vpow.pop %v5808
    %v5810 = vmul.f32 %v5730, 1.442695
    %v5811 = vpow.pop %v5810
    %v5812 = vmul.f32 %v5731, 1.442695
    %v5813 = vpow.pop %v5812
    %v5814 = vmul.f32 %v5732, 1.442695
    %v5815 = vpow.pop %v5814
    %v5816 = vmul.f32 %v5733, 1.442695
    %v5817 = vpow.pop %v5816
    %v5818 = vmul.f32 %v5734, 1.442695
    %v5819 = vpow.pop %v5818
    %v5820 = vmul.f32 %v5735, 1.442695
    %v5821 = vpow.pop %v5820
    %v5822 = vmul.f32 %v5736, 1.442695
    %v5823 = vpow.pop %v5822
    %v5824 = vmul.f32 %v5737, 1.442695
    %v5825 = vpow.pop %v5824
    %v5826 = vmul.f32 %v5738, 1.442695
    %v5827 = vpow.pop %v5826
    %v5828 = vmul.f32 %v5739, 1.442695
    %v5829 = vpow.pop %v5828
    %v5830 = vmul.f32 %v5740, 1.442695
    %v5831 = vpow.pop %v5830
    %v5832 = vmul.f32 %v5741, 1.442695
    %v5833 = vpow.pop %v5832
    %v5834 = vmul.f32 %v5742, 1.442695
    %v5835 = vpow.pop %v5834
    %v5836 = vmul.f32 %v5743, 1.442695
    %v5837 = vpow.pop %v5836
    %v5838 = vmul.f32 %v5744, 1.442695
    %v5839 = vpow.pop %v5838
    %v5840 = vmul.f32 %v5745, 1.442695
    %v5841 = vpow.pop %v5840
    %v5842 = vmul.f32 %v5746, 1.442695
    %v5843 = vpow.pop %v5842
    %v5844 = vmul.f32 %v5747, 1.442695
    %v5845 = vpow.pop %v5844
    %v5846 = vmul.f32 %v5748, 1.442695
    %v5847 = vpow.pop %v5846
    %v5848 = vmul.f32 %v5749, 1.442695
    %v5849 = vpow.pop %v5848
    %v5850 = vmul.f32 %v5750, 1.442695
    %v5851 = vpow.pop %v5850
    %v5852 = vmul.f32 %v5751, 1.442695
    %v5853 = vpow.pop %v5852
    %v5854 = vmul.f32 %v5752, 1.442695
    %v5855 = vpow.pop %v5854
    %v5856 = vmul.f32 %v5753, 1.442695
    %v5857 = vpow.pop %v5856
    %v5858 = vmul.f32 %v5754, 1.442695
    %v5859 = vpow.pop %v5858
    %v5860 = vmul.f32 %v5755, 1.442695
    %v5861 = vpow.pop %v5860
    %v5862 = vmul.f32 %v5756, 1.442695
    %v5863 = vpow.pop %v5862
    %v5864 = vmul.f32 %v5757, 1.442695
    %v5865 = vpow.pop %v5864
    %v5866 = vmul.f32 %v5758, 1.442695
    %v5867 = vpow.pop %v5866
    %v5868 = vmul.f32 %v5759, 1.442695
    %v5869 = vpow.pop %v5868
    %v5870 = vmul.f32 %v5760, 1.442695
    %v5871 = vpow.pop %v5870
    %v5872 = vmul.f32 %v5761, 1.442695
    %v5873 = vpow.pop %v5872
    %v5874 = vmul.f32 %v5762, 1.442695
    %v5875 = vpow.pop %v5874
    %v5876 = vmul.f32 %v5763, 1.442695
    %v5877 = vpow.pop %v5876
    %v5878 = vmul.f32 %v5764, 1.442695
    %v5879 = vpow.pop %v5878
    %v5880 = vmul.f32 %v5765, 1.442695
    %v5881 = vpow.pop %v5880
    %v5882 = vmul.f32 %v5766, 1.442695
    %v5883 = vpow.pop %v5882
    %v5884 = vmul.f32 %v5767, 1.442695
    %v5885 = vpow.pop %v5884
    %v5886 = vmul.f32 %v5768, 1.442695
    %v5887 = vpow.pop %v5886
    %v5888 = vmul.f32 %v5769, 1.442695
    %v5889 = vpow.pop %v5888
    %v5890 = vmul.f32 %v5770, 1.442695
    %v5891 = vpow.pop %v5890
    %v5892 = vmul.f32 %v5771, 1.442695
    %v5893 = vpow.pop %v5892
    %v5894 = vmul.f32 %v5772, 1.442695
    %v5895 = vpow.pop %v5894
    %v5896 = vmul.f32 %v5773, 1.442695
    %v5897 = vpow.pop %v5896
    %v5898 = vmul.f32 %v5774, 1.442695
    %v5899 = vpow.pop %v5898
    %v5900 = vmul.f32 %v5775, 1.442695
    %v5901 = vpow.pop %v5900
    %v5902 = vmul.f32 %v5776, 1.442695
    %v5903 = vpow.pop %v5902
    %v5904 = vmul.f32 %v5777, 1.442695
    %v5905 = vpow.pop %v5904
    %v5906 = vsel %vm417, %v5779, 0.0
    %5907 = vadd.xlane.f32.xlu0 %v5906
    %v5908 = vpop.xlane.xlu0 %5907
    %v5909 = vsel %vm417, %v5781, 0.0
    %5910 = vadd.xlane.f32.xlu0 %v5909
    %v5911 = vpop.xlane.xlu0 %5910
    %v5912 = vsel %vm417, %v5783, 0.0
    %5913 = vadd.xlane.f32.xlu0 %v5912
    %v5914 = vpop.xlane.xlu0 %5913
    %v5915 = vsel %vm417, %v5785, 0.0
    %5916 = vadd.xlane.f32.xlu0 %v5915
    %v5917 = vpop.xlane.xlu0 %5916
    %v5918 = vsel %vm417, %v5787, 0.0
    %5919 = vadd.xlane.f32.xlu0 %v5918
    %v5920 = vpop.xlane.xlu0 %5919
    %v5921 = vsel %vm417, %v5789, 0.0
    %5922 = vadd.xlane.f32.xlu0 %v5921
    %v5923 = vpop.xlane.xlu0 %5922
    %v5924 = vsel %vm417, %v5791, 0.0
    %5925 = vadd.xlane.f32.xlu0 %v5924
    %v5926 = vpop.xlane.xlu0 %5925
    %v5927 = vsel %vm417, %v5793, 0.0
    %5928 = vadd.xlane.f32.xlu0 %v5927
    %v5929 = vpop.xlane.xlu0 %5928
    %v5930 = vsel %vm417, %v5795, 0.0
    %5931 = vadd.xlane.f32.xlu0 %v5930
    %v5932 = vpop.xlane.xlu0 %5931
    %v5933 = vsel %vm417, %v5797, 0.0
    %5934 = vadd.xlane.f32.xlu0 %v5933
    %v5935 = vpop.xlane.xlu0 %5934
    %v5936 = vsel %vm417, %v5799, 0.0
    %5937 = vadd.xlane.f32.xlu0 %v5936
    %v5938 = vpop.xlane.xlu0 %5937
    %v5939 = vsel %vm417, %v5801, 0.0
    %5940 = vadd.xlane.f32.xlu0 %v5939
    %v5941 = vpop.xlane.xlu0 %5940
    %v5942 = vsel %vm417, %v5803, 0.0
    %5943 = vadd.xlane.f32.xlu0 %v5942
    %v5944 = vpop.xlane.xlu0 %5943
    %v5945 = vsel %vm417, %v5805, 0.0
    %5946 = vadd.xlane.f32.xlu0 %v5945
    %v5947 = vpop.xlane.xlu0 %5946
    %v5948 = vsel %vm417, %v5807, 0.0
    %5949 = vadd.xlane.f32.xlu0 %v5948
    %v5950 = vpop.xlane.xlu0 %5949
    %v5951 = vsel %vm417, %v5809, 0.0
    %5952 = vadd.xlane.f32.xlu0 %v5951
    %v5953 = vpop.xlane.xlu0 %5952
    %v5954 = vsel %vm417, %v5811, 0.0
    %5955 = vadd.xlane.f32.xlu0 %v5954
    %v5956 = vpop.xlane.xlu0 %5955
    %v5957 = vsel %vm417, %v5813, 0.0
    %5958 = vadd.xlane.f32.xlu0 %v5957
    %v5959 = vpop.xlane.xlu0 %5958
    %v5960 = vsel %vm417, %v5815, 0.0
    %5961 = vadd.xlane.f32.xlu0 %v5960
    %v5962 = vpop.xlane.xlu0 %5961
    %v5963 = vsel %vm417, %v5817, 0.0
    %5964 = vadd.xlane.f32.xlu0 %v5963
    %v5965 = vpop.xlane.xlu0 %5964
    %v5966 = vsel %vm417, %v5819, 0.0
    %5967 = vadd.xlane.f32.xlu0 %v5966
    %v5968 = vpop.xlane.xlu0 %5967
    %v5969 = vsel %vm417, %v5821, 0.0
    %5970 = vadd.xlane.f32.xlu0 %v5969
    %v5971 = vpop.xlane.xlu0 %5970
    %v5972 = vsel %vm417, %v5823, 0.0
    %5973 = vadd.xlane.f32.xlu0 %v5972
    %v5974 = vpop.xlane.xlu0 %5973
    %v5975 = vsel %vm417, %v5825, 0.0
    %5976 = vadd.xlane.f32.xlu0 %v5975
    %v5977 = vpop.xlane.xlu0 %5976
    %v5978 = vsel %vm417, %v5827, 0.0
    %5979 = vadd.xlane.f32.xlu0 %v5978
    %v5980 = vpop.xlane.xlu0 %5979
    %v5981 = vsel %vm417, %v5829, 0.0
    %5982 = vadd.xlane.f32.xlu0 %v5981
    %v5983 = vpop.xlane.xlu0 %5982
    %v5984 = vsel %vm417, %v5831, 0.0
    %5985 = vadd.xlane.f32.xlu0 %v5984
    %v5986 = vpop.xlane.xlu0 %5985
    %v5987 = vsel %vm417, %v5833, 0.0
    %5988 = vadd.xlane.f32.xlu0 %v5987
    %v5989 = vpop.xlane.xlu0 %5988
    %v5990 = vsel %vm417, %v5835, 0.0
    %5991 = vadd.xlane.f32.xlu0 %v5990
    %v5992 = vpop.xlane.xlu0 %5991
    %v5993 = vsel %vm417, %v5837, 0.0
    %5994 = vadd.xlane.f32.xlu0 %v5993
    %v5995 = vpop.xlane.xlu0 %5994
    %v5996 = vsel %vm417, %v5839, 0.0
    %5997 = vadd.xlane.f32.xlu0 %v5996
    %v5998 = vpop.xlane.xlu0 %5997
    %v5999 = vsel %vm417, %v5841, 0.0
    %6000 = vadd.xlane.f32.xlu0 %v5999
    %v6001 = vpop.xlane.xlu0 %6000
    %v6002 = vsel %vm417, %v5843, 0.0
    %6003 = vadd.xlane.f32.xlu0 %v6002
    %v6004 = vpop.xlane.xlu0 %6003
    %v6005 = vsel %vm417, %v5845, 0.0
    %6006 = vadd.xlane.f32.xlu0 %v6005
    %v6007 = vpop.xlane.xlu0 %6006
    %v6008 = vsel %vm417, %v5847, 0.0
    %6009 = vadd.xlane.f32.xlu0 %v6008
    %v6010 = vpop.xlane.xlu0 %6009
    %v6011 = vsel %vm417, %v5849, 0.0
    %6012 = vadd.xlane.f32.xlu0 %v6011
    %v6013 = vpop.xlane.xlu0 %6012
    %v6014 = vsel %vm417, %v5851, 0.0
    %6015 = vadd.xlane.f32.xlu0 %v6014
    %v6016 = vpop.xlane.xlu0 %6015
    %v6017 = vsel %vm417, %v5853, 0.0
    %6018 = vadd.xlane.f32.xlu0 %v6017
    %v6019 = vpop.xlane.xlu0 %6018
    %v6020 = vsel %vm417, %v5855, 0.0
    %6021 = vadd.xlane.f32.xlu0 %v6020
    %v6022 = vpop.xlane.xlu0 %6021
    %v6023 = vsel %vm417, %v5857, 0.0
    %6024 = vadd.xlane.f32.xlu0 %v6023
    %v6025 = vpop.xlane.xlu0 %6024
    %v6026 = vsel %vm417, %v5859, 0.0
    %6027 = vadd.xlane.f32.xlu0 %v6026
    %v6028 = vpop.xlane.xlu0 %6027
    %v6029 = vsel %vm417, %v5861, 0.0
    %6030 = vadd.xlane.f32.xlu0 %v6029
    %v6031 = vpop.xlane.xlu0 %6030
    %v6032 = vsel %vm417, %v5863, 0.0
    %6033 = vadd.xlane.f32.xlu0 %v6032
    %v6034 = vpop.xlane.xlu0 %6033
    %v6035 = vsel %vm417, %v5865, 0.0
    %6036 = vadd.xlane.f32.xlu0 %v6035
    %v6037 = vpop.xlane.xlu0 %6036
    %v6038 = vsel %vm417, %v5867, 0.0
    %6039 = vadd.xlane.f32.xlu0 %v6038
    %v6040 = vpop.xlane.xlu0 %6039
    %v6041 = vsel %vm417, %v5869, 0.0
    %6042 = vadd.xlane.f32.xlu0 %v6041
    %v6043 = vpop.xlane.xlu0 %6042
    %v6044 = vsel %vm417, %v5871, 0.0
    %6045 = vadd.xlane.f32.xlu0 %v6044
    %v6046 = vpop.xlane.xlu0 %6045
    %v6047 = vsel %vm417, %v5873, 0.0
    %6048 = vadd.xlane.f32.xlu0 %v6047
    %v6049 = vpop.xlane.xlu0 %6048
    %v6050 = vsel %vm417, %v5875, 0.0
    %6051 = vadd.xlane.f32.xlu0 %v6050
    %v6052 = vpop.xlane.xlu0 %6051
    %v6053 = vsel %vm417, %v5877, 0.0
    %6054 = vadd.xlane.f32.xlu0 %v6053
    %v6055 = vpop.xlane.xlu0 %6054
    %v6056 = vsel %vm417, %v5879, 0.0
    %6057 = vadd.xlane.f32.xlu0 %v6056
    %v6058 = vpop.xlane.xlu0 %6057
    %v6059 = vsel %vm417, %v5881, 0.0
    %6060 = vadd.xlane.f32.xlu0 %v6059
    %v6061 = vpop.xlane.xlu0 %6060
    %v6062 = vsel %vm417, %v5883, 0.0
    %6063 = vadd.xlane.f32.xlu0 %v6062
    %v6064 = vpop.xlane.xlu0 %6063
    %v6065 = vsel %vm417, %v5885, 0.0
    %6066 = vadd.xlane.f32.xlu0 %v6065
    %v6067 = vpop.xlane.xlu0 %6066
    %v6068 = vsel %vm417, %v5887, 0.0
    %6069 = vadd.xlane.f32.xlu0 %v6068
    %v6070 = vpop.xlane.xlu0 %6069
    %v6071 = vsel %vm417, %v5889, 0.0
    %6072 = vadd.xlane.f32.xlu0 %v6071
    %v6073 = vpop.xlane.xlu0 %6072
    %v6074 = vsel %vm417, %v5891, 0.0
    %6075 = vadd.xlane.f32.xlu0 %v6074
    %v6076 = vpop.xlane.xlu0 %6075
    %v6077 = vsel %vm417, %v5893, 0.0
    %6078 = vadd.xlane.f32.xlu0 %v6077
    %v6079 = vpop.xlane.xlu0 %6078
    %v6080 = vsel %vm417, %v5895, 0.0
    %6081 = vadd.xlane.f32.xlu0 %v6080
    %v6082 = vpop.xlane.xlu0 %6081
    %v6083 = vsel %vm417, %v5897, 0.0
    %6084 = vadd.xlane.f32.xlu0 %v6083
    %v6085 = vpop.xlane.xlu0 %6084
    %v6086 = vsel %vm417, %v5899, 0.0
    %6087 = vadd.xlane.f32.xlu0 %v6086
    %v6088 = vpop.xlane.xlu0 %6087
    %v6089 = vsel %vm417, %v5901, 0.0
    %6090 = vadd.xlane.f32.xlu0 %v6089
    %v6091 = vpop.xlane.xlu0 %6090
    %v6092 = vsel %vm417, %v5903, 0.0
    %6093 = vadd.xlane.f32.xlu0 %v6092
    %v6094 = vpop.xlane.xlu0 %6093
    %v6095 = vsel %vm417, %v5905, 0.0
    %6096 = vadd.xlane.f32.xlu0 %v6095
    %v6097 = vpop.xlane.xlu0 %6096
    %v6098 = vrcp.pop %v5908
    %v6099 = vrcp.pop %v5911
    %v6100 = vrcp.pop %v5914
    %v6101 = vrcp.pop %v5917
    %v6102 = vrcp.pop %v5920
    %v6103 = vrcp.pop %v5923
    %v6104 = vrcp.pop %v5926
    %v6105 = vrcp.pop %v5929
    %v6106 = vrcp.pop %v5932
    %v6107 = vrcp.pop %v5935
    %v6108 = vrcp.pop %v5938
    %v6109 = vrcp.pop %v5941
    %v6110 = vrcp.pop %v5944
    %v6111 = vrcp.pop %v5947
    %v6112 = vrcp.pop %v5950
    %v6113 = vrcp.pop %v5953
    %v6114 = vrcp.pop %v5956
    %v6115 = vrcp.pop %v5959
    %v6116 = vrcp.pop %v5962
    %v6117 = vrcp.pop %v5965
    %v6118 = vrcp.pop %v5968
    %v6119 = vrcp.pop %v5971
    %v6120 = vrcp.pop %v5974
    %v6121 = vrcp.pop %v5977
    %v6122 = vrcp.pop %v5980
    %v6123 = vrcp.pop %v5983
    %v6124 = vrcp.pop %v5986
    %v6125 = vrcp.pop %v5989
    %v6126 = vrcp.pop %v5992
    %v6127 = vrcp.pop %v5995
    %v6128 = vrcp.pop %v5998
    %v6129 = vrcp.pop %v6001
    %v6130 = vrcp.pop %v6004
    %v6131 = vrcp.pop %v6007
    %v6132 = vrcp.pop %v6010
    %v6133 = vrcp.pop %v6013
    %v6134 = vrcp.pop %v6016
    %v6135 = vrcp.pop %v6019
    %v6136 = vrcp.pop %v6022
    %v6137 = vrcp.pop %v6025
    %v6138 = vrcp.pop %v6028
    %v6139 = vrcp.pop %v6031
    %v6140 = vrcp.pop %v6034
    %v6141 = vrcp.pop %v6037
    %v6142 = vrcp.pop %v6040
    %v6143 = vrcp.pop %v6043
    %v6144 = vrcp.pop %v6046
    %v6145 = vrcp.pop %v6049
    %v6146 = vrcp.pop %v6052
    %v6147 = vrcp.pop %v6055
    %v6148 = vrcp.pop %v6058
    %v6149 = vrcp.pop %v6061
    %v6150 = vrcp.pop %v6064
    %v6151 = vrcp.pop %v6067
    %v6152 = vrcp.pop %v6070
    %v6153 = vrcp.pop %v6073
    %v6154 = vrcp.pop %v6076
    %v6155 = vrcp.pop %v6079
    %v6156 = vrcp.pop %v6082
    %v6157 = vrcp.pop %v6085
    %v6158 = vrcp.pop %v6088
    %v6159 = vrcp.pop %v6091
    %v6160 = vrcp.pop %v6094
    %v6161 = vrcp.pop %v6097
    %v6162 = vmul.f32 %v5779, %v6098
    %v6163 = vmul.f32 %v5781, %v6099
    %v6164 = vmul.f32 %v5783, %v6100
    %v6165 = vmul.f32 %v5785, %v6101
    %v6166 = vmul.f32 %v5787, %v6102
    %v6167 = vmul.f32 %v5789, %v6103
    %v6168 = vmul.f32 %v5791, %v6104
    %v6169 = vmul.f32 %v5793, %v6105
    %v6170 = vmul.f32 %v5795, %v6106
    %v6171 = vmul.f32 %v5797, %v6107
    %v6172 = vmul.f32 %v5799, %v6108
    %v6173 = vmul.f32 %v5801, %v6109
    %v6174 = vmul.f32 %v5803, %v6110
    %v6175 = vmul.f32 %v5805, %v6111
    %v6176 = vmul.f32 %v5807, %v6112
    %v6177 = vmul.f32 %v5809, %v6113
    %v6178 = vmul.f32 %v5811, %v6114
    %v6179 = vmul.f32 %v5813, %v6115
    %v6180 = vmul.f32 %v5815, %v6116
    %v6181 = vmul.f32 %v5817, %v6117
    %v6182 = vmul.f32 %v5819, %v6118
    %v6183 = vmul.f32 %v5821, %v6119
    %v6184 = vmul.f32 %v5823, %v6120
    %v6185 = vmul.f32 %v5825, %v6121
    %v6186 = vmul.f32 %v5827, %v6122
    %v6187 = vmul.f32 %v5829, %v6123
    %v6188 = vmul.f32 %v5831, %v6124
    %v6189 = vmul.f32 %v5833, %v6125
    %v6190 = vmul.f32 %v5835, %v6126
    %v6191 = vmul.f32 %v5837, %v6127
    %v6192 = vmul.f32 %v5839, %v6128
    %v6193 = vmul.f32 %v5841, %v6129
    %v6194 = vmul.f32 %v5843, %v6130
    %v6195 = vmul.f32 %v5845, %v6131
    %v6196 = vmul.f32 %v5847, %v6132
    %v6197 = vmul.f32 %v5849, %v6133
    %v6198 = vmul.f32 %v5851, %v6134
    %v6199 = vmul.f32 %v5853, %v6135
    %v6200 = vmul.f32 %v5855, %v6136
    %v6201 = vmul.f32 %v5857, %v6137
    %v6202 = vmul.f32 %v5859, %v6138
    %v6203 = vmul.f32 %v5861, %v6139
    %v6204 = vmul.f32 %v5863, %v6140
    %v6205 = vmul.f32 %v5865, %v6141
    %v6206 = vmul.f32 %v5867, %v6142
    %v6207 = vmul.f32 %v5869, %v6143
    %v6208 = vmul.f32 %v5871, %v6144
    %v6209 = vmul.f32 %v5873, %v6145
    %v6210 = vmul.f32 %v5875, %v6146
    %v6211 = vmul.f32 %v5877, %v6147
    %v6212 = vmul.f32 %v5879, %v6148
    %v6213 = vmul.f32 %v5881, %v6149
    %v6214 = vmul.f32 %v5883, %v6150
    %v6215 = vmul.f32 %v5885, %v6151
    %v6216 = vmul.f32 %v5887, %v6152
    %v6217 = vmul.f32 %v5889, %v6153
    %v6218 = vmul.f32 %v5891, %v6154
    %v6219 = vmul.f32 %v5893, %v6155
    %v6220 = vmul.f32 %v5895, %v6156
    %v6221 = vmul.f32 %v5897, %v6157
    %v6222 = vmul.f32 %v5899, %v6158
    %v6223 = vmul.f32 %v5901, %v6159
    %v6224 = vmul.f32 %v5903, %v6160
    %v6225 = vmul.f32 %v5905, %v6161
    %v6226 = vpack.c.bf16 %v6162, %v6162
    %v6227 = vpack.c.bf16 %v6163, %v6163
    %v6228 = vpack.c.bf16 %v6164, %v6164
    %v6229 = vpack.c.bf16 %v6165, %v6165
    %v6230 = vpack.c.bf16 %v6166, %v6166
    %v6231 = vpack.c.bf16 %v6167, %v6167
    %v6232 = vpack.c.bf16 %v6168, %v6168
    %v6233 = vpack.c.bf16 %v6169, %v6169
    %v6234 = vpack.c.bf16 %v6170, %v6170
    %v6235 = vpack.c.bf16 %v6171, %v6171
    %v6236 = vpack.c.bf16 %v6172, %v6172
    %v6237 = vpack.c.bf16 %v6173, %v6173
    %v6238 = vpack.c.bf16 %v6174, %v6174
    %v6239 = vpack.c.bf16 %v6175, %v6175
    %v6240 = vpack.c.bf16 %v6176, %v6176
    %v6241 = vpack.c.bf16 %v6177, %v6177
    %v6242 = vpack.c.bf16 %v6178, %v6178
    %v6243 = vpack.c.bf16 %v6179, %v6179
    %v6244 = vpack.c.bf16 %v6180, %v6180
    %v6245 = vpack.c.bf16 %v6181, %v6181
    %v6246 = vpack.c.bf16 %v6182, %v6182
    %v6247 = vpack.c.bf16 %v6183, %v6183
    %v6248 = vpack.c.bf16 %v6184, %v6184
    %v6249 = vpack.c.bf16 %v6185, %v6185
    %v6250 = vpack.c.bf16 %v6186, %v6186
    %v6251 = vpack.c.bf16 %v6187, %v6187
    %v6252 = vpack.c.bf16 %v6188, %v6188
    %v6253 = vpack.c.bf16 %v6189, %v6189
    %v6254 = vpack.c.bf16 %v6190, %v6190
    %v6255 = vpack.c.bf16 %v6191, %v6191
    %v6256 = vpack.c.bf16 %v6192, %v6192
    %v6257 = vpack.c.bf16 %v6193, %v6193
    %v6258 = vpack.c.bf16 %v6194, %v6194
    %v6259 = vpack.c.bf16 %v6195, %v6195
    %v6260 = vpack.c.bf16 %v6196, %v6196
    %v6261 = vpack.c.bf16 %v6197, %v6197
    %v6262 = vpack.c.bf16 %v6198, %v6198
    %v6263 = vpack.c.bf16 %v6199, %v6199
    %v6264 = vpack.c.bf16 %v6200, %v6200
    %v6265 = vpack.c.bf16 %v6201, %v6201
    %v6266 = vpack.c.bf16 %v6202, %v6202
    %v6267 = vpack.c.bf16 %v6203, %v6203
    %v6268 = vpack.c.bf16 %v6204, %v6204
    %v6269 = vpack.c.bf16 %v6205, %v6205
    %v6270 = vpack.c.bf16 %v6206, %v6206
    %v6271 = vpack.c.bf16 %v6207, %v6207
    %v6272 = vpack.c.bf16 %v6208, %v6208
    %v6273 = vpack.c.bf16 %v6209, %v6209
    %v6274 = vpack.c.bf16 %v6210, %v6210
    %v6275 = vpack.c.bf16 %v6211, %v6211
    %v6276 = vpack.c.bf16 %v6212, %v6212
    %v6277 = vpack.c.bf16 %v6213, %v6213
    %v6278 = vpack.c.bf16 %v6214, %v6214
    %v6279 = vpack.c.bf16 %v6215, %v6215
    %v6280 = vpack.c.bf16 %v6216, %v6216
    %v6281 = vpack.c.bf16 %v6217, %v6217
    %v6282 = vpack.c.bf16 %v6218, %v6218
    %v6283 = vpack.c.bf16 %v6219, %v6219
    %v6284 = vpack.c.bf16 %v6220, %v6220
    %v6285 = vpack.c.bf16 %v6221, %v6221
    %v6286 = vpack.c.bf16 %v6222, %v6222
    %v6287 = vpack.c.bf16 %v6223, %v6223
    %v6288 = vpack.c.bf16 %v6224, %v6224
    %v6289 = vpack.c.bf16 %v6225, %v6225
    %v6298 = vunpack.c.l.b16 %v6226
    %v6299 = vunpack.c.l.b16 %v6227
    %v6300 = vunpack.c.l.b16 %v6228
    %v6301 = vunpack.c.l.b16 %v6229
    %v6302 = vunpack.c.l.b16 %v6230
    %v6303 = vunpack.c.l.b16 %v6231
    %v6304 = vunpack.c.l.b16 %v6232
    %v6305 = vunpack.c.l.b16 %v6233
    %v6306 = vpack.c.b16 %v6299, %v6298
    %v6307 = vpack.c.b16 %v6301, %v6300
    %v6308 = vpack.c.b16 %v6303, %v6302
    %v6309 = vpack.c.b16 %v6305, %v6304
    %v6310 = vunpack.c.l.b16 %v4778
    %v6311 = vunpack.c.l.b16 %v4779
    %v6312 = vunpack.c.l.b16 %v4780
    %v6313 = vunpack.c.l.b16 %v4781
    %v6314 = vunpack.c.l.b16 %v4782
    %v6315 = vunpack.c.l.b16 %v4783
    %v6316 = vunpack.c.l.b16 %v4784
    %v6317 = vunpack.c.l.b16 %v4785
    %v6318 = vpack.c.b16 %v6311, %v6310
    %v6319 = vpack.c.b16 %v6313, %v6312
    %v6320 = vpack.c.b16 %v6315, %v6314
    %v6321 = vpack.c.b16 %v6317, %v6316
    %v6327 = vsel %vm417, %v6306, 0
    %v6330 = vsel %vm417, %v6307, 0
    %v6333 = vsel %vm417, %v6308, 0
    %v6336 = vsel %vm417, %v6309, 0
    %6338 = vmatpush.bf16.msra.mxu0 0
    %6339 = vmatpush.bf16.msra.mxu0 0
    %6340 = vmatpush.bf16.msra.mxu0 0
    %6341 = vmatpush.bf16.msra.mxu0 0
    %6342 = vmatpush.bf16.msra.mxu0 %v6321
    %6343 = vmatpush.bf16.msra.mxu0 %v6320
    %6344 = vmatpush.bf16.msra.mxu0 %v6319
    %6345 = vmatpush.bf16.msra.mxu0 %v6318
    %6346 = vmatmul.bf16.gmra.mxu0 %v6327
    %v6347 = vpop.f32.mrf.mxu0
    %v6348 = vadd.f32 0.0, %v6347
    %v6349 = vpop.f32.mrf.mxu0
    %v6350 = vadd.f32 0.0, %v6349
    %6351 = vmatmul.bf16.gmra.mxu0 %v6330
    %v6352 = vpop.f32.mrf.mxu0
    %v6353 = vadd.f32 0.0, %v6352
    %v6354 = vpop.f32.mrf.mxu0
    %v6355 = vadd.f32 0.0, %v6354
    %6356 = vmatmul.bf16.gmra.mxu0 %v6333
    %v6357 = vpop.f32.mrf.mxu0
    %v6358 = vadd.f32 0.0, %v6357
    %v6359 = vpop.f32.mrf.mxu0
    %v6360 = vadd.f32 0.0, %v6359
    %6361 = vmatmul.bf16.gmra.mxu0 %v6336
    %v6362 = vpop.f32.mrf.mxu0
    %v6363 = vadd.f32 0.0, %v6362
    %v6364 = vpop.f32.mrf.mxu0
    %v6365 = vadd.f32 0.0, %v6364
    %6366 = vdwg.mxu0
    %v6375 = vunpack.c.l.b16 %v6234
    %v6376 = vunpack.c.l.b16 %v6235
    %v6377 = vunpack.c.l.b16 %v6236
    %v6378 = vunpack.c.l.b16 %v6237
    %v6379 = vunpack.c.l.b16 %v6238
    %v6380 = vunpack.c.l.b16 %v6239
    %v6381 = vunpack.c.l.b16 %v6240
    %v6382 = vunpack.c.l.b16 %v6241
    %v6383 = vpack.c.b16 %v6376, %v6375
    %v6384 = vpack.c.b16 %v6378, %v6377
    %v6385 = vpack.c.b16 %v6380, %v6379
    %v6386 = vpack.c.b16 %v6382, %v6381
    %v6387 = vunpack.c.l.b16 %v4786
    %v6388 = vunpack.c.l.b16 %v4787
    %v6389 = vunpack.c.l.b16 %v4788
    %v6390 = vunpack.c.l.b16 %v4789
    %v6391 = vunpack.c.l.b16 %v4790
    %v6392 = vunpack.c.l.b16 %v4791
    %v6393 = vunpack.c.l.b16 %v4792
    %v6394 = vunpack.c.l.b16 %v4793
    %v6395 = vpack.c.b16 %v6388, %v6387
    %v6396 = vpack.c.b16 %v6390, %v6389
    %v6397 = vpack.c.b16 %v6392, %v6391
    %v6398 = vpack.c.b16 %v6394, %v6393
    %v6404 = vsel %vm417, %v6383, 0
    %v6407 = vsel %vm417, %v6384, 0
    %v6410 = vsel %vm417, %v6385, 0
    %v6413 = vsel %vm417, %v6386, 0
    %6415 = vmatpush.bf16.msra.mxu0 0
    %6416 = vmatpush.bf16.msra.mxu0 0
    %6417 = vmatpush.bf16.msra.mxu0 0
    %6418 = vmatpush.bf16.msra.mxu0 0
    %6419 = vmatpush.bf16.msra.mxu0 %v6398
    %6420 = vmatpush.bf16.msra.mxu0 %v6397
    %6421 = vmatpush.bf16.msra.mxu0 %v6396
    %6422 = vmatpush.bf16.msra.mxu0 %v6395
    %6423 = vmatmul.bf16.gmra.mxu0 %v6404
    %v6424 = vpop.f32.mrf.mxu0
    %v6425 = vadd.f32 0.0, %v6424
    %v6426 = vpop.f32.mrf.mxu0
    %v6427 = vadd.f32 0.0, %v6426
    %6428 = vmatmul.bf16.gmra.mxu0 %v6407
    %v6429 = vpop.f32.mrf.mxu0
    %v6430 = vadd.f32 0.0, %v6429
    %v6431 = vpop.f32.mrf.mxu0
    %v6432 = vadd.f32 0.0, %v6431
    %6433 = vmatmul.bf16.gmra.mxu0 %v6410
    %v6434 = vpop.f32.mrf.mxu0
    %v6435 = vadd.f32 0.0, %v6434
    %v6436 = vpop.f32.mrf.mxu0
    %v6437 = vadd.f32 0.0, %v6436
    %6438 = vmatmul.bf16.gmra.mxu0 %v6413
    %v6439 = vpop.f32.mrf.mxu0
    %v6440 = vadd.f32 0.0, %v6439
    %v6441 = vpop.f32.mrf.mxu0
    %v6442 = vadd.f32 0.0, %v6441
    %6443 = vdwg.mxu0
    %v6452 = vunpack.c.l.b16 %v6242
    %v6453 = vunpack.c.l.b16 %v6243
    %v6454 = vunpack.c.l.b16 %v6244
    %v6455 = vunpack.c.l.b16 %v6245
    %v6456 = vunpack.c.l.b16 %v6246
    %v6457 = vunpack.c.l.b16 %v6247
    %v6458 = vunpack.c.l.b16 %v6248
    %v6459 = vunpack.c.l.b16 %v6249
    %v6460 = vpack.c.b16 %v6453, %v6452
    %v6461 = vpack.c.b16 %v6455, %v6454
    %v6462 = vpack.c.b16 %v6457, %v6456
    %v6463 = vpack.c.b16 %v6459, %v6458
    %v6464 = vunpack.c.l.b16 %v4811
    %v6465 = vunpack.c.l.b16 %v4813
    %v6466 = vunpack.c.l.b16 %v4815
    %v6467 = vunpack.c.l.b16 %v4817
    %v6468 = vunpack.c.l.b16 %v4819
    %v6469 = vunpack.c.l.b16 %v4821
    %v6470 = vunpack.c.l.b16 %v4823
    %v6471 = vunpack.c.l.b16 %v4825
    %v6472 = vpack.c.b16 %v6465, %v6464
    %v6473 = vpack.c.b16 %v6467, %v6466
    %v6474 = vpack.c.b16 %v6469, %v6468
    %v6475 = vpack.c.b16 %v6471, %v6470
    %v6481 = vsel %vm417, %v6460, 0
    %v6484 = vsel %vm417, %v6461, 0
    %v6487 = vsel %vm417, %v6462, 0
    %v6490 = vsel %vm417, %v6463, 0
    %6492 = vmatpush.bf16.msra.mxu0 0
    %6493 = vmatpush.bf16.msra.mxu0 0
    %6494 = vmatpush.bf16.msra.mxu0 0
    %6495 = vmatpush.bf16.msra.mxu0 0
    %6496 = vmatpush.bf16.msra.mxu0 %v6475
    %6497 = vmatpush.bf16.msra.mxu0 %v6474
    %6498 = vmatpush.bf16.msra.mxu0 %v6473
    %6499 = vmatpush.bf16.msra.mxu0 %v6472
    %6500 = vmatmul.bf16.gmra.mxu0 %v6481
    %v6501 = vpop.f32.mrf.mxu0
    %v6502 = vadd.f32 0.0, %v6501
    %v6503 = vpop.f32.mrf.mxu0
    %v6504 = vadd.f32 0.0, %v6503
    %6505 = vmatmul.bf16.gmra.mxu0 %v6484
    %v6506 = vpop.f32.mrf.mxu0
    %v6507 = vadd.f32 0.0, %v6506
    %v6508 = vpop.f32.mrf.mxu0
    %v6509 = vadd.f32 0.0, %v6508
    %6510 = vmatmul.bf16.gmra.mxu0 %v6487
    %v6511 = vpop.f32.mrf.mxu0
    %v6512 = vadd.f32 0.0, %v6511
    %v6513 = vpop.f32.mrf.mxu0
    %v6514 = vadd.f32 0.0, %v6513
    %6515 = vmatmul.bf16.gmra.mxu0 %v6490
    %v6516 = vpop.f32.mrf.mxu0
    %v6517 = vadd.f32 0.0, %v6516
    %v6518 = vpop.f32.mrf.mxu0
    %v6519 = vadd.f32 0.0, %v6518
    %6520 = vdwg.mxu0
    %v6529 = vunpack.c.l.b16 %v6250
    %v6530 = vunpack.c.l.b16 %v6251
    %v6531 = vunpack.c.l.b16 %v6252
    %v6532 = vunpack.c.l.b16 %v6253
    %v6533 = vunpack.c.l.b16 %v6254
    %v6534 = vunpack.c.l.b16 %v6255
    %v6535 = vunpack.c.l.b16 %v6256
    %v6536 = vunpack.c.l.b16 %v6257
    %v6537 = vpack.c.b16 %v6530, %v6529
    %v6538 = vpack.c.b16 %v6532, %v6531
    %v6539 = vpack.c.b16 %v6534, %v6533
    %v6540 = vpack.c.b16 %v6536, %v6535
    %v6541 = vunpack.c.l.b16 %v4827
    %v6542 = vunpack.c.l.b16 %v4829
    %v6543 = vunpack.c.l.b16 %v4831
    %v6544 = vunpack.c.l.b16 %v4833
    %v6545 = vunpack.c.l.b16 %v4835
    %v6546 = vunpack.c.l.b16 %v4837
    %v6547 = vunpack.c.l.b16 %v4839
    %v6548 = vunpack.c.l.b16 %v4841
    %v6549 = vpack.c.b16 %v6542, %v6541
    %v6550 = vpack.c.b16 %v6544, %v6543
    %v6551 = vpack.c.b16 %v6546, %v6545
    %v6552 = vpack.c.b16 %v6548, %v6547
    %v6558 = vsel %vm417, %v6537, 0
    %v6561 = vsel %vm417, %v6538, 0
    %v6564 = vsel %vm417, %v6539, 0
    %v6567 = vsel %vm417, %v6540, 0
    %6569 = vmatpush.bf16.msra.mxu0 0
    %6570 = vmatpush.bf16.msra.mxu0 0
    %6571 = vmatpush.bf16.msra.mxu0 0
    %6572 = vmatpush.bf16.msra.mxu0 0
    %6573 = vmatpush.bf16.msra.mxu0 %v6552
    %6574 = vmatpush.bf16.msra.mxu0 %v6551
    %6575 = vmatpush.bf16.msra.mxu0 %v6550
    %6576 = vmatpush.bf16.msra.mxu0 %v6549
    %6577 = vmatmul.bf16.gmra.mxu0 %v6558
    %v6578 = vpop.f32.mrf.mxu0
    %v6579 = vadd.f32 0.0, %v6578
    %v6580 = vpop.f32.mrf.mxu0
    %v6581 = vadd.f32 0.0, %v6580
    %6582 = vmatmul.bf16.gmra.mxu0 %v6561
    %v6583 = vpop.f32.mrf.mxu0
    %v6584 = vadd.f32 0.0, %v6583
    %v6585 = vpop.f32.mrf.mxu0
    %v6586 = vadd.f32 0.0, %v6585
    %6587 = vmatmul.bf16.gmra.mxu0 %v6564
    %v6588 = vpop.f32.mrf.mxu0
    %v6589 = vadd.f32 0.0, %v6588
    %v6590 = vpop.f32.mrf.mxu0
    %v6591 = vadd.f32 0.0, %v6590
    %6592 = vmatmul.bf16.gmra.mxu0 %v6567
    %v6593 = vpop.f32.mrf.mxu0
    %v6594 = vadd.f32 0.0, %v6593
    %v6595 = vpop.f32.mrf.mxu0
    %v6596 = vadd.f32 0.0, %v6595
    %6597 = vdwg.mxu0
    %v6606 = vunpack.c.l.b16 %v6258
    %v6607 = vunpack.c.l.b16 %v6259
    %v6608 = vunpack.c.l.b16 %v6260
    %v6609 = vunpack.c.l.b16 %v6261
    %v6610 = vunpack.c.l.b16 %v6262
    %v6611 = vunpack.c.l.b16 %v6263
    %v6612 = vunpack.c.l.b16 %v6264
    %v6613 = vunpack.c.l.b16 %v6265
    %v6614 = vpack.c.b16 %v6607, %v6606
    %v6615 = vpack.c.b16 %v6609, %v6608
    %v6616 = vpack.c.b16 %v6611, %v6610
    %v6617 = vpack.c.b16 %v6613, %v6612
    %v6618 = vunpack.c.l.b16 %v4843
    %v6619 = vunpack.c.l.b16 %v4845
    %v6620 = vunpack.c.l.b16 %v4847
    %v6621 = vunpack.c.l.b16 %v4849
    %v6622 = vunpack.c.l.b16 %v4851
    %v6623 = vunpack.c.l.b16 %v4853
    %v6624 = vunpack.c.l.b16 %v4855
    %v6625 = vunpack.c.l.b16 %v4857
    %v6626 = vpack.c.b16 %v6619, %v6618
    %v6627 = vpack.c.b16 %v6621, %v6620
    %v6628 = vpack.c.b16 %v6623, %v6622
    %v6629 = vpack.c.b16 %v6625, %v6624
    %v6635 = vsel %vm417, %v6614, 0
    %v6638 = vsel %vm417, %v6615, 0
    %v6641 = vsel %vm417, %v6616, 0
    %v6644 = vsel %vm417, %v6617, 0
    %6646 = vmatpush.bf16.msra.mxu0 0
    %6647 = vmatpush.bf16.msra.mxu0 0
    %6648 = vmatpush.bf16.msra.mxu0 0
    %6649 = vmatpush.bf16.msra.mxu0 0
    %6650 = vmatpush.bf16.msra.mxu0 %v6629
    %6651 = vmatpush.bf16.msra.mxu0 %v6628
    %6652 = vmatpush.bf16.msra.mxu0 %v6627
    %6653 = vmatpush.bf16.msra.mxu0 %v6626
    %6654 = vmatmul.bf16.gmra.mxu0 %v6635
    %v6655 = vpop.f32.mrf.mxu0
    %v6656 = vadd.f32 0.0, %v6655
    %v6657 = vpop.f32.mrf.mxu0
    %v6658 = vadd.f32 0.0, %v6657
    %6659 = vmatmul.bf16.gmra.mxu0 %v6638
    %v6660 = vpop.f32.mrf.mxu0
    %v6661 = vadd.f32 0.0, %v6660
    %v6662 = vpop.f32.mrf.mxu0
    %v6663 = vadd.f32 0.0, %v6662
    %6664 = vmatmul.bf16.gmra.mxu0 %v6641
    %v6665 = vpop.f32.mrf.mxu0
    %v6666 = vadd.f32 0.0, %v6665
    %v6667 = vpop.f32.mrf.mxu0
    %v6668 = vadd.f32 0.0, %v6667
    %6669 = vmatmul.bf16.gmra.mxu0 %v6644
    %v6670 = vpop.f32.mrf.mxu0
    %v6671 = vadd.f32 0.0, %v6670
    %v6672 = vpop.f32.mrf.mxu0
    %v6673 = vadd.f32 0.0, %v6672
    %6674 = vdwg.mxu0
    %v6683 = vunpack.c.l.b16 %v6266
    %v6684 = vunpack.c.l.b16 %v6267
    %v6685 = vunpack.c.l.b16 %v6268
    %v6686 = vunpack.c.l.b16 %v6269
    %v6687 = vunpack.c.l.b16 %v6270
    %v6688 = vunpack.c.l.b16 %v6271
    %v6689 = vunpack.c.l.b16 %v6272
    %v6690 = vunpack.c.l.b16 %v6273
    %v6691 = vpack.c.b16 %v6684, %v6683
    %v6692 = vpack.c.b16 %v6686, %v6685
    %v6693 = vpack.c.b16 %v6688, %v6687
    %v6694 = vpack.c.b16 %v6690, %v6689
    %v6695 = vunpack.c.l.b16 %v4859
    %v6696 = vunpack.c.l.b16 %v4861
    %v6697 = vunpack.c.l.b16 %v4863
    %v6698 = vunpack.c.l.b16 %v4865
    %v6699 = vunpack.c.l.b16 %v4867
    %v6700 = vunpack.c.l.b16 %v4869
    %v6701 = vunpack.c.l.b16 %v4871
    %v6702 = vunpack.c.l.b16 %v4873
    %v6703 = vpack.c.b16 %v6696, %v6695
    %v6704 = vpack.c.b16 %v6698, %v6697
    %v6705 = vpack.c.b16 %v6700, %v6699
    %v6706 = vpack.c.b16 %v6702, %v6701
    %v6712 = vsel %vm417, %v6691, 0
    %v6715 = vsel %vm417, %v6692, 0
    %v6718 = vsel %vm417, %v6693, 0
    %v6721 = vsel %vm417, %v6694, 0
    %6723 = vmatpush.bf16.msra.mxu0 0
    %6724 = vmatpush.bf16.msra.mxu0 0
    %6725 = vmatpush.bf16.msra.mxu0 0
    %6726 = vmatpush.bf16.msra.mxu0 0
    %6727 = vmatpush.bf16.msra.mxu0 %v6706
    %6728 = vmatpush.bf16.msra.mxu0 %v6705
    %6729 = vmatpush.bf16.msra.mxu0 %v6704
    %6730 = vmatpush.bf16.msra.mxu0 %v6703
    %6731 = vmatmul.bf16.gmra.mxu0 %v6712
    %v6732 = vpop.f32.mrf.mxu0
    %v6733 = vadd.f32 0.0, %v6732
    %v6734 = vpop.f32.mrf.mxu0
    %v6735 = vadd.f32 0.0, %v6734
    %6736 = vmatmul.bf16.gmra.mxu0 %v6715
    %v6737 = vpop.f32.mrf.mxu0
    %v6738 = vadd.f32 0.0, %v6737
    %v6739 = vpop.f32.mrf.mxu0
    %v6740 = vadd.f32 0.0, %v6739
    %6741 = vmatmul.bf16.gmra.mxu0 %v6718
    %v6742 = vpop.f32.mrf.mxu0
    %v6743 = vadd.f32 0.0, %v6742
    %v6744 = vpop.f32.mrf.mxu0
    %v6745 = vadd.f32 0.0, %v6744
    %6746 = vmatmul.bf16.gmra.mxu0 %v6721
    %v6747 = vpop.f32.mrf.mxu0
    %v6748 = vadd.f32 0.0, %v6747
    %v6749 = vpop.f32.mrf.mxu0
    %v6750 = vadd.f32 0.0, %v6749
    %6751 = vdwg.mxu0
    %v6760 = vunpack.c.l.b16 %v6274
    %v6761 = vunpack.c.l.b16 %v6275
    %v6762 = vunpack.c.l.b16 %v6276
    %v6763 = vunpack.c.l.b16 %v6277
    %v6764 = vunpack.c.l.b16 %v6278
    %v6765 = vunpack.c.l.b16 %v6279
    %v6766 = vunpack.c.l.b16 %v6280
    %v6767 = vunpack.c.l.b16 %v6281
    %v6768 = vpack.c.b16 %v6761, %v6760
    %v6769 = vpack.c.b16 %v6763, %v6762
    %v6770 = vpack.c.b16 %v6765, %v6764
    %v6771 = vpack.c.b16 %v6767, %v6766
    %v6772 = vunpack.c.l.b16 %v4875
    %v6773 = vunpack.c.l.b16 %v4877
    %v6774 = vunpack.c.l.b16 %v4879
    %v6775 = vunpack.c.l.b16 %v4881
    %v6776 = vunpack.c.l.b16 %v4883
    %v6777 = vunpack.c.l.b16 %v4885
    %v6778 = vunpack.c.l.b16 %v4887
    %v6779 = vunpack.c.l.b16 %v4889
    %v6780 = vpack.c.b16 %v6773, %v6772
    %v6781 = vpack.c.b16 %v6775, %v6774
    %v6782 = vpack.c.b16 %v6777, %v6776
    %v6783 = vpack.c.b16 %v6779, %v6778
    %v6789 = vsel %vm417, %v6768, 0
    %v6792 = vsel %vm417, %v6769, 0
    %v6795 = vsel %vm417, %v6770, 0
    %v6798 = vsel %vm417, %v6771, 0
    %6800 = vmatpush.bf16.msra.mxu0 0
    %6801 = vmatpush.bf16.msra.mxu0 0
    %6802 = vmatpush.bf16.msra.mxu0 0
    %6803 = vmatpush.bf16.msra.mxu0 0
    %6804 = vmatpush.bf16.msra.mxu0 %v6783
    %6805 = vmatpush.bf16.msra.mxu0 %v6782
    %6806 = vmatpush.bf16.msra.mxu0 %v6781
    %6807 = vmatpush.bf16.msra.mxu0 %v6780
    %6808 = vmatmul.bf16.gmra.mxu0 %v6789
    %v6809 = vpop.f32.mrf.mxu0
    %v6810 = vadd.f32 0.0, %v6809
    %v6811 = vpop.f32.mrf.mxu0
    %v6812 = vadd.f32 0.0, %v6811
    %6813 = vmatmul.bf16.gmra.mxu0 %v6792
    %v6814 = vpop.f32.mrf.mxu0
    %v6815 = vadd.f32 0.0, %v6814
    %v6816 = vpop.f32.mrf.mxu0
    %v6817 = vadd.f32 0.0, %v6816
    %6818 = vmatmul.bf16.gmra.mxu0 %v6795
    %v6819 = vpop.f32.mrf.mxu0
    %v6820 = vadd.f32 0.0, %v6819
    %v6821 = vpop.f32.mrf.mxu0
    %v6822 = vadd.f32 0.0, %v6821
    %6823 = vmatmul.bf16.gmra.mxu0 %v6798
    %v6824 = vpop.f32.mrf.mxu0
    %v6825 = vadd.f32 0.0, %v6824
    %v6826 = vpop.f32.mrf.mxu0
    %v6827 = vadd.f32 0.0, %v6826
    %6828 = vdwg.mxu0
    %v6837 = vunpack.c.l.b16 %v6282
    %v6838 = vunpack.c.l.b16 %v6283
    %v6839 = vunpack.c.l.b16 %v6284
    %v6840 = vunpack.c.l.b16 %v6285
    %v6841 = vunpack.c.l.b16 %v6286
    %v6842 = vunpack.c.l.b16 %v6287
    %v6843 = vunpack.c.l.b16 %v6288
    %v6844 = vunpack.c.l.b16 %v6289
    %v6845 = vpack.c.b16 %v6838, %v6837
    %v6846 = vpack.c.b16 %v6840, %v6839
    %v6847 = vpack.c.b16 %v6842, %v6841
    %v6848 = vpack.c.b16 %v6844, %v6843
    %v6849 = vunpack.c.l.b16 %v4891
    %v6850 = vunpack.c.l.b16 %v4893
    %v6851 = vunpack.c.l.b16 %v4895
    %v6852 = vunpack.c.l.b16 %v4897
    %v6853 = vunpack.c.l.b16 %v4899
    %v6854 = vunpack.c.l.b16 %v4901
    %v6855 = vunpack.c.l.b16 %v4903
    %v6856 = vunpack.c.l.b16 %v4905
    %v6857 = vpack.c.b16 %v6850, %v6849
    %v6858 = vpack.c.b16 %v6852, %v6851
    %v6859 = vpack.c.b16 %v6854, %v6853
    %v6860 = vpack.c.b16 %v6856, %v6855
    %v6866 = vsel %vm417, %v6845, 0
    %v6869 = vsel %vm417, %v6846, 0
    %v6872 = vsel %vm417, %v6847, 0
    %v6875 = vsel %vm417, %v6848, 0
    %6877 = vmatpush.bf16.msra.mxu0 0
    %6878 = vmatpush.bf16.msra.mxu0 0
    %6879 = vmatpush.bf16.msra.mxu0 0
    %6880 = vmatpush.bf16.msra.mxu0 0
    %6881 = vmatpush.bf16.msra.mxu0 %v6860
    %6882 = vmatpush.bf16.msra.mxu0 %v6859
    %6883 = vmatpush.bf16.msra.mxu0 %v6858
    %6884 = vmatpush.bf16.msra.mxu0 %v6857
    %6885 = vmatmul.bf16.gmra.mxu0 %v6866
    %v6886 = vpop.f32.mrf.mxu0
    %v6887 = vadd.f32 0.0, %v6886
    %v6888 = vpop.f32.mrf.mxu0
    %v6889 = vadd.f32 0.0, %v6888
    %6890 = vmatmul.bf16.gmra.mxu0 %v6869
    %v6891 = vpop.f32.mrf.mxu0
    %v6892 = vadd.f32 0.0, %v6891
    %v6893 = vpop.f32.mrf.mxu0
    %v6894 = vadd.f32 0.0, %v6893
    %6895 = vmatmul.bf16.gmra.mxu0 %v6872
    %v6896 = vpop.f32.mrf.mxu0
    %v6897 = vadd.f32 0.0, %v6896
    %v6898 = vpop.f32.mrf.mxu0
    %v6899 = vadd.f32 0.0, %v6898
    %6900 = vmatmul.bf16.gmra.mxu0 %v6875
    %v6901 = vpop.f32.mrf.mxu0
    %v6902 = vadd.f32 0.0, %v6901
    %v6903 = vpop.f32.mrf.mxu0
    %v6904 = vadd.f32 0.0, %v6903
    %6905 = vdwg.mxu0
    %6922 = vrot.lane.b32.xlu0 %v6502, 16
    %v6923 = vpop.permute.xlu0 %6922
    %6924 = vrot.lane.b32.xlu0 %v6504, 16
    %v6925 = vpop.permute.xlu0 %6924
    %6926 = vrot.lane.b32.xlu0 %v6507, 16
    %v6927 = vpop.permute.xlu0 %6926
    %6928 = vrot.lane.b32.xlu0 %v6509, 16
    %v6929 = vpop.permute.xlu0 %6928
    %6930 = vrot.lane.b32.xlu0 %v6512, 16
    %v6931 = vpop.permute.xlu0 %6930
    %6932 = vrot.lane.b32.xlu0 %v6514, 16
    %v6933 = vpop.permute.xlu0 %6932
    %6934 = vrot.lane.b32.xlu0 %v6517, 16
    %v6935 = vpop.permute.xlu0 %6934
    %6936 = vrot.lane.b32.xlu0 %v6519, 16
    %v6937 = vpop.permute.xlu0 %6936
    %6938 = vrot.lane.b32.xlu0 %v6579, 16
    %v6939 = vpop.permute.xlu0 %6938
    %6940 = vrot.lane.b32.xlu0 %v6581, 16
    %v6941 = vpop.permute.xlu0 %6940
    %6942 = vrot.lane.b32.xlu0 %v6584, 16
    %v6943 = vpop.permute.xlu0 %6942
    %6944 = vrot.lane.b32.xlu0 %v6586, 16
    %v6945 = vpop.permute.xlu0 %6944
    %6946 = vrot.lane.b32.xlu0 %v6589, 16
    %v6947 = vpop.permute.xlu0 %6946
    %6948 = vrot.lane.b32.xlu0 %v6591, 16
    %v6949 = vpop.permute.xlu0 %6948
    %6950 = vrot.lane.b32.xlu0 %v6594, 16
    %v6951 = vpop.permute.xlu0 %6950
    %6952 = vrot.lane.b32.xlu0 %v6596, 16
    %v6953 = vpop.permute.xlu0 %6952
    %6986 = vrot.lane.b32.xlu0 %v6656, 32
    %v6987 = vpop.permute.xlu0 %6986
    %6988 = vrot.lane.b32.xlu0 %v6658, 32
    %v6989 = vpop.permute.xlu0 %6988
    %6990 = vrot.lane.b32.xlu0 %v6661, 32
    %v6991 = vpop.permute.xlu0 %6990
    %6992 = vrot.lane.b32.xlu0 %v6663, 32
    %v6993 = vpop.permute.xlu0 %6992
    %6994 = vrot.lane.b32.xlu0 %v6666, 32
    %v6995 = vpop.permute.xlu0 %6994
    %6996 = vrot.lane.b32.xlu0 %v6668, 32
    %v6997 = vpop.permute.xlu0 %6996
    %6998 = vrot.lane.b32.xlu0 %v6671, 32
    %v6999 = vpop.permute.xlu0 %6998
    %7000 = vrot.lane.b32.xlu0 %v6673, 32
    %v7001 = vpop.permute.xlu0 %7000
    %7002 = vrot.lane.b32.xlu0 %v6733, 32
    %v7003 = vpop.permute.xlu0 %7002
    %7004 = vrot.lane.b32.xlu0 %v6735, 32
    %v7005 = vpop.permute.xlu0 %7004
    %7006 = vrot.lane.b32.xlu0 %v6738, 32
    %v7007 = vpop.permute.xlu0 %7006
    %7008 = vrot.lane.b32.xlu0 %v6740, 32
    %v7009 = vpop.permute.xlu0 %7008
    %7010 = vrot.lane.b32.xlu0 %v6743, 32
    %v7011 = vpop.permute.xlu0 %7010
    %7012 = vrot.lane.b32.xlu0 %v6745, 32
    %v7013 = vpop.permute.xlu0 %7012
    %7014 = vrot.lane.b32.xlu0 %v6748, 32
    %v7015 = vpop.permute.xlu0 %7014
    %7016 = vrot.lane.b32.xlu0 %v6750, 32
    %v7017 = vpop.permute.xlu0 %7016
    %7050 = vrot.lane.b32.xlu0 %v6810, 48
    %v7051 = vpop.permute.xlu0 %7050
    %7052 = vrot.lane.b32.xlu0 %v6812, 48
    %v7053 = vpop.permute.xlu0 %7052
    %7054 = vrot.lane.b32.xlu0 %v6815, 48
    %v7055 = vpop.permute.xlu0 %7054
    %7056 = vrot.lane.b32.xlu0 %v6817, 48
    %v7057 = vpop.permute.xlu0 %7056
    %7058 = vrot.lane.b32.xlu0 %v6820, 48
    %v7059 = vpop.permute.xlu0 %7058
    %7060 = vrot.lane.b32.xlu0 %v6822, 48
    %v7061 = vpop.permute.xlu0 %7060
    %7062 = vrot.lane.b32.xlu0 %v6825, 48
    %v7063 = vpop.permute.xlu0 %7062
    %7064 = vrot.lane.b32.xlu0 %v6827, 48
    %v7065 = vpop.permute.xlu0 %7064
    %7066 = vrot.lane.b32.xlu0 %v6887, 48
    %v7067 = vpop.permute.xlu0 %7066
    %7068 = vrot.lane.b32.xlu0 %v6889, 48
    %v7069 = vpop.permute.xlu0 %7068
    %7070 = vrot.lane.b32.xlu0 %v6892, 48
    %v7071 = vpop.permute.xlu0 %7070
    %7072 = vrot.lane.b32.xlu0 %v6894, 48
    %v7073 = vpop.permute.xlu0 %7072
    %7074 = vrot.lane.b32.xlu0 %v6897, 48
    %v7075 = vpop.permute.xlu0 %7074
    %7076 = vrot.lane.b32.xlu0 %v6899, 48
    %v7077 = vpop.permute.xlu0 %7076
    %7078 = vrot.lane.b32.xlu0 %v6902, 48
    %v7079 = vpop.permute.xlu0 %7078
    %7080 = vrot.lane.b32.xlu0 %v6904, 48
    %v7081 = vpop.permute.xlu0 %7080
    %v7098 = vsel %vm1491, %v6348, %v6923
    %v7099 = vsel %vm1491, %v6350, %v6925
    %v7100 = vsel %vm1491, %v6353, %v6927
    %v7101 = vsel %vm1491, %v6355, %v6929
    %v7102 = vsel %vm1491, %v6358, %v6931
    %v7103 = vsel %vm1491, %v6360, %v6933
    %v7104 = vsel %vm1491, %v6363, %v6935
    %v7105 = vsel %vm1491, %v6365, %v6937
    %v7106 = vsel %vm1491, %v6425, %v6939
    %v7107 = vsel %vm1491, %v6427, %v6941
    %v7108 = vsel %vm1491, %v6430, %v6943
    %v7109 = vsel %vm1491, %v6432, %v6945
    %v7110 = vsel %vm1491, %v6435, %v6947
    %v7111 = vsel %vm1491, %v6437, %v6949
    %v7112 = vsel %vm1491, %v6440, %v6951
    %v7113 = vsel %vm1491, %v6442, %v6953
    %v7114 = vsel %vm97, %v7098, %v6987
    %v7115 = vsel %vm97, %v7099, %v6989
    %v7116 = vsel %vm97, %v7100, %v6991
    %v7117 = vsel %vm97, %v7101, %v6993
    %v7118 = vsel %vm97, %v7102, %v6995
    %v7119 = vsel %vm97, %v7103, %v6997
    %v7120 = vsel %vm97, %v7104, %v6999
    %v7121 = vsel %vm97, %v7105, %v7001
    %v7122 = vsel %vm97, %v7106, %v7003
    %v7123 = vsel %vm97, %v7107, %v7005
    %v7124 = vsel %vm97, %v7108, %v7007
    %v7125 = vsel %vm97, %v7109, %v7009
    %v7126 = vsel %vm97, %v7110, %v7011
    %v7127 = vsel %vm97, %v7111, %v7013
    %v7128 = vsel %vm97, %v7112, %v7015
    %v7129 = vsel %vm97, %v7113, %v7017
    %v7130 = vsel %vm3692, %v7114, %v7051
    %v7131 = vsel %vm3692, %v7115, %v7053
    %v7132 = vsel %vm3692, %v7116, %v7055
    %v7133 = vsel %vm3692, %v7117, %v7057
    %v7134 = vsel %vm3692, %v7118, %v7059
    %v7135 = vsel %vm3692, %v7119, %v7061
    %v7136 = vsel %vm3692, %v7120, %v7063
    %v7137 = vsel %vm3692, %v7121, %v7065
    %v7138 = vsel %vm3692, %v7122, %v7067
    %v7139 = vsel %vm3692, %v7123, %v7069
    %v7140 = vsel %vm3692, %v7124, %v7071
    %v7141 = vsel %vm3692, %v7125, %v7073
    %v7142 = vsel %vm3692, %v7126, %v7075
    %v7143 = vsel %vm3692, %v7127, %v7077
    %v7144 = vsel %vm3692, %v7128, %v7079
    %v7145 = vsel %vm3692, %v7129, %v7081
    %v7146 = vpack.c.bf16 %v7131, %v7130
    %v7147 = vpack.c.bf16 %v7133, %v7132
    %v7148 = vpack.c.bf16 %v7135, %v7134
    %v7149 = vpack.c.bf16 %v7137, %v7136
    %v7150 = vpack.c.bf16 %v7139, %v7138
    %v7151 = vpack.c.bf16 %v7141, %v7140
    %v7152 = vpack.c.bf16 %v7143, %v7142
    %v7153 = vpack.c.bf16 %v7145, %v7144
    %v7154 = vld [vmem:[#allocation4] sm:$0xf]
    %v7155 = vld [vmem:[#allocation4 + $0x4] sm:$0xf]
    %v7156 = vld [vmem:[#allocation4 + $0x8] sm:$0xf]
    %v7157 = vld [vmem:[#allocation4 + $0xc] sm:$0xf]
    %v7158 = vld [vmem:[#allocation4 + $0x10] sm:$0xf]
    %v7159 = vld [vmem:[#allocation4 + $0x14] sm:$0xf]
    %v7160 = vld [vmem:[#allocation4 + $0x18] sm:$0xf]
    %v7161 = vld [vmem:[#allocation4 + $0x1c] sm:$0xf]
    %v7170 = vunpack.c.l.b16 %v7154
    %v7171 = vunpack.c.l.b16 %v7155
    %v7172 = vunpack.c.l.b16 %v7156
    %v7173 = vunpack.c.l.b16 %v7157
    %v7174 = vunpack.c.l.b16 %v7158
    %v7175 = vunpack.c.l.b16 %v7159
    %v7176 = vunpack.c.l.b16 %v7160
    %v7177 = vunpack.c.l.b16 %v7161
    %v7178 = vpack.c.b16 %v7171, %v7170
    %v7179 = vpack.c.b16 %v7173, %v7172
    %v7180 = vpack.c.b16 %v7175, %v7174
    %v7181 = vpack.c.b16 %v7177, %v7176
    %v7187 = vsel %vm417, %v7146, 0
    %v7190 = vsel %vm417, %v7147, 0
    %v7193 = vsel %vm417, %v7148, 0
    %v7196 = vsel %vm417, %v7149, 0
    %v7199 = vsel %vm417, %v7150, 0
    %v7202 = vsel %vm417, %v7151, 0
    %v7205 = vsel %vm417, %v7152, 0
    %v7208 = vsel %vm417, %v7153, 0
    %7210 = vmatpush.bf16.msra.mxu0 0
    %7211 = vmatpush.bf16.msra.mxu0 0
    %7212 = vmatpush.bf16.msra.mxu0 0
    %7213 = vmatpush.bf16.msra.mxu0 0
    %7214 = vmatpush.bf16.msra.mxu0 %v7181
    %7215 = vmatpush.bf16.msra.mxu0 %v7180
    %7216 = vmatpush.bf16.msra.mxu0 %v7179
    %7217 = vmatpush.bf16.msra.mxu0 %v7178
    %7218 = vmatmul.bf16.gmra.mxu0 %v7187
    %v7219 = vpop.f32.mrf.mxu0
    %v7220 = vadd.f32 0.0, %v7219
    %v7221 = vpop.f32.mrf.mxu0
    %v7222 = vadd.f32 0.0, %v7221
    %7223 = vmatmul.bf16.gmra.mxu0 %v7190
    %v7224 = vpop.f32.mrf.mxu0
    %v7225 = vadd.f32 0.0, %v7224
    %v7226 = vpop.f32.mrf.mxu0
    %v7227 = vadd.f32 0.0, %v7226
    %7228 = vmatmul.bf16.gmra.mxu0 %v7193
    %v7229 = vpop.f32.mrf.mxu0
    %v7230 = vadd.f32 0.0, %v7229
    %v7231 = vpop.f32.mrf.mxu0
    %v7232 = vadd.f32 0.0, %v7231
    %7233 = vmatmul.bf16.gmra.mxu0 %v7196
    %v7234 = vpop.f32.mrf.mxu0
    %v7235 = vadd.f32 0.0, %v7234
    %v7236 = vpop.f32.mrf.mxu0
    %v7237 = vadd.f32 0.0, %v7236
    %7238 = vmatmul.bf16.gmra.mxu0 %v7199
    %v7239 = vpop.f32.mrf.mxu0
    %v7240 = vadd.f32 0.0, %v7239
    %v7241 = vpop.f32.mrf.mxu0
    %v7242 = vadd.f32 0.0, %v7241
    %7243 = vmatmul.bf16.gmra.mxu0 %v7202
    %v7244 = vpop.f32.mrf.mxu0
    %v7245 = vadd.f32 0.0, %v7244
    %v7246 = vpop.f32.mrf.mxu0
    %v7247 = vadd.f32 0.0, %v7246
    %7248 = vmatmul.bf16.gmra.mxu0 %v7205
    %v7249 = vpop.f32.mrf.mxu0
    %v7250 = vadd.f32 0.0, %v7249
    %v7251 = vpop.f32.mrf.mxu0
    %v7252 = vadd.f32 0.0, %v7251
    %7253 = vmatmul.bf16.gmra.mxu0 %v7208
    %v7254 = vpop.f32.mrf.mxu0
    %v7255 = vadd.f32 0.0, %v7254
    %v7256 = vpop.f32.mrf.mxu0
    %v7257 = vadd.f32 0.0, %v7256
    %7258 = vdwg.mxu0
    %v7260 = vperm.slane %v95, 0
    %v7262 = vadd.f32 %v7220, %v7260
    %v7263 = vadd.f32 %v7222, %v7260
    %v7264 = vadd.f32 %v7225, %v7260
    %v7265 = vadd.f32 %v7227, %v7260
    %v7266 = vadd.f32 %v7230, %v7260
    %v7267 = vadd.f32 %v7232, %v7260
    %v7268 = vadd.f32 %v7235, %v7260
    %v7269 = vadd.f32 %v7237, %v7260
    %v7270 = vadd.f32 %v7240, %v7260
    %v7271 = vadd.f32 %v7242, %v7260
    %v7272 = vadd.f32 %v7245, %v7260
    %v7273 = vadd.f32 %v7247, %v7260
    %v7274 = vadd.f32 %v7250, %v7260
    %v7275 = vadd.f32 %v7252, %v7260
    %v7276 = vadd.f32 %v7255, %v7260
    %v7277 = vadd.f32 %v7257, %v7260
    %v7278 = vadd.f32 %v7262, %v3841
    %v7279 = vadd.f32 %v7263, %v3842
    %v7280 = vadd.f32 %v7264, %v3843
    %v7281 = vadd.f32 %v7265, %v3844
    %v7282 = vadd.f32 %v7266, %v3845
    %v7283 = vadd.f32 %v7267, %v3846
    %v7284 = vadd.f32 %v7268, %v3847
    %v7285 = vadd.f32 %v7269, %v3848
    %v7286 = vadd.f32 %v7270, %v3849
    %v7287 = vadd.f32 %v7271, %v3850
    %v7288 = vadd.f32 %v7272, %v3851
    %v7289 = vadd.f32 %v7273, %v3852
    %v7290 = vadd.f32 %v7274, %v3853
    %v7291 = vadd.f32 %v7275, %v3854
    %v7292 = vadd.f32 %v7276, %v3855
    %v7293 = vadd.f32 %v7277, %v3856
    %v7294 = vsel %vm417, %v7278, 0.0
    %7295 = vadd.xlane.f32.xlu0 %v7294
    %v7296 = vpop.xlane.xlu0 %7295
    %v7297 = vsel %vm417, %v7279, 0.0
    %7298 = vadd.xlane.f32.xlu0 %v7297
    %v7299 = vpop.xlane.xlu0 %7298
    %v7300 = vsel %vm417, %v7280, 0.0
    %7301 = vadd.xlane.f32.xlu0 %v7300
    %v7302 = vpop.xlane.xlu0 %7301
    %v7303 = vsel %vm417, %v7281, 0.0
    %7304 = vadd.xlane.f32.xlu0 %v7303
    %v7305 = vpop.xlane.xlu0 %7304
    %v7306 = vsel %vm417, %v7282, 0.0
    %7307 = vadd.xlane.f32.xlu0 %v7306
    %v7308 = vpop.xlane.xlu0 %7307
    %v7309 = vsel %vm417, %v7283, 0.0
    %7310 = vadd.xlane.f32.xlu0 %v7309
    %v7311 = vpop.xlane.xlu0 %7310
    %v7312 = vsel %vm417, %v7284, 0.0
    %7313 = vadd.xlane.f32.xlu0 %v7312
    %v7314 = vpop.xlane.xlu0 %7313
    %v7315 = vsel %vm417, %v7285, 0.0
    %7316 = vadd.xlane.f32.xlu0 %v7315
    %v7317 = vpop.xlane.xlu0 %7316
    %v7318 = vsel %vm417, %v7286, 0.0
    %7319 = vadd.xlane.f32.xlu0 %v7318
    %v7320 = vpop.xlane.xlu0 %7319
    %v7321 = vsel %vm417, %v7287, 0.0
    %7322 = vadd.xlane.f32.xlu0 %v7321
    %v7323 = vpop.xlane.xlu0 %7322
    %v7324 = vsel %vm417, %v7288, 0.0
    %7325 = vadd.xlane.f32.xlu0 %v7324
    %v7326 = vpop.xlane.xlu0 %7325
    %v7327 = vsel %vm417, %v7289, 0.0
    %7328 = vadd.xlane.f32.xlu0 %v7327
    %v7329 = vpop.xlane.xlu0 %7328
    %v7330 = vsel %vm417, %v7290, 0.0
    %7331 = vadd.xlane.f32.xlu0 %v7330
    %v7332 = vpop.xlane.xlu0 %7331
    %v7333 = vsel %vm417, %v7291, 0.0
    %7334 = vadd.xlane.f32.xlu0 %v7333
    %v7335 = vpop.xlane.xlu0 %7334
    %v7336 = vsel %vm417, %v7292, 0.0
    %7337 = vadd.xlane.f32.xlu0 %v7336
    %v7338 = vpop.xlane.xlu0 %7337
    %v7339 = vsel %vm417, %v7293, 0.0
    %7340 = vadd.xlane.f32.xlu0 %v7339
    %v7341 = vpop.xlane.xlu0 %7340
    %v7342 = vmul.f32 %v7296, %v146
    %v7343 = vmul.f32 %v7299, %v146
    %v7344 = vmul.f32 %v7302, %v146
    %v7345 = vmul.f32 %v7305, %v146
    %v7346 = vmul.f32 %v7308, %v146
    %v7347 = vmul.f32 %v7311, %v146
    %v7348 = vmul.f32 %v7314, %v146
    %v7349 = vmul.f32 %v7317, %v146
    %v7350 = vmul.f32 %v7320, %v146
    %v7351 = vmul.f32 %v7323, %v146
    %v7352 = vmul.f32 %v7326, %v146
    %v7353 = vmul.f32 %v7329, %v146
    %v7354 = vmul.f32 %v7332, %v146
    %v7355 = vmul.f32 %v7335, %v146
    %v7356 = vmul.f32 %v7338, %v146
    %v7357 = vmul.f32 %v7341, %v146
    %v7358 = vsub.f32 %v7278, %v7342
    %v7359 = vsub.f32 %v7279, %v7343
    %v7360 = vsub.f32 %v7280, %v7344
    %v7361 = vsub.f32 %v7281, %v7345
    %v7362 = vsub.f32 %v7282, %v7346
    %v7363 = vsub.f32 %v7283, %v7347
    %v7364 = vsub.f32 %v7284, %v7348
    %v7365 = vsub.f32 %v7285, %v7349
    %v7366 = vsub.f32 %v7286, %v7350
    %v7367 = vsub.f32 %v7287, %v7351
    %v7368 = vsub.f32 %v7288, %v7352
    %v7369 = vsub.f32 %v7289, %v7353
    %v7370 = vsub.f32 %v7290, %v7354
    %v7371 = vsub.f32 %v7291, %v7355
    %v7372 = vsub.f32 %v7292, %v7356
    %v7373 = vsub.f32 %v7293, %v7357
    %v7374 = vmul.f32 %v7358, %v7358
    %v7375 = vmul.f32 %v7359, %v7359
    %v7376 = vmul.f32 %v7360, %v7360
    %v7377 = vmul.f32 %v7361, %v7361
    %v7378 = vmul.f32 %v7362, %v7362
    %v7379 = vmul.f32 %v7363, %v7363
    %v7380 = vmul.f32 %v7364, %v7364
    %v7381 = vmul.f32 %v7365, %v7365
    %v7382 = vmul.f32 %v7366, %v7366
    %v7383 = vmul.f32 %v7367, %v7367
    %v7384 = vmul.f32 %v7368, %v7368
    %v7385 = vmul.f32 %v7369, %v7369
    %v7386 = vmul.f32 %v7370, %v7370
    %v7387 = vmul.f32 %v7371, %v7371
    %v7388 = vmul.f32 %v7372, %v7372
    %v7389 = vmul.f32 %v7373, %v7373
    %v7390 = vsel %vm417, %v7374, 0.0
    %7391 = vadd.xlane.f32.xlu0 %v7390
    %v7392 = vpop.xlane.xlu0 %7391
    %v7393 = vsel %vm417, %v7375, 0.0
    %7394 = vadd.xlane.f32.xlu0 %v7393
    %v7395 = vpop.xlane.xlu0 %7394
    %v7396 = vsel %vm417, %v7376, 0.0
    %7397 = vadd.xlane.f32.xlu0 %v7396
    %v7398 = vpop.xlane.xlu0 %7397
    %v7399 = vsel %vm417, %v7377, 0.0
    %7400 = vadd.xlane.f32.xlu0 %v7399
    %v7401 = vpop.xlane.xlu0 %7400
    %v7402 = vsel %vm417, %v7378, 0.0
    %7403 = vadd.xlane.f32.xlu0 %v7402
    %v7404 = vpop.xlane.xlu0 %7403
    %v7405 = vsel %vm417, %v7379, 0.0
    %7406 = vadd.xlane.f32.xlu0 %v7405
    %v7407 = vpop.xlane.xlu0 %7406
    %v7408 = vsel %vm417, %v7380, 0.0
    %7409 = vadd.xlane.f32.xlu0 %v7408
    %v7410 = vpop.xlane.xlu0 %7409
    %v7411 = vsel %vm417, %v7381, 0.0
    %7412 = vadd.xlane.f32.xlu0 %v7411
    %v7413 = vpop.xlane.xlu0 %7412
    %v7414 = vsel %vm417, %v7382, 0.0
    %7415 = vadd.xlane.f32.xlu0 %v7414
    %v7416 = vpop.xlane.xlu0 %7415
    %v7417 = vsel %vm417, %v7383, 0.0
    %7418 = vadd.xlane.f32.xlu0 %v7417
    %v7419 = vpop.xlane.xlu0 %7418
    %v7420 = vsel %vm417, %v7384, 0.0
    %7421 = vadd.xlane.f32.xlu0 %v7420
    %v7422 = vpop.xlane.xlu0 %7421
    %v7423 = vsel %vm417, %v7385, 0.0
    %7424 = vadd.xlane.f32.xlu0 %v7423
    %v7425 = vpop.xlane.xlu0 %7424
    %v7426 = vsel %vm417, %v7386, 0.0
    %7427 = vadd.xlane.f32.xlu0 %v7426
    %v7428 = vpop.xlane.xlu0 %7427
    %v7429 = vsel %vm417, %v7387, 0.0
    %7430 = vadd.xlane.f32.xlu0 %v7429
    %v7431 = vpop.xlane.xlu0 %7430
    %v7432 = vsel %vm417, %v7388, 0.0
    %7433 = vadd.xlane.f32.xlu0 %v7432
    %v7434 = vpop.xlane.xlu0 %7433
    %v7435 = vsel %vm417, %v7389, 0.0
    %7436 = vadd.xlane.f32.xlu0 %v7435
    %v7437 = vpop.xlane.xlu0 %7436
    %v7438 = vmul.f32 %v7392, %v146
    %v7439 = vmul.f32 %v7395, %v146
    %v7440 = vmul.f32 %v7398, %v146
    %v7441 = vmul.f32 %v7401, %v146
    %v7442 = vmul.f32 %v7404, %v146
    %v7443 = vmul.f32 %v7407, %v146
    %v7444 = vmul.f32 %v7410, %v146
    %v7445 = vmul.f32 %v7413, %v146
    %v7446 = vmul.f32 %v7416, %v146
    %v7447 = vmul.f32 %v7419, %v146
    %v7448 = vmul.f32 %v7422, %v146
    %v7449 = vmul.f32 %v7425, %v146
    %v7450 = vmul.f32 %v7428, %v146
    %v7451 = vmul.f32 %v7431, %v146
    %v7452 = vmul.f32 %v7434, %v146
    %v7453 = vmul.f32 %v7437, %v146
    %v7454 = vadd.f32 %v7438, 1e-05
    %v7455 = vadd.f32 %v7439, 1e-05
    %v7456 = vadd.f32 %v7440, 1e-05
    %v7457 = vadd.f32 %v7441, 1e-05
    %v7458 = vadd.f32 %v7442, 1e-05
    %v7459 = vadd.f32 %v7443, 1e-05
    %v7460 = vadd.f32 %v7444, 1e-05
    %v7461 = vadd.f32 %v7445, 1e-05
    %v7462 = vadd.f32 %v7446, 1e-05
    %v7463 = vadd.f32 %v7447, 1e-05
    %v7464 = vadd.f32 %v7448, 1e-05
    %v7465 = vadd.f32 %v7449, 1e-05
    %v7466 = vadd.f32 %v7450, 1e-05
    %v7467 = vadd.f32 %v7451, 1e-05
    %v7468 = vadd.f32 %v7452, 1e-05
    %v7469 = vadd.f32 %v7453, 1e-05
    %v7470 = vrsqrt.pop %v7454
    %v7471 = vmul.f32 %v7470, %v7454
    %v7472 = vmul.f32 %v7471, %v7470
    %v7473 = vmul.f32 0.5, %v7472
    %v7474 = vsub.f32 1.5, %v7473
    %v7475 = vmul.f32 %v7470, %v7474
    %vm7476 = vweird.f32 %v7454
    %vm7477 = vweird.f32 %v7470
    %vm7478 = vmor %vm7476, %vm7477
    %v7479 = vsel %vm7478, %v7470, %v7475
    %v7480 = vrsqrt.pop %v7455
    %v7481 = vmul.f32 %v7480, %v7455
    %v7482 = vmul.f32 %v7481, %v7480
    %v7483 = vmul.f32 0.5, %v7482
    %v7484 = vsub.f32 1.5, %v7483
    %v7485 = vmul.f32 %v7480, %v7484
    %vm7486 = vweird.f32 %v7455
    %vm7487 = vweird.f32 %v7480
    %vm7488 = vmor %vm7486, %vm7487
    %v7489 = vsel %vm7488, %v7480, %v7485
    %v7490 = vrsqrt.pop %v7456
    %v7491 = vmul.f32 %v7490, %v7456
    %v7492 = vmul.f32 %v7491, %v7490
    %v7493 = vmul.f32 0.5, %v7492
    %v7494 = vsub.f32 1.5, %v7493
    %v7495 = vmul.f32 %v7490, %v7494
    %vm7496 = vweird.f32 %v7456
    %vm7497 = vweird.f32 %v7490
    %vm7498 = vmor %vm7496, %vm7497
    %v7499 = vsel %vm7498, %v7490, %v7495
    %v7500 = vrsqrt.pop %v7457
    %v7501 = vmul.f32 %v7500, %v7457
    %v7502 = vmul.f32 %v7501, %v7500
    %v7503 = vmul.f32 0.5, %v7502
    %v7504 = vsub.f32 1.5, %v7503
    %v7505 = vmul.f32 %v7500, %v7504
    %vm7506 = vweird.f32 %v7457
    %vm7507 = vweird.f32 %v7500
    %vm7508 = vmor %vm7506, %vm7507
    %v7509 = vsel %vm7508, %v7500, %v7505
    %v7510 = vrsqrt.pop %v7458
    %v7511 = vmul.f32 %v7510, %v7458
    %v7512 = vmul.f32 %v7511, %v7510
    %v7513 = vmul.f32 0.5, %v7512
    %v7514 = vsub.f32 1.5, %v7513
    %v7515 = vmul.f32 %v7510, %v7514
    %vm7516 = vweird.f32 %v7458
    %vm7517 = vweird.f32 %v7510
    %vm7518 = vmor %vm7516, %vm7517
    %v7519 = vsel %vm7518, %v7510, %v7515
    %v7520 = vrsqrt.pop %v7459
    %v7521 = vmul.f32 %v7520, %v7459
    %v7522 = vmul.f32 %v7521, %v7520
    %v7523 = vmul.f32 0.5, %v7522
    %v7524 = vsub.f32 1.5, %v7523
    %v7525 = vmul.f32 %v7520, %v7524
    %vm7526 = vweird.f32 %v7459
    %vm7527 = vweird.f32 %v7520
    %vm7528 = vmor %vm7526, %vm7527
    %v7529 = vsel %vm7528, %v7520, %v7525
    %v7530 = vrsqrt.pop %v7460
    %v7531 = vmul.f32 %v7530, %v7460
    %v7532 = vmul.f32 %v7531, %v7530
    %v7533 = vmul.f32 0.5, %v7532
    %v7534 = vsub.f32 1.5, %v7533
    %v7535 = vmul.f32 %v7530, %v7534
    %vm7536 = vweird.f32 %v7460
    %vm7537 = vweird.f32 %v7530
    %vm7538 = vmor %vm7536, %vm7537
    %v7539 = vsel %vm7538, %v7530, %v7535
    %v7540 = vrsqrt.pop %v7461
    %v7541 = vmul.f32 %v7540, %v7461
    %v7542 = vmul.f32 %v7541, %v7540
    %v7543 = vmul.f32 0.5, %v7542
    %v7544 = vsub.f32 1.5, %v7543
    %v7545 = vmul.f32 %v7540, %v7544
    %vm7546 = vweird.f32 %v7461
    %vm7547 = vweird.f32 %v7540
    %vm7548 = vmor %vm7546, %vm7547
    %v7549 = vsel %vm7548, %v7540, %v7545
    %v7550 = vrsqrt.pop %v7462
    %v7551 = vmul.f32 %v7550, %v7462
    %v7552 = vmul.f32 %v7551, %v7550
    %v7553 = vmul.f32 0.5, %v7552
    %v7554 = vsub.f32 1.5, %v7553
    %v7555 = vmul.f32 %v7550, %v7554
    %vm7556 = vweird.f32 %v7462
    %vm7557 = vweird.f32 %v7550
    %vm7558 = vmor %vm7556, %vm7557
    %v7559 = vsel %vm7558, %v7550, %v7555
    %v7560 = vrsqrt.pop %v7463
    %v7561 = vmul.f32 %v7560, %v7463
    %v7562 = vmul.f32 %v7561, %v7560
    %v7563 = vmul.f32 0.5, %v7562
    %v7564 = vsub.f32 1.5, %v7563
    %v7565 = vmul.f32 %v7560, %v7564
    %vm7566 = vweird.f32 %v7463
    %vm7567 = vweird.f32 %v7560
    %vm7568 = vmor %vm7566, %vm7567
    %v7569 = vsel %vm7568, %v7560, %v7565
    %v7570 = vrsqrt.pop %v7464
    %v7571 = vmul.f32 %v7570, %v7464
    %v7572 = vmul.f32 %v7571, %v7570
    %v7573 = vmul.f32 0.5, %v7572
    %v7574 = vsub.f32 1.5, %v7573
    %v7575 = vmul.f32 %v7570, %v7574
    %vm7576 = vweird.f32 %v7464
    %vm7577 = vweird.f32 %v7570
    %vm7578 = vmor %vm7576, %vm7577
    %v7579 = vsel %vm7578, %v7570, %v7575
    %v7580 = vrsqrt.pop %v7465
    %v7581 = vmul.f32 %v7580, %v7465
    %v7582 = vmul.f32 %v7581, %v7580
    %v7583 = vmul.f32 0.5, %v7582
    %v7584 = vsub.f32 1.5, %v7583
    %v7585 = vmul.f32 %v7580, %v7584
    %vm7586 = vweird.f32 %v7465
    %vm7587 = vweird.f32 %v7580
    %vm7588 = vmor %vm7586, %vm7587
    %v7589 = vsel %vm7588, %v7580, %v7585
    %v7590 = vrsqrt.pop %v7466
    %v7591 = vmul.f32 %v7590, %v7466
    %v7592 = vmul.f32 %v7591, %v7590
    %v7593 = vmul.f32 0.5, %v7592
    %v7594 = vsub.f32 1.5, %v7593
    %v7595 = vmul.f32 %v7590, %v7594
    %vm7596 = vweird.f32 %v7466
    %vm7597 = vweird.f32 %v7590
    %vm7598 = vmor %vm7596, %vm7597
    %v7599 = vsel %vm7598, %v7590, %v7595
    %v7600 = vrsqrt.pop %v7467
    %v7601 = vmul.f32 %v7600, %v7467
    %v7602 = vmul.f32 %v7601, %v7600
    %v7603 = vmul.f32 0.5, %v7602
    %v7604 = vsub.f32 1.5, %v7603
    %v7605 = vmul.f32 %v7600, %v7604
    %vm7606 = vweird.f32 %v7467
    %vm7607 = vweird.f32 %v7600
    %vm7608 = vmor %vm7606, %vm7607
    %v7609 = vsel %vm7608, %v7600, %v7605
    %v7610 = vrsqrt.pop %v7468
    %v7611 = vmul.f32 %v7610, %v7468
    %v7612 = vmul.f32 %v7611, %v7610
    %v7613 = vmul.f32 0.5, %v7612
    %v7614 = vsub.f32 1.5, %v7613
    %v7615 = vmul.f32 %v7610, %v7614
    %vm7616 = vweird.f32 %v7468
    %vm7617 = vweird.f32 %v7610
    %vm7618 = vmor %vm7616, %vm7617
    %v7619 = vsel %vm7618, %v7610, %v7615
    %v7620 = vrsqrt.pop %v7469
    %v7621 = vmul.f32 %v7620, %v7469
    %v7622 = vmul.f32 %v7621, %v7620
    %v7623 = vmul.f32 0.5, %v7622
    %v7624 = vsub.f32 1.5, %v7623
    %v7625 = vmul.f32 %v7620, %v7624
    %vm7626 = vweird.f32 %v7469
    %vm7627 = vweird.f32 %v7620
    %vm7628 = vmor %vm7626, %vm7627
    %v7629 = vsel %vm7628, %v7620, %v7625
    %v7630 = vmul.f32 %v7358, %v7479
    %v7631 = vmul.f32 %v7359, %v7489
    %v7632 = vmul.f32 %v7360, %v7499
    %v7633 = vmul.f32 %v7361, %v7509
    %v7634 = vmul.f32 %v7362, %v7519
    %v7635 = vmul.f32 %v7363, %v7529
    %v7636 = vmul.f32 %v7364, %v7539
    %v7637 = vmul.f32 %v7365, %v7549
    %v7638 = vmul.f32 %v7366, %v7559
    %v7639 = vmul.f32 %v7367, %v7569
    %v7640 = vmul.f32 %v7368, %v7579
    %v7641 = vmul.f32 %v7369, %v7589
    %v7642 = vmul.f32 %v7370, %v7599
    %v7643 = vmul.f32 %v7371, %v7609
    %v7644 = vmul.f32 %v7372, %v7619
    %v7645 = vmul.f32 %v7373, %v7629
    %v7646 = vrot.slane %v95, 1
    %v7647 = vperm.slane %v7646, 0
    %v7649 = vmul.f32 %v7630, %v7647
    %v7650 = vmul.f32 %v7631, %v7647
    %v7651 = vmul.f32 %v7632, %v7647
    %v7652 = vmul.f32 %v7633, %v7647
    %v7653 = vmul.f32 %v7634, %v7647
    %v7654 = vmul.f32 %v7635, %v7647
    %v7655 = vmul.f32 %v7636, %v7647
    %v7656 = vmul.f32 %v7637, %v7647
    %v7657 = vmul.f32 %v7638, %v7647
    %v7658 = vmul.f32 %v7639, %v7647
    %v7659 = vmul.f32 %v7640, %v7647
    %v7660 = vmul.f32 %v7641, %v7647
    %v7661 = vmul.f32 %v7642, %v7647
    %v7662 = vmul.f32 %v7643, %v7647
    %v7663 = vmul.f32 %v7644, %v7647
    %v7664 = vmul.f32 %v7645, %v7647
    %v7665 = vrot.slane %v95, 2
    %v7666 = vperm.slane %v7665, 0
    %v7668 = vadd.f32 %v7649, %v7666
    %v7669 = vadd.f32 %v7650, %v7666
    %v7670 = vadd.f32 %v7651, %v7666
    %v7671 = vadd.f32 %v7652, %v7666
    %v7672 = vadd.f32 %v7653, %v7666
    %v7673 = vadd.f32 %v7654, %v7666
    %v7674 = vadd.f32 %v7655, %v7666
    %v7675 = vadd.f32 %v7656, %v7666
    %v7676 = vadd.f32 %v7657, %v7666
    %v7677 = vadd.f32 %v7658, %v7666
    %v7678 = vadd.f32 %v7659, %v7666
    %v7679 = vadd.f32 %v7660, %v7666
    %v7680 = vadd.f32 %v7661, %v7666
    %v7681 = vadd.f32 %v7662, %v7666
    %v7682 = vadd.f32 %v7663, %v7666
    %v7683 = vadd.f32 %v7664, %v7666
    %v7684 = vpack.c.bf16 %v7669, %v7668
    %v7685 = vpack.c.bf16 %v7671, %v7670
    %v7686 = vpack.c.bf16 %v7673, %v7672
    %v7687 = vpack.c.bf16 %v7675, %v7674
    %v7688 = vpack.c.bf16 %v7677, %v7676
    %v7689 = vpack.c.bf16 %v7679, %v7678
    %v7690 = vpack.c.bf16 %v7681, %v7680
    %v7691 = vpack.c.bf16 %v7683, %v7682
    %v7692 = vld [vmem:[%s11] sm:$0xff]
    %v7693 = vld [vmem:[%s11 + $0x8] sm:$0xff]
    %v7694 = vld [vmem:[%s11 + $0x10] sm:$0xff]
    %v7695 = vld [vmem:[%s11 + $0x18] sm:$0xff]
    %v7696 = vld [vmem:[%s11 + $0x20] sm:$0xff]
    %v7697 = vld [vmem:[%s11 + $0x28] sm:$0xff]
    %v7698 = vld [vmem:[%s11 + $0x30] sm:$0xff]
    %v7699 = vld [vmem:[%s11 + $0x38] sm:$0xff]
    %v7700 = vld [vmem:[%s11 + $0x40] sm:$0xff]
    %v7701 = vld [vmem:[%s11 + $0x48] sm:$0xff]
    %v7702 = vld [vmem:[%s11 + $0x50] sm:$0xff]
    %v7703 = vld [vmem:[%s11 + $0x58] sm:$0xff]
    %v7704 = vld [vmem:[%s11 + $0x60] sm:$0xff]
    %v7705 = vld [vmem:[%s11 + $0x68] sm:$0xff]
    %v7706 = vld [vmem:[%s11 + $0x70] sm:$0xff]
    %v7707 = vld [vmem:[%s11 + $0x78] sm:$0xff]
    %v7724 = vunpack.c.l.b16 %v7692
    %v7725 = vunpack.c.h.b16 %v7692
    %v7726 = vunpack.c.l.b16 %v7693
    %v7727 = vunpack.c.h.b16 %v7693
    %v7728 = vunpack.c.l.b16 %v7694
    %v7729 = vunpack.c.h.b16 %v7694
    %v7730 = vunpack.c.l.b16 %v7695
    %v7731 = vunpack.c.h.b16 %v7695
    %v7732 = vunpack.c.l.b16 %v7696
    %v7733 = vunpack.c.h.b16 %v7696
    %v7734 = vunpack.c.l.b16 %v7697
    %v7735 = vunpack.c.h.b16 %v7697
    %v7736 = vunpack.c.l.b16 %v7698
    %v7737 = vunpack.c.h.b16 %v7698
    %v7738 = vunpack.c.l.b16 %v7699
    %v7739 = vunpack.c.h.b16 %v7699
    %v7740 = vunpack.c.l.b16 %v7700
    %v7741 = vunpack.c.h.b16 %v7700
    %v7742 = vunpack.c.l.b16 %v7701
    %v7743 = vunpack.c.h.b16 %v7701
    %v7744 = vunpack.c.l.b16 %v7702
    %v7745 = vunpack.c.h.b16 %v7702
    %v7746 = vunpack.c.l.b16 %v7703
    %v7747 = vunpack.c.h.b16 %v7703
    %v7748 = vunpack.c.l.b16 %v7704
    %v7749 = vunpack.c.h.b16 %v7704
    %v7750 = vunpack.c.l.b16 %v7705
    %v7751 = vunpack.c.h.b16 %v7705
    %v7752 = vunpack.c.l.b16 %v7706
    %v7753 = vunpack.c.h.b16 %v7706
    %v7754 = vunpack.c.l.b16 %v7707
    %v7755 = vunpack.c.h.b16 %v7707
    %v7756 = vpack.c.b16 %v7728, %v7724
    %v7757 = vpack.c.b16 %v7729, %v7725
    %v7758 = vpack.c.b16 %v7730, %v7726
    %v7759 = vpack.c.b16 %v7731, %v7727
    %v7760 = vpack.c.b16 %v7736, %v7732
    %v7761 = vpack.c.b16 %v7737, %v7733
    %v7762 = vpack.c.b16 %v7738, %v7734
    %v7763 = vpack.c.b16 %v7739, %v7735
    %v7764 = vpack.c.b16 %v7744, %v7740
    %v7765 = vpack.c.b16 %v7745, %v7741
    %v7766 = vpack.c.b16 %v7746, %v7742
    %v7767 = vpack.c.b16 %v7747, %v7743
    %v7768 = vpack.c.b16 %v7752, %v7748
    %v7769 = vpack.c.b16 %v7753, %v7749
    %v7770 = vpack.c.b16 %v7754, %v7750
    %v7771 = vpack.c.b16 %v7755, %v7751
    %v7789 = vsel %vm417, %v7684, 0
    %v7792 = vsel %vm417, %v7685, 0
    %v7795 = vsel %vm417, %v7686, 0
    %v7798 = vsel %vm417, %v7687, 0
    %v7801 = vsel %vm417, %v7688, 0
    %v7804 = vsel %vm417, %v7689, 0
    %v7807 = vsel %vm417, %v7690, 0
    %v7810 = vsel %vm417, %v7691, 0
    %7812 = vmatpush.bf16.msra.mxu0 0
    %7813 = vmatpush.bf16.msra.mxu0 0
    %7814 = vmatpush.bf16.msra.mxu0 0
    %7815 = vmatpush.bf16.msra.mxu0 0
    %7816 = vmatpush.bf16.msra.mxu0 %v7768
    %7817 = vmatpush.bf16.msra.mxu0 %v7764
    %7818 = vmatpush.bf16.msra.mxu0 %v7760
    %7819 = vmatpush.bf16.msra.mxu0 %v7756
    %7820 = vmatmul.bf16.gmra.mxu0 %v7789
    %v7821 = vpop.f32.mrf.mxu0
    %v7822 = vadd.f32 0.0, %v7821
    %v7823 = vpop.f32.mrf.mxu0
    %v7824 = vadd.f32 0.0, %v7823
    %7825 = vmatmul.bf16.gmra.mxu0 %v7792
    %v7826 = vpop.f32.mrf.mxu0
    %v7827 = vadd.f32 0.0, %v7826
    %v7828 = vpop.f32.mrf.mxu0
    %v7829 = vadd.f32 0.0, %v7828
    %7830 = vmatmul.bf16.gmra.mxu0 %v7795
    %v7831 = vpop.f32.mrf.mxu0
    %v7832 = vadd.f32 0.0, %v7831
    %v7833 = vpop.f32.mrf.mxu0
    %v7834 = vadd.f32 0.0, %v7833
    %7835 = vmatmul.bf16.gmra.mxu0 %v7798
    %v7836 = vpop.f32.mrf.mxu0
    %v7837 = vadd.f32 0.0, %v7836
    %v7838 = vpop.f32.mrf.mxu0
    %v7839 = vadd.f32 0.0, %v7838
    %7840 = vmatmul.bf16.gmra.mxu0 %v7801
    %v7841 = vpop.f32.mrf.mxu0
    %v7842 = vadd.f32 0.0, %v7841
    %v7843 = vpop.f32.mrf.mxu0
    %v7844 = vadd.f32 0.0, %v7843
    %7845 = vmatmul.bf16.gmra.mxu0 %v7804
    %v7846 = vpop.f32.mrf.mxu0
    %v7847 = vadd.f32 0.0, %v7846
    %v7848 = vpop.f32.mrf.mxu0
    %v7849 = vadd.f32 0.0, %v7848
    %7850 = vmatmul.bf16.gmra.mxu0 %v7807
    %v7851 = vpop.f32.mrf.mxu0
    %v7852 = vadd.f32 0.0, %v7851
    %v7853 = vpop.f32.mrf.mxu0
    %v7854 = vadd.f32 0.0, %v7853
    %7855 = vmatmul.bf16.gmra.mxu0 %v7810
    %v7856 = vpop.f32.mrf.mxu0
    %v7857 = vadd.f32 0.0, %v7856
    %v7858 = vpop.f32.mrf.mxu0
    %v7859 = vadd.f32 0.0, %v7858
    %7860 = vdwg.mxu0
    %7861 = vmatpush.bf16.msra.mxu0 0
    %7862 = vmatpush.bf16.msra.mxu0 0
    %7863 = vmatpush.bf16.msra.mxu0 0
    %7864 = vmatpush.bf16.msra.mxu0 0
    %7865 = vmatpush.bf16.msra.mxu0 %v7769
    %7866 = vmatpush.bf16.msra.mxu0 %v7765
    %7867 = vmatpush.bf16.msra.mxu0 %v7761
    %7868 = vmatpush.bf16.msra.mxu0 %v7757
    %7869 = vmatmul.bf16.gmra.mxu0 %v7789
    %v7870 = vpop.f32.mrf.mxu0
    %v7871 = vadd.f32 0.0, %v7870
    %v7872 = vpop.f32.mrf.mxu0
    %v7873 = vadd.f32 0.0, %v7872
    %7874 = vmatmul.bf16.gmra.mxu0 %v7792
    %v7875 = vpop.f32.mrf.mxu0
    %v7876 = vadd.f32 0.0, %v7875
    %v7877 = vpop.f32.mrf.mxu0
    %v7878 = vadd.f32 0.0, %v7877
    %7879 = vmatmul.bf16.gmra.mxu0 %v7795
    %v7880 = vpop.f32.mrf.mxu0
    %v7881 = vadd.f32 0.0, %v7880
    %v7882 = vpop.f32.mrf.mxu0
    %v7883 = vadd.f32 0.0, %v7882
    %7884 = vmatmul.bf16.gmra.mxu0 %v7798
    %v7885 = vpop.f32.mrf.mxu0
    %v7886 = vadd.f32 0.0, %v7885
    %v7887 = vpop.f32.mrf.mxu0
    %v7888 = vadd.f32 0.0, %v7887
    %7889 = vmatmul.bf16.gmra.mxu0 %v7801
    %v7890 = vpop.f32.mrf.mxu0
    %v7891 = vadd.f32 0.0, %v7890
    %v7892 = vpop.f32.mrf.mxu0
    %v7893 = vadd.f32 0.0, %v7892
    %7894 = vmatmul.bf16.gmra.mxu0 %v7804
    %v7895 = vpop.f32.mrf.mxu0
    %v7896 = vadd.f32 0.0, %v7895
    %v7897 = vpop.f32.mrf.mxu0
    %v7898 = vadd.f32 0.0, %v7897
    %7899 = vmatmul.bf16.gmra.mxu0 %v7807
    %v7900 = vpop.f32.mrf.mxu0
    %v7901 = vadd.f32 0.0, %v7900
    %v7902 = vpop.f32.mrf.mxu0
    %v7903 = vadd.f32 0.0, %v7902
    %7904 = vmatmul.bf16.gmra.mxu0 %v7810
    %v7905 = vpop.f32.mrf.mxu0
    %v7906 = vadd.f32 0.0, %v7905
    %v7907 = vpop.f32.mrf.mxu0
    %v7908 = vadd.f32 0.0, %v7907
    %7909 = vdwg.mxu0
    %7910 = vmatpush.bf16.msra.mxu0 0
    %7911 = vmatpush.bf16.msra.mxu0 0
    %7912 = vmatpush.bf16.msra.mxu0 0
    %7913 = vmatpush.bf16.msra.mxu0 0
    %7914 = vmatpush.bf16.msra.mxu0 %v7770
    %7915 = vmatpush.bf16.msra.mxu0 %v7766
    %7916 = vmatpush.bf16.msra.mxu0 %v7762
    %7917 = vmatpush.bf16.msra.mxu0 %v7758
    %7918 = vmatmul.bf16.gmra.mxu0 %v7789
    %v7919 = vpop.f32.mrf.mxu0
    %v7920 = vadd.f32 0.0, %v7919
    %v7921 = vpop.f32.mrf.mxu0
    %v7922 = vadd.f32 0.0, %v7921
    %7923 = vmatmul.bf16.gmra.mxu0 %v7792
    %v7924 = vpop.f32.mrf.mxu0
    %v7925 = vadd.f32 0.0, %v7924
    %v7926 = vpop.f32.mrf.mxu0
    %v7927 = vadd.f32 0.0, %v7926
    %7928 = vmatmul.bf16.gmra.mxu0 %v7795
    %v7929 = vpop.f32.mrf.mxu0
    %v7930 = vadd.f32 0.0, %v7929
    %v7931 = vpop.f32.mrf.mxu0
    %v7932 = vadd.f32 0.0, %v7931
    %7933 = vmatmul.bf16.gmra.mxu0 %v7798
    %v7934 = vpop.f32.mrf.mxu0
    %v7935 = vadd.f32 0.0, %v7934
    %v7936 = vpop.f32.mrf.mxu0
    %v7937 = vadd.f32 0.0, %v7936
    %7938 = vmatmul.bf16.gmra.mxu0 %v7801
    %v7939 = vpop.f32.mrf.mxu0
    %v7940 = vadd.f32 0.0, %v7939
    %v7941 = vpop.f32.mrf.mxu0
    %v7942 = vadd.f32 0.0, %v7941
    %7943 = vmatmul.bf16.gmra.mxu0 %v7804
    %v7944 = vpop.f32.mrf.mxu0
    %v7945 = vadd.f32 0.0, %v7944
    %v7946 = vpop.f32.mrf.mxu0
    %v7947 = vadd.f32 0.0, %v7946
    %7948 = vmatmul.bf16.gmra.mxu0 %v7807
    %v7949 = vpop.f32.mrf.mxu0
    %v7950 = vadd.f32 0.0, %v7949
    %v7951 = vpop.f32.mrf.mxu0
    %v7952 = vadd.f32 0.0, %v7951
    %7953 = vmatmul.bf16.gmra.mxu0 %v7810
    %v7954 = vpop.f32.mrf.mxu0
    %v7955 = vadd.f32 0.0, %v7954
    %v7956 = vpop.f32.mrf.mxu0
    %v7957 = vadd.f32 0.0, %v7956
    %7958 = vdwg.mxu0
    %7959 = vmatpush.bf16.msra.mxu0 0
    %7960 = vmatpush.bf16.msra.mxu0 0
    %7961 = vmatpush.bf16.msra.mxu0 0
    %7962 = vmatpush.bf16.msra.mxu0 0
    %7963 = vmatpush.bf16.msra.mxu0 %v7771
    %7964 = vmatpush.bf16.msra.mxu0 %v7767
    %7965 = vmatpush.bf16.msra.mxu0 %v7763
    %7966 = vmatpush.bf16.msra.mxu0 %v7759
    %7967 = vmatmul.bf16.gmra.mxu0 %v7789
    %v7968 = vpop.f32.mrf.mxu0
    %v7969 = vadd.f32 0.0, %v7968
    %v7970 = vpop.f32.mrf.mxu0
    %v7971 = vadd.f32 0.0, %v7970
    %7972 = vmatmul.bf16.gmra.mxu0 %v7792
    %v7973 = vpop.f32.mrf.mxu0
    %v7974 = vadd.f32 0.0, %v7973
    %v7975 = vpop.f32.mrf.mxu0
    %v7976 = vadd.f32 0.0, %v7975
    %7977 = vmatmul.bf16.gmra.mxu0 %v7795
    %v7978 = vpop.f32.mrf.mxu0
    %v7979 = vadd.f32 0.0, %v7978
    %v7980 = vpop.f32.mrf.mxu0
    %v7981 = vadd.f32 0.0, %v7980
    %7982 = vmatmul.bf16.gmra.mxu0 %v7798
    %v7983 = vpop.f32.mrf.mxu0
    %v7984 = vadd.f32 0.0, %v7983
    %v7985 = vpop.f32.mrf.mxu0
    %v7986 = vadd.f32 0.0, %v7985
    %7987 = vmatmul.bf16.gmra.mxu0 %v7801
    %v7988 = vpop.f32.mrf.mxu0
    %v7989 = vadd.f32 0.0, %v7988
    %v7990 = vpop.f32.mrf.mxu0
    %v7991 = vadd.f32 0.0, %v7990
    %7992 = vmatmul.bf16.gmra.mxu0 %v7804
    %v7993 = vpop.f32.mrf.mxu0
    %v7994 = vadd.f32 0.0, %v7993
    %v7995 = vpop.f32.mrf.mxu0
    %v7996 = vadd.f32 0.0, %v7995
    %7997 = vmatmul.bf16.gmra.mxu0 %v7807
    %v7998 = vpop.f32.mrf.mxu0
    %v7999 = vadd.f32 0.0, %v7998
    %v8000 = vpop.f32.mrf.mxu0
    %v8001 = vadd.f32 0.0, %v8000
    %8002 = vmatmul.bf16.gmra.mxu0 %v7810
    %v8003 = vpop.f32.mrf.mxu0
    %v8004 = vadd.f32 0.0, %v8003
    %v8005 = vpop.f32.mrf.mxu0
    %v8006 = vadd.f32 0.0, %v8005
    %8007 = vdwg.mxu0
    %v8009 = vrot.slane %v95, 5
    %v8010 = vrot.slane %v96, 5
    %vm8011 = vcmask 1042432
    %v8012 = vsel %vm8011, %v8009, %v8010
    %v8013 = vperm.slane %v8012, 0
    %v8014 = vperm.slane %v8012, 1
    %v8015 = vperm.slane %v8012, 2
    %v8016 = vperm.slane %v8012, 3
    %v8021 = vadd.f32 %v7822, %v8013
    %v8022 = vadd.f32 %v7871, %v8014
    %v8023 = vadd.f32 %v7920, %v8015
    %v8024 = vadd.f32 %v7969, %v8016
    %v8025 = vadd.f32 %v7824, %v8013
    %v8026 = vadd.f32 %v7873, %v8014
    %v8027 = vadd.f32 %v7922, %v8015
    %v8028 = vadd.f32 %v7971, %v8016
    %v8029 = vadd.f32 %v7827, %v8013
    %v8030 = vadd.f32 %v7876, %v8014
    %v8031 = vadd.f32 %v7925, %v8015
    %v8032 = vadd.f32 %v7974, %v8016
    %v8033 = vadd.f32 %v7829, %v8013
    %v8034 = vadd.f32 %v7878, %v8014
    %v8035 = vadd.f32 %v7927, %v8015
    %v8036 = vadd.f32 %v7976, %v8016
    %v8037 = vadd.f32 %v7832, %v8013
    %v8038 = vadd.f32 %v7881, %v8014
    %v8039 = vadd.f32 %v7930, %v8015
    %v8040 = vadd.f32 %v7979, %v8016
    %v8041 = vadd.f32 %v7834, %v8013
    %v8042 = vadd.f32 %v7883, %v8014
    %v8043 = vadd.f32 %v7932, %v8015
    %v8044 = vadd.f32 %v7981, %v8016
    %v8045 = vadd.f32 %v7837, %v8013
    %v8046 = vadd.f32 %v7886, %v8014
    %v8047 = vadd.f32 %v7935, %v8015
    %v8048 = vadd.f32 %v7984, %v8016
    %v8049 = vadd.f32 %v7839, %v8013
    %v8050 = vadd.f32 %v7888, %v8014
    %v8051 = vadd.f32 %v7937, %v8015
    %v8052 = vadd.f32 %v7986, %v8016
    %v8053 = vadd.f32 %v7842, %v8013
    %v8054 = vadd.f32 %v7891, %v8014
    %v8055 = vadd.f32 %v7940, %v8015
    %v8056 = vadd.f32 %v7989, %v8016
    %v8057 = vadd.f32 %v7844, %v8013
    %v8058 = vadd.f32 %v7893, %v8014
    %v8059 = vadd.f32 %v7942, %v8015
    %v8060 = vadd.f32 %v7991, %v8016
    %v8061 = vadd.f32 %v7847, %v8013
    %v8062 = vadd.f32 %v7896, %v8014
    %v8063 = vadd.f32 %v7945, %v8015
    %v8064 = vadd.f32 %v7994, %v8016
    %v8065 = vadd.f32 %v7849, %v8013
    %v8066 = vadd.f32 %v7898, %v8014
    %v8067 = vadd.f32 %v7947, %v8015
    %v8068 = vadd.f32 %v7996, %v8016
    %v8069 = vadd.f32 %v7852, %v8013
    %v8070 = vadd.f32 %v7901, %v8014
    %v8071 = vadd.f32 %v7950, %v8015
    %v8072 = vadd.f32 %v7999, %v8016
    %v8073 = vadd.f32 %v7854, %v8013
    %v8074 = vadd.f32 %v7903, %v8014
    %v8075 = vadd.f32 %v7952, %v8015
    %v8076 = vadd.f32 %v8001, %v8016
    %v8077 = vadd.f32 %v7857, %v8013
    %v8078 = vadd.f32 %v7906, %v8014
    %v8079 = vadd.f32 %v7955, %v8015
    %v8080 = vadd.f32 %v8004, %v8016
    %v8081 = vadd.f32 %v7859, %v8013
    %v8082 = vadd.f32 %v7908, %v8014
    %v8083 = vadd.f32 %v7957, %v8015
    %v8084 = vadd.f32 %v8006, %v8016
    %v8085 = vmul.f32 %v8023, 0.5
    %v8086 = vmul.f32 %v8024, 0.5
    %v8087 = vmul.f32 %v8027, 0.5
    %v8088 = vmul.f32 %v8028, 0.5
    %v8089 = vmul.f32 %v8031, 0.5
    %v8090 = vmul.f32 %v8032, 0.5
    %v8091 = vmul.f32 %v8035, 0.5
    %v8092 = vmul.f32 %v8036, 0.5
    %v8093 = vmul.f32 %v8039, 0.5
    %v8094 = vmul.f32 %v8040, 0.5
    %v8095 = vmul.f32 %v8043, 0.5
    %v8096 = vmul.f32 %v8044, 0.5
    %v8097 = vmul.f32 %v8047, 0.5
    %v8098 = vmul.f32 %v8048, 0.5
    %v8099 = vmul.f32 %v8051, 0.5
    %v8100 = vmul.f32 %v8052, 0.5
    %v8101 = vmul.f32 %v8055, 0.5
    %v8102 = vmul.f32 %v8056, 0.5
    %v8103 = vmul.f32 %v8059, 0.5
    %v8104 = vmul.f32 %v8060, 0.5
    %v8105 = vmul.f32 %v8063, 0.5
    %v8106 = vmul.f32 %v8064, 0.5
    %v8107 = vmul.f32 %v8067, 0.5
    %v8108 = vmul.f32 %v8068, 0.5
    %v8109 = vmul.f32 %v8071, 0.5
    %v8110 = vmul.f32 %v8072, 0.5
    %v8111 = vmul.f32 %v8075, 0.5
    %v8112 = vmul.f32 %v8076, 0.5
    %v8113 = vmul.f32 %v8079, 0.5
    %v8114 = vmul.f32 %v8080, 0.5
    %v8115 = vmul.f32 %v8083, 0.5
    %v8116 = vmul.f32 %v8084, 0.5
    %v8117 = vmul.f32 %v8023, %v8023
    %v8118 = vmul.f32 %v8024, %v8024
    %v8119 = vmul.f32 %v8027, %v8027
    %v8120 = vmul.f32 %v8028, %v8028
    %v8121 = vmul.f32 %v8031, %v8031
    %v8122 = vmul.f32 %v8032, %v8032
    %v8123 = vmul.f32 %v8035, %v8035
    %v8124 = vmul.f32 %v8036, %v8036
    %v8125 = vmul.f32 %v8039, %v8039
    %v8126 = vmul.f32 %v8040, %v8040
    %v8127 = vmul.f32 %v8043, %v8043
    %v8128 = vmul.f32 %v8044, %v8044
    %v8129 = vmul.f32 %v8047, %v8047
    %v8130 = vmul.f32 %v8048, %v8048
    %v8131 = vmul.f32 %v8051, %v8051
    %v8132 = vmul.f32 %v8052, %v8052
    %v8133 = vmul.f32 %v8055, %v8055
    %v8134 = vmul.f32 %v8056, %v8056
    %v8135 = vmul.f32 %v8059, %v8059
    %v8136 = vmul.f32 %v8060, %v8060
    %v8137 = vmul.f32 %v8063, %v8063
    %v8138 = vmul.f32 %v8064, %v8064
    %v8139 = vmul.f32 %v8067, %v8067
    %v8140 = vmul.f32 %v8068, %v8068
    %v8141 = vmul.f32 %v8071, %v8071
    %v8142 = vmul.f32 %v8072, %v8072
    %v8143 = vmul.f32 %v8075, %v8075
    %v8144 = vmul.f32 %v8076, %v8076
    %v8145 = vmul.f32 %v8079, %v8079
    %v8146 = vmul.f32 %v8080, %v8080
    %v8147 = vmul.f32 %v8083, %v8083
    %v8148 = vmul.f32 %v8084, %v8084
    %v8149 = vmul.f32 %v8117, %v8023
    %v8150 = vmul.f32 %v8118, %v8024
    %v8151 = vmul.f32 %v8119, %v8027
    %v8152 = vmul.f32 %v8120, %v8028
    %v8153 = vmul.f32 %v8121, %v8031
    %v8154 = vmul.f32 %v8122, %v8032
    %v8155 = vmul.f32 %v8123, %v8035
    %v8156 = vmul.f32 %v8124, %v8036
    %v8157 = vmul.f32 %v8125, %v8039
    %v8158 = vmul.f32 %v8126, %v8040
    %v8159 = vmul.f32 %v8127, %v8043
    %v8160 = vmul.f32 %v8128, %v8044
    %v8161 = vmul.f32 %v8129, %v8047
    %v8162 = vmul.f32 %v8130, %v8048
    %v8163 = vmul.f32 %v8131, %v8051
    %v8164 = vmul.f32 %v8132, %v8052
    %v8165 = vmul.f32 %v8133, %v8055
    %v8166 = vmul.f32 %v8134, %v8056
    %v8167 = vmul.f32 %v8135, %v8059
    %v8168 = vmul.f32 %v8136, %v8060
    %v8169 = vmul.f32 %v8137, %v8063
    %v8170 = vmul.f32 %v8138, %v8064
    %v8171 = vmul.f32 %v8139, %v8067
    %v8172 = vmul.f32 %v8140, %v8068
    %v8173 = vmul.f32 %v8141, %v8071
    %v8174 = vmul.f32 %v8142, %v8072
    %v8175 = vmul.f32 %v8143, %v8075
    %v8176 = vmul.f32 %v8144, %v8076
    %v8177 = vmul.f32 %v8145, %v8079
    %v8178 = vmul.f32 %v8146, %v8080
    %v8179 = vmul.f32 %v8147, %v8083
    %v8180 = vmul.f32 %v8148, %v8084
    %v8181 = vmul.f32 %v8149, 0.044715
    %v8182 = vmul.f32 %v8150, 0.044715
    %v8183 = vmul.f32 %v8151, 0.044715
    %v8184 = vmul.f32 %v8152, 0.044715
    %v8185 = vmul.f32 %v8153, 0.044715
    %v8186 = vmul.f32 %v8154, 0.044715
    %v8187 = vmul.f32 %v8155, 0.044715
    %v8188 = vmul.f32 %v8156, 0.044715
    %v8189 = vmul.f32 %v8157, 0.044715
    %v8190 = vmul.f32 %v8158, 0.044715
    %v8191 = vmul.f32 %v8159, 0.044715
    %v8192 = vmul.f32 %v8160, 0.044715
    %v8193 = vmul.f32 %v8161, 0.044715
    %v8194 = vmul.f32 %v8162, 0.044715
    %v8195 = vmul.f32 %v8163, 0.044715
    %v8196 = vmul.f32 %v8164, 0.044715
    %v8197 = vmul.f32 %v8165, 0.044715
    %v8198 = vmul.f32 %v8166, 0.044715
    %v8199 = vmul.f32 %v8167, 0.044715
    %v8200 = vmul.f32 %v8168, 0.044715
    %v8201 = vmul.f32 %v8169, 0.044715
    %v8202 = vmul.f32 %v8170, 0.044715
    %v8203 = vmul.f32 %v8171, 0.044715
    %v8204 = vmul.f32 %v8172, 0.044715
    %v8205 = vmul.f32 %v8173, 0.044715
    %v8206 = vmul.f32 %v8174, 0.044715
    %v8207 = vmul.f32 %v8175, 0.044715
    %v8208 = vmul.f32 %v8176, 0.044715
    %v8209 = vmul.f32 %v8177, 0.044715
    %v8210 = vmul.f32 %v8178, 0.044715
    %v8211 = vmul.f32 %v8179, 0.044715
    %v8212 = vmul.f32 %v8180, 0.044715
    %v8213 = vadd.f32 %v8023, %v8181
    %v8214 = vadd.f32 %v8024, %v8182
    %v8215 = vadd.f32 %v8027, %v8183
    %v8216 = vadd.f32 %v8028, %v8184
    %v8217 = vadd.f32 %v8031, %v8185
    %v8218 = vadd.f32 %v8032, %v8186
    %v8219 = vadd.f32 %v8035, %v8187
    %v8220 = vadd.f32 %v8036, %v8188
    %v8221 = vadd.f32 %v8039, %v8189
    %v8222 = vadd.f32 %v8040, %v8190
    %v8223 = vadd.f32 %v8043, %v8191
    %v8224 = vadd.f32 %v8044, %v8192
    %v8225 = vadd.f32 %v8047, %v8193
    %v8226 = vadd.f32 %v8048, %v8194
    %v8227 = vadd.f32 %v8051, %v8195
    %v8228 = vadd.f32 %v8052, %v8196
    %v8229 = vadd.f32 %v8055, %v8197
    %v8230 = vadd.f32 %v8056, %v8198
    %v8231 = vadd.f32 %v8059, %v8199
    %v8232 = vadd.f32 %v8060, %v8200
    %v8233 = vadd.f32 %v8063, %v8201
    %v8234 = vadd.f32 %v8064, %v8202
    %v8235 = vadd.f32 %v8067, %v8203
    %v8236 = vadd.f32 %v8068, %v8204
    %v8237 = vadd.f32 %v8071, %v8205
    %v8238 = vadd.f32 %v8072, %v8206
    %v8239 = vadd.f32 %v8075, %v8207
    %v8240 = vadd.f32 %v8076, %v8208
    %v8241 = vadd.f32 %v8079, %v8209
    %v8242 = vadd.f32 %v8080, %v8210
    %v8243 = vadd.f32 %v8083, %v8211
    %v8244 = vadd.f32 %v8084, %v8212
    %v8245 = vmul.f32 %v8213, 0.7978846
    %v8246 = vmul.f32 %v8214, 0.7978846
    %v8247 = vmul.f32 %v8215, 0.7978846
    %v8248 = vmul.f32 %v8216, 0.7978846
    %v8249 = vmul.f32 %v8217, 0.7978846
    %v8250 = vmul.f32 %v8218, 0.7978846
    %v8251 = vmul.f32 %v8219, 0.7978846
    %v8252 = vmul.f32 %v8220, 0.7978846
    %v8253 = vmul.f32 %v8221, 0.7978846
    %v8254 = vmul.f32 %v8222, 0.7978846
    %v8255 = vmul.f32 %v8223, 0.7978846
    %v8256 = vmul.f32 %v8224, 0.7978846
    %v8257 = vmul.f32 %v8225, 0.7978846
    %v8258 = vmul.f32 %v8226, 0.7978846
    %v8259 = vmul.f32 %v8227, 0.7978846
    %v8260 = vmul.f32 %v8228, 0.7978846
    %v8261 = vmul.f32 %v8229, 0.7978846
    %v8262 = vmul.f32 %v8230, 0.7978846
    %v8263 = vmul.f32 %v8231, 0.7978846
    %v8264 = vmul.f32 %v8232, 0.7978846
    %v8265 = vmul.f32 %v8233, 0.7978846
    %v8266 = vmul.f32 %v8234, 0.7978846
    %v8267 = vmul.f32 %v8235, 0.7978846
    %v8268 = vmul.f32 %v8236, 0.7978846
    %v8269 = vmul.f32 %v8237, 0.7978846
    %v8270 = vmul.f32 %v8238, 0.7978846
    %v8271 = vmul.f32 %v8239, 0.7978846
    %v8272 = vmul.f32 %v8240, 0.7978846
    %v8273 = vmul.f32 %v8241, 0.7978846
    %v8274 = vmul.f32 %v8242, 0.7978846
    %v8275 = vmul.f32 %v8243, 0.7978846
    %v8276 = vmul.f32 %v8244, 0.7978846
    %v8277 = vtanh.pop %v8245
    %v8278 = vtanh.pop %v8246
    %v8279 = vtanh.pop %v8247
    %v8280 = vtanh.pop %v8248
    %v8281 = vtanh.pop %v8249
    %v8282 = vtanh.pop %v8250
    %v8283 = vtanh.pop %v8251
    %v8284 = vtanh.pop %v8252
    %v8285 = vtanh.pop %v8253
    %v8286 = vtanh.pop %v8254
    %v8287 = vtanh.pop %v8255
    %v8288 = vtanh.pop %v8256
    %v8289 = vtanh.pop %v8257
    %v8290 = vtanh.pop %v8258
    %v8291 = vtanh.pop %v8259
    %v8292 = vtanh.pop %v8260
    %v8293 = vtanh.pop %v8261
    %v8294 = vtanh.pop %v8262
    %v8295 = vtanh.pop %v8263
    %v8296 = vtanh.pop %v8264
    %v8297 = vtanh.pop %v8265
    %v8298 = vtanh.pop %v8266
    %v8299 = vtanh.pop %v8267
    %v8300 = vtanh.pop %v8268
    %v8301 = vtanh.pop %v8269
    %v8302 = vtanh.pop %v8270
    %v8303 = vtanh.pop %v8271
    %v8304 = vtanh.pop %v8272
    %v8305 = vtanh.pop %v8273
    %v8306 = vtanh.pop %v8274
    %v8307 = vtanh.pop %v8275
    %v8308 = vtanh.pop %v8276
    %v8309 = vadd.f32 %v8277, 1.0
    %v8310 = vadd.f32 %v8278, 1.0
    %v8311 = vadd.f32 %v8279, 1.0
    %v8312 = vadd.f32 %v8280, 1.0
    %v8313 = vadd.f32 %v8281, 1.0
    %v8314 = vadd.f32 %v8282, 1.0
    %v8315 = vadd.f32 %v8283, 1.0
    %v8316 = vadd.f32 %v8284, 1.0
    %v8317 = vadd.f32 %v8285, 1.0
    %v8318 = vadd.f32 %v8286, 1.0
    %v8319 = vadd.f32 %v8287, 1.0
    %v8320 = vadd.f32 %v8288, 1.0
    %v8321 = vadd.f32 %v8289, 1.0
    %v8322 = vadd.f32 %v8290, 1.0
    %v8323 = vadd.f32 %v8291, 1.0
    %v8324 = vadd.f32 %v8292, 1.0
    %v8325 = vadd.f32 %v8293, 1.0
    %v8326 = vadd.f32 %v8294, 1.0
    %v8327 = vadd.f32 %v8295, 1.0
    %v8328 = vadd.f32 %v8296, 1.0
    %v8329 = vadd.f32 %v8297, 1.0
    %v8330 = vadd.f32 %v8298, 1.0
    %v8331 = vadd.f32 %v8299, 1.0
    %v8332 = vadd.f32 %v8300, 1.0
    %v8333 = vadd.f32 %v8301, 1.0
    %v8334 = vadd.f32 %v8302, 1.0
    %v8335 = vadd.f32 %v8303, 1.0
    %v8336 = vadd.f32 %v8304, 1.0
    %v8337 = vadd.f32 %v8305, 1.0
    %v8338 = vadd.f32 %v8306, 1.0
    %v8339 = vadd.f32 %v8307, 1.0
    %v8340 = vadd.f32 %v8308, 1.0
    %v8341 = vmul.f32 %v8085, %v8309
    %v8342 = vmul.f32 %v8086, %v8310
    %v8343 = vmul.f32 %v8087, %v8311
    %v8344 = vmul.f32 %v8088, %v8312
    %v8345 = vmul.f32 %v8089, %v8313
    %v8346 = vmul.f32 %v8090, %v8314
    %v8347 = vmul.f32 %v8091, %v8315
    %v8348 = vmul.f32 %v8092, %v8316
    %v8349 = vmul.f32 %v8093, %v8317
    %v8350 = vmul.f32 %v8094, %v8318
    %v8351 = vmul.f32 %v8095, %v8319
    %v8352 = vmul.f32 %v8096, %v8320
    %v8353 = vmul.f32 %v8097, %v8321
    %v8354 = vmul.f32 %v8098, %v8322
    %v8355 = vmul.f32 %v8099, %v8323
    %v8356 = vmul.f32 %v8100, %v8324
    %v8357 = vmul.f32 %v8101, %v8325
    %v8358 = vmul.f32 %v8102, %v8326
    %v8359 = vmul.f32 %v8103, %v8327
    %v8360 = vmul.f32 %v8104, %v8328
    %v8361 = vmul.f32 %v8105, %v8329
    %v8362 = vmul.f32 %v8106, %v8330
    %v8363 = vmul.f32 %v8107, %v8331
    %v8364 = vmul.f32 %v8108, %v8332
    %v8365 = vmul.f32 %v8109, %v8333
    %v8366 = vmul.f32 %v8110, %v8334
    %v8367 = vmul.f32 %v8111, %v8335
    %v8368 = vmul.f32 %v8112, %v8336
    %v8369 = vmul.f32 %v8113, %v8337
    %v8370 = vmul.f32 %v8114, %v8338
    %v8371 = vmul.f32 %v8115, %v8339
    %v8372 = vmul.f32 %v8116, %v8340
    %v8373 = vmul.f32 %v8021, %v8341
    %v8374 = vmul.f32 %v8022, %v8342
    %v8375 = vmul.f32 %v8025, %v8343
    %v8376 = vmul.f32 %v8026, %v8344
    %v8377 = vmul.f32 %v8029, %v8345
    %v8378 = vmul.f32 %v8030, %v8346
    %v8379 = vmul.f32 %v8033, %v8347
    %v8380 = vmul.f32 %v8034, %v8348
    %v8381 = vmul.f32 %v8037, %v8349
    %v8382 = vmul.f32 %v8038, %v8350
    %v8383 = vmul.f32 %v8041, %v8351
    %v8384 = vmul.f32 %v8042, %v8352
    %v8385 = vmul.f32 %v8045, %v8353
    %v8386 = vmul.f32 %v8046, %v8354
    %v8387 = vmul.f32 %v8049, %v8355
    %v8388 = vmul.f32 %v8050, %v8356
    %v8389 = vmul.f32 %v8053, %v8357
    %v8390 = vmul.f32 %v8054, %v8358
    %v8391 = vmul.f32 %v8057, %v8359
    %v8392 = vmul.f32 %v8058, %v8360
    %v8393 = vmul.f32 %v8061, %v8361
    %v8394 = vmul.f32 %v8062, %v8362
    %v8395 = vmul.f32 %v8065, %v8363
    %v8396 = vmul.f32 %v8066, %v8364
    %v8397 = vmul.f32 %v8069, %v8365
    %v8398 = vmul.f32 %v8070, %v8366
    %v8399 = vmul.f32 %v8073, %v8367
    %v8400 = vmul.f32 %v8074, %v8368
    %v8401 = vmul.f32 %v8077, %v8369
    %v8402 = vmul.f32 %v8078, %v8370
    %v8403 = vmul.f32 %v8081, %v8371
    %v8404 = vmul.f32 %v8082, %v8372
    %v8405 = vpack.c.bf16 %v8375, %v8373
    %v8406 = vpack.c.bf16 %v8376, %v8374
    %v8407 = vpack.c.bf16 %v8379, %v8377
    %v8408 = vpack.c.bf16 %v8380, %v8378
    %v8409 = vpack.c.bf16 %v8383, %v8381
    %v8410 = vpack.c.bf16 %v8384, %v8382
    %v8411 = vpack.c.bf16 %v8387, %v8385
    %v8412 = vpack.c.bf16 %v8388, %v8386
    %v8413 = vpack.c.bf16 %v8391, %v8389
    %v8414 = vpack.c.bf16 %v8392, %v8390
    %v8415 = vpack.c.bf16 %v8395, %v8393
    %v8416 = vpack.c.bf16 %v8396, %v8394
    %v8417 = vpack.c.bf16 %v8399, %v8397
    %v8418 = vpack.c.bf16 %v8400, %v8398
    %v8419 = vpack.c.bf16 %v8403, %v8401
    %v8420 = vpack.c.bf16 %v8404, %v8402
    %v8421 = vld [vmem:[%s12] sm:$0xf]
    %v8422 = vld [vmem:[%s12 + $0x4] sm:$0xf]
    %v8423 = vld [vmem:[%s12 + $0x8] sm:$0xf]
    %v8424 = vld [vmem:[%s12 + $0xc] sm:$0xf]
    %v8425 = vld [vmem:[%s12 + $0x10] sm:$0xf]
    %v8426 = vld [vmem:[%s12 + $0x14] sm:$0xf]
    %v8427 = vld [vmem:[%s12 + $0x18] sm:$0xf]
    %v8428 = vld [vmem:[%s12 + $0x1c] sm:$0xf]
    %v8429 = vld [vmem:[%s12 + $0x20] sm:$0xf]
    %v8430 = vld [vmem:[%s12 + $0x24] sm:$0xf]
    %v8431 = vld [vmem:[%s12 + $0x28] sm:$0xf]
    %v8432 = vld [vmem:[%s12 + $0x2c] sm:$0xf]
    %v8433 = vld [vmem:[%s12 + $0x30] sm:$0xf]
    %v8434 = vld [vmem:[%s12 + $0x34] sm:$0xf]
    %v8435 = vld [vmem:[%s12 + $0x38] sm:$0xf]
    %v8436 = vld [vmem:[%s12 + $0x3c] sm:$0xf]
    %v8437 = vld [vmem:[%s12 + $0x40] sm:$0xf]
    %v8438 = vld [vmem:[%s12 + $0x44] sm:$0xf]
    %v8439 = vld [vmem:[%s12 + $0x48] sm:$0xf]
    %v8440 = vld [vmem:[%s12 + $0x4c] sm:$0xf]
    %v8441 = vld [vmem:[%s12 + $0x50] sm:$0xf]
    %v8442 = vld [vmem:[%s12 + $0x54] sm:$0xf]
    %v8443 = vld [vmem:[%s12 + $0x58] sm:$0xf]
    %v8444 = vld [vmem:[%s12 + $0x5c] sm:$0xf]
    %v8445 = vld [vmem:[%s12 + $0x60] sm:$0xf]
    %v8446 = vld [vmem:[%s12 + $0x64] sm:$0xf]
    %v8447 = vld [vmem:[%s12 + $0x68] sm:$0xf]
    %v8448 = vld [vmem:[%s12 + $0x6c] sm:$0xf]
    %v8449 = vld [vmem:[%s12 + $0x70] sm:$0xf]
    %v8450 = vld [vmem:[%s12 + $0x74] sm:$0xf]
    %v8451 = vld [vmem:[%s12 + $0x78] sm:$0xf]
    %v8452 = vld [vmem:[%s12 + $0x7c] sm:$0xf]
    %v8485 = vunpack.c.l.b16 %v8421
    %v8486 = vunpack.c.l.b16 %v8422
    %v8487 = vunpack.c.l.b16 %v8423
    %v8488 = vunpack.c.l.b16 %v8424
    %v8489 = vunpack.c.l.b16 %v8425
    %v8490 = vunpack.c.l.b16 %v8426
    %v8491 = vunpack.c.l.b16 %v8427
    %v8492 = vunpack.c.l.b16 %v8428
    %v8493 = vunpack.c.l.b16 %v8429
    %v8494 = vunpack.c.l.b16 %v8430
    %v8495 = vunpack.c.l.b16 %v8431
    %v8496 = vunpack.c.l.b16 %v8432
    %v8497 = vunpack.c.l.b16 %v8433
    %v8498 = vunpack.c.l.b16 %v8434
    %v8499 = vunpack.c.l.b16 %v8435
    %v8500 = vunpack.c.l.b16 %v8436
    %v8501 = vunpack.c.l.b16 %v8437
    %v8502 = vunpack.c.l.b16 %v8438
    %v8503 = vunpack.c.l.b16 %v8439
    %v8504 = vunpack.c.l.b16 %v8440
    %v8505 = vunpack.c.l.b16 %v8441
    %v8506 = vunpack.c.l.b16 %v8442
    %v8507 = vunpack.c.l.b16 %v8443
    %v8508 = vunpack.c.l.b16 %v8444
    %v8509 = vunpack.c.l.b16 %v8445
    %v8510 = vunpack.c.l.b16 %v8446
    %v8511 = vunpack.c.l.b16 %v8447
    %v8512 = vunpack.c.l.b16 %v8448
    %v8513 = vunpack.c.l.b16 %v8449
    %v8514 = vunpack.c.l.b16 %v8450
    %v8515 = vunpack.c.l.b16 %v8451
    %v8516 = vunpack.c.l.b16 %v8452
    %v8517 = vpack.c.b16 %v8486, %v8485
    %v8518 = vpack.c.b16 %v8488, %v8487
    %v8519 = vpack.c.b16 %v8490, %v8489
    %v8520 = vpack.c.b16 %v8492, %v8491
    %v8521 = vpack.c.b16 %v8494, %v8493
    %v8522 = vpack.c.b16 %v8496, %v8495
    %v8523 = vpack.c.b16 %v8498, %v8497
    %v8524 = vpack.c.b16 %v8500, %v8499
    %v8525 = vpack.c.b16 %v8502, %v8501
    %v8526 = vpack.c.b16 %v8504, %v8503
    %v8527 = vpack.c.b16 %v8506, %v8505
    %v8528 = vpack.c.b16 %v8508, %v8507
    %v8529 = vpack.c.b16 %v8510, %v8509
    %v8530 = vpack.c.b16 %v8512, %v8511
    %v8531 = vpack.c.b16 %v8514, %v8513
    %v8532 = vpack.c.b16 %v8516, %v8515
    %8549 = vmatpush.bf16.msra.mxu0 %v8524
    %8550 = vmatpush.bf16.msra.mxu0 %v8523
    %8551 = vmatpush.bf16.msra.mxu0 %v8522
    %8552 = vmatpush.bf16.msra.mxu0 %v8521
    %8553 = vmatpush.bf16.msra.mxu0 %v8520
    %8554 = vmatpush.bf16.msra.mxu0 %v8519
    %8555 = vmatpush.bf16.msra.mxu0 %v8518
    %8556 = vmatpush.bf16.msra.mxu0 %v8517
    %8557 = vmatmul.bf16.gmra.mxu0 %v8405
    %v8558 = vpop.f32.mrf.mxu0
    %v8559 = vadd.f32 0.0, %v8558
    %v8560 = vpop.f32.mrf.mxu0
    %v8561 = vadd.f32 0.0, %v8560
    %8562 = vmatmul.bf16.gmra.mxu0 %v8407
    %v8563 = vpop.f32.mrf.mxu0
    %v8564 = vadd.f32 0.0, %v8563
    %v8565 = vpop.f32.mrf.mxu0
    %v8566 = vadd.f32 0.0, %v8565
    %8567 = vmatmul.bf16.gmra.mxu0 %v8409
    %v8568 = vpop.f32.mrf.mxu0
    %v8569 = vadd.f32 0.0, %v8568
    %v8570 = vpop.f32.mrf.mxu0
    %v8571 = vadd.f32 0.0, %v8570
    %8572 = vmatmul.bf16.gmra.mxu0 %v8411
    %v8573 = vpop.f32.mrf.mxu0
    %v8574 = vadd.f32 0.0, %v8573
    %v8575 = vpop.f32.mrf.mxu0
    %v8576 = vadd.f32 0.0, %v8575
    %8577 = vmatmul.bf16.gmra.mxu0 %v8413
    %v8578 = vpop.f32.mrf.mxu0
    %v8579 = vadd.f32 0.0, %v8578
    %v8580 = vpop.f32.mrf.mxu0
    %v8581 = vadd.f32 0.0, %v8580
    %8582 = vmatmul.bf16.gmra.mxu0 %v8415
    %v8583 = vpop.f32.mrf.mxu0
    %v8584 = vadd.f32 0.0, %v8583
    %v8585 = vpop.f32.mrf.mxu0
    %v8586 = vadd.f32 0.0, %v8585
    %8587 = vmatmul.bf16.gmra.mxu0 %v8417
    %v8588 = vpop.f32.mrf.mxu0
    %v8589 = vadd.f32 0.0, %v8588
    %v8590 = vpop.f32.mrf.mxu0
    %v8591 = vadd.f32 0.0, %v8590
    %8592 = vmatmul.bf16.gmra.mxu0 %v8419
    %v8593 = vpop.f32.mrf.mxu0
    %v8594 = vadd.f32 0.0, %v8593
    %v8595 = vpop.f32.mrf.mxu0
    %v8596 = vadd.f32 0.0, %v8595
    %8597 = vdwg.mxu0
    %8598 = vmatpush.bf16.msra.mxu0 %v8532
    %8599 = vmatpush.bf16.msra.mxu0 %v8531
    %8600 = vmatpush.bf16.msra.mxu0 %v8530
    %8601 = vmatpush.bf16.msra.mxu0 %v8529
    %8602 = vmatpush.bf16.msra.mxu0 %v8528
    %8603 = vmatpush.bf16.msra.mxu0 %v8527
    %8604 = vmatpush.bf16.msra.mxu0 %v8526
    %8605 = vmatpush.bf16.msra.mxu0 %v8525
    %8606 = vmatmul.bf16.gmra.mxu0 %v8406
    %v8607 = vpop.f32.mrf.mxu0
    %v8608 = vadd.f32 %v8559, %v8607
    %v8609 = vpop.f32.mrf.mxu0
    %v8610 = vadd.f32 %v8561, %v8609
    %8611 = vmatmul.bf16.gmra.mxu0 %v8408
    %v8612 = vpop.f32.mrf.mxu0
    %v8613 = vadd.f32 %v8564, %v8612
    %v8614 = vpop.f32.mrf.mxu0
    %v8615 = vadd.f32 %v8566, %v8614
    %8616 = vmatmul.bf16.gmra.mxu0 %v8410
    %v8617 = vpop.f32.mrf.mxu0
    %v8618 = vadd.f32 %v8569, %v8617
    %v8619 = vpop.f32.mrf.mxu0
    %v8620 = vadd.f32 %v8571, %v8619
    %8621 = vmatmul.bf16.gmra.mxu0 %v8412
    %v8622 = vpop.f32.mrf.mxu0
    %v8623 = vadd.f32 %v8574, %v8622
    %v8624 = vpop.f32.mrf.mxu0
    %v8625 = vadd.f32 %v8576, %v8624
    %8626 = vmatmul.bf16.gmra.mxu0 %v8414
    %v8627 = vpop.f32.mrf.mxu0
    %v8628 = vadd.f32 %v8579, %v8627
    %v8629 = vpop.f32.mrf.mxu0
    %v8630 = vadd.f32 %v8581, %v8629
    %8631 = vmatmul.bf16.gmra.mxu0 %v8416
    %v8632 = vpop.f32.mrf.mxu0
    %v8633 = vadd.f32 %v8584, %v8632
    %v8634 = vpop.f32.mrf.mxu0
    %v8635 = vadd.f32 %v8586, %v8634
    %8636 = vmatmul.bf16.gmra.mxu0 %v8418
    %v8637 = vpop.f32.mrf.mxu0
    %v8638 = vadd.f32 %v8589, %v8637
    %v8639 = vpop.f32.mrf.mxu0
    %v8640 = vadd.f32 %v8591, %v8639
    %8641 = vmatmul.bf16.gmra.mxu0 %v8420
    %v8642 = vpop.f32.mrf.mxu0
    %v8643 = vadd.f32 %v8594, %v8642
    %v8644 = vpop.f32.mrf.mxu0
    %v8645 = vadd.f32 %v8596, %v8644
    %8646 = vdwg.mxu0
    %v8647 = vrot.slane %v95, 3
    %v8648 = vperm.slane %v8647, 0
    %v8650 = vadd.f32 %v8608, %v8648
    %v8651 = vadd.f32 %v8610, %v8648
    %v8652 = vadd.f32 %v8613, %v8648
    %v8653 = vadd.f32 %v8615, %v8648
    %v8654 = vadd.f32 %v8618, %v8648
    %v8655 = vadd.f32 %v8620, %v8648
    %v8656 = vadd.f32 %v8623, %v8648
    %v8657 = vadd.f32 %v8625, %v8648
    %v8658 = vadd.f32 %v8628, %v8648
    %v8659 = vadd.f32 %v8630, %v8648
    %v8660 = vadd.f32 %v8633, %v8648
    %v8661 = vadd.f32 %v8635, %v8648
    %v8662 = vadd.f32 %v8638, %v8648
    %v8663 = vadd.f32 %v8640, %v8648
    %v8664 = vadd.f32 %v8643, %v8648
    %v8665 = vadd.f32 %v8645, %v8648
    %v8666 = vadd.f32 %v8650, %v7278
    %v8667 = vadd.f32 %v8651, %v7279
    %v8668 = vadd.f32 %v8652, %v7280
    %v8669 = vadd.f32 %v8653, %v7281
    %v8670 = vadd.f32 %v8654, %v7282
    %v8671 = vadd.f32 %v8655, %v7283
    %v8672 = vadd.f32 %v8656, %v7284
    %v8673 = vadd.f32 %v8657, %v7285
    %v8674 = vadd.f32 %v8658, %v7286
    %v8675 = vadd.f32 %v8659, %v7287
    %v8676 = vadd.f32 %v8660, %v7288
    %v8677 = vadd.f32 %v8661, %v7289
    %v8678 = vadd.f32 %v8662, %v7290
    %v8679 = vadd.f32 %v8663, %v7291
    %v8680 = vadd.f32 %v8664, %v7292
    %v8681 = vadd.f32 %v8665, %v7293
    %v8682 = vpack.c.bf16 %v8667, %v8666
    %v8683 = vpack.c.bf16 %v8669, %v8668
    %v8684 = vpack.c.bf16 %v8671, %v8670
    %v8685 = vpack.c.bf16 %v8673, %v8672
    %v8686 = vpack.c.bf16 %v8675, %v8674
    %v8687 = vpack.c.bf16 %v8677, %v8676
    %v8688 = vpack.c.bf16 %v8679, %v8678
    %v8689 = vpack.c.bf16 %v8681, %v8680
    %v8690 = vld [vmem:[%s13] sm:$0xf]
    %v8691 = vld [vmem:[%s13 + $0x4] sm:$0xf]
    %v8692 = vld [vmem:[%s13 + $0x8] sm:$0xf]
    %v8693 = vld [vmem:[%s13 + $0xc] sm:$0xf]
    %v8694 = vld [vmem:[%s13 + $0x10] sm:$0xf]
    %v8695 = vld [vmem:[%s13 + $0x14] sm:$0xf]
    %v8696 = vld [vmem:[%s13 + $0x18] sm:$0xf]
    %v8697 = vld [vmem:[%s13 + $0x1c] sm:$0xf]
    %v8706 = vunpack.c.l.b16 %v8690
    %v8707 = vunpack.c.l.b16 %v8691
    %v8708 = vunpack.c.l.b16 %v8692
    %v8709 = vunpack.c.l.b16 %v8693
    %v8710 = vunpack.c.l.b16 %v8694
    %v8711 = vunpack.c.l.b16 %v8695
    %v8712 = vunpack.c.l.b16 %v8696
    %v8713 = vunpack.c.l.b16 %v8697
    %v8714 = vpack.c.b16 %v8707, %v8706
    %v8715 = vpack.c.b16 %v8709, %v8708
    %v8716 = vpack.c.b16 %v8711, %v8710
    %v8717 = vpack.c.b16 %v8713, %v8712
    %v8723 = vsel %vm417, %v8682, 0
    %v8726 = vsel %vm417, %v8683, 0
    %v8729 = vsel %vm417, %v8684, 0
    %v8732 = vsel %vm417, %v8685, 0
    %v8735 = vsel %vm417, %v8686, 0
    %v8738 = vsel %vm417, %v8687, 0
    %v8741 = vsel %vm417, %v8688, 0
    %v8744 = vsel %vm417, %v8689, 0
    %8746 = vmatpush.bf16.msra.mxu0 0
    %8747 = vmatpush.bf16.msra.mxu0 0
    %8748 = vmatpush.bf16.msra.mxu0 0
    %8749 = vmatpush.bf16.msra.mxu0 0
    %8750 = vmatpush.bf16.msra.mxu0 %v8717
    %8751 = vmatpush.bf16.msra.mxu0 %v8716
    %8752 = vmatpush.bf16.msra.mxu0 %v8715
    %8753 = vmatpush.bf16.msra.mxu0 %v8714
    %8754 = vmatmul.bf16.gmra.mxu0 %v8723
    %v8755 = vpop.f32.mrf.mxu0
    %v8756 = vadd.f32 0.0, %v8755
    %v8757 = vpop.f32.mrf.mxu0
    %v8758 = vadd.f32 0.0, %v8757
    %8759 = vmatmul.bf16.gmra.mxu0 %v8726
    %v8760 = vpop.f32.mrf.mxu0
    %v8761 = vadd.f32 0.0, %v8760
    %v8762 = vpop.f32.mrf.mxu0
    %v8763 = vadd.f32 0.0, %v8762
    %8764 = vmatmul.bf16.gmra.mxu0 %v8729
    %v8765 = vpop.f32.mrf.mxu0
    %v8766 = vadd.f32 0.0, %v8765
    %v8767 = vpop.f32.mrf.mxu0
    %v8768 = vadd.f32 0.0, %v8767
    %8769 = vmatmul.bf16.gmra.mxu0 %v8732
    %v8770 = vpop.f32.mrf.mxu0
    %v8771 = vadd.f32 0.0, %v8770
    %v8772 = vpop.f32.mrf.mxu0
    %v8773 = vadd.f32 0.0, %v8772
    %8774 = vmatmul.bf16.gmra.mxu0 %v8735
    %v8775 = vpop.f32.mrf.mxu0
    %v8776 = vadd.f32 0.0, %v8775
    %v8777 = vpop.f32.mrf.mxu0
    %v8778 = vadd.f32 0.0, %v8777
    %8779 = vmatmul.bf16.gmra.mxu0 %v8738
    %v8780 = vpop.f32.mrf.mxu0
    %v8781 = vadd.f32 0.0, %v8780
    %v8782 = vpop.f32.mrf.mxu0
    %v8783 = vadd.f32 0.0, %v8782
    %8784 = vmatmul.bf16.gmra.mxu0 %v8741
    %v8785 = vpop.f32.mrf.mxu0
    %v8786 = vadd.f32 0.0, %v8785
    %v8787 = vpop.f32.mrf.mxu0
    %v8788 = vadd.f32 0.0, %v8787
    %8789 = vmatmul.bf16.gmra.mxu0 %v8744
    %v8790 = vpop.f32.mrf.mxu0
    %v8791 = vadd.f32 0.0, %v8790
    %v8792 = vpop.f32.mrf.mxu0
    %v8793 = vadd.f32 0.0, %v8792
    %8794 = vdwg.mxu0
    %v8795 = vrot.slane %v95, 4
    %v8796 = vperm.slane %v8795, 0
    %v8798 = vadd.f32 %v8756, %v8796
    %v8799 = vadd.f32 %v8758, %v8796
    %v8800 = vadd.f32 %v8761, %v8796
    %v8801 = vadd.f32 %v8763, %v8796
    %v8802 = vadd.f32 %v8766, %v8796
    %v8803 = vadd.f32 %v8768, %v8796
    %v8804 = vadd.f32 %v8771, %v8796
    %v8805 = vadd.f32 %v8773, %v8796
    %v8806 = vadd.f32 %v8776, %v8796
    %v8807 = vadd.f32 %v8778, %v8796
    %v8808 = vadd.f32 %v8781, %v8796
    %v8809 = vadd.f32 %v8783, %v8796
    %v8810 = vadd.f32 %v8786, %v8796
    %v8811 = vadd.f32 %v8788, %v8796
    %v8812 = vadd.f32 %v8791, %v8796
    %v8813 = vadd.f32 %v8793, %v8796
    %v8814 = vadd.f32 %v8798, %v78
    %v8815 = vadd.f32 %v8799, %v79
    %v8816 = vadd.f32 %v8800, %v80
    %v8817 = vadd.f32 %v8801, %v81
    %v8818 = vadd.f32 %v8802, %v82
    %v8819 = vadd.f32 %v8803, %v83
    %v8820 = vadd.f32 %v8804, %v84
    %v8821 = vadd.f32 %v8805, %v85
    %v8822 = vadd.f32 %v8806, %v86
    %v8823 = vadd.f32 %v8807, %v87
    %v8824 = vadd.f32 %v8808, %v88
    %v8825 = vadd.f32 %v8809, %v89
    %v8826 = vadd.f32 %v8810, %v90
    %v8827 = vadd.f32 %v8811, %v91
    %v8828 = vadd.f32 %v8812, %v92
    %v8829 = vadd.f32 %v8813, %v93
    %8830 = vst.msk [vmem:[%s14] sm:$0xff] %vm97, %v8814
    %8831 = vst.msk [vmem:[%s14 + $0x8] sm:$0xff] %vm97, %v8815
    %8832 = vst.msk [vmem:[%s14 + $0x10] sm:$0xff] %vm97, %v8816
    %8833 = vst.msk [vmem:[%s14 + $0x18] sm:$0xff] %vm97, %v8817
    %8834 = vst.msk [vmem:[%s14 + $0x20] sm:$0xff] %vm97, %v8818
    %8835 = vst.msk [vmem:[%s14 + $0x28] sm:$0xff] %vm97, %v8819
    %8836 = vst.msk [vmem:[%s14 + $0x30] sm:$0xff] %vm97, %v8820
    %8837 = vst.msk [vmem:[%s14 + $0x38] sm:$0xff] %vm97, %v8821
    %8838 = vst.msk [vmem:[%s14 + $0x40] sm:$0xff] %vm97, %v8822
    %8839 = vst.msk [vmem:[%s14 + $0x48] sm:$0xff] %vm97, %v8823
    %8840 = vst.msk [vmem:[%s14 + $0x50] sm:$0xff] %vm97, %v8824
    %8841 = vst.msk [vmem:[%s14 + $0x58] sm:$0xff] %vm97, %v8825
    %8842 = vst.msk [vmem:[%s14 + $0x60] sm:$0xff] %vm97, %v8826
    %8843 = vst.msk [vmem:[%s14 + $0x68] sm:$0xff] %vm97, %v8827
    %8844 = vst.msk [vmem:[%s14 + $0x70] sm:$0xff] %vm97, %v8828
    %8845 = vst.msk [vmem:[%s14 + $0x78] sm:$0xff] %vm97, %v8829
    // Predicated region
    $region66: #{tpu_custom_call.1} parent=1 // pred_check
      _
    $region67: #{tpu_custom_call.1} parent=1 // pred_check_branch
      %8847 = sbr.rel (0) target = $region69
    $region68: #{tpu_custom_call.1} parent=1 // pred_region
      _
    $region69: #{tpu_custom_call.1} parent=1 // pred_fallthru
      _
    // Predicated region
    $region70: #{tpu_custom_call.1} parent=1 // pred_check
      _
    $region71: #{tpu_custom_call.1} parent=1 // pred_check_branch
      %8849 = sbr.rel (0) target = $region73
    $region72: #{tpu_custom_call.1} parent=1 // pred_region
      _
    $region73: #{tpu_custom_call.1} parent=1 // pred_fallthru
      _
    %8850 = vsyncpa [#allocation3], 1
    %8851 = vsyncpa [#allocation5], 1

</llo_original>
